<compile_context>
chip_gen: v7x
topology: tpu7x:2x2x1
jax: 0.10.0
libtpu: 0.0.40
codegen_flags: <defaults>
</compile_context>

<pallas_src>
import functools

import jax
import jax.numpy as jnp
from jax.experimental import pallas as pl
from jax.experimental.pallas import tpu as pltpu


def _round_up(a, b):
    return pl.cdiv(a, b) * b


# ----------------------------------------------------------------------------
# Pallas kernel: in-kernel neighbor gather (one-hot matmul) + shared 3-layer
# MLP + prefix-masked running max, all channels-first / lane-dense.
#
#   idx_ref  : (1, TM*K)     int32  per-tile neighbor ids, k-major / m-minor
#   cnt_ref  : (1, TM)       int32  valid-neighbor count per center (prefix)
#   coff_ref : (F, TM)       f32    per-center offset (0 for x rows, center pos)
#   feat_ref : (F, N_pad)    bf16   point table [x | pos], VMEM-resident
#   w*_ref   : (H_out, H_in) bf16   transposed Linear weights; b*_ref (H_out,1) f32
#   o_ref    : (H3, TM)      f32    lane-dense output slab
# ----------------------------------------------------------------------------
def _sa_conv_kernel(idx_ref, cnt_ref, coff_ref, feat_ref,
                    w1_ref, b1_ref, w2_ref, b2_ref, w3_ref, b3_ref,
                    o_ref, *, chunk):
    h3, tm = o_ref.shape
    n_pad = feat_ref.shape[1]
    chtm = chunk * tm
    nq = idx_ref.shape[1] // chtm           # number of neighbor chunks

    feat = feat_ref[...]                    # (F, N_pad) bf16, resident across grid
    counts = cnt_ref[...]                   # (1, TM) int32
    # Hoisted per-tile constants (JAX does not CSE broadcasts inside loops).
    off_t = jnp.concatenate([coff_ref[...]] * chunk, axis=1)        # (F, CHTM) f32
    n_iota = jax.lax.broadcasted_iota(jnp.int32, (n_pad, chtm), 0)  # row = point id

    w1 = w1_ref[...]; b1 = b1_ref[...]
    w2 = w2_ref[...]; b2 = b2_ref[...]
    w3 = w3_ref[...]; b3 = b3_ref[...]

    def chunk_step(q, acc):
        lane0 = pl.multiple_of(q * chtm, chtm)
        idx_c = idx_ref[:, pl.ds(lane0, chtm)]                      # (1, CHTM) int32

        # In-kernel gather on the (otherwise ~idle) MXU: one-hot matmul.
        # Exact: each output column has exactly one nonzero product.
        onehot = (n_iota == idx_c).astype(jnp.bfloat16)             # (N_pad, CHTM)
        g = jnp.dot(feat, onehot, preferred_element_type=jnp.float32)   # (F, CHTM)
        g = (g - off_t).astype(jnp.bfloat16)     # pos[j] - pos[center]; x unchanged

        h = jnp.dot(w1, g, preferred_element_type=jnp.float32) + b1
        h = jnp.maximum(h, 0.0).astype(jnp.bfloat16)
        h = jnp.dot(w2, h, preferred_element_type=jnp.float32) + b2
        h = jnp.maximum(h, 0.0).astype(jnp.bfloat16)
        h = jnp.dot(w3, h, preferred_element_type=jnp.float32) + b3
        h = jnp.maximum(h, 0.0)                                     # (H3, CHTM) >= 0

        # Sequential running max over this chunk's neighbor slabs (slab j =
        # lanes [j*TM,(j+1)*TM)) -> only ~2 slabs live at a time (no spills).
        # Invalid (padded) slots are zero-filled: equivalent to a masked max
        # ONLY because the MLP ends in ReLU (values >= 0) and every center has
        # itself as a neighbor (count >= 1).
        for j in range(chunk):
            valid_j = (q * chunk + j) < counts                      # (1, TM) bool
            slab = h[:, j * tm:(j + 1) * tm]
            acc = jnp.maximum(acc, jnp.where(valid_j, slab, 0.0))
        return acc

    acc0 = jnp.zeros((h3, tm), jnp.float32)
    acc = jax.lax.fori_loop(0, nq, chunk_step, acc0, unroll=True)
    o_ref[...] = acc


def pointnet_conv_maxpool(x, pos, centers_pos, nbr_idx, counts, params,
                          *, tm=512, chunk=8):
    """Shared-MLP + masked max over radius neighborhoods (PointNetConv core).

    x: (N, C) f32, pos: (N, 3) f32, centers_pos: (M, 3) f32,
    nbr_idx: (M, K) int32 (valid ids packed first), counts: (M,) int32.
    Returns (M, H3) f32.
    """
    (w1, b1), (w2, b2), (w3, b3) = params
    n, c = x.shape
    m, k = nbr_idx.shape
    h1 = w1.shape[1]
    h3 = w3.shape[1]
    f = c + 3
    f_pad = _round_up(f, 8)              # 7 -> 8: aligned sublane dim for g / w1
    n_pad = _round_up(n, 128)
    k_pad = _round_up(k, chunk)

    # M-tile: large tiles amortize the ~0.35us per-grid-step overhead; clamp for
    # tiny problems and keep >= 2 grid steps when there is enough work so v7x
    # megacore can shard the "parallel" axis across both TensorCores.
    tm_eff = min(tm, _round_up(m, 128))
    mp = _round_up(m, tm_eff)
    if mp // tm_eff < 2 and m > 128:
        tm_eff = _round_up(pl.cdiv(m, 2), 128)
        mp = _round_up(m, tm_eff)
    t = mp // tm_eff

    # ---- channels-first operands built directly at source: no (M, K, F)
    # grouped tensor in HBM and no post-hoc relayout of it ----
    feat_cf = jnp.zeros((f_pad, n_pad), jnp.float32)
    feat_cf = feat_cf.at[:c, :n].set(x.T)
    feat_cf = feat_cf.at[c:f, :n].set(pos.T)
    feat_cf = feat_cf.astype(jnp.bfloat16)                 # point table [x | pos]

    coff_cf = jnp.zeros((f_pad, mp), jnp.float32)          # per-center offsets
    coff_cf = coff_cf.at[c:f, :m].set(centers_pos.T)

    # Neighbor ids, lane-dense per tile, k-major / m-minor (slot j of tile i in
    # lanes [j*TM, (j+1)*TM)).  int32: ~K x smaller than the grouped features
    # this replaces, so this small relayout is negligible.
    idx_p = jnp.zeros((mp, k_pad), jnp.int32)
    idx_p = idx_p.at[:m, :k].set(nbr_idx)
    idx_cf = (idx_p.reshape(t, tm_eff, k_pad)
              .transpose(0, 2, 1)
              .reshape(1, mp * k_pad))

    cnt_p = jnp.zeros((1, mp), jnp.int32)
    cnt_p = cnt_p.at[0, :m].set(counts)

    w1t = (jnp.zeros((h1, f_pad), jnp.float32).at[:, :f].set(w1.T)
           .astype(jnp.bfloat16))
    b1c = b1.reshape(-1, 1).astype(jnp.float32)
    w2t = w2.T.astype(jnp.bfloat16)
    b2c = b2.reshape(-1, 1).astype(jnp.float32)
    w3t = w3.T.astype(jnp.bfloat16)
    b3c = b3.reshape(-1, 1).astype(jnp.float32)

    def full(a):
        return pl.BlockSpec(a.shape, lambda i, _nd=a.ndim: (0,) * _nd)

    out_cf = pl.pallas_call(
        functools.partial(_sa_conv_kernel, chunk=chunk),
        out_shape=jax.ShapeDtypeStruct((h3, mp), jnp.float32),
        grid_spec=pltpu.PrefetchScalarGridSpec(
            num_scalar_prefetch=0,
            grid=(t,),
            in_specs=[
                pl.BlockSpec((1, tm_eff * k_pad), lambda i: (0, i)),  # neighbor ids
                pl.BlockSpec((1, tm_eff), lambda i: (0, i)),          # counts
                pl.BlockSpec((f_pad, tm_eff), lambda i: (0, i)),      # center offsets
                pl.BlockSpec((f_pad, n_pad), lambda i: (0, 0)),       # point table (resident)
                full(w1t), full(b1c), full(w2t), full(b2c), full(w3t), full(b3c),
            ],
            out_specs=pl.BlockSpec((h3, tm_eff), lambda i: (0, i)),   # lane-dense out
        ),
        compiler_params=pltpu.CompilerParams(
            dimension_semantics=("parallel",),
            # Peak per-step VMEM = resident point table + double-buffered int32
            # ids/counts/f32 offsets + per-chunk f32 MLP intermediates: a few
            # MiB at tm=512/chunk=8 for typical point counts.  48 MiB keeps
            # headroom on v7x's 64 MiB physical VMEM; v5e/v6e could go higher.
            vmem_limit_bytes=48 * 1024 * 1024),
    )(idx_cf, cnt_p, coff_cf, feat_cf, w1t, b1c, w2t, b2c, w3t, b3c)

    # TODO(synk): for very large point counts the (N_pad, chunk*TM) one-hot
    # should be N-chunked (or replaced by a DMA gather); fine at typical N.
    return out_cf.T[:m]                                     # (M, H3)


# ----------------------------------------------------------------------------
# Plain-JAX glue: FPS, radius ball query (no clean Pallas equivalent)
# ----------------------------------------------------------------------------
def fps_single(pos, n_sample):
    """Farthest point sampling over one batch element (deterministic start=0)."""
    # TODO(synk): torch_cluster.fps uses a random start point; we start at 0.
    n = pos.shape[0]

    def body(i, state):
        sel, dists = state
        last = pos[sel[i - 1]]
        d = jnp.sum((pos - last) ** 2, axis=-1)
        dists = jnp.minimum(dists, d)
        sel = sel.at[i].set(jnp.argmax(dists).astype(jnp.int32))
        return sel, dists

    sel0 = jnp.zeros((n_sample,), dtype=jnp.int32)
    dists0 = jnp.full((n,), jnp.inf, dtype=jnp.float32)
    sel, _ = jax.lax.fori_loop(1, n_sample, body, (sel0, dists0))
    return sel


def radius_dense(pos, batch, centers_pos, centers_batch, r, k):
    """Dense ball query: first <=k neighbors within radius r, same batch."""
    d2 = jnp.sum((centers_pos[:, None, :] - pos[None, :, :]) ** 2, axis=-1)
    same = centers_batch[:, None] == batch[None, :]
    valid = (d2 <= r * r) & same                             # (M, N)
    # First <= k valid columns per row; top_k on the 0/1 validity score is
    # stable (prefers lower indices on ties) so valid neighbors pack first.
    score, nbr_idx = jax.lax.top_k(valid.astype(jnp.float32), k)
    return nbr_idx.astype(jnp.int32), score                  # (M,K), (M,K) 0/1


def sample_and_group(pos, batch, *, ratio, r, max_neighbors, points_per_batch):
    nb = int(batch.max()) + 1
    npb = points_per_batch
    # TODO(synk): torch_cluster.fps uses per-batch ceil; we use floor.
    n_sample = int(npb * ratio)
    sel = jax.vmap(lambda p: fps_single(p, n_sample))(pos.reshape(nb, npb, 3))
    idx = (sel + (jnp.arange(nb, dtype=jnp.int32) * npb)[:, None]).reshape(-1)
    centers_pos = pos[idx]
    centers_batch = batch[idx]
    k_eff = min(max_neighbors, pos.shape[0])
    # TODO(synk): dense O(M*N) ball query; torch_cluster's neighbor order when
    # a ball exceeds max_neighbors is implementation-defined.
    nbr_idx, score = radius_dense(pos, batch, centers_pos, centers_batch, r, k_eff)
    # Valid neighbors per center; always >= 1 since each center contains itself.
    counts = jnp.sum(score, axis=1).astype(jnp.int32)
    return idx, centers_pos, centers_batch, nbr_idx, counts


def sa_module_forward(x, pos, batch, params, *, ratio, r, max_neighbors=64,
                      points_per_batch=None):
    """JAX/Pallas equivalent of SAModule.forward."""
    _, centers_pos, centers_batch, nbr_idx, counts = sample_and_group(
        pos, batch, ratio=ratio, r=r, max_neighbors=max_neighbors,
        points_per_batch=points_per_batch)
    x_out = pointnet_conv_maxpool(x, pos, centers_pos, nbr_idx, counts, params)
    return x_out, centers_pos, centers_batch


# ----------------------------------------------------------------------------
# Pure-JAX reference (mirrors the kernel's bf16 quantization points)
# ----------------------------------------------------------------------------
def reference_conv_maxpool(x, pos, centers_pos, nbr_idx, counts, params):
    (w1, b1), (w2, b2), (w3, b3) = params
    c = x.shape[1]
    feat = jnp.concatenate([x, pos], axis=-1)
    feat = feat.astype(jnp.bfloat16).astype(jnp.float32)     # kernel stores bf16
    g = feat[nbr_idx]                                        # (M, K, F)
    g = g.at[..., c:].add(-centers_pos[:, None, :])

    def lin(a, w, b):
        return jnp.dot(a.astype(jnp.bfloat16), w.astype(jnp.bfloat16),
                       preferred_element_type=jnp.float32) + b

    h = jnp.maximum(lin(g, w1, b1), 0.0)
    h = jnp.maximum(lin(h, w2, b2), 0.0)
    h = jnp.maximum(lin(h, w3, b3), 0.0)                     # (M, K, H3)
    valid = jnp.arange(nbr_idx.shape[1])[None, :] < counts[:, None]
    h = jnp.where(valid[..., None], h, 0.0)
    return jnp.max(h, axis=1)


# ----------------------------------------------------------------------------
# Deterministic parameter init for the PointNetConv MLP  [C+3 -> 16 -> 16 -> 32]
# ----------------------------------------------------------------------------
def init_linear(key, fan_in, fan_out):
    kw, kb = jax.random.split(key)
    bound = 1.0 / jnp.sqrt(jnp.float32(fan_in))
    w = jax.random.uniform(kw, (fan_in, fan_out), jnp.float32, -bound, bound)
    b = jax.random.uniform(kb, (1, fan_out), jnp.float32, -bound, bound)
    return w, b


if __name__ == "__main__":
    key = jax.random.PRNGKey(0)
    k_pos, k_x, k_p1, k_p2, k_p3 = jax.random.split(key, 5)

    # Small problem: 2 batch elements x 16 points, 4 input channels.
    B, NPB, C = 2, 16, 4
    N = B * NPB
    RATIO, R, K = 0.5, 0.4, 64

    pos = jax.random.uniform(k_pos, (N, 3), jnp.float32)     # points in [0,1]^3
    x = jax.random.normal(k_x, (N, C), jnp.float32)
    batch = jnp.repeat(jnp.arange(B, dtype=jnp.int32), NPB)

    f_in = C + 3
    params = (init_linear(k_p1, f_in, 16),
              init_linear(k_p2, 16, 16),
              init_linear(k_p3, 16, 32))

    x_out, pos_out, batch_out = sa_module_forward(
        x, pos, batch, params, ratio=RATIO, r=R,
        max_neighbors=K, points_per_batch=NPB)
    jax.block_until_ready((x_out, pos_out, batch_out))

    M = int(N * RATIO)
    assert x_out.shape == (M, 32)
    assert pos_out.shape == (M, 3)
    assert batch_out.shape == (M,)
    assert bool(jnp.all(jnp.isfinite(x_out)))

    # Tolerance check against a pure-JAX reference (same sampling/grouping,
    # mirrored bf16 casts) -- guards the gather / masking / max-pool logic.
    _, c_pos, _, nbr_idx, counts = sample_and_group(
        pos, batch, ratio=RATIO, r=R, max_neighbors=K, points_per_batch=NPB)
    ref = reference_conv_maxpool(x, pos, c_pos, nbr_idx, counts, params)
    err = float(jnp.max(jnp.abs(x_out - ref)))
    assert err < 1e-2, f"max abs error vs reference: {err}"

    print("KERNEL_OK")
</pallas_src>

<mosaic_0001>
module attributes {stable_mosaic.version = 11 : i64} {
  func.func @_sa_conv_kernel(%arg0: i32, %arg1: memref<1x4096xi32, #tpu.memory_space<vmem>>, %arg2: memref<1x128xi32, #tpu.memory_space<vmem>>, %arg3: memref<8x128xf32, #tpu.memory_space<vmem>>, %arg4: memref<8x128xbf16, #tpu.memory_space<vmem>>, %arg5: memref<16x8xbf16, #tpu.memory_space<vmem>>, %arg6: memref<16x1xf32, #tpu.memory_space<vmem>>, %arg7: memref<16x16xbf16, #tpu.memory_space<vmem>>, %arg8: memref<16x1xf32, #tpu.memory_space<vmem>>, %arg9: memref<32x16xbf16, #tpu.memory_space<vmem>>, %arg10: memref<32x1xf32, #tpu.memory_space<vmem>>, %arg11: memref<32x128xf32, #tpu.memory_space<vmem>>) attributes {dimension_semantics = [#tpu.dimension_semantics<parallel>], iteration_bounds = array<i64: 1>, scalar_prefetch = 0 : i64, scratch_operands = 0 : i64, tpu.core_type = #tpu.core_type<tc>, window_params = [{transform_indices = @transform_0, window_bounds = array<i64: 1, 4096>}, {transform_indices = @transform_1, window_bounds = array<i64: 1, 128>}, {transform_indices = @transform_2, window_bounds = array<i64: 8, 128>}, {pipeline_mode = #tpu.pipeline_mode<synchronous>, transform_indices = @transform_3, window_bounds = array<i64: 8, 128>}, {pipeline_mode = #tpu.pipeline_mode<synchronous>, transform_indices = @transform_4, window_bounds = array<i64: 16, 8>}, {pipeline_mode = #tpu.pipeline_mode<synchronous>, transform_indices = @transform_5, window_bounds = array<i64: 16, 1>}, {pipeline_mode = #tpu.pipeline_mode<synchronous>, transform_indices = @transform_6, window_bounds = array<i64: 16, 16>}, {pipeline_mode = #tpu.pipeline_mode<synchronous>, transform_indices = @transform_7, window_bounds = array<i64: 16, 1>}, {pipeline_mode = #tpu.pipeline_mode<synchronous>, transform_indices = @transform_8, window_bounds = array<i64: 32, 16>}, {pipeline_mode = #tpu.pipeline_mode<synchronous>, transform_indices = @transform_9, window_bounds = array<i64: 32, 1>}, {transform_indices = @transform_10, window_bounds = array<i64: 32, 128>}]} {
    %c0 = arith.constant 0 : index
    %c0_0 = arith.constant 0 : index
    %0 = vector.load %arg4[%c0, %c0_0] : memref<8x128xbf16, #tpu.memory_space<vmem>>, vector<8x128xbf16>
    %c0_1 = arith.constant 0 : index
    %c0_2 = arith.constant 0 : index
    %1 = vector.load %arg2[%c0_1, %c0_2] : memref<1x128xi32, #tpu.memory_space<vmem>>, vector<1x128xi32>
    %c0_3 = arith.constant 0 : index
    %c0_4 = arith.constant 0 : index
    %2 = vector.load %arg3[%c0_3, %c0_4] : memref<8x128xf32, #tpu.memory_space<vmem>>, vector<8x128xf32>
    %3 = tpu.concatenate %2, %2, %2, %2, %2, %2, %2, %2 in 1 : vector<8x128xf32>, vector<8x128xf32>, vector<8x128xf32>, vector<8x128xf32>, vector<8x128xf32>, vector<8x128xf32>, vector<8x128xf32>, vector<8x128xf32> -> vector<8x1024xf32>
    %4 = tpu.iota {dimensions = array<i32: 0>} : vector<128x1024xi32>
    %c0_5 = arith.constant 0 : index
    %c0_6 = arith.constant 0 : index
    %5 = vector.load %arg5[%c0_5, %c0_6] : memref<16x8xbf16, #tpu.memory_space<vmem>>, vector<16x8xbf16>
    %c0_7 = arith.constant 0 : index
    %c0_8 = arith.constant 0 : index
    %6 = vector.load %arg6[%c0_7, %c0_8] : memref<16x1xf32, #tpu.memory_space<vmem>>, vector<16x1xf32>
    %c0_9 = arith.constant 0 : index
    %c0_10 = arith.constant 0 : index
    %7 = vector.load %arg7[%c0_9, %c0_10] : memref<16x16xbf16, #tpu.memory_space<vmem>>, vector<16x16xbf16>
    %c0_11 = arith.constant 0 : index
    %c0_12 = arith.constant 0 : index
    %8 = vector.load %arg8[%c0_11, %c0_12] : memref<16x1xf32, #tpu.memory_space<vmem>>, vector<16x1xf32>
    %c0_13 = arith.constant 0 : index
    %c0_14 = arith.constant 0 : index
    %9 = vector.load %arg9[%c0_13, %c0_14] : memref<32x16xbf16, #tpu.memory_space<vmem>>, vector<32x16xbf16>
    %c0_15 = arith.constant 0 : index
    %c0_16 = arith.constant 0 : index
    %10 = vector.load %arg10[%c0_15, %c0_16] : memref<32x1xf32, #tpu.memory_space<vmem>>, vector<32x1xf32>
    %cst = arith.constant 0.000000e+00 : f32
    %11 = vector.broadcast %cst : f32 to vector<32x128xf32>
    %c0_i32 = arith.constant 0 : i32
    %c1024_i32 = arith.constant 1024 : i32
    %12 = arith.muli %c0_i32, %c1024_i32 : i32
    %13 = tpu.assume_multiple %12, 1024 : i32
    %c0_17 = arith.constant 0 : index
    %14 = arith.index_cast %13 : i32 to index
    %15 = vector.load %arg1[%c0_17, %14] : memref<1x4096xi32, #tpu.memory_space<vmem>>, vector<1x1024xi32>
    %16 = vector.broadcast %15 : vector<1x1024xi32> to vector<128x1024xi32>
    %17 = arith.cmpi eq, %4, %16 : vector<128x1024xi32>
    %18 = arith.extui %17 : vector<128x1024xi1> to vector<128x1024xi32>
    %19 = arith.sitofp %18 : vector<128x1024xi32> to vector<128x1024xf32>
    %20 = arith.truncf %19 : vector<128x1024xf32> to vector<128x1024xbf16>
    %cst_18 = arith.constant dense<0.000000e+00> : vector<8x1024xf32>
    %21 = tpu.matmul %0, %20, %cst_18 {dimension_numbers = #tpu.dot_dimension_numbers<[1], [0], [0], [1], [0, 0, 1, 1], [], []>} : vector<8x128xbf16>, vector<128x1024xbf16>, vector<8x1024xf32> -> vector<8x1024xf32>
    %22 = arith.subf %21, %3 : vector<8x1024xf32>
    %23 = arith.truncf %22 : vector<8x1024xf32> to vector<8x1024xbf16>
    %cst_19 = arith.constant dense<0.000000e+00> : vector<16x1024xf32>
    %24 = tpu.matmul %5, %23, %cst_19 {dimension_numbers = #tpu.dot_dimension_numbers<[1], [0], [0], [1], [0, 0, 1, 1], [], []>} : vector<16x8xbf16>, vector<8x1024xbf16>, vector<16x1024xf32> -> vector<16x1024xf32>
    %25 = vector.broadcast %6 : vector<16x1xf32> to vector<16x1024xf32>
    %26 = arith.addf %24, %25 : vector<16x1024xf32>
    %cst_20 = arith.constant 0.000000e+00 : f32
    %27 = vector.broadcast %cst_20 : f32 to vector<16x1024xf32>
    %28 = arith.maximumf %26, %27 : vector<16x1024xf32>
    %29 = arith.truncf %28 : vector<16x1024xf32> to vector<16x1024xbf16>
    %cst_21 = arith.constant dense<0.000000e+00> : vector<16x1024xf32>
    %30 = tpu.matmul %7, %29, %cst_21 {dimension_numbers = #tpu.dot_dimension_numbers<[1], [0], [0], [1], [0, 0, 1, 1], [], []>} : vector<16x16xbf16>, vector<16x1024xbf16>, vector<16x1024xf32> -> vector<16x1024xf32>
    %31 = vector.broadcast %8 : vector<16x1xf32> to vector<16x1024xf32>
    %32 = arith.addf %30, %31 : vector<16x1024xf32>
    %cst_22 = arith.constant 0.000000e+00 : f32
    %33 = vector.broadcast %cst_22 : f32 to vector<16x1024xf32>
    %34 = arith.maximumf %32, %33 : vector<16x1024xf32>
    %35 = arith.truncf %34 : vector<16x1024xf32> to vector<16x1024xbf16>
    %cst_23 = arith.constant dense<0.000000e+00> : vector<32x1024xf32>
    %36 = tpu.matmul %9, %35, %cst_23 {dimension_numbers = #tpu.dot_dimension_numbers<[1], [0], [0], [1], [0, 0, 1, 1], [], []>} : vector<32x16xbf16>, vector<16x1024xbf16>, vector<32x1024xf32> -> vector<32x1024xf32>
    %37 = vector.broadcast %10 : vector<32x1xf32> to vector<32x1024xf32>
    %38 = arith.addf %36, %37 : vector<32x1024xf32>
    %cst_24 = arith.constant 0.000000e+00 : f32
    %39 = vector.broadcast %cst_24 : f32 to vector<32x1024xf32>
    %40 = arith.maximumf %38, %39 : vector<32x1024xf32>
    %c8_i32 = arith.constant 8 : i32
    %41 = arith.muli %c0_i32, %c8_i32 : i32
    %c0_i32_25 = arith.constant 0 : i32
    %42 = arith.addi %41, %c0_i32_25 : i32
    %43 = vector.broadcast %42 : i32 to vector<1x128xi32>
    %44 = arith.cmpi slt, %43, %1 : vector<1x128xi32>
    %45 = vector.extract_strided_slice %40 {offsets = [0, 0], sizes = [32, 128], strides = [1, 1]} : vector<32x1024xf32> to vector<32x128xf32>
    %cst_26 = arith.constant 0.000000e+00 : f32
    %46 = vector.shape_cast %44 : vector<1x128xi1> to vector<1x128xi1>
    %47 = vector.broadcast %46 : vector<1x128xi1> to vector<32x128xi1>
    %48 = vector.broadcast %cst_26 : f32 to vector<32x128xf32>
    %49 = arith.select %47, %45, %48 : vector<32x128xi1>, vector<32x128xf32>
    %50 = arith.maximumf %11, %49 : vector<32x128xf32>
    %c8_i32_27 = arith.constant 8 : i32
    %51 = arith.muli %c0_i32, %c8_i32_27 : i32
    %c1_i32 = arith.constant 1 : i32
    %52 = arith.addi %51, %c1_i32 : i32
    %53 = vector.broadcast %52 : i32 to vector<1x128xi32>
    %54 = arith.cmpi slt, %53, %1 : vector<1x128xi32>
    %55 = vector.extract_strided_slice %40 {offsets = [0, 128], sizes = [32, 128], strides = [1, 1]} : vector<32x1024xf32> to vector<32x128xf32>
    %cst_28 = arith.constant 0.000000e+00 : f32
    %56 = vector.shape_cast %54 : vector<1x128xi1> to vector<1x128xi1>
    %57 = vector.broadcast %56 : vector<1x128xi1> to vector<32x128xi1>
    %58 = vector.broadcast %cst_28 : f32 to vector<32x128xf32>
    %59 = arith.select %57, %55, %58 : vector<32x128xi1>, vector<32x128xf32>
    %60 = arith.maximumf %50, %59 : vector<32x128xf32>
    %c8_i32_29 = arith.constant 8 : i32
    %61 = arith.muli %c0_i32, %c8_i32_29 : i32
    %c2_i32 = arith.constant 2 : i32
    %62 = arith.addi %61, %c2_i32 : i32
    %63 = vector.broadcast %62 : i32 to vector<1x128xi32>
    %64 = arith.cmpi slt, %63, %1 : vector<1x128xi32>
    %65 = vector.extract_strided_slice %40 {offsets = [0, 256], sizes = [32, 128], strides = [1, 1]} : vector<32x1024xf32> to vector<32x128xf32>
    %cst_30 = arith.constant 0.000000e+00 : f32
    %66 = vector.shape_cast %64 : vector<1x128xi1> to vector<1x128xi1>
    %67 = vector.broadcast %66 : vector<1x128xi1> to vector<32x128xi1>
    %68 = vector.broadcast %cst_30 : f32 to vector<32x128xf32>
    %69 = arith.select %67, %65, %68 : vector<32x128xi1>, vector<32x128xf32>
    %70 = arith.maximumf %60, %69 : vector<32x128xf32>
    %c8_i32_31 = arith.constant 8 : i32
    %71 = arith.muli %c0_i32, %c8_i32_31 : i32
    %c3_i32 = arith.constant 3 : i32
    %72 = arith.addi %71, %c3_i32 : i32
    %73 = vector.broadcast %72 : i32 to vector<1x128xi32>
    %74 = arith.cmpi slt, %73, %1 : vector<1x128xi32>
    %75 = vector.extract_strided_slice %40 {offsets = [0, 384], sizes = [32, 128], strides = [1, 1]} : vector<32x1024xf32> to vector<32x128xf32>
    %cst_32 = arith.constant 0.000000e+00 : f32
    %76 = vector.shape_cast %74 : vector<1x128xi1> to vector<1x128xi1>
    %77 = vector.broadcast %76 : vector<1x128xi1> to vector<32x128xi1>
    %78 = vector.broadcast %cst_32 : f32 to vector<32x128xf32>
    %79 = arith.select %77, %75, %78 : vector<32x128xi1>, vector<32x128xf32>
    %80 = arith.maximumf %70, %79 : vector<32x128xf32>
    %c8_i32_33 = arith.constant 8 : i32
    %81 = arith.muli %c0_i32, %c8_i32_33 : i32
    %c4_i32 = arith.constant 4 : i32
    %82 = arith.addi %81, %c4_i32 : i32
    %83 = vector.broadcast %82 : i32 to vector<1x128xi32>
    %84 = arith.cmpi slt, %83, %1 : vector<1x128xi32>
    %85 = vector.extract_strided_slice %40 {offsets = [0, 512], sizes = [32, 128], strides = [1, 1]} : vector<32x1024xf32> to vector<32x128xf32>
    %cst_34 = arith.constant 0.000000e+00 : f32
    %86 = vector.shape_cast %84 : vector<1x128xi1> to vector<1x128xi1>
    %87 = vector.broadcast %86 : vector<1x128xi1> to vector<32x128xi1>
    %88 = vector.broadcast %cst_34 : f32 to vector<32x128xf32>
    %89 = arith.select %87, %85, %88 : vector<32x128xi1>, vector<32x128xf32>
    %90 = arith.maximumf %80, %89 : vector<32x128xf32>
    %c8_i32_35 = arith.constant 8 : i32
    %91 = arith.muli %c0_i32, %c8_i32_35 : i32
    %c5_i32 = arith.constant 5 : i32
    %92 = arith.addi %91, %c5_i32 : i32
    %93 = vector.broadcast %92 : i32 to vector<1x128xi32>
    %94 = arith.cmpi slt, %93, %1 : vector<1x128xi32>
    %95 = vector.extract_strided_slice %40 {offsets = [0, 640], sizes = [32, 128], strides = [1, 1]} : vector<32x1024xf32> to vector<32x128xf32>
    %cst_36 = arith.constant 0.000000e+00 : f32
    %96 = vector.shape_cast %94 : vector<1x128xi1> to vector<1x128xi1>
    %97 = vector.broadcast %96 : vector<1x128xi1> to vector<32x128xi1>
    %98 = vector.broadcast %cst_36 : f32 to vector<32x128xf32>
    %99 = arith.select %97, %95, %98 : vector<32x128xi1>, vector<32x128xf32>
    %100 = arith.maximumf %90, %99 : vector<32x128xf32>
    %c8_i32_37 = arith.constant 8 : i32
    %101 = arith.muli %c0_i32, %c8_i32_37 : i32
    %c6_i32 = arith.constant 6 : i32
    %102 = arith.addi %101, %c6_i32 : i32
    %103 = vector.broadcast %102 : i32 to vector<1x128xi32>
    %104 = arith.cmpi slt, %103, %1 : vector<1x128xi32>
    %105 = vector.extract_strided_slice %40 {offsets = [0, 768], sizes = [32, 128], strides = [1, 1]} : vector<32x1024xf32> to vector<32x128xf32>
    %cst_38 = arith.constant 0.000000e+00 : f32
    %106 = vector.shape_cast %104 : vector<1x128xi1> to vector<1x128xi1>
    %107 = vector.broadcast %106 : vector<1x128xi1> to vector<32x128xi1>
    %108 = vector.broadcast %cst_38 : f32 to vector<32x128xf32>
    %109 = arith.select %107, %105, %108 : vector<32x128xi1>, vector<32x128xf32>
    %110 = arith.maximumf %100, %109 : vector<32x128xf32>
    %c8_i32_39 = arith.constant 8 : i32
    %111 = arith.muli %c0_i32, %c8_i32_39 : i32
    %c7_i32 = arith.constant 7 : i32
    %112 = arith.addi %111, %c7_i32 : i32
    %113 = vector.broadcast %112 : i32 to vector<1x128xi32>
    %114 = arith.cmpi slt, %113, %1 : vector<1x128xi32>
    %115 = vector.extract_strided_slice %40 {offsets = [0, 896], sizes = [32, 128], strides = [1, 1]} : vector<32x1024xf32> to vector<32x128xf32>
    %cst_40 = arith.constant 0.000000e+00 : f32
    %116 = vector.shape_cast %114 : vector<1x128xi1> to vector<1x128xi1>
    %117 = vector.broadcast %116 : vector<1x128xi1> to vector<32x128xi1>
    %118 = vector.broadcast %cst_40 : f32 to vector<32x128xf32>
    %119 = arith.select %117, %115, %118 : vector<32x128xi1>, vector<32x128xf32>
    %120 = arith.maximumf %110, %119 : vector<32x128xf32>
    %c1_i32_41 = arith.constant 1 : i32
    %c1024_i32_42 = arith.constant 1024 : i32
    %121 = arith.muli %c1_i32_41, %c1024_i32_42 : i32
    %122 = tpu.assume_multiple %121, 1024 : i32
    %c0_43 = arith.constant 0 : index
    %123 = arith.index_cast %122 : i32 to index
    %124 = vector.load %arg1[%c0_43, %123] : memref<1x4096xi32, #tpu.memory_space<vmem>>, vector<1x1024xi32>
    %125 = vector.broadcast %124 : vector<1x1024xi32> to vector<128x1024xi32>
    %126 = arith.cmpi eq, %4, %125 : vector<128x1024xi32>
    %127 = arith.extui %126 : vector<128x1024xi1> to vector<128x1024xi32>
    %128 = arith.sitofp %127 : vector<128x1024xi32> to vector<128x1024xf32>
    %129 = arith.truncf %128 : vector<128x1024xf32> to vector<128x1024xbf16>
    %cst_44 = arith.constant dense<0.000000e+00> : vector<8x1024xf32>
    %130 = tpu.matmul %0, %129, %cst_44 {dimension_numbers = #tpu.dot_dimension_numbers<[1], [0], [0], [1], [0, 0, 1, 1], [], []>} : vector<8x128xbf16>, vector<128x1024xbf16>, vector<8x1024xf32> -> vector<8x1024xf32>
    %131 = arith.subf %130, %3 : vector<8x1024xf32>
    %132 = arith.truncf %131 : vector<8x1024xf32> to vector<8x1024xbf16>
    %cst_45 = arith.constant dense<0.000000e+00> : vector<16x1024xf32>
    %133 = tpu.matmul %5, %132, %cst_45 {dimension_numbers = #tpu.dot_dimension_numbers<[1], [0], [0], [1], [0, 0, 1, 1], [], []>} : vector<16x8xbf16>, vector<8x1024xbf16>, vector<16x1024xf32> -> vector<16x1024xf32>
    %134 = vector.broadcast %6 : vector<16x1xf32> to vector<16x1024xf32>
    %135 = arith.addf %133, %134 : vector<16x1024xf32>
    %cst_46 = arith.constant 0.000000e+00 : f32
    %136 = vector.broadcast %cst_46 : f32 to vector<16x1024xf32>
    %137 = arith.maximumf %135, %136 : vector<16x1024xf32>
    %138 = arith.truncf %137 : vector<16x1024xf32> to vector<16x1024xbf16>
    %cst_47 = arith.constant dense<0.000000e+00> : vector<16x1024xf32>
    %139 = tpu.matmul %7, %138, %cst_47 {dimension_numbers = #tpu.dot_dimension_numbers<[1], [0], [0], [1], [0, 0, 1, 1], [], []>} : vector<16x16xbf16>, vector<16x1024xbf16>, vector<16x1024xf32> -> vector<16x1024xf32>
    %140 = vector.broadcast %8 : vector<16x1xf32> to vector<16x1024xf32>
    %141 = arith.addf %139, %140 : vector<16x1024xf32>
    %cst_48 = arith.constant 0.000000e+00 : f32
    %142 = vector.broadcast %cst_48 : f32 to vector<16x1024xf32>
    %143 = arith.maximumf %141, %142 : vector<16x1024xf32>
    %144 = arith.truncf %143 : vector<16x1024xf32> to vector<16x1024xbf16>
    %cst_49 = arith.constant dense<0.000000e+00> : vector<32x1024xf32>
    %145 = tpu.matmul %9, %144, %cst_49 {dimension_numbers = #tpu.dot_dimension_numbers<[1], [0], [0], [1], [0, 0, 1, 1], [], []>} : vector<32x16xbf16>, vector<16x1024xbf16>, vector<32x1024xf32> -> vector<32x1024xf32>
    %146 = vector.broadcast %10 : vector<32x1xf32> to vector<32x1024xf32>
    %147 = arith.addf %145, %146 : vector<32x1024xf32>
    %cst_50 = arith.constant 0.000000e+00 : f32
    %148 = vector.broadcast %cst_50 : f32 to vector<32x1024xf32>
    %149 = arith.maximumf %147, %148 : vector<32x1024xf32>
    %c8_i32_51 = arith.constant 8 : i32
    %150 = arith.muli %c1_i32_41, %c8_i32_51 : i32
    %c0_i32_52 = arith.constant 0 : i32
    %151 = arith.addi %150, %c0_i32_52 : i32
    %152 = vector.broadcast %151 : i32 to vector<1x128xi32>
    %153 = arith.cmpi slt, %152, %1 : vector<1x128xi32>
    %154 = vector.extract_strided_slice %149 {offsets = [0, 0], sizes = [32, 128], strides = [1, 1]} : vector<32x1024xf32> to vector<32x128xf32>
    %cst_53 = arith.constant 0.000000e+00 : f32
    %155 = vector.shape_cast %153 : vector<1x128xi1> to vector<1x128xi1>
    %156 = vector.broadcast %155 : vector<1x128xi1> to vector<32x128xi1>
    %157 = vector.broadcast %cst_53 : f32 to vector<32x128xf32>
    %158 = arith.select %156, %154, %157 : vector<32x128xi1>, vector<32x128xf32>
    %159 = arith.maximumf %120, %158 : vector<32x128xf32>
    %c8_i32_54 = arith.constant 8 : i32
    %160 = arith.muli %c1_i32_41, %c8_i32_54 : i32
    %c1_i32_55 = arith.constant 1 : i32
    %161 = arith.addi %160, %c1_i32_55 : i32
    %162 = vector.broadcast %161 : i32 to vector<1x128xi32>
    %163 = arith.cmpi slt, %162, %1 : vector<1x128xi32>
    %164 = vector.extract_strided_slice %149 {offsets = [0, 128], sizes = [32, 128], strides = [1, 1]} : vector<32x1024xf32> to vector<32x128xf32>
    %cst_56 = arith.constant 0.000000e+00 : f32
    %165 = vector.shape_cast %163 : vector<1x128xi1> to vector<1x128xi1>
    %166 = vector.broadcast %165 : vector<1x128xi1> to vector<32x128xi1>
    %167 = vector.broadcast %cst_56 : f32 to vector<32x128xf32>
    %168 = arith.select %166, %164, %167 : vector<32x128xi1>, vector<32x128xf32>
    %169 = arith.maximumf %159, %168 : vector<32x128xf32>
    %c8_i32_57 = arith.constant 8 : i32
    %170 = arith.muli %c1_i32_41, %c8_i32_57 : i32
    %c2_i32_58 = arith.constant 2 : i32
    %171 = arith.addi %170, %c2_i32_58 : i32
    %172 = vector.broadcast %171 : i32 to vector<1x128xi32>
    %173 = arith.cmpi slt, %172, %1 : vector<1x128xi32>
    %174 = vector.extract_strided_slice %149 {offsets = [0, 256], sizes = [32, 128], strides = [1, 1]} : vector<32x1024xf32> to vector<32x128xf32>
    %cst_59 = arith.constant 0.000000e+00 : f32
    %175 = vector.shape_cast %173 : vector<1x128xi1> to vector<1x128xi1>
    %176 = vector.broadcast %175 : vector<1x128xi1> to vector<32x128xi1>
    %177 = vector.broadcast %cst_59 : f32 to vector<32x128xf32>
    %178 = arith.select %176, %174, %177 : vector<32x128xi1>, vector<32x128xf32>
    %179 = arith.maximumf %169, %178 : vector<32x128xf32>
    %c8_i32_60 = arith.constant 8 : i32
    %180 = arith.muli %c1_i32_41, %c8_i32_60 : i32
    %c3_i32_61 = arith.constant 3 : i32
    %181 = arith.addi %180, %c3_i32_61 : i32
    %182 = vector.broadcast %181 : i32 to vector<1x128xi32>
    %183 = arith.cmpi slt, %182, %1 : vector<1x128xi32>
    %184 = vector.extract_strided_slice %149 {offsets = [0, 384], sizes = [32, 128], strides = [1, 1]} : vector<32x1024xf32> to vector<32x128xf32>
    %cst_62 = arith.constant 0.000000e+00 : f32
    %185 = vector.shape_cast %183 : vector<1x128xi1> to vector<1x128xi1>
    %186 = vector.broadcast %185 : vector<1x128xi1> to vector<32x128xi1>
    %187 = vector.broadcast %cst_62 : f32 to vector<32x128xf32>
    %188 = arith.select %186, %184, %187 : vector<32x128xi1>, vector<32x128xf32>
    %189 = arith.maximumf %179, %188 : vector<32x128xf32>
    %c8_i32_63 = arith.constant 8 : i32
    %190 = arith.muli %c1_i32_41, %c8_i32_63 : i32
    %c4_i32_64 = arith.constant 4 : i32
    %191 = arith.addi %190, %c4_i32_64 : i32
    %192 = vector.broadcast %191 : i32 to vector<1x128xi32>
    %193 = arith.cmpi slt, %192, %1 : vector<1x128xi32>
    %194 = vector.extract_strided_slice %149 {offsets = [0, 512], sizes = [32, 128], strides = [1, 1]} : vector<32x1024xf32> to vector<32x128xf32>
    %cst_65 = arith.constant 0.000000e+00 : f32
    %195 = vector.shape_cast %193 : vector<1x128xi1> to vector<1x128xi1>
    %196 = vector.broadcast %195 : vector<1x128xi1> to vector<32x128xi1>
    %197 = vector.broadcast %cst_65 : f32 to vector<32x128xf32>
    %198 = arith.select %196, %194, %197 : vector<32x128xi1>, vector<32x128xf32>
    %199 = arith.maximumf %189, %198 : vector<32x128xf32>
    %c8_i32_66 = arith.constant 8 : i32
    %200 = arith.muli %c1_i32_41, %c8_i32_66 : i32
    %c5_i32_67 = arith.constant 5 : i32
    %201 = arith.addi %200, %c5_i32_67 : i32
    %202 = vector.broadcast %201 : i32 to vector<1x128xi32>
    %203 = arith.cmpi slt, %202, %1 : vector<1x128xi32>
    %204 = vector.extract_strided_slice %149 {offsets = [0, 640], sizes = [32, 128], strides = [1, 1]} : vector<32x1024xf32> to vector<32x128xf32>
    %cst_68 = arith.constant 0.000000e+00 : f32
    %205 = vector.shape_cast %203 : vector<1x128xi1> to vector<1x128xi1>
    %206 = vector.broadcast %205 : vector<1x128xi1> to vector<32x128xi1>
    %207 = vector.broadcast %cst_68 : f32 to vector<32x128xf32>
    %208 = arith.select %206, %204, %207 : vector<32x128xi1>, vector<32x128xf32>
    %209 = arith.maximumf %199, %208 : vector<32x128xf32>
    %c8_i32_69 = arith.constant 8 : i32
    %210 = arith.muli %c1_i32_41, %c8_i32_69 : i32
    %c6_i32_70 = arith.constant 6 : i32
    %211 = arith.addi %210, %c6_i32_70 : i32
    %212 = vector.broadcast %211 : i32 to vector<1x128xi32>
    %213 = arith.cmpi slt, %212, %1 : vector<1x128xi32>
    %214 = vector.extract_strided_slice %149 {offsets = [0, 768], sizes = [32, 128], strides = [1, 1]} : vector<32x1024xf32> to vector<32x128xf32>
    %cst_71 = arith.constant 0.000000e+00 : f32
    %215 = vector.shape_cast %213 : vector<1x128xi1> to vector<1x128xi1>
    %216 = vector.broadcast %215 : vector<1x128xi1> to vector<32x128xi1>
    %217 = vector.broadcast %cst_71 : f32 to vector<32x128xf32>
    %218 = arith.select %216, %214, %217 : vector<32x128xi1>, vector<32x128xf32>
    %219 = arith.maximumf %209, %218 : vector<32x128xf32>
    %c8_i32_72 = arith.constant 8 : i32
    %220 = arith.muli %c1_i32_41, %c8_i32_72 : i32
    %c7_i32_73 = arith.constant 7 : i32
    %221 = arith.addi %220, %c7_i32_73 : i32
    %222 = vector.broadcast %221 : i32 to vector<1x128xi32>
    %223 = arith.cmpi slt, %222, %1 : vector<1x128xi32>
    %224 = vector.extract_strided_slice %149 {offsets = [0, 896], sizes = [32, 128], strides = [1, 1]} : vector<32x1024xf32> to vector<32x128xf32>
    %cst_74 = arith.constant 0.000000e+00 : f32
    %225 = vector.shape_cast %223 : vector<1x128xi1> to vector<1x128xi1>
    %226 = vector.broadcast %225 : vector<1x128xi1> to vector<32x128xi1>
    %227 = vector.broadcast %cst_74 : f32 to vector<32x128xf32>
    %228 = arith.select %226, %224, %227 : vector<32x128xi1>, vector<32x128xf32>
    %229 = arith.maximumf %219, %228 : vector<32x128xf32>
    %c2_i32_75 = arith.constant 2 : i32
    %c1024_i32_76 = arith.constant 1024 : i32
    %230 = arith.muli %c2_i32_75, %c1024_i32_76 : i32
    %231 = tpu.assume_multiple %230, 1024 : i32
    %c0_77 = arith.constant 0 : index
    %232 = arith.index_cast %231 : i32 to index
    %233 = vector.load %arg1[%c0_77, %232] : memref<1x4096xi32, #tpu.memory_space<vmem>>, vector<1x1024xi32>
    %234 = vector.broadcast %233 : vector<1x1024xi32> to vector<128x1024xi32>
    %235 = arith.cmpi eq, %4, %234 : vector<128x1024xi32>
    %236 = arith.extui %235 : vector<128x1024xi1> to vector<128x1024xi32>
    %237 = arith.sitofp %236 : vector<128x1024xi32> to vector<128x1024xf32>
    %238 = arith.truncf %237 : vector<128x1024xf32> to vector<128x1024xbf16>
    %cst_78 = arith.constant dense<0.000000e+00> : vector<8x1024xf32>
    %239 = tpu.matmul %0, %238, %cst_78 {dimension_numbers = #tpu.dot_dimension_numbers<[1], [0], [0], [1], [0, 0, 1, 1], [], []>} : vector<8x128xbf16>, vector<128x1024xbf16>, vector<8x1024xf32> -> vector<8x1024xf32>
    %240 = arith.subf %239, %3 : vector<8x1024xf32>
    %241 = arith.truncf %240 : vector<8x1024xf32> to vector<8x1024xbf16>
    %cst_79 = arith.constant dense<0.000000e+00> : vector<16x1024xf32>
    %242 = tpu.matmul %5, %241, %cst_79 {dimension_numbers = #tpu.dot_dimension_numbers<[1], [0], [0], [1], [0, 0, 1, 1], [], []>} : vector<16x8xbf16>, vector<8x1024xbf16>, vector<16x1024xf32> -> vector<16x1024xf32>
    %243 = vector.broadcast %6 : vector<16x1xf32> to vector<16x1024xf32>
    %244 = arith.addf %242, %243 : vector<16x1024xf32>
    %cst_80 = arith.constant 0.000000e+00 : f32
    %245 = vector.broadcast %cst_80 : f32 to vector<16x1024xf32>
    %246 = arith.maximumf %244, %245 : vector<16x1024xf32>
    %247 = arith.truncf %246 : vector<16x1024xf32> to vector<16x1024xbf16>
    %cst_81 = arith.constant dense<0.000000e+00> : vector<16x1024xf32>
    %248 = tpu.matmul %7, %247, %cst_81 {dimension_numbers = #tpu.dot_dimension_numbers<[1], [0], [0], [1], [0, 0, 1, 1], [], []>} : vector<16x16xbf16>, vector<16x1024xbf16>, vector<16x1024xf32> -> vector<16x1024xf32>
    %249 = vector.broadcast %8 : vector<16x1xf32> to vector<16x1024xf32>
    %250 = arith.addf %248, %249 : vector<16x1024xf32>
    %cst_82 = arith.constant 0.000000e+00 : f32
    %251 = vector.broadcast %cst_82 : f32 to vector<16x1024xf32>
    %252 = arith.maximumf %250, %251 : vector<16x1024xf32>
    %253 = arith.truncf %252 : vector<16x1024xf32> to vector<16x1024xbf16>
    %cst_83 = arith.constant dense<0.000000e+00> : vector<32x1024xf32>
    %254 = tpu.matmul %9, %253, %cst_83 {dimension_numbers = #tpu.dot_dimension_numbers<[1], [0], [0], [1], [0, 0, 1, 1], [], []>} : vector<32x16xbf16>, vector<16x1024xbf16>, vector<32x1024xf32> -> vector<32x1024xf32>
    %255 = vector.broadcast %10 : vector<32x1xf32> to vector<32x1024xf32>
    %256 = arith.addf %254, %255 : vector<32x1024xf32>
    %cst_84 = arith.constant 0.000000e+00 : f32
    %257 = vector.broadcast %cst_84 : f32 to vector<32x1024xf32>
    %258 = arith.maximumf %256, %257 : vector<32x1024xf32>
    %c8_i32_85 = arith.constant 8 : i32
    %259 = arith.muli %c2_i32_75, %c8_i32_85 : i32
    %c0_i32_86 = arith.constant 0 : i32
    %260 = arith.addi %259, %c0_i32_86 : i32
    %261 = vector.broadcast %260 : i32 to vector<1x128xi32>
    %262 = arith.cmpi slt, %261, %1 : vector<1x128xi32>
    %263 = vector.extract_strided_slice %258 {offsets = [0, 0], sizes = [32, 128], strides = [1, 1]} : vector<32x1024xf32> to vector<32x128xf32>
    %cst_87 = arith.constant 0.000000e+00 : f32
    %264 = vector.shape_cast %262 : vector<1x128xi1> to vector<1x128xi1>
    %265 = vector.broadcast %264 : vector<1x128xi1> to vector<32x128xi1>
    %266 = vector.broadcast %cst_87 : f32 to vector<32x128xf32>
    %267 = arith.select %265, %263, %266 : vector<32x128xi1>, vector<32x128xf32>
    %268 = arith.maximumf %229, %267 : vector<32x128xf32>
    %c8_i32_88 = arith.constant 8 : i32
    %269 = arith.muli %c2_i32_75, %c8_i32_88 : i32
    %c1_i32_89 = arith.constant 1 : i32
    %270 = arith.addi %269, %c1_i32_89 : i32
    %271 = vector.broadcast %270 : i32 to vector<1x128xi32>
    %272 = arith.cmpi slt, %271, %1 : vector<1x128xi32>
    %273 = vector.extract_strided_slice %258 {offsets = [0, 128], sizes = [32, 128], strides = [1, 1]} : vector<32x1024xf32> to vector<32x128xf32>
    %cst_90 = arith.constant 0.000000e+00 : f32
    %274 = vector.shape_cast %272 : vector<1x128xi1> to vector<1x128xi1>
    %275 = vector.broadcast %274 : vector<1x128xi1> to vector<32x128xi1>
    %276 = vector.broadcast %cst_90 : f32 to vector<32x128xf32>
    %277 = arith.select %275, %273, %276 : vector<32x128xi1>, vector<32x128xf32>
    %278 = arith.maximumf %268, %277 : vector<32x128xf32>
    %c8_i32_91 = arith.constant 8 : i32
    %279 = arith.muli %c2_i32_75, %c8_i32_91 : i32
    %c2_i32_92 = arith.constant 2 : i32
    %280 = arith.addi %279, %c2_i32_92 : i32
    %281 = vector.broadcast %280 : i32 to vector<1x128xi32>
    %282 = arith.cmpi slt, %281, %1 : vector<1x128xi32>
    %283 = vector.extract_strided_slice %258 {offsets = [0, 256], sizes = [32, 128], strides = [1, 1]} : vector<32x1024xf32> to vector<32x128xf32>
    %cst_93 = arith.constant 0.000000e+00 : f32
    %284 = vector.shape_cast %282 : vector<1x128xi1> to vector<1x128xi1>
    %285 = vector.broadcast %284 : vector<1x128xi1> to vector<32x128xi1>
    %286 = vector.broadcast %cst_93 : f32 to vector<32x128xf32>
    %287 = arith.select %285, %283, %286 : vector<32x128xi1>, vector<32x128xf32>
    %288 = arith.maximumf %278, %287 : vector<32x128xf32>
    %c8_i32_94 = arith.constant 8 : i32
    %289 = arith.muli %c2_i32_75, %c8_i32_94 : i32
    %c3_i32_95 = arith.constant 3 : i32
    %290 = arith.addi %289, %c3_i32_95 : i32
    %291 = vector.broadcast %290 : i32 to vector<1x128xi32>
    %292 = arith.cmpi slt, %291, %1 : vector<1x128xi32>
    %293 = vector.extract_strided_slice %258 {offsets = [0, 384], sizes = [32, 128], strides = [1, 1]} : vector<32x1024xf32> to vector<32x128xf32>
    %cst_96 = arith.constant 0.000000e+00 : f32
    %294 = vector.shape_cast %292 : vector<1x128xi1> to vector<1x128xi1>
    %295 = vector.broadcast %294 : vector<1x128xi1> to vector<32x128xi1>
    %296 = vector.broadcast %cst_96 : f32 to vector<32x128xf32>
    %297 = arith.select %295, %293, %296 : vector<32x128xi1>, vector<32x128xf32>
    %298 = arith.maximumf %288, %297 : vector<32x128xf32>
    %c8_i32_97 = arith.constant 8 : i32
    %299 = arith.muli %c2_i32_75, %c8_i32_97 : i32
    %c4_i32_98 = arith.constant 4 : i32
    %300 = arith.addi %299, %c4_i32_98 : i32
    %301 = vector.broadcast %300 : i32 to vector<1x128xi32>
    %302 = arith.cmpi slt, %301, %1 : vector<1x128xi32>
    %303 = vector.extract_strided_slice %258 {offsets = [0, 512], sizes = [32, 128], strides = [1, 1]} : vector<32x1024xf32> to vector<32x128xf32>
    %cst_99 = arith.constant 0.000000e+00 : f32
    %304 = vector.shape_cast %302 : vector<1x128xi1> to vector<1x128xi1>
    %305 = vector.broadcast %304 : vector<1x128xi1> to vector<32x128xi1>
    %306 = vector.broadcast %cst_99 : f32 to vector<32x128xf32>
    %307 = arith.select %305, %303, %306 : vector<32x128xi1>, vector<32x128xf32>
    %308 = arith.maximumf %298, %307 : vector<32x128xf32>
    %c8_i32_100 = arith.constant 8 : i32
    %309 = arith.muli %c2_i32_75, %c8_i32_100 : i32
    %c5_i32_101 = arith.constant 5 : i32
    %310 = arith.addi %309, %c5_i32_101 : i32
    %311 = vector.broadcast %310 : i32 to vector<1x128xi32>
    %312 = arith.cmpi slt, %311, %1 : vector<1x128xi32>
    %313 = vector.extract_strided_slice %258 {offsets = [0, 640], sizes = [32, 128], strides = [1, 1]} : vector<32x1024xf32> to vector<32x128xf32>
    %cst_102 = arith.constant 0.000000e+00 : f32
    %314 = vector.shape_cast %312 : vector<1x128xi1> to vector<1x128xi1>
    %315 = vector.broadcast %314 : vector<1x128xi1> to vector<32x128xi1>
    %316 = vector.broadcast %cst_102 : f32 to vector<32x128xf32>
    %317 = arith.select %315, %313, %316 : vector<32x128xi1>, vector<32x128xf32>
    %318 = arith.maximumf %308, %317 : vector<32x128xf32>
    %c8_i32_103 = arith.constant 8 : i32
    %319 = arith.muli %c2_i32_75, %c8_i32_103 : i32
    %c6_i32_104 = arith.constant 6 : i32
    %320 = arith.addi %319, %c6_i32_104 : i32
    %321 = vector.broadcast %320 : i32 to vector<1x128xi32>
    %322 = arith.cmpi slt, %321, %1 : vector<1x128xi32>
    %323 = vector.extract_strided_slice %258 {offsets = [0, 768], sizes = [32, 128], strides = [1, 1]} : vector<32x1024xf32> to vector<32x128xf32>
    %cst_105 = arith.constant 0.000000e+00 : f32
    %324 = vector.shape_cast %322 : vector<1x128xi1> to vector<1x128xi1>
    %325 = vector.broadcast %324 : vector<1x128xi1> to vector<32x128xi1>
    %326 = vector.broadcast %cst_105 : f32 to vector<32x128xf32>
    %327 = arith.select %325, %323, %326 : vector<32x128xi1>, vector<32x128xf32>
    %328 = arith.maximumf %318, %327 : vector<32x128xf32>
    %c8_i32_106 = arith.constant 8 : i32
    %329 = arith.muli %c2_i32_75, %c8_i32_106 : i32
    %c7_i32_107 = arith.constant 7 : i32
    %330 = arith.addi %329, %c7_i32_107 : i32
    %331 = vector.broadcast %330 : i32 to vector<1x128xi32>
    %332 = arith.cmpi slt, %331, %1 : vector<1x128xi32>
    %333 = vector.extract_strided_slice %258 {offsets = [0, 896], sizes = [32, 128], strides = [1, 1]} : vector<32x1024xf32> to vector<32x128xf32>
    %cst_108 = arith.constant 0.000000e+00 : f32
    %334 = vector.shape_cast %332 : vector<1x128xi1> to vector<1x128xi1>
    %335 = vector.broadcast %334 : vector<1x128xi1> to vector<32x128xi1>
    %336 = vector.broadcast %cst_108 : f32 to vector<32x128xf32>
    %337 = arith.select %335, %333, %336 : vector<32x128xi1>, vector<32x128xf32>
    %338 = arith.maximumf %328, %337 : vector<32x128xf32>
    %c3_i32_109 = arith.constant 3 : i32
    %c1024_i32_110 = arith.constant 1024 : i32
    %339 = arith.muli %c3_i32_109, %c1024_i32_110 : i32
    %340 = tpu.assume_multiple %339, 1024 : i32
    %c0_111 = arith.constant 0 : index
    %341 = arith.index_cast %340 : i32 to index
    %342 = vector.load %arg1[%c0_111, %341] : memref<1x4096xi32, #tpu.memory_space<vmem>>, vector<1x1024xi32>
    %343 = vector.broadcast %342 : vector<1x1024xi32> to vector<128x1024xi32>
    %344 = arith.cmpi eq, %4, %343 : vector<128x1024xi32>
    %345 = arith.extui %344 : vector<128x1024xi1> to vector<128x1024xi32>
    %346 = arith.sitofp %345 : vector<128x1024xi32> to vector<128x1024xf32>
    %347 = arith.truncf %346 : vector<128x1024xf32> to vector<128x1024xbf16>
    %cst_112 = arith.constant dense<0.000000e+00> : vector<8x1024xf32>
    %348 = tpu.matmul %0, %347, %cst_112 {dimension_numbers = #tpu.dot_dimension_numbers<[1], [0], [0], [1], [0, 0, 1, 1], [], []>} : vector<8x128xbf16>, vector<128x1024xbf16>, vector<8x1024xf32> -> vector<8x1024xf32>
    %349 = arith.subf %348, %3 : vector<8x1024xf32>
    %350 = arith.truncf %349 : vector<8x1024xf32> to vector<8x1024xbf16>
    %cst_113 = arith.constant dense<0.000000e+00> : vector<16x1024xf32>
    %351 = tpu.matmul %5, %350, %cst_113 {dimension_numbers = #tpu.dot_dimension_numbers<[1], [0], [0], [1], [0, 0, 1, 1], [], []>} : vector<16x8xbf16>, vector<8x1024xbf16>, vector<16x1024xf32> -> vector<16x1024xf32>
    %352 = vector.broadcast %6 : vector<16x1xf32> to vector<16x1024xf32>
    %353 = arith.addf %351, %352 : vector<16x1024xf32>
    %cst_114 = arith.constant 0.000000e+00 : f32
    %354 = vector.broadcast %cst_114 : f32 to vector<16x1024xf32>
    %355 = arith.maximumf %353, %354 : vector<16x1024xf32>
    %356 = arith.truncf %355 : vector<16x1024xf32> to vector<16x1024xbf16>
    %cst_115 = arith.constant dense<0.000000e+00> : vector<16x1024xf32>
    %357 = tpu.matmul %7, %356, %cst_115 {dimension_numbers = #tpu.dot_dimension_numbers<[1], [0], [0], [1], [0, 0, 1, 1], [], []>} : vector<16x16xbf16>, vector<16x1024xbf16>, vector<16x1024xf32> -> vector<16x1024xf32>
    %358 = vector.broadcast %8 : vector<16x1xf32> to vector<16x1024xf32>
    %359 = arith.addf %357, %358 : vector<16x1024xf32>
    %cst_116 = arith.constant 0.000000e+00 : f32
    %360 = vector.broadcast %cst_116 : f32 to vector<16x1024xf32>
    %361 = arith.maximumf %359, %360 : vector<16x1024xf32>
    %362 = arith.truncf %361 : vector<16x1024xf32> to vector<16x1024xbf16>
    %cst_117 = arith.constant dense<0.000000e+00> : vector<32x1024xf32>
    %363 = tpu.matmul %9, %362, %cst_117 {dimension_numbers = #tpu.dot_dimension_numbers<[1], [0], [0], [1], [0, 0, 1, 1], [], []>} : vector<32x16xbf16>, vector<16x1024xbf16>, vector<32x1024xf32> -> vector<32x1024xf32>
    %364 = vector.broadcast %10 : vector<32x1xf32> to vector<32x1024xf32>
    %365 = arith.addf %363, %364 : vector<32x1024xf32>
    %cst_118 = arith.constant 0.000000e+00 : f32
    %366 = vector.broadcast %cst_118 : f32 to vector<32x1024xf32>
    %367 = arith.maximumf %365, %366 : vector<32x1024xf32>
    %c8_i32_119 = arith.constant 8 : i32
    %368 = arith.muli %c3_i32_109, %c8_i32_119 : i32
    %c0_i32_120 = arith.constant 0 : i32
    %369 = arith.addi %368, %c0_i32_120 : i32
    %370 = vector.broadcast %369 : i32 to vector<1x128xi32>
    %371 = arith.cmpi slt, %370, %1 : vector<1x128xi32>
    %372 = vector.extract_strided_slice %367 {offsets = [0, 0], sizes = [32, 128], strides = [1, 1]} : vector<32x1024xf32> to vector<32x128xf32>
    %cst_121 = arith.constant 0.000000e+00 : f32
    %373 = vector.shape_cast %371 : vector<1x128xi1> to vector<1x128xi1>
    %374 = vector.broadcast %373 : vector<1x128xi1> to vector<32x128xi1>
    %375 = vector.broadcast %cst_121 : f32 to vector<32x128xf32>
    %376 = arith.select %374, %372, %375 : vector<32x128xi1>, vector<32x128xf32>
    %377 = arith.maximumf %338, %376 : vector<32x128xf32>
    %c8_i32_122 = arith.constant 8 : i32
    %378 = arith.muli %c3_i32_109, %c8_i32_122 : i32
    %c1_i32_123 = arith.constant 1 : i32
    %379 = arith.addi %378, %c1_i32_123 : i32
    %380 = vector.broadcast %379 : i32 to vector<1x128xi32>
    %381 = arith.cmpi slt, %380, %1 : vector<1x128xi32>
    %382 = vector.extract_strided_slice %367 {offsets = [0, 128], sizes = [32, 128], strides = [1, 1]} : vector<32x1024xf32> to vector<32x128xf32>
    %cst_124 = arith.constant 0.000000e+00 : f32
    %383 = vector.shape_cast %381 : vector<1x128xi1> to vector<1x128xi1>
    %384 = vector.broadcast %383 : vector<1x128xi1> to vector<32x128xi1>
    %385 = vector.broadcast %cst_124 : f32 to vector<32x128xf32>
    %386 = arith.select %384, %382, %385 : vector<32x128xi1>, vector<32x128xf32>
    %387 = arith.maximumf %377, %386 : vector<32x128xf32>
    %c8_i32_125 = arith.constant 8 : i32
    %388 = arith.muli %c3_i32_109, %c8_i32_125 : i32
    %c2_i32_126 = arith.constant 2 : i32
    %389 = arith.addi %388, %c2_i32_126 : i32
    %390 = vector.broadcast %389 : i32 to vector<1x128xi32>
    %391 = arith.cmpi slt, %390, %1 : vector<1x128xi32>
    %392 = vector.extract_strided_slice %367 {offsets = [0, 256], sizes = [32, 128], strides = [1, 1]} : vector<32x1024xf32> to vector<32x128xf32>
    %cst_127 = arith.constant 0.000000e+00 : f32
    %393 = vector.shape_cast %391 : vector<1x128xi1> to vector<1x128xi1>
    %394 = vector.broadcast %393 : vector<1x128xi1> to vector<32x128xi1>
    %395 = vector.broadcast %cst_127 : f32 to vector<32x128xf32>
    %396 = arith.select %394, %392, %395 : vector<32x128xi1>, vector<32x128xf32>
    %397 = arith.maximumf %387, %396 : vector<32x128xf32>
    %c8_i32_128 = arith.constant 8 : i32
    %398 = arith.muli %c3_i32_109, %c8_i32_128 : i32
    %c3_i32_129 = arith.constant 3 : i32
    %399 = arith.addi %398, %c3_i32_129 : i32
    %400 = vector.broadcast %399 : i32 to vector<1x128xi32>
    %401 = arith.cmpi slt, %400, %1 : vector<1x128xi32>
    %402 = vector.extract_strided_slice %367 {offsets = [0, 384], sizes = [32, 128], strides = [1, 1]} : vector<32x1024xf32> to vector<32x128xf32>
    %cst_130 = arith.constant 0.000000e+00 : f32
    %403 = vector.shape_cast %401 : vector<1x128xi1> to vector<1x128xi1>
    %404 = vector.broadcast %403 : vector<1x128xi1> to vector<32x128xi1>
    %405 = vector.broadcast %cst_130 : f32 to vector<32x128xf32>
    %406 = arith.select %404, %402, %405 : vector<32x128xi1>, vector<32x128xf32>
    %407 = arith.maximumf %397, %406 : vector<32x128xf32>
    %c8_i32_131 = arith.constant 8 : i32
    %408 = arith.muli %c3_i32_109, %c8_i32_131 : i32
    %c4_i32_132 = arith.constant 4 : i32
    %409 = arith.addi %408, %c4_i32_132 : i32
    %410 = vector.broadcast %409 : i32 to vector<1x128xi32>
    %411 = arith.cmpi slt, %410, %1 : vector<1x128xi32>
    %412 = vector.extract_strided_slice %367 {offsets = [0, 512], sizes = [32, 128], strides = [1, 1]} : vector<32x1024xf32> to vector<32x128xf32>
    %cst_133 = arith.constant 0.000000e+00 : f32
    %413 = vector.shape_cast %411 : vector<1x128xi1> to vector<1x128xi1>
    %414 = vector.broadcast %413 : vector<1x128xi1> to vector<32x128xi1>
    %415 = vector.broadcast %cst_133 : f32 to vector<32x128xf32>
    %416 = arith.select %414, %412, %415 : vector<32x128xi1>, vector<32x128xf32>
    %417 = arith.maximumf %407, %416 : vector<32x128xf32>
    %c8_i32_134 = arith.constant 8 : i32
    %418 = arith.muli %c3_i32_109, %c8_i32_134 : i32
    %c5_i32_135 = arith.constant 5 : i32
    %419 = arith.addi %418, %c5_i32_135 : i32
    %420 = vector.broadcast %419 : i32 to vector<1x128xi32>
    %421 = arith.cmpi slt, %420, %1 : vector<1x128xi32>
    %422 = vector.extract_strided_slice %367 {offsets = [0, 640], sizes = [32, 128], strides = [1, 1]} : vector<32x1024xf32> to vector<32x128xf32>
    %cst_136 = arith.constant 0.000000e+00 : f32
    %423 = vector.shape_cast %421 : vector<1x128xi1> to vector<1x128xi1>
    %424 = vector.broadcast %423 : vector<1x128xi1> to vector<32x128xi1>
    %425 = vector.broadcast %cst_136 : f32 to vector<32x128xf32>
    %426 = arith.select %424, %422, %425 : vector<32x128xi1>, vector<32x128xf32>
    %427 = arith.maximumf %417, %426 : vector<32x128xf32>
    %c8_i32_137 = arith.constant 8 : i32
    %428 = arith.muli %c3_i32_109, %c8_i32_137 : i32
    %c6_i32_138 = arith.constant 6 : i32
    %429 = arith.addi %428, %c6_i32_138 : i32
    %430 = vector.broadcast %429 : i32 to vector<1x128xi32>
    %431 = arith.cmpi slt, %430, %1 : vector<1x128xi32>
    %432 = vector.extract_strided_slice %367 {offsets = [0, 768], sizes = [32, 128], strides = [1, 1]} : vector<32x1024xf32> to vector<32x128xf32>
    %cst_139 = arith.constant 0.000000e+00 : f32
    %433 = vector.shape_cast %431 : vector<1x128xi1> to vector<1x128xi1>
    %434 = vector.broadcast %433 : vector<1x128xi1> to vector<32x128xi1>
    %435 = vector.broadcast %cst_139 : f32 to vector<32x128xf32>
    %436 = arith.select %434, %432, %435 : vector<32x128xi1>, vector<32x128xf32>
    %437 = arith.maximumf %427, %436 : vector<32x128xf32>
    %c8_i32_140 = arith.constant 8 : i32
    %438 = arith.muli %c3_i32_109, %c8_i32_140 : i32
    %c7_i32_141 = arith.constant 7 : i32
    %439 = arith.addi %438, %c7_i32_141 : i32
    %440 = vector.broadcast %439 : i32 to vector<1x128xi32>
    %441 = arith.cmpi slt, %440, %1 : vector<1x128xi32>
    %442 = vector.extract_strided_slice %367 {offsets = [0, 896], sizes = [32, 128], strides = [1, 1]} : vector<32x1024xf32> to vector<32x128xf32>
    %cst_142 = arith.constant 0.000000e+00 : f32
    %443 = vector.shape_cast %441 : vector<1x128xi1> to vector<1x128xi1>
    %444 = vector.broadcast %443 : vector<1x128xi1> to vector<32x128xi1>
    %445 = vector.broadcast %cst_142 : f32 to vector<32x128xf32>
    %446 = arith.select %444, %442, %445 : vector<32x128xi1>, vector<32x128xf32>
    %447 = arith.maximumf %437, %446 : vector<32x128xf32>
    %c4_i32_143 = arith.constant 4 : i32
    %c0_144 = arith.constant 0 : index
    %c0_145 = arith.constant 0 : index
    %448 = vector.load %arg11[%c0_144, %c0_145] : memref<32x128xf32, #tpu.memory_space<vmem>>, vector<32x128xf32>
    tpu.vector_store %arg11[%c0_144, %c0_145], %447 {strides = array<i32>} : memref<32x128xf32, #tpu.memory_space<vmem>>, vector<32x128xf32>,
    return
  }
  func.func @transform_0(%arg0: i32) -> (i32, i32) {
    %c0_i32 = arith.constant 0 : i32
    %c0_i32_0 = arith.constant 0 : i32
    return %c0_i32, %arg0 : i32, i32
  }
  func.func @transform_1(%arg0: i32) -> (i32, i32) {
    %c0_i32 = arith.constant 0 : i32
    %c0_i32_0 = arith.constant 0 : i32
    return %c0_i32, %arg0 : i32, i32
  }
  func.func @transform_2(%arg0: i32) -> (i32, i32) {
    %c0_i32 = arith.constant 0 : i32
    %c0_i32_0 = arith.constant 0 : i32
    return %c0_i32, %arg0 : i32, i32
  }
  func.func @transform_3(%arg0: i32) -> (i32, i32) {
    %c0_i32 = arith.constant 0 : i32
    %c0_i32_0 = arith.constant 0 : i32
    %c0_i32_1 = arith.constant 0 : i32
    return %c0_i32, %c0_i32_0 : i32, i32
  }
  func.func @transform_4(%arg0: i32) -> (i32, i32) {
    %c0_i32 = arith.constant 0 : i32
    %c0_i32_0 = arith.constant 0 : i32
    %c0_i32_1 = arith.constant 0 : i32
    return %c0_i32, %c0_i32_0 : i32, i32
  }
  func.func @transform_5(%arg0: i32) -> (i32, i32) {
    %c0_i32 = arith.constant 0 : i32
    %c0_i32_0 = arith.constant 0 : i32
    %c0_i32_1 = arith.constant 0 : i32
    return %c0_i32, %c0_i32_0 : i32, i32
  }
  func.func @transform_6(%arg0: i32) -> (i32, i32) {
    %c0_i32 = arith.constant 0 : i32
    %c0_i32_0 = arith.constant 0 : i32
    %c0_i32_1 = arith.constant 0 : i32
    return %c0_i32, %c0_i32_0 : i32, i32
  }
  func.func @transform_7(%arg0: i32) -> (i32, i32) {
    %c0_i32 = arith.constant 0 : i32
    %c0_i32_0 = arith.constant 0 : i32
    %c0_i32_1 = arith.constant 0 : i32
    return %c0_i32, %c0_i32_0 : i32, i32
  }
  func.func @transform_8(%arg0: i32) -> (i32, i32) {
    %c0_i32 = arith.constant 0 : i32
    %c0_i32_0 = arith.constant 0 : i32
    %c0_i32_1 = arith.constant 0 : i32
    return %c0_i32, %c0_i32_0 : i32, i32
  }
  func.func @transform_9(%arg0: i32) -> (i32, i32) {
    %c0_i32 = arith.constant 0 : i32
    %c0_i32_0 = arith.constant 0 : i32
    %c0_i32_1 = arith.constant 0 : i32
    return %c0_i32, %c0_i32_0 : i32, i32
  }
  func.func @transform_10(%arg0: i32) -> (i32, i32) {
    %c0_i32 = arith.constant 0 : i32
    %c0_i32_0 = arith.constant 0 : i32
    return %c0_i32, %arg0 : i32, i32
  }
}

</mosaic_0001>

<llo_original>
// kernel: tpu_custom_call.1
$region0: #{tpu_custom_call.1}
  #allocation0 [shape = 'u32[]', space=smem, size = 0x4, offset = 0x4, fixed_abs, tag = 'smem constant byte address 0x4 - core index']
  #allocation1 [shape = 'u32[144,128]{1,0:T(1,128)}', space=vmem, size = 0x12000, scoped, tag = 'internal scratch']
  %s0 = inlined_call_operand.vmem [shape: s32[1,4096], index: 0, kind: input, shape index: {}]
  %s1 = inlined_call_operand.vmem [shape: s32[1,128], index: 1, kind: input, shape index: {}]
  %s2 = inlined_call_operand.vmem [shape: f32[8,128], index: 2, kind: input, shape index: {}]
  %s3 = inlined_call_operand.vmem [shape: bf16[8,128], index: 3, kind: input, shape index: {}]
  %s4 = inlined_call_operand.vmem [shape: bf16[16,8], index: 4, kind: input, shape index: {}]
  %s5 = inlined_call_operand.vmem [shape: f32[16,1], index: 5, kind: input, shape index: {}]
  %s6 = inlined_call_operand.vmem [shape: bf16[16,16], index: 6, kind: input, shape index: {}]
  %s7 = inlined_call_operand.vmem [shape: f32[16,1], index: 7, kind: input, shape index: {}]
  %s8 = inlined_call_operand.vmem [shape: bf16[32,16], index: 8, kind: input, shape index: {}]
  %s9 = inlined_call_operand.vmem [shape: f32[32,1], index: 9, kind: input, shape index: {}]
  %s10 = inlined_call_operand.hbm [shape: f32[32,128], index: 10, kind: output, shape index: {}]
  %s11 = sld [smem:[#allocation0]]
  $region50: #{tpu_custom_call.1} parent=0
    _
  %s13 = ssub.s32 1, %s11
  %s14 = scalar_select 0, %s13, %s11
  $region1: #{tpu_custom_call.1} parent=0
    #allocation2 [shape = 'u8[16384]{0}', space=vmem, size = 0x4000, scoped, tag = 'output window, operand 0, single buffered']
    #allocation3 [shape = 's32[1]{0}', space=sflag, size = 0x4, scoped, tag = 'scoped memory for tpu_custom_call.1']
    %15 = vsyncpa [#allocation3], 0
    // Predicated region
    $region2: #{tpu_custom_call.1} parent=1 // pred_check
      _
    $region3: #{tpu_custom_call.1} parent=1 // pred_check_branch
      %17 = sbr.rel (0) target = $region5
    $region4: #{tpu_custom_call.1} parent=1 // pred_region
      _
    $region5: #{tpu_custom_call.1} parent=1 // pred_fallthru
      _
    // Predicated region
    $region6: #{tpu_custom_call.1} parent=1 // pred_check
      _
    $region7: #{tpu_custom_call.1} parent=1 // pred_check_branch
      %19 = sbr.rel (0) target = $region9
    $region8: #{tpu_custom_call.1} parent=1 // pred_region
      _
    $region9: #{tpu_custom_call.1} parent=1 // pred_fallthru
      _
    // Predicated region
    $region10: #{tpu_custom_call.1} parent=1 // pred_check
      _
    $region11: #{tpu_custom_call.1} parent=1 // pred_check_branch
      %21 = sbr.rel (0) target = $region13
    $region12: #{tpu_custom_call.1} parent=1 // pred_region
      _
    $region13: #{tpu_custom_call.1} parent=1 // pred_fallthru
      _
    // Predicated region
    $region14: #{tpu_custom_call.1} parent=1 // pred_check
      _
    $region15: #{tpu_custom_call.1} parent=1 // pred_check_branch
      %23 = sbr.rel (0) target = $region17
    $region16: #{tpu_custom_call.1} parent=1 // pred_region
      _
    $region17: #{tpu_custom_call.1} parent=1 // pred_fallthru
      _
    // Predicated region
    $region18: #{tpu_custom_call.1} parent=1 // pred_check
      _
    $region19: #{tpu_custom_call.1} parent=1 // pred_check_branch
      %25 = sbr.rel (0) target = $region21
    $region20: #{tpu_custom_call.1} parent=1 // pred_region
      _
    $region21: #{tpu_custom_call.1} parent=1 // pred_fallthru
      _
    // Predicated region
    $region22: #{tpu_custom_call.1} parent=1 // pred_check
      _
    $region23: #{tpu_custom_call.1} parent=1 // pred_check_branch
      %27 = sbr.rel (0) target = $region25
    $region24: #{tpu_custom_call.1} parent=1 // pred_region
      _
    $region25: #{tpu_custom_call.1} parent=1 // pred_fallthru
      _
    // Predicated region
    $region26: #{tpu_custom_call.1} parent=1 // pred_check
      _
    $region27: #{tpu_custom_call.1} parent=1 // pred_check_branch
      %29 = sbr.rel (0) target = $region29
    $region28: #{tpu_custom_call.1} parent=1 // pred_region
      _
    $region29: #{tpu_custom_call.1} parent=1 // pred_fallthru
      _
    // Predicated region
    $region30: #{tpu_custom_call.1} parent=1 // pred_check
      _
    $region31: #{tpu_custom_call.1} parent=1 // pred_check_branch
      %31 = sbr.rel (0) target = $region33
    $region32: #{tpu_custom_call.1} parent=1 // pred_region
      _
    $region33: #{tpu_custom_call.1} parent=1 // pred_fallthru
      _
    // Predicated region
    $region34: #{tpu_custom_call.1} parent=1 // pred_check
      _
    $region35: #{tpu_custom_call.1} parent=1 // pred_check_branch
      %33 = sbr.rel (0) target = $region37
    $region36: #{tpu_custom_call.1} parent=1 // pred_region
      _
    $region37: #{tpu_custom_call.1} parent=1 // pred_fallthru
      _
    // Predicated region
    $region38: #{tpu_custom_call.1} parent=1 // pred_check
      _
    $region39: #{tpu_custom_call.1} parent=1 // pred_check_branch
      %35 = sbr.rel (0) target = $region41
    $region40: #{tpu_custom_call.1} parent=1 // pred_region
      _
    $region41: #{tpu_custom_call.1} parent=1 // pred_fallthru
      _
    %v37 = vld [vmem:[%s3] sm:$0xf]
    %v38 = vld [vmem:[%s1] sm:$0x1]
    %v39 = vld [vmem:[%s2] sm:$0xff]
    %v40 = vlaneseq
    %v41 = vshrl.u32 %v40, 7
    %v42 = vadd.s32 %v41, 8
    %v43 = vadd.s32 %v41, 16
    %v44 = vadd.s32 %v41, 24
    %v45 = vadd.s32 %v41, 32
    %v46 = vadd.s32 %v41, 40
    %v47 = vadd.s32 %v41, 48
    %v48 = vadd.s32 %v41, 56
    %v49 = vadd.s32 %v41, 64
    %v50 = vadd.s32 %v41, 72
    %v51 = vadd.s32 %v41, 80
    %v52 = vadd.s32 %v41, 88
    %v53 = vadd.s32 %v41, 96
    %v54 = vadd.s32 %v41, 104
    %v55 = vadd.s32 %v41, 112
    %v56 = vadd.s32 %v41, 120
    %v57 = vld [vmem:[%s4] sm:$0xf]
    %v58 = vld [vmem:[%s4 + $0x4] sm:$0xf]
    %v59 = vld [vmem:[%s5] sm:$0xff]
    %v60 = vld [vmem:[%s5 + $0x8] sm:$0xff]
    %v61 = vld [vmem:[%s6] sm:$0xf]
    %v62 = vld [vmem:[%s6 + $0x4] sm:$0xf]
    %v63 = vld [vmem:[%s7] sm:$0xff]
    %v64 = vld [vmem:[%s7 + $0x8] sm:$0xff]
    %v65 = vld [vmem:[%s8] sm:$0xf]
    %v66 = vld [vmem:[%s8 + $0x4] sm:$0xf]
    %v67 = vld [vmem:[%s8 + $0x8] sm:$0xf]
    %v68 = vld [vmem:[%s8 + $0xc] sm:$0xf]
    %v69 = vld [vmem:[%s9] sm:$0xff]
    %v70 = vld [vmem:[%s9 + $0x8] sm:$0xff]
    %v71 = vld [vmem:[%s9 + $0x10] sm:$0xff]
    %v72 = vld [vmem:[%s9 + $0x18] sm:$0xff]
    %v73 = vld [vmem:[%s0] sm:$0xff]
    %v74 = vlaneseq
    %v75 = vshrl.u32 %v74, 7
    %v76 = vsub.s32 0, %v75
    %v77 = vrot.slane %v73, %v76
    %v78 = vlaneseq
    %v79 = vshrl.u32 %v78, 7
    %v80 = vsub.s32 1, %v79
    %v81 = vrot.slane %v73, %v80
    %v82 = vlaneseq
    %v83 = vshrl.u32 %v82, 7
    %v84 = vsub.s32 2, %v83
    %v85 = vrot.slane %v73, %v84
    %v86 = vlaneseq
    %v87 = vshrl.u32 %v86, 7
    %v88 = vsub.s32 3, %v87
    %v89 = vrot.slane %v73, %v88
    %v90 = vlaneseq
    %v91 = vshrl.u32 %v90, 7
    %v92 = vsub.s32 4, %v91
    %v93 = vrot.slane %v73, %v92
    %v94 = vlaneseq
    %v95 = vshrl.u32 %v94, 7
    %v96 = vsub.s32 5, %v95
    %v97 = vrot.slane %v73, %v96
    %v98 = vlaneseq
    %v99 = vshrl.u32 %v98, 7
    %v100 = vsub.s32 6, %v99
    %v101 = vrot.slane %v73, %v100
    %v102 = vlaneseq
    %v103 = vshrl.u32 %v102, 7
    %v104 = vsub.s32 7, %v103
    %v105 = vrot.slane %v73, %v104
    %vm106 = vcmp.eq.s32.totalorder %v41, %v77
    %vm107 = vcmp.eq.s32.totalorder %v41, %v81
    %vm108 = vcmp.eq.s32.totalorder %v41, %v85
    %vm109 = vcmp.eq.s32.totalorder %v41, %v89
    %vm110 = vcmp.eq.s32.totalorder %v41, %v93
    %vm111 = vcmp.eq.s32.totalorder %v41, %v97
    %vm112 = vcmp.eq.s32.totalorder %v41, %v101
    %vm113 = vcmp.eq.s32.totalorder %v41, %v105
    %vm114 = vcmp.eq.s32.totalorder %v42, %v77
    %vm115 = vcmp.eq.s32.totalorder %v42, %v81
    %vm116 = vcmp.eq.s32.totalorder %v42, %v85
    %vm117 = vcmp.eq.s32.totalorder %v42, %v89
    %vm118 = vcmp.eq.s32.totalorder %v42, %v93
    %vm119 = vcmp.eq.s32.totalorder %v42, %v97
    %vm120 = vcmp.eq.s32.totalorder %v42, %v101
    %vm121 = vcmp.eq.s32.totalorder %v42, %v105
    %vm122 = vcmp.eq.s32.totalorder %v43, %v77
    %vm123 = vcmp.eq.s32.totalorder %v43, %v81
    %vm124 = vcmp.eq.s32.totalorder %v43, %v85
    %vm125 = vcmp.eq.s32.totalorder %v43, %v89
    %vm126 = vcmp.eq.s32.totalorder %v43, %v93
    %vm127 = vcmp.eq.s32.totalorder %v43, %v97
    %vm128 = vcmp.eq.s32.totalorder %v43, %v101
    %vm129 = vcmp.eq.s32.totalorder %v43, %v105
    %vm130 = vcmp.eq.s32.totalorder %v44, %v77
    %vm131 = vcmp.eq.s32.totalorder %v44, %v81
    %vm132 = vcmp.eq.s32.totalorder %v44, %v85
    %vm133 = vcmp.eq.s32.totalorder %v44, %v89
    %vm134 = vcmp.eq.s32.totalorder %v44, %v93
    %vm135 = vcmp.eq.s32.totalorder %v44, %v97
    %vm136 = vcmp.eq.s32.totalorder %v44, %v101
    %vm137 = vcmp.eq.s32.totalorder %v44, %v105
    %vm138 = vcmp.eq.s32.totalorder %v45, %v77
    %vm139 = vcmp.eq.s32.totalorder %v45, %v81
    %vm140 = vcmp.eq.s32.totalorder %v45, %v85
    %vm141 = vcmp.eq.s32.totalorder %v45, %v89
    %vm142 = vcmp.eq.s32.totalorder %v45, %v93
    %vm143 = vcmp.eq.s32.totalorder %v45, %v97
    %vm144 = vcmp.eq.s32.totalorder %v45, %v101
    %vm145 = vcmp.eq.s32.totalorder %v45, %v105
    %vm146 = vcmp.eq.s32.totalorder %v46, %v77
    %vm147 = vcmp.eq.s32.totalorder %v46, %v81
    %vm148 = vcmp.eq.s32.totalorder %v46, %v85
    %vm149 = vcmp.eq.s32.totalorder %v46, %v89
    %vm150 = vcmp.eq.s32.totalorder %v46, %v93
    %vm151 = vcmp.eq.s32.totalorder %v46, %v97
    %vm152 = vcmp.eq.s32.totalorder %v46, %v101
    %vm153 = vcmp.eq.s32.totalorder %v46, %v105
    %vm154 = vcmp.eq.s32.totalorder %v47, %v77
    %vm155 = vcmp.eq.s32.totalorder %v47, %v81
    %vm156 = vcmp.eq.s32.totalorder %v47, %v85
    %vm157 = vcmp.eq.s32.totalorder %v47, %v89
    %vm158 = vcmp.eq.s32.totalorder %v47, %v93
    %vm159 = vcmp.eq.s32.totalorder %v47, %v97
    %vm160 = vcmp.eq.s32.totalorder %v47, %v101
    %vm161 = vcmp.eq.s32.totalorder %v47, %v105
    %vm162 = vcmp.eq.s32.totalorder %v48, %v77
    %vm163 = vcmp.eq.s32.totalorder %v48, %v81
    %vm164 = vcmp.eq.s32.totalorder %v48, %v85
    %vm165 = vcmp.eq.s32.totalorder %v48, %v89
    %vm166 = vcmp.eq.s32.totalorder %v48, %v93
    %vm167 = vcmp.eq.s32.totalorder %v48, %v97
    %vm168 = vcmp.eq.s32.totalorder %v48, %v101
    %vm169 = vcmp.eq.s32.totalorder %v48, %v105
    %vm170 = vcmp.eq.s32.totalorder %v49, %v77
    %vm171 = vcmp.eq.s32.totalorder %v49, %v81
    %vm172 = vcmp.eq.s32.totalorder %v49, %v85
    %vm173 = vcmp.eq.s32.totalorder %v49, %v89
    %vm174 = vcmp.eq.s32.totalorder %v49, %v93
    %vm175 = vcmp.eq.s32.totalorder %v49, %v97
    %vm176 = vcmp.eq.s32.totalorder %v49, %v101
    %vm177 = vcmp.eq.s32.totalorder %v49, %v105
    %vm178 = vcmp.eq.s32.totalorder %v50, %v77
    %vm179 = vcmp.eq.s32.totalorder %v50, %v81
    %vm180 = vcmp.eq.s32.totalorder %v50, %v85
    %vm181 = vcmp.eq.s32.totalorder %v50, %v89
    %vm182 = vcmp.eq.s32.totalorder %v50, %v93
    %vm183 = vcmp.eq.s32.totalorder %v50, %v97
    %vm184 = vcmp.eq.s32.totalorder %v50, %v101
    %vm185 = vcmp.eq.s32.totalorder %v50, %v105
    %vm186 = vcmp.eq.s32.totalorder %v51, %v77
    %vm187 = vcmp.eq.s32.totalorder %v51, %v81
    %vm188 = vcmp.eq.s32.totalorder %v51, %v85
    %vm189 = vcmp.eq.s32.totalorder %v51, %v89
    %vm190 = vcmp.eq.s32.totalorder %v51, %v93
    %vm191 = vcmp.eq.s32.totalorder %v51, %v97
    %vm192 = vcmp.eq.s32.totalorder %v51, %v101
    %vm193 = vcmp.eq.s32.totalorder %v51, %v105
    %vm194 = vcmp.eq.s32.totalorder %v52, %v77
    %vm195 = vcmp.eq.s32.totalorder %v52, %v81
    %vm196 = vcmp.eq.s32.totalorder %v52, %v85
    %vm197 = vcmp.eq.s32.totalorder %v52, %v89
    %vm198 = vcmp.eq.s32.totalorder %v52, %v93
    %vm199 = vcmp.eq.s32.totalorder %v52, %v97
    %vm200 = vcmp.eq.s32.totalorder %v52, %v101
    %vm201 = vcmp.eq.s32.totalorder %v52, %v105
    %vm202 = vcmp.eq.s32.totalorder %v53, %v77
    %vm203 = vcmp.eq.s32.totalorder %v53, %v81
    %vm204 = vcmp.eq.s32.totalorder %v53, %v85
    %vm205 = vcmp.eq.s32.totalorder %v53, %v89
    %vm206 = vcmp.eq.s32.totalorder %v53, %v93
    %vm207 = vcmp.eq.s32.totalorder %v53, %v97
    %vm208 = vcmp.eq.s32.totalorder %v53, %v101
    %vm209 = vcmp.eq.s32.totalorder %v53, %v105
    %vm210 = vcmp.eq.s32.totalorder %v54, %v77
    %vm211 = vcmp.eq.s32.totalorder %v54, %v81
    %vm212 = vcmp.eq.s32.totalorder %v54, %v85
    %vm213 = vcmp.eq.s32.totalorder %v54, %v89
    %vm214 = vcmp.eq.s32.totalorder %v54, %v93
    %vm215 = vcmp.eq.s32.totalorder %v54, %v97
    %vm216 = vcmp.eq.s32.totalorder %v54, %v101
    %vm217 = vcmp.eq.s32.totalorder %v54, %v105
    %vm218 = vcmp.eq.s32.totalorder %v55, %v77
    %vm219 = vcmp.eq.s32.totalorder %v55, %v81
    %vm220 = vcmp.eq.s32.totalorder %v55, %v85
    %vm221 = vcmp.eq.s32.totalorder %v55, %v89
    %vm222 = vcmp.eq.s32.totalorder %v55, %v93
    %vm223 = vcmp.eq.s32.totalorder %v55, %v97
    %vm224 = vcmp.eq.s32.totalorder %v55, %v101
    %vm225 = vcmp.eq.s32.totalorder %v55, %v105
    %vm226 = vcmp.eq.s32.totalorder %v56, %v77
    %vm227 = vcmp.eq.s32.totalorder %v56, %v81
    %vm228 = vcmp.eq.s32.totalorder %v56, %v85
    %vm229 = vcmp.eq.s32.totalorder %v56, %v89
    %vm230 = vcmp.eq.s32.totalorder %v56, %v93
    %vm231 = vcmp.eq.s32.totalorder %v56, %v97
    %vm232 = vcmp.eq.s32.totalorder %v56, %v101
    %vm233 = vcmp.eq.s32.totalorder %v56, %v105
    %v234 = vsel %vm106, 1, 0
    %v235 = vsel %vm107, 1, 0
    %v236 = vsel %vm108, 1, 0
    %v237 = vsel %vm109, 1, 0
    %v238 = vsel %vm110, 1, 0
    %v239 = vsel %vm111, 1, 0
    %v240 = vsel %vm112, 1, 0
    %v241 = vsel %vm113, 1, 0
    %v242 = vsel %vm114, 1, 0
    %v243 = vsel %vm115, 1, 0
    %v244 = vsel %vm116, 1, 0
    %v245 = vsel %vm117, 1, 0
    %v246 = vsel %vm118, 1, 0
    %v247 = vsel %vm119, 1, 0
    %v248 = vsel %vm120, 1, 0
    %v249 = vsel %vm121, 1, 0
    %v250 = vsel %vm122, 1, 0
    %v251 = vsel %vm123, 1, 0
    %v252 = vsel %vm124, 1, 0
    %v253 = vsel %vm125, 1, 0
    %v254 = vsel %vm126, 1, 0
    %v255 = vsel %vm127, 1, 0
    %v256 = vsel %vm128, 1, 0
    %v257 = vsel %vm129, 1, 0
    %v258 = vsel %vm130, 1, 0
    %v259 = vsel %vm131, 1, 0
    %v260 = vsel %vm132, 1, 0
    %v261 = vsel %vm133, 1, 0
    %v262 = vsel %vm134, 1, 0
    %v263 = vsel %vm135, 1, 0
    %v264 = vsel %vm136, 1, 0
    %v265 = vsel %vm137, 1, 0
    %v266 = vsel %vm138, 1, 0
    %v267 = vsel %vm139, 1, 0
    %v268 = vsel %vm140, 1, 0
    %v269 = vsel %vm141, 1, 0
    %v270 = vsel %vm142, 1, 0
    %v271 = vsel %vm143, 1, 0
    %v272 = vsel %vm144, 1, 0
    %v273 = vsel %vm145, 1, 0
    %v274 = vsel %vm146, 1, 0
    %v275 = vsel %vm147, 1, 0
    %v276 = vsel %vm148, 1, 0
    %v277 = vsel %vm149, 1, 0
    %v278 = vsel %vm150, 1, 0
    %v279 = vsel %vm151, 1, 0
    %v280 = vsel %vm152, 1, 0
    %v281 = vsel %vm153, 1, 0
    %v282 = vsel %vm154, 1, 0
    %v283 = vsel %vm155, 1, 0
    %v284 = vsel %vm156, 1, 0
    %v285 = vsel %vm157, 1, 0
    %v286 = vsel %vm158, 1, 0
    %v287 = vsel %vm159, 1, 0
    %v288 = vsel %vm160, 1, 0
    %v289 = vsel %vm161, 1, 0
    %v290 = vsel %vm162, 1, 0
    %v291 = vsel %vm163, 1, 0
    %v292 = vsel %vm164, 1, 0
    %v293 = vsel %vm165, 1, 0
    %v294 = vsel %vm166, 1, 0
    %v295 = vsel %vm167, 1, 0
    %v296 = vsel %vm168, 1, 0
    %v297 = vsel %vm169, 1, 0
    %v298 = vsel %vm170, 1, 0
    %v299 = vsel %vm171, 1, 0
    %v300 = vsel %vm172, 1, 0
    %v301 = vsel %vm173, 1, 0
    %v302 = vsel %vm174, 1, 0
    %v303 = vsel %vm175, 1, 0
    %v304 = vsel %vm176, 1, 0
    %v305 = vsel %vm177, 1, 0
    %v306 = vsel %vm178, 1, 0
    %v307 = vsel %vm179, 1, 0
    %v308 = vsel %vm180, 1, 0
    %v309 = vsel %vm181, 1, 0
    %v310 = vsel %vm182, 1, 0
    %v311 = vsel %vm183, 1, 0
    %v312 = vsel %vm184, 1, 0
    %v313 = vsel %vm185, 1, 0
    %v314 = vsel %vm186, 1, 0
    %v315 = vsel %vm187, 1, 0
    %v316 = vsel %vm188, 1, 0
    %v317 = vsel %vm189, 1, 0
    %v318 = vsel %vm190, 1, 0
    %v319 = vsel %vm191, 1, 0
    %v320 = vsel %vm192, 1, 0
    %v321 = vsel %vm193, 1, 0
    %v322 = vsel %vm194, 1, 0
    %v323 = vsel %vm195, 1, 0
    %v324 = vsel %vm196, 1, 0
    %v325 = vsel %vm197, 1, 0
    %v326 = vsel %vm198, 1, 0
    %v327 = vsel %vm199, 1, 0
    %v328 = vsel %vm200, 1, 0
    %v329 = vsel %vm201, 1, 0
    %v330 = vsel %vm202, 1, 0
    %v331 = vsel %vm203, 1, 0
    %v332 = vsel %vm204, 1, 0
    %v333 = vsel %vm205, 1, 0
    %v334 = vsel %vm206, 1, 0
    %v335 = vsel %vm207, 1, 0
    %v336 = vsel %vm208, 1, 0
    %v337 = vsel %vm209, 1, 0
    %v338 = vsel %vm210, 1, 0
    %v339 = vsel %vm211, 1, 0
    %v340 = vsel %vm212, 1, 0
    %v341 = vsel %vm213, 1, 0
    %v342 = vsel %vm214, 1, 0
    %v343 = vsel %vm215, 1, 0
    %v344 = vsel %vm216, 1, 0
    %v345 = vsel %vm217, 1, 0
    %v346 = vsel %vm218, 1, 0
    %v347 = vsel %vm219, 1, 0
    %v348 = vsel %vm220, 1, 0
    %v349 = vsel %vm221, 1, 0
    %v350 = vsel %vm222, 1, 0
    %v351 = vsel %vm223, 1, 0
    %v352 = vsel %vm224, 1, 0
    %v353 = vsel %vm225, 1, 0
    %v354 = vsel %vm226, 1, 0
    %v355 = vsel %vm227, 1, 0
    %v356 = vsel %vm228, 1, 0
    %v357 = vsel %vm229, 1, 0
    %v358 = vsel %vm230, 1, 0
    %v359 = vsel %vm231, 1, 0
    %v360 = vsel %vm232, 1, 0
    %v361 = vsel %vm233, 1, 0
    %v362 = vcvt.s32.f32 %v234
    %v363 = vcvt.s32.f32 %v235
    %v364 = vcvt.s32.f32 %v236
    %v365 = vcvt.s32.f32 %v237
    %v366 = vcvt.s32.f32 %v238
    %v367 = vcvt.s32.f32 %v239
    %v368 = vcvt.s32.f32 %v240
    %v369 = vcvt.s32.f32 %v241
    %v370 = vcvt.s32.f32 %v242
    %v371 = vcvt.s32.f32 %v243
    %v372 = vcvt.s32.f32 %v244
    %v373 = vcvt.s32.f32 %v245
    %v374 = vcvt.s32.f32 %v246
    %v375 = vcvt.s32.f32 %v247
    %v376 = vcvt.s32.f32 %v248
    %v377 = vcvt.s32.f32 %v249
    %v378 = vcvt.s32.f32 %v250
    %v379 = vcvt.s32.f32 %v251
    %v380 = vcvt.s32.f32 %v252
    %v381 = vcvt.s32.f32 %v253
    %v382 = vcvt.s32.f32 %v254
    %v383 = vcvt.s32.f32 %v255
    %v384 = vcvt.s32.f32 %v256
    %v385 = vcvt.s32.f32 %v257
    %v386 = vcvt.s32.f32 %v258
    %v387 = vcvt.s32.f32 %v259
    %v388 = vcvt.s32.f32 %v260
    %v389 = vcvt.s32.f32 %v261
    %v390 = vcvt.s32.f32 %v262
    %v391 = vcvt.s32.f32 %v263
    %v392 = vcvt.s32.f32 %v264
    %v393 = vcvt.s32.f32 %v265
    %v394 = vcvt.s32.f32 %v266
    %v395 = vcvt.s32.f32 %v267
    %v396 = vcvt.s32.f32 %v268
    %v397 = vcvt.s32.f32 %v269
    %v398 = vcvt.s32.f32 %v270
    %v399 = vcvt.s32.f32 %v271
    %v400 = vcvt.s32.f32 %v272
    %v401 = vcvt.s32.f32 %v273
    %v402 = vcvt.s32.f32 %v274
    %v403 = vcvt.s32.f32 %v275
    %v404 = vcvt.s32.f32 %v276
    %v405 = vcvt.s32.f32 %v277
    %v406 = vcvt.s32.f32 %v278
    %v407 = vcvt.s32.f32 %v279
    %v408 = vcvt.s32.f32 %v280
    %v409 = vcvt.s32.f32 %v281
    %v410 = vcvt.s32.f32 %v282
    %v411 = vcvt.s32.f32 %v283
    %v412 = vcvt.s32.f32 %v284
    %v413 = vcvt.s32.f32 %v285
    %v414 = vcvt.s32.f32 %v286
    %v415 = vcvt.s32.f32 %v287
    %v416 = vcvt.s32.f32 %v288
    %v417 = vcvt.s32.f32 %v289
    %v418 = vcvt.s32.f32 %v290
    %v419 = vcvt.s32.f32 %v291
    %v420 = vcvt.s32.f32 %v292
    %v421 = vcvt.s32.f32 %v293
    %v422 = vcvt.s32.f32 %v294
    %v423 = vcvt.s32.f32 %v295
    %v424 = vcvt.s32.f32 %v296
    %v425 = vcvt.s32.f32 %v297
    %v426 = vcvt.s32.f32 %v298
    %v427 = vcvt.s32.f32 %v299
    %v428 = vcvt.s32.f32 %v300
    %v429 = vcvt.s32.f32 %v301
    %v430 = vcvt.s32.f32 %v302
    %v431 = vcvt.s32.f32 %v303
    %v432 = vcvt.s32.f32 %v304
    %v433 = vcvt.s32.f32 %v305
    %v434 = vcvt.s32.f32 %v306
    %v435 = vcvt.s32.f32 %v307
    %v436 = vcvt.s32.f32 %v308
    %v437 = vcvt.s32.f32 %v309
    %v438 = vcvt.s32.f32 %v310
    %v439 = vcvt.s32.f32 %v311
    %v440 = vcvt.s32.f32 %v312
    %v441 = vcvt.s32.f32 %v313
    %v442 = vcvt.s32.f32 %v314
    %v443 = vcvt.s32.f32 %v315
    %v444 = vcvt.s32.f32 %v316
    %v445 = vcvt.s32.f32 %v317
    %v446 = vcvt.s32.f32 %v318
    %v447 = vcvt.s32.f32 %v319
    %v448 = vcvt.s32.f32 %v320
    %v449 = vcvt.s32.f32 %v321
    %v450 = vcvt.s32.f32 %v322
    %v451 = vcvt.s32.f32 %v323
    %v452 = vcvt.s32.f32 %v324
    %v453 = vcvt.s32.f32 %v325
    %v454 = vcvt.s32.f32 %v326
    %v455 = vcvt.s32.f32 %v327
    %v456 = vcvt.s32.f32 %v328
    %v457 = vcvt.s32.f32 %v329
    %v458 = vcvt.s32.f32 %v330
    %v459 = vcvt.s32.f32 %v331
    %v460 = vcvt.s32.f32 %v332
    %v461 = vcvt.s32.f32 %v333
    %v462 = vcvt.s32.f32 %v334
    %v463 = vcvt.s32.f32 %v335
    %v464 = vcvt.s32.f32 %v336
    %v465 = vcvt.s32.f32 %v337
    %v466 = vcvt.s32.f32 %v338
    %v467 = vcvt.s32.f32 %v339
    %v468 = vcvt.s32.f32 %v340
    %v469 = vcvt.s32.f32 %v341
    %v470 = vcvt.s32.f32 %v342
    %v471 = vcvt.s32.f32 %v343
    %v472 = vcvt.s32.f32 %v344
    %v473 = vcvt.s32.f32 %v345
    %v474 = vcvt.s32.f32 %v346
    %v475 = vcvt.s32.f32 %v347
    %v476 = vcvt.s32.f32 %v348
    %v477 = vcvt.s32.f32 %v349
    %v478 = vcvt.s32.f32 %v350
    %v479 = vcvt.s32.f32 %v351
    %v480 = vcvt.s32.f32 %v352
    %v481 = vcvt.s32.f32 %v353
    %v482 = vcvt.s32.f32 %v354
    %v483 = vcvt.s32.f32 %v355
    %v484 = vcvt.s32.f32 %v356
    %v485 = vcvt.s32.f32 %v357
    %v486 = vcvt.s32.f32 %v358
    %v487 = vcvt.s32.f32 %v359
    %v488 = vcvt.s32.f32 %v360
    %v489 = vcvt.s32.f32 %v361
    %v490 = vpack.c.bf16 %v370, %v362
    %v491 = vpack.c.bf16 %v371, %v363
    %v492 = vpack.c.bf16 %v372, %v364
    %v493 = vpack.c.bf16 %v373, %v365
    %v494 = vpack.c.bf16 %v374, %v366
    %v495 = vpack.c.bf16 %v375, %v367
    %v496 = vpack.c.bf16 %v376, %v368
    %v497 = vpack.c.bf16 %v377, %v369
    %v498 = vpack.c.bf16 %v386, %v378
    %v499 = vpack.c.bf16 %v387, %v379
    %v500 = vpack.c.bf16 %v388, %v380
    %v501 = vpack.c.bf16 %v389, %v381
    %v502 = vpack.c.bf16 %v390, %v382
    %v503 = vpack.c.bf16 %v391, %v383
    %v504 = vpack.c.bf16 %v392, %v384
    %v505 = vpack.c.bf16 %v393, %v385
    %v506 = vpack.c.bf16 %v402, %v394
    %v507 = vpack.c.bf16 %v403, %v395
    %v508 = vpack.c.bf16 %v404, %v396
    %v509 = vpack.c.bf16 %v405, %v397
    %v510 = vpack.c.bf16 %v406, %v398
    %v511 = vpack.c.bf16 %v407, %v399
    %v512 = vpack.c.bf16 %v408, %v400
    %v513 = vpack.c.bf16 %v409, %v401
    %v514 = vpack.c.bf16 %v418, %v410
    %v515 = vpack.c.bf16 %v419, %v411
    %v516 = vpack.c.bf16 %v420, %v412
    %v517 = vpack.c.bf16 %v421, %v413
    %v518 = vpack.c.bf16 %v422, %v414
    %v519 = vpack.c.bf16 %v423, %v415
    %v520 = vpack.c.bf16 %v424, %v416
    %v521 = vpack.c.bf16 %v425, %v417
    %v522 = vpack.c.bf16 %v434, %v426
    %v523 = vpack.c.bf16 %v435, %v427
    %v524 = vpack.c.bf16 %v436, %v428
    %v525 = vpack.c.bf16 %v437, %v429
    %v526 = vpack.c.bf16 %v438, %v430
    %v527 = vpack.c.bf16 %v439, %v431
    %v528 = vpack.c.bf16 %v440, %v432
    %v529 = vpack.c.bf16 %v441, %v433
    %v530 = vpack.c.bf16 %v450, %v442
    %v531 = vpack.c.bf16 %v451, %v443
    %v532 = vpack.c.bf16 %v452, %v444
    %v533 = vpack.c.bf16 %v453, %v445
    %v534 = vpack.c.bf16 %v454, %v446
    %v535 = vpack.c.bf16 %v455, %v447
    %v536 = vpack.c.bf16 %v456, %v448
    %v537 = vpack.c.bf16 %v457, %v449
    %v538 = vpack.c.bf16 %v466, %v458
    %v539 = vpack.c.bf16 %v467, %v459
    %v540 = vpack.c.bf16 %v468, %v460
    %v541 = vpack.c.bf16 %v469, %v461
    %v542 = vpack.c.bf16 %v470, %v462
    %v543 = vpack.c.bf16 %v471, %v463
    %v544 = vpack.c.bf16 %v472, %v464
    %v545 = vpack.c.bf16 %v473, %v465
    %v546 = vpack.c.bf16 %v482, %v474
    %v547 = vpack.c.bf16 %v483, %v475
    %v548 = vpack.c.bf16 %v484, %v476
    %v549 = vpack.c.bf16 %v485, %v477
    %v550 = vpack.c.bf16 %v486, %v478
    %v551 = vpack.c.bf16 %v487, %v479
    %v552 = vpack.c.bf16 %v488, %v480
    %v553 = vpack.c.bf16 %v489, %v481
    %554 = vmatprep.subr.bf16.mxu0 %v491
    %555 = vmatpush1.bf16.msra.mxu0 %v490
    %556 = vmatprep.subr.bf16.mxu0 %v499
    %557 = vmatpush1.bf16.msra.mxu0 %v498
    %558 = vmatprep.subr.bf16.mxu0 %v507
    %559 = vmatpush1.bf16.msra.mxu0 %v506
    %560 = vmatprep.subr.bf16.mxu0 %v515
    %561 = vmatpush1.bf16.msra.mxu0 %v514
    %562 = vmatprep.subr.bf16.mxu0 %v523
    %563 = vmatpush1.bf16.msra.mxu0 %v522
    %564 = vmatprep.subr.bf16.mxu0 %v531
    %565 = vmatpush1.bf16.msra.mxu0 %v530
    %566 = vmatprep.subr.bf16.mxu0 %v539
    %567 = vmatpush1.bf16.msra.mxu0 %v538
    %568 = vmatprep.subr.bf16.mxu0 %v547
    %569 = vmatpush1.bf16.msra.mxu0 %v546
    %570 = vmatprep.subr.bf16.mxu0 0
    %571 = vmatpush1.bf16.msra.mxu0 0
    %572 = vmatprep.subr.bf16.mxu0 0
    %573 = vmatpush1.bf16.msra.mxu0 0
    %574 = vmatprep.subr.bf16.mxu0 0
    %575 = vmatpush1.bf16.msra.mxu0 0
    %576 = vmatprep.subr.bf16.mxu0 0
    %577 = vmatpush1.bf16.msra.mxu0 0
    %578 = vmatprep.subr.bf16.mxu0 0
    %579 = vmatpush1.bf16.msra.mxu0 0
    %580 = vmatprep.subr.bf16.mxu0 0
    %581 = vmatpush1.bf16.msra.mxu0 0
    %582 = vmatprep.subr.bf16.mxu0 0
    %583 = vmatpush1.bf16.msra.mxu0 0
    %584 = vmatprep.subr.bf16.mxu0 0
    %585 = vmatpush1.bf16.msra.mxu0 0
    %586 = vmatprep.mubr.bf16.mxu0 0
    %587 = vmatmul.mubr.bf16.gmra.mrb[0].mxu0 %v37
    %v588 = vpop.f32.mrb[0].mxu0
    %v589 = vadd.f32 0.0, %v588
    %v590 = vpop.f32.mrb[0].mxu0
    %v591 = vadd.f32 0.0, %v590
    %v592 = vpop.f32.mrb[0].mxu0
    %v593 = vpop.f32.mrb[0].mxu0
    %594 = vdwg.mxu0
    %595 = vmatprep.subr.bf16.mxu0 %v493
    %596 = vmatpush1.bf16.msra.mxu0 %v492
    %597 = vmatprep.subr.bf16.mxu0 %v501
    %598 = vmatpush1.bf16.msra.mxu0 %v500
    %599 = vmatprep.subr.bf16.mxu0 %v509
    %600 = vmatpush1.bf16.msra.mxu0 %v508
    %601 = vmatprep.subr.bf16.mxu0 %v517
    %602 = vmatpush1.bf16.msra.mxu0 %v516
    %603 = vmatprep.subr.bf16.mxu0 %v525
    %604 = vmatpush1.bf16.msra.mxu0 %v524
    %605 = vmatprep.subr.bf16.mxu0 %v533
    %606 = vmatpush1.bf16.msra.mxu0 %v532
    %607 = vmatprep.subr.bf16.mxu0 %v541
    %608 = vmatpush1.bf16.msra.mxu0 %v540
    %609 = vmatprep.subr.bf16.mxu0 %v549
    %610 = vmatpush1.bf16.msra.mxu0 %v548
    %611 = vmatprep.subr.bf16.mxu0 0
    %612 = vmatpush1.bf16.msra.mxu0 0
    %613 = vmatprep.subr.bf16.mxu0 0
    %614 = vmatpush1.bf16.msra.mxu0 0
    %615 = vmatprep.subr.bf16.mxu0 0
    %616 = vmatpush1.bf16.msra.mxu0 0
    %617 = vmatprep.subr.bf16.mxu0 0
    %618 = vmatpush1.bf16.msra.mxu0 0
    %619 = vmatprep.subr.bf16.mxu0 0
    %620 = vmatpush1.bf16.msra.mxu0 0
    %621 = vmatprep.subr.bf16.mxu0 0
    %622 = vmatpush1.bf16.msra.mxu0 0
    %623 = vmatprep.subr.bf16.mxu0 0
    %624 = vmatpush1.bf16.msra.mxu0 0
    %625 = vmatprep.subr.bf16.mxu0 0
    %626 = vmatpush1.bf16.msra.mxu0 0
    %627 = vmatprep.mubr.bf16.mxu0 0
    %628 = vmatmul.mubr.bf16.gmra.mrb[0].mxu0 %v37
    %v629 = vpop.f32.mrb[0].mxu0
    %v630 = vadd.f32 0.0, %v629
    %v631 = vpop.f32.mrb[0].mxu0
    %v632 = vadd.f32 0.0, %v631
    %v633 = vpop.f32.mrb[0].mxu0
    %v634 = vpop.f32.mrb[0].mxu0
    %635 = vdwg.mxu0
    %636 = vmatprep.subr.bf16.mxu0 %v495
    %637 = vmatpush1.bf16.msra.mxu0 %v494
    %638 = vmatprep.subr.bf16.mxu0 %v503
    %639 = vmatpush1.bf16.msra.mxu0 %v502
    %640 = vmatprep.subr.bf16.mxu0 %v511
    %641 = vmatpush1.bf16.msra.mxu0 %v510
    %642 = vmatprep.subr.bf16.mxu0 %v519
    %643 = vmatpush1.bf16.msra.mxu0 %v518
    %644 = vmatprep.subr.bf16.mxu0 %v527
    %645 = vmatpush1.bf16.msra.mxu0 %v526
    %646 = vmatprep.subr.bf16.mxu0 %v535
    %647 = vmatpush1.bf16.msra.mxu0 %v534
    %648 = vmatprep.subr.bf16.mxu0 %v543
    %649 = vmatpush1.bf16.msra.mxu0 %v542
    %650 = vmatprep.subr.bf16.mxu0 %v551
    %651 = vmatpush1.bf16.msra.mxu0 %v550
    %652 = vmatprep.subr.bf16.mxu0 0
    %653 = vmatpush1.bf16.msra.mxu0 0
    %654 = vmatprep.subr.bf16.mxu0 0
    %655 = vmatpush1.bf16.msra.mxu0 0
    %656 = vmatprep.subr.bf16.mxu0 0
    %657 = vmatpush1.bf16.msra.mxu0 0
    %658 = vmatprep.subr.bf16.mxu0 0
    %659 = vmatpush1.bf16.msra.mxu0 0
    %660 = vmatprep.subr.bf16.mxu0 0
    %661 = vmatpush1.bf16.msra.mxu0 0
    %662 = vmatprep.subr.bf16.mxu0 0
    %663 = vmatpush1.bf16.msra.mxu0 0
    %664 = vmatprep.subr.bf16.mxu0 0
    %665 = vmatpush1.bf16.msra.mxu0 0
    %666 = vmatprep.subr.bf16.mxu0 0
    %667 = vmatpush1.bf16.msra.mxu0 0
    %668 = vmatprep.mubr.bf16.mxu0 0
    %669 = vmatmul.mubr.bf16.gmra.mrb[0].mxu0 %v37
    %v670 = vpop.f32.mrb[0].mxu0
    %v671 = vadd.f32 0.0, %v670
    %v672 = vpop.f32.mrb[0].mxu0
    %v673 = vadd.f32 0.0, %v672
    %v674 = vpop.f32.mrb[0].mxu0
    %v675 = vpop.f32.mrb[0].mxu0
    %676 = vdwg.mxu0
    %677 = vmatprep.subr.bf16.mxu0 %v497
    %678 = vmatpush1.bf16.msra.mxu0 %v496
    %679 = vmatprep.subr.bf16.mxu0 %v505
    %680 = vmatpush1.bf16.msra.mxu0 %v504
    %681 = vmatprep.subr.bf16.mxu0 %v513
    %682 = vmatpush1.bf16.msra.mxu0 %v512
    %683 = vmatprep.subr.bf16.mxu0 %v521
    %684 = vmatpush1.bf16.msra.mxu0 %v520
    %685 = vmatprep.subr.bf16.mxu0 %v529
    %686 = vmatpush1.bf16.msra.mxu0 %v528
    %687 = vmatprep.subr.bf16.mxu0 %v537
    %688 = vmatpush1.bf16.msra.mxu0 %v536
    %689 = vmatprep.subr.bf16.mxu0 %v545
    %690 = vmatpush1.bf16.msra.mxu0 %v544
    %691 = vmatprep.subr.bf16.mxu0 %v553
    %692 = vmatpush1.bf16.msra.mxu0 %v552
    %693 = vmatprep.subr.bf16.mxu0 0
    %694 = vmatpush1.bf16.msra.mxu0 0
    %695 = vmatprep.subr.bf16.mxu0 0
    %696 = vmatpush1.bf16.msra.mxu0 0
    %697 = vmatprep.subr.bf16.mxu0 0
    %698 = vmatpush1.bf16.msra.mxu0 0
    %699 = vmatprep.subr.bf16.mxu0 0
    %700 = vmatpush1.bf16.msra.mxu0 0
    %701 = vmatprep.subr.bf16.mxu0 0
    %702 = vmatpush1.bf16.msra.mxu0 0
    %703 = vmatprep.subr.bf16.mxu0 0
    %704 = vmatpush1.bf16.msra.mxu0 0
    %705 = vmatprep.subr.bf16.mxu0 0
    %706 = vmatpush1.bf16.msra.mxu0 0
    %707 = vmatprep.subr.bf16.mxu0 0
    %708 = vmatpush1.bf16.msra.mxu0 0
    %709 = vmatprep.mubr.bf16.mxu0 0
    %710 = vmatmul.mubr.bf16.gmra.mrb[0].mxu0 %v37
    %v711 = vpop.f32.mrb[0].mxu0
    %v712 = vadd.f32 0.0, %v711
    %v713 = vpop.f32.mrb[0].mxu0
    %v714 = vadd.f32 0.0, %v713
    %v715 = vpop.f32.mrb[0].mxu0
    %v716 = vpop.f32.mrb[0].mxu0
    %717 = vdwg.mxu0
    %v718 = vsub.f32 %v589, %v39
    %v719 = vsub.f32 %v591, %v39
    %v720 = vsub.f32 %v630, %v39
    %v721 = vsub.f32 %v632, %v39
    %v722 = vsub.f32 %v671, %v39
    %v723 = vsub.f32 %v673, %v39
    %v724 = vsub.f32 %v712, %v39
    %v725 = vsub.f32 %v714, %v39
    %v726 = vpack.c.bf16 %v718, %v718
    %v727 = vpack.c.bf16 %v719, %v719
    %v728 = vpack.c.bf16 %v720, %v720
    %v729 = vpack.c.bf16 %v721, %v721
    %v730 = vpack.c.bf16 %v722, %v722
    %v731 = vpack.c.bf16 %v723, %v723
    %v732 = vpack.c.bf16 %v724, %v724
    %v733 = vpack.c.bf16 %v725, %v725
    %735 = vset.pattern.permute.xlu0 0
    %736 = vperm.xlu0 %735, %v59
    %v737 = vpop.permute.xlu0 %736
    %740 = vset.pattern.permute.xlu0 0
    %741 = vperm.xlu0 %740, %v60
    %v742 = vpop.permute.xlu0 %741
    %v746 = vunpack.c.l.b16 %v57
    %v747 = vunpack.c.l.b16 %v58
    %v748 = vpack.c.b16 %v747, %v746
    %vm749 = vcmask 64512
    %v751 = vsel %vm749, %v748, 0
    %vm753 = vcmask 1043456
    %v755 = vsel %vm753, %v726, 0
    %v758 = vsel %vm753, %v727, 0
    %v761 = vsel %vm753, %v728, 0
    %v764 = vsel %vm753, %v729, 0
    %v767 = vsel %vm753, %v730, 0
    %v770 = vsel %vm753, %v731, 0
    %v773 = vsel %vm753, %v732, 0
    %v776 = vsel %vm753, %v733, 0
    %778 = vmatprep.subr.bf16.mxu0 %v758
    %779 = vmatpush1.bf16.msra.mxu0 %v755
    %780 = vmatprep.subr.bf16.mxu0 0
    %781 = vmatpush1.bf16.msra.mxu0 0
    %782 = vmatprep.subr.bf16.mxu0 0
    %783 = vmatpush1.bf16.msra.mxu0 0
    %784 = vmatprep.subr.bf16.mxu0 0
    %785 = vmatpush1.bf16.msra.mxu0 0
    %786 = vmatprep.subr.bf16.mxu0 0
    %787 = vmatpush1.bf16.msra.mxu0 0
    %788 = vmatprep.subr.bf16.mxu0 0
    %789 = vmatpush1.bf16.msra.mxu0 0
    %790 = vmatprep.subr.bf16.mxu0 0
    %791 = vmatpush1.bf16.msra.mxu0 0
    %792 = vmatprep.subr.bf16.mxu0 0
    %793 = vmatpush1.bf16.msra.mxu0 0
    %794 = vmatprep.subr.bf16.mxu0 0
    %795 = vmatpush1.bf16.msra.mxu0 0
    %796 = vmatprep.subr.bf16.mxu0 0
    %797 = vmatpush1.bf16.msra.mxu0 0
    %798 = vmatprep.subr.bf16.mxu0 0
    %799 = vmatpush1.bf16.msra.mxu0 0
    %800 = vmatprep.subr.bf16.mxu0 0
    %801 = vmatpush1.bf16.msra.mxu0 0
    %802 = vmatprep.subr.bf16.mxu0 0
    %803 = vmatpush1.bf16.msra.mxu0 0
    %804 = vmatprep.subr.bf16.mxu0 0
    %805 = vmatpush1.bf16.msra.mxu0 0
    %806 = vmatprep.subr.bf16.mxu0 0
    %807 = vmatpush1.bf16.msra.mxu0 0
    %808 = vmatprep.subr.bf16.mxu0 0
    %809 = vmatpush1.bf16.msra.mxu0 0
    %810 = vmatprep.mubr.bf16.mxu0 0
    %811 = vmatmul.mubr.bf16.gmra.mrb[0].mxu0 %v751
    %v812 = vpop.f32.mrb[0].mxu0
    %v813 = vadd.f32 %v737, %v812
    %v814 = vpop.f32.mrb[0].mxu0
    %v815 = vadd.f32 %v737, %v814
    %v816 = vpop.f32.mrb[0].mxu0
    %v817 = vadd.f32 %v742, %v816
    %v818 = vpop.f32.mrb[0].mxu0
    %v819 = vadd.f32 %v742, %v818
    %820 = vdwg.mxu0
    %821 = vmatprep.subr.bf16.mxu0 %v764
    %822 = vmatpush1.bf16.msra.mxu0 %v761
    %823 = vmatprep.subr.bf16.mxu0 0
    %824 = vmatpush1.bf16.msra.mxu0 0
    %825 = vmatprep.subr.bf16.mxu0 0
    %826 = vmatpush1.bf16.msra.mxu0 0
    %827 = vmatprep.subr.bf16.mxu0 0
    %828 = vmatpush1.bf16.msra.mxu0 0
    %829 = vmatprep.subr.bf16.mxu0 0
    %830 = vmatpush1.bf16.msra.mxu0 0
    %831 = vmatprep.subr.bf16.mxu0 0
    %832 = vmatpush1.bf16.msra.mxu0 0
    %833 = vmatprep.subr.bf16.mxu0 0
    %834 = vmatpush1.bf16.msra.mxu0 0
    %835 = vmatprep.subr.bf16.mxu0 0
    %836 = vmatpush1.bf16.msra.mxu0 0
    %837 = vmatprep.subr.bf16.mxu0 0
    %838 = vmatpush1.bf16.msra.mxu0 0
    %839 = vmatprep.subr.bf16.mxu0 0
    %840 = vmatpush1.bf16.msra.mxu0 0
    %841 = vmatprep.subr.bf16.mxu0 0
    %842 = vmatpush1.bf16.msra.mxu0 0
    %843 = vmatprep.subr.bf16.mxu0 0
    %844 = vmatpush1.bf16.msra.mxu0 0
    %845 = vmatprep.subr.bf16.mxu0 0
    %846 = vmatpush1.bf16.msra.mxu0 0
    %847 = vmatprep.subr.bf16.mxu0 0
    %848 = vmatpush1.bf16.msra.mxu0 0
    %849 = vmatprep.subr.bf16.mxu0 0
    %850 = vmatpush1.bf16.msra.mxu0 0
    %851 = vmatprep.subr.bf16.mxu0 0
    %852 = vmatpush1.bf16.msra.mxu0 0
    %853 = vmatprep.mubr.bf16.mxu0 0
    %854 = vmatmul.mubr.bf16.gmra.mrb[0].mxu0 %v751
    %v855 = vpop.f32.mrb[0].mxu0
    %v856 = vadd.f32 %v737, %v855
    %v857 = vpop.f32.mrb[0].mxu0
    %v858 = vadd.f32 %v737, %v857
    %v859 = vpop.f32.mrb[0].mxu0
    %v860 = vadd.f32 %v742, %v859
    %v861 = vpop.f32.mrb[0].mxu0
    %v862 = vadd.f32 %v742, %v861
    %863 = vdwg.mxu0
    %864 = vmatprep.subr.bf16.mxu0 %v770
    %865 = vmatpush1.bf16.msra.mxu0 %v767
    %866 = vmatprep.subr.bf16.mxu0 0
    %867 = vmatpush1.bf16.msra.mxu0 0
    %868 = vmatprep.subr.bf16.mxu0 0
    %869 = vmatpush1.bf16.msra.mxu0 0
    %870 = vmatprep.subr.bf16.mxu0 0
    %871 = vmatpush1.bf16.msra.mxu0 0
    %872 = vmatprep.subr.bf16.mxu0 0
    %873 = vmatpush1.bf16.msra.mxu0 0
    %874 = vmatprep.subr.bf16.mxu0 0
    %875 = vmatpush1.bf16.msra.mxu0 0
    %876 = vmatprep.subr.bf16.mxu0 0
    %877 = vmatpush1.bf16.msra.mxu0 0
    %878 = vmatprep.subr.bf16.mxu0 0
    %879 = vmatpush1.bf16.msra.mxu0 0
    %880 = vmatprep.subr.bf16.mxu0 0
    %881 = vmatpush1.bf16.msra.mxu0 0
    %882 = vmatprep.subr.bf16.mxu0 0
    %883 = vmatpush1.bf16.msra.mxu0 0
    %884 = vmatprep.subr.bf16.mxu0 0
    %885 = vmatpush1.bf16.msra.mxu0 0
    %886 = vmatprep.subr.bf16.mxu0 0
    %887 = vmatpush1.bf16.msra.mxu0 0
    %888 = vmatprep.subr.bf16.mxu0 0
    %889 = vmatpush1.bf16.msra.mxu0 0
    %890 = vmatprep.subr.bf16.mxu0 0
    %891 = vmatpush1.bf16.msra.mxu0 0
    %892 = vmatprep.subr.bf16.mxu0 0
    %893 = vmatpush1.bf16.msra.mxu0 0
    %894 = vmatprep.subr.bf16.mxu0 0
    %895 = vmatpush1.bf16.msra.mxu0 0
    %896 = vmatprep.mubr.bf16.mxu0 0
    %897 = vmatmul.mubr.bf16.gmra.mrb[0].mxu0 %v751
    %v898 = vpop.f32.mrb[0].mxu0
    %v899 = vadd.f32 %v737, %v898
    %v900 = vpop.f32.mrb[0].mxu0
    %v901 = vadd.f32 %v737, %v900
    %v902 = vpop.f32.mrb[0].mxu0
    %v903 = vadd.f32 %v742, %v902
    %v904 = vpop.f32.mrb[0].mxu0
    %v905 = vadd.f32 %v742, %v904
    %906 = vdwg.mxu0
    %907 = vmatprep.subr.bf16.mxu0 %v776
    %908 = vmatpush1.bf16.msra.mxu0 %v773
    %909 = vmatprep.subr.bf16.mxu0 0
    %910 = vmatpush1.bf16.msra.mxu0 0
    %911 = vmatprep.subr.bf16.mxu0 0
    %912 = vmatpush1.bf16.msra.mxu0 0
    %913 = vmatprep.subr.bf16.mxu0 0
    %914 = vmatpush1.bf16.msra.mxu0 0
    %915 = vmatprep.subr.bf16.mxu0 0
    %916 = vmatpush1.bf16.msra.mxu0 0
    %917 = vmatprep.subr.bf16.mxu0 0
    %918 = vmatpush1.bf16.msra.mxu0 0
    %919 = vmatprep.subr.bf16.mxu0 0
    %920 = vmatpush1.bf16.msra.mxu0 0
    %921 = vmatprep.subr.bf16.mxu0 0
    %922 = vmatpush1.bf16.msra.mxu0 0
    %923 = vmatprep.subr.bf16.mxu0 0
    %924 = vmatpush1.bf16.msra.mxu0 0
    %925 = vmatprep.subr.bf16.mxu0 0
    %926 = vmatpush1.bf16.msra.mxu0 0
    %927 = vmatprep.subr.bf16.mxu0 0
    %928 = vmatpush1.bf16.msra.mxu0 0
    %929 = vmatprep.subr.bf16.mxu0 0
    %930 = vmatpush1.bf16.msra.mxu0 0
    %931 = vmatprep.subr.bf16.mxu0 0
    %932 = vmatpush1.bf16.msra.mxu0 0
    %933 = vmatprep.subr.bf16.mxu0 0
    %934 = vmatpush1.bf16.msra.mxu0 0
    %935 = vmatprep.subr.bf16.mxu0 0
    %936 = vmatpush1.bf16.msra.mxu0 0
    %937 = vmatprep.subr.bf16.mxu0 0
    %938 = vmatpush1.bf16.msra.mxu0 0
    %939 = vmatprep.mubr.bf16.mxu0 0
    %940 = vmatmul.mubr.bf16.gmra.mrb[0].mxu0 %v751
    %v941 = vpop.f32.mrb[0].mxu0
    %v942 = vadd.f32 %v737, %v941
    %v943 = vpop.f32.mrb[0].mxu0
    %v944 = vadd.f32 %v737, %v943
    %v945 = vpop.f32.mrb[0].mxu0
    %v946 = vadd.f32 %v742, %v945
    %v947 = vpop.f32.mrb[0].mxu0
    %v948 = vadd.f32 %v742, %v947
    %949 = vdwg.mxu0
    %v950 = vmax.f32 %v813, 0.0
    %v951 = vmax.f32 %v815, 0.0
    %v952 = vmax.f32 %v856, 0.0
    %v953 = vmax.f32 %v858, 0.0
    %v954 = vmax.f32 %v899, 0.0
    %v955 = vmax.f32 %v901, 0.0
    %v956 = vmax.f32 %v942, 0.0
    %v957 = vmax.f32 %v944, 0.0
    %v958 = vmax.f32 %v817, 0.0
    %v959 = vmax.f32 %v819, 0.0
    %v960 = vmax.f32 %v860, 0.0
    %v961 = vmax.f32 %v862, 0.0
    %v962 = vmax.f32 %v903, 0.0
    %v963 = vmax.f32 %v905, 0.0
    %v964 = vmax.f32 %v946, 0.0
    %v965 = vmax.f32 %v948, 0.0
    %v966 = vpack.c.bf16 %v958, %v950
    %v967 = vpack.c.bf16 %v959, %v951
    %v968 = vpack.c.bf16 %v960, %v952
    %v969 = vpack.c.bf16 %v961, %v953
    %v970 = vpack.c.bf16 %v962, %v954
    %v971 = vpack.c.bf16 %v963, %v955
    %v972 = vpack.c.bf16 %v964, %v956
    %v973 = vpack.c.bf16 %v965, %v957
    %975 = vset.pattern.permute.xlu0 0
    %976 = vperm.xlu0 %975, %v63
    %v977 = vpop.permute.xlu0 %976
    %980 = vset.pattern.permute.xlu0 0
    %981 = vperm.xlu0 %980, %v64
    %v982 = vpop.permute.xlu0 %981
    %v986 = vunpack.c.l.b16 %v61
    %v987 = vunpack.c.l.b16 %v62
    %v988 = vpack.c.b16 %v987, %v986
    %vm989 = vcmask 130048
    %v991 = vsel %vm989, %v988, 0
    %993 = vmatprep.subr.bf16.mxu0 %v967
    %994 = vmatpush1.bf16.msra.mxu0 %v966
    %995 = vmatprep.subr.bf16.mxu0 0
    %996 = vmatpush1.bf16.msra.mxu0 0
    %997 = vmatprep.subr.bf16.mxu0 0
    %998 = vmatpush1.bf16.msra.mxu0 0
    %999 = vmatprep.subr.bf16.mxu0 0
    %1000 = vmatpush1.bf16.msra.mxu0 0
    %1001 = vmatprep.subr.bf16.mxu0 0
    %1002 = vmatpush1.bf16.msra.mxu0 0
    %1003 = vmatprep.subr.bf16.mxu0 0
    %1004 = vmatpush1.bf16.msra.mxu0 0
    %1005 = vmatprep.subr.bf16.mxu0 0
    %1006 = vmatpush1.bf16.msra.mxu0 0
    %1007 = vmatprep.subr.bf16.mxu0 0
    %1008 = vmatpush1.bf16.msra.mxu0 0
    %1009 = vmatprep.subr.bf16.mxu0 0
    %1010 = vmatpush1.bf16.msra.mxu0 0
    %1011 = vmatprep.subr.bf16.mxu0 0
    %1012 = vmatpush1.bf16.msra.mxu0 0
    %1013 = vmatprep.subr.bf16.mxu0 0
    %1014 = vmatpush1.bf16.msra.mxu0 0
    %1015 = vmatprep.subr.bf16.mxu0 0
    %1016 = vmatpush1.bf16.msra.mxu0 0
    %1017 = vmatprep.subr.bf16.mxu0 0
    %1018 = vmatpush1.bf16.msra.mxu0 0
    %1019 = vmatprep.subr.bf16.mxu0 0
    %1020 = vmatpush1.bf16.msra.mxu0 0
    %1021 = vmatprep.subr.bf16.mxu0 0
    %1022 = vmatpush1.bf16.msra.mxu0 0
    %1023 = vmatprep.subr.bf16.mxu0 0
    %1024 = vmatpush1.bf16.msra.mxu0 0
    %1025 = vmatprep.mubr.bf16.mxu0 0
    %1026 = vmatmul.mubr.bf16.gmra.mrb[0].mxu0 %v991
    %v1027 = vpop.f32.mrb[0].mxu0
    %v1028 = vadd.f32 %v977, %v1027
    %v1029 = vpop.f32.mrb[0].mxu0
    %v1030 = vadd.f32 %v977, %v1029
    %v1031 = vpop.f32.mrb[0].mxu0
    %v1032 = vadd.f32 %v982, %v1031
    %v1033 = vpop.f32.mrb[0].mxu0
    %v1034 = vadd.f32 %v982, %v1033
    %1035 = vdwg.mxu0
    %1036 = vmatprep.subr.bf16.mxu0 %v969
    %1037 = vmatpush1.bf16.msra.mxu0 %v968
    %1038 = vmatprep.subr.bf16.mxu0 0
    %1039 = vmatpush1.bf16.msra.mxu0 0
    %1040 = vmatprep.subr.bf16.mxu0 0
    %1041 = vmatpush1.bf16.msra.mxu0 0
    %1042 = vmatprep.subr.bf16.mxu0 0
    %1043 = vmatpush1.bf16.msra.mxu0 0
    %1044 = vmatprep.subr.bf16.mxu0 0
    %1045 = vmatpush1.bf16.msra.mxu0 0
    %1046 = vmatprep.subr.bf16.mxu0 0
    %1047 = vmatpush1.bf16.msra.mxu0 0
    %1048 = vmatprep.subr.bf16.mxu0 0
    %1049 = vmatpush1.bf16.msra.mxu0 0
    %1050 = vmatprep.subr.bf16.mxu0 0
    %1051 = vmatpush1.bf16.msra.mxu0 0
    %1052 = vmatprep.subr.bf16.mxu0 0
    %1053 = vmatpush1.bf16.msra.mxu0 0
    %1054 = vmatprep.subr.bf16.mxu0 0
    %1055 = vmatpush1.bf16.msra.mxu0 0
    %1056 = vmatprep.subr.bf16.mxu0 0
    %1057 = vmatpush1.bf16.msra.mxu0 0
    %1058 = vmatprep.subr.bf16.mxu0 0
    %1059 = vmatpush1.bf16.msra.mxu0 0
    %1060 = vmatprep.subr.bf16.mxu0 0
    %1061 = vmatpush1.bf16.msra.mxu0 0
    %1062 = vmatprep.subr.bf16.mxu0 0
    %1063 = vmatpush1.bf16.msra.mxu0 0
    %1064 = vmatprep.subr.bf16.mxu0 0
    %1065 = vmatpush1.bf16.msra.mxu0 0
    %1066 = vmatprep.subr.bf16.mxu0 0
    %1067 = vmatpush1.bf16.msra.mxu0 0
    %1068 = vmatprep.mubr.bf16.mxu0 0
    %1069 = vmatmul.mubr.bf16.gmra.mrb[0].mxu0 %v991
    %v1070 = vpop.f32.mrb[0].mxu0
    %v1071 = vadd.f32 %v977, %v1070
    %v1072 = vpop.f32.mrb[0].mxu0
    %v1073 = vadd.f32 %v977, %v1072
    %v1074 = vpop.f32.mrb[0].mxu0
    %v1075 = vadd.f32 %v982, %v1074
    %v1076 = vpop.f32.mrb[0].mxu0
    %v1077 = vadd.f32 %v982, %v1076
    %1078 = vdwg.mxu0
    %1079 = vmatprep.subr.bf16.mxu0 %v971
    %1080 = vmatpush1.bf16.msra.mxu0 %v970
    %1081 = vmatprep.subr.bf16.mxu0 0
    %1082 = vmatpush1.bf16.msra.mxu0 0
    %1083 = vmatprep.subr.bf16.mxu0 0
    %1084 = vmatpush1.bf16.msra.mxu0 0
    %1085 = vmatprep.subr.bf16.mxu0 0
    %1086 = vmatpush1.bf16.msra.mxu0 0
    %1087 = vmatprep.subr.bf16.mxu0 0
    %1088 = vmatpush1.bf16.msra.mxu0 0
    %1089 = vmatprep.subr.bf16.mxu0 0
    %1090 = vmatpush1.bf16.msra.mxu0 0
    %1091 = vmatprep.subr.bf16.mxu0 0
    %1092 = vmatpush1.bf16.msra.mxu0 0
    %1093 = vmatprep.subr.bf16.mxu0 0
    %1094 = vmatpush1.bf16.msra.mxu0 0
    %1095 = vmatprep.subr.bf16.mxu0 0
    %1096 = vmatpush1.bf16.msra.mxu0 0
    %1097 = vmatprep.subr.bf16.mxu0 0
    %1098 = vmatpush1.bf16.msra.mxu0 0
    %1099 = vmatprep.subr.bf16.mxu0 0
    %1100 = vmatpush1.bf16.msra.mxu0 0
    %1101 = vmatprep.subr.bf16.mxu0 0
    %1102 = vmatpush1.bf16.msra.mxu0 0
    %1103 = vmatprep.subr.bf16.mxu0 0
    %1104 = vmatpush1.bf16.msra.mxu0 0
    %1105 = vmatprep.subr.bf16.mxu0 0
    %1106 = vmatpush1.bf16.msra.mxu0 0
    %1107 = vmatprep.subr.bf16.mxu0 0
    %1108 = vmatpush1.bf16.msra.mxu0 0
    %1109 = vmatprep.subr.bf16.mxu0 0
    %1110 = vmatpush1.bf16.msra.mxu0 0
    %1111 = vmatprep.mubr.bf16.mxu0 0
    %1112 = vmatmul.mubr.bf16.gmra.mrb[0].mxu0 %v991
    %v1113 = vpop.f32.mrb[0].mxu0
    %v1114 = vadd.f32 %v977, %v1113
    %v1115 = vpop.f32.mrb[0].mxu0
    %v1116 = vadd.f32 %v977, %v1115
    %v1117 = vpop.f32.mrb[0].mxu0
    %v1118 = vadd.f32 %v982, %v1117
    %v1119 = vpop.f32.mrb[0].mxu0
    %v1120 = vadd.f32 %v982, %v1119
    %1121 = vdwg.mxu0
    %1122 = vmatprep.subr.bf16.mxu0 %v973
    %1123 = vmatpush1.bf16.msra.mxu0 %v972
    %1124 = vmatprep.subr.bf16.mxu0 0
    %1125 = vmatpush1.bf16.msra.mxu0 0
    %1126 = vmatprep.subr.bf16.mxu0 0
    %1127 = vmatpush1.bf16.msra.mxu0 0
    %1128 = vmatprep.subr.bf16.mxu0 0
    %1129 = vmatpush1.bf16.msra.mxu0 0
    %1130 = vmatprep.subr.bf16.mxu0 0
    %1131 = vmatpush1.bf16.msra.mxu0 0
    %1132 = vmatprep.subr.bf16.mxu0 0
    %1133 = vmatpush1.bf16.msra.mxu0 0
    %1134 = vmatprep.subr.bf16.mxu0 0
    %1135 = vmatpush1.bf16.msra.mxu0 0
    %1136 = vmatprep.subr.bf16.mxu0 0
    %1137 = vmatpush1.bf16.msra.mxu0 0
    %1138 = vmatprep.subr.bf16.mxu0 0
    %1139 = vmatpush1.bf16.msra.mxu0 0
    %1140 = vmatprep.subr.bf16.mxu0 0
    %1141 = vmatpush1.bf16.msra.mxu0 0
    %1142 = vmatprep.subr.bf16.mxu0 0
    %1143 = vmatpush1.bf16.msra.mxu0 0
    %1144 = vmatprep.subr.bf16.mxu0 0
    %1145 = vmatpush1.bf16.msra.mxu0 0
    %1146 = vmatprep.subr.bf16.mxu0 0
    %1147 = vmatpush1.bf16.msra.mxu0 0
    %1148 = vmatprep.subr.bf16.mxu0 0
    %1149 = vmatpush1.bf16.msra.mxu0 0
    %1150 = vmatprep.subr.bf16.mxu0 0
    %1151 = vmatpush1.bf16.msra.mxu0 0
    %1152 = vmatprep.subr.bf16.mxu0 0
    %1153 = vmatpush1.bf16.msra.mxu0 0
    %1154 = vmatprep.mubr.bf16.mxu0 0
    %1155 = vmatmul.mubr.bf16.gmra.mrb[0].mxu0 %v991
    %v1156 = vpop.f32.mrb[0].mxu0
    %v1157 = vadd.f32 %v977, %v1156
    %v1158 = vpop.f32.mrb[0].mxu0
    %v1159 = vadd.f32 %v977, %v1158
    %v1160 = vpop.f32.mrb[0].mxu0
    %v1161 = vadd.f32 %v982, %v1160
    %v1162 = vpop.f32.mrb[0].mxu0
    %v1163 = vadd.f32 %v982, %v1162
    %1164 = vdwg.mxu0
    %v1165 = vmax.f32 %v1028, 0.0
    %v1166 = vmax.f32 %v1030, 0.0
    %v1167 = vmax.f32 %v1071, 0.0
    %v1168 = vmax.f32 %v1073, 0.0
    %v1169 = vmax.f32 %v1114, 0.0
    %v1170 = vmax.f32 %v1116, 0.0
    %v1171 = vmax.f32 %v1157, 0.0
    %v1172 = vmax.f32 %v1159, 0.0
    %v1173 = vmax.f32 %v1032, 0.0
    %v1174 = vmax.f32 %v1034, 0.0
    %v1175 = vmax.f32 %v1075, 0.0
    %v1176 = vmax.f32 %v1077, 0.0
    %v1177 = vmax.f32 %v1118, 0.0
    %v1178 = vmax.f32 %v1120, 0.0
    %v1179 = vmax.f32 %v1161, 0.0
    %v1180 = vmax.f32 %v1163, 0.0
    %v1181 = vpack.c.bf16 %v1173, %v1165
    %v1182 = vpack.c.bf16 %v1174, %v1166
    %v1183 = vpack.c.bf16 %v1175, %v1167
    %v1184 = vpack.c.bf16 %v1176, %v1168
    %v1185 = vpack.c.bf16 %v1177, %v1169
    %v1186 = vpack.c.bf16 %v1178, %v1170
    %v1187 = vpack.c.bf16 %v1179, %v1171
    %v1188 = vpack.c.bf16 %v1180, %v1172
    %1190 = vset.pattern.permute.xlu0 0
    %1191 = vperm.xlu0 %1190, %v69
    %v1192 = vpop.permute.xlu0 %1191
    %1195 = vset.pattern.permute.xlu0 0
    %1196 = vperm.xlu0 %1195, %v70
    %v1197 = vpop.permute.xlu0 %1196
    %1200 = vset.pattern.permute.xlu0 0
    %1201 = vperm.xlu0 %1200, %v71
    %v1202 = vpop.permute.xlu0 %1201
    %1205 = vset.pattern.permute.xlu0 0
    %1206 = vperm.xlu0 %1205, %v72
    %v1207 = vpop.permute.xlu0 %1206
    %v1213 = vunpack.c.l.b16 %v65
    %v1214 = vunpack.c.l.b16 %v66
    %v1215 = vunpack.c.l.b16 %v67
    %v1216 = vunpack.c.l.b16 %v68
    %v1217 = vpack.c.b16 %v1214, %v1213
    %v1218 = vpack.c.b16 %v1216, %v1215
    %v1220 = vsel %vm989, %v1217, 0
    %v1223 = vsel %vm989, %v1218, 0
    %1225 = vmatprep.subr.bf16.mxu0 %v1182
    %1226 = vmatpush1.bf16.msra.mxu0 %v1181
    %1227 = vmatprep.subr.bf16.mxu0 0
    %1228 = vmatpush1.bf16.msra.mxu0 0
    %1229 = vmatprep.subr.bf16.mxu0 0
    %1230 = vmatpush1.bf16.msra.mxu0 0
    %1231 = vmatprep.subr.bf16.mxu0 0
    %1232 = vmatpush1.bf16.msra.mxu0 0
    %1233 = vmatprep.subr.bf16.mxu0 0
    %1234 = vmatpush1.bf16.msra.mxu0 0
    %1235 = vmatprep.subr.bf16.mxu0 0
    %1236 = vmatpush1.bf16.msra.mxu0 0
    %1237 = vmatprep.subr.bf16.mxu0 0
    %1238 = vmatpush1.bf16.msra.mxu0 0
    %1239 = vmatprep.subr.bf16.mxu0 0
    %1240 = vmatpush1.bf16.msra.mxu0 0
    %1241 = vmatprep.subr.bf16.mxu0 0
    %1242 = vmatpush1.bf16.msra.mxu0 0
    %1243 = vmatprep.subr.bf16.mxu0 0
    %1244 = vmatpush1.bf16.msra.mxu0 0
    %1245 = vmatprep.subr.bf16.mxu0 0
    %1246 = vmatpush1.bf16.msra.mxu0 0
    %1247 = vmatprep.subr.bf16.mxu0 0
    %1248 = vmatpush1.bf16.msra.mxu0 0
    %1249 = vmatprep.subr.bf16.mxu0 0
    %1250 = vmatpush1.bf16.msra.mxu0 0
    %1251 = vmatprep.subr.bf16.mxu0 0
    %1252 = vmatpush1.bf16.msra.mxu0 0
    %1253 = vmatprep.subr.bf16.mxu0 0
    %1254 = vmatpush1.bf16.msra.mxu0 0
    %1255 = vmatprep.subr.bf16.mxu0 0
    %1256 = vmatpush1.bf16.msra.mxu0 0
    %1257 = vmatprep.mubr.bf16.mxu0 0
    %1258 = vmatmul.mubr.bf16.gmra.mrb[0].mxu0 %v1220
    %v1259 = vpop.f32.mrb[0].mxu0
    %v1260 = vadd.f32 %v1192, %v1259
    %v1261 = vpop.f32.mrb[0].mxu0
    %v1262 = vadd.f32 %v1192, %v1261
    %v1263 = vpop.f32.mrb[0].mxu0
    %v1264 = vadd.f32 %v1197, %v1263
    %v1265 = vpop.f32.mrb[0].mxu0
    %v1266 = vadd.f32 %v1197, %v1265
    %1267 = vmatprep.mubr.bf16.mxu0 0
    %1268 = vmatmul.mubr.bf16.gmra.mrb[0].mxu0 %v1223
    %v1269 = vpop.f32.mrb[0].mxu0
    %v1270 = vadd.f32 %v1202, %v1269
    %v1271 = vpop.f32.mrb[0].mxu0
    %v1272 = vadd.f32 %v1202, %v1271
    %v1273 = vpop.f32.mrb[0].mxu0
    %v1274 = vadd.f32 %v1207, %v1273
    %v1275 = vpop.f32.mrb[0].mxu0
    %v1276 = vadd.f32 %v1207, %v1275
    %1277 = vdwg.mxu0
    %1278 = vmatprep.subr.bf16.mxu0 %v1184
    %1279 = vmatpush1.bf16.msra.mxu0 %v1183
    %1280 = vmatprep.subr.bf16.mxu0 0
    %1281 = vmatpush1.bf16.msra.mxu0 0
    %1282 = vmatprep.subr.bf16.mxu0 0
    %1283 = vmatpush1.bf16.msra.mxu0 0
    %1284 = vmatprep.subr.bf16.mxu0 0
    %1285 = vmatpush1.bf16.msra.mxu0 0
    %1286 = vmatprep.subr.bf16.mxu0 0
    %1287 = vmatpush1.bf16.msra.mxu0 0
    %1288 = vmatprep.subr.bf16.mxu0 0
    %1289 = vmatpush1.bf16.msra.mxu0 0
    %1290 = vmatprep.subr.bf16.mxu0 0
    %1291 = vmatpush1.bf16.msra.mxu0 0
    %1292 = vmatprep.subr.bf16.mxu0 0
    %1293 = vmatpush1.bf16.msra.mxu0 0
    %1294 = vmatprep.subr.bf16.mxu0 0
    %1295 = vmatpush1.bf16.msra.mxu0 0
    %1296 = vmatprep.subr.bf16.mxu0 0
    %1297 = vmatpush1.bf16.msra.mxu0 0
    %1298 = vmatprep.subr.bf16.mxu0 0
    %1299 = vmatpush1.bf16.msra.mxu0 0
    %1300 = vmatprep.subr.bf16.mxu0 0
    %1301 = vmatpush1.bf16.msra.mxu0 0
    %1302 = vmatprep.subr.bf16.mxu0 0
    %1303 = vmatpush1.bf16.msra.mxu0 0
    %1304 = vmatprep.subr.bf16.mxu0 0
    %1305 = vmatpush1.bf16.msra.mxu0 0
    %1306 = vmatprep.subr.bf16.mxu0 0
    %1307 = vmatpush1.bf16.msra.mxu0 0
    %1308 = vmatprep.subr.bf16.mxu0 0
    %1309 = vmatpush1.bf16.msra.mxu0 0
    %1310 = vmatprep.mubr.bf16.mxu0 0
    %1311 = vmatmul.mubr.bf16.gmra.mrb[0].mxu0 %v1220
    %v1312 = vpop.f32.mrb[0].mxu0
    %v1313 = vadd.f32 %v1192, %v1312
    %v1314 = vpop.f32.mrb[0].mxu0
    %v1315 = vadd.f32 %v1192, %v1314
    %v1316 = vpop.f32.mrb[0].mxu0
    %v1317 = vadd.f32 %v1197, %v1316
    %v1318 = vpop.f32.mrb[0].mxu0
    %v1319 = vadd.f32 %v1197, %v1318
    %1320 = vmatprep.mubr.bf16.mxu0 0
    %1321 = vmatmul.mubr.bf16.gmra.mrb[0].mxu0 %v1223
    %v1322 = vpop.f32.mrb[0].mxu0
    %v1323 = vadd.f32 %v1202, %v1322
    %v1324 = vpop.f32.mrb[0].mxu0
    %v1325 = vadd.f32 %v1202, %v1324
    %v1326 = vpop.f32.mrb[0].mxu0
    %v1327 = vadd.f32 %v1207, %v1326
    %v1328 = vpop.f32.mrb[0].mxu0
    %v1329 = vadd.f32 %v1207, %v1328
    %1330 = vdwg.mxu0
    %1331 = vmatprep.subr.bf16.mxu0 %v1186
    %1332 = vmatpush1.bf16.msra.mxu0 %v1185
    %1333 = vmatprep.subr.bf16.mxu0 0
    %1334 = vmatpush1.bf16.msra.mxu0 0
    %1335 = vmatprep.subr.bf16.mxu0 0
    %1336 = vmatpush1.bf16.msra.mxu0 0
    %1337 = vmatprep.subr.bf16.mxu0 0
    %1338 = vmatpush1.bf16.msra.mxu0 0
    %1339 = vmatprep.subr.bf16.mxu0 0
    %1340 = vmatpush1.bf16.msra.mxu0 0
    %1341 = vmatprep.subr.bf16.mxu0 0
    %1342 = vmatpush1.bf16.msra.mxu0 0
    %1343 = vmatprep.subr.bf16.mxu0 0
    %1344 = vmatpush1.bf16.msra.mxu0 0
    %1345 = vmatprep.subr.bf16.mxu0 0
    %1346 = vmatpush1.bf16.msra.mxu0 0
    %1347 = vmatprep.subr.bf16.mxu0 0
    %1348 = vmatpush1.bf16.msra.mxu0 0
    %1349 = vmatprep.subr.bf16.mxu0 0
    %1350 = vmatpush1.bf16.msra.mxu0 0
    %1351 = vmatprep.subr.bf16.mxu0 0
    %1352 = vmatpush1.bf16.msra.mxu0 0
    %1353 = vmatprep.subr.bf16.mxu0 0
    %1354 = vmatpush1.bf16.msra.mxu0 0
    %1355 = vmatprep.subr.bf16.mxu0 0
    %1356 = vmatpush1.bf16.msra.mxu0 0
    %1357 = vmatprep.subr.bf16.mxu0 0
    %1358 = vmatpush1.bf16.msra.mxu0 0
    %1359 = vmatprep.subr.bf16.mxu0 0
    %1360 = vmatpush1.bf16.msra.mxu0 0
    %1361 = vmatprep.subr.bf16.mxu0 0
    %1362 = vmatpush1.bf16.msra.mxu0 0
    %1363 = vmatprep.mubr.bf16.mxu0 0
    %1364 = vmatmul.mubr.bf16.gmra.mrb[0].mxu0 %v1220
    %v1365 = vpop.f32.mrb[0].mxu0
    %v1366 = vadd.f32 %v1192, %v1365
    %v1367 = vpop.f32.mrb[0].mxu0
    %v1368 = vadd.f32 %v1192, %v1367
    %v1369 = vpop.f32.mrb[0].mxu0
    %v1370 = vadd.f32 %v1197, %v1369
    %v1371 = vpop.f32.mrb[0].mxu0
    %v1372 = vadd.f32 %v1197, %v1371
    %1373 = vmatprep.mubr.bf16.mxu0 0
    %1374 = vmatmul.mubr.bf16.gmra.mrb[0].mxu0 %v1223
    %v1375 = vpop.f32.mrb[0].mxu0
    %v1376 = vadd.f32 %v1202, %v1375
    %v1377 = vpop.f32.mrb[0].mxu0
    %v1378 = vadd.f32 %v1202, %v1377
    %v1379 = vpop.f32.mrb[0].mxu0
    %v1380 = vadd.f32 %v1207, %v1379
    %v1381 = vpop.f32.mrb[0].mxu0
    %v1382 = vadd.f32 %v1207, %v1381
    %1383 = vdwg.mxu0
    %1384 = vmatprep.subr.bf16.mxu0 %v1188
    %1385 = vmatpush1.bf16.msra.mxu0 %v1187
    %1386 = vmatprep.subr.bf16.mxu0 0
    %1387 = vmatpush1.bf16.msra.mxu0 0
    %1388 = vmatprep.subr.bf16.mxu0 0
    %1389 = vmatpush1.bf16.msra.mxu0 0
    %1390 = vmatprep.subr.bf16.mxu0 0
    %1391 = vmatpush1.bf16.msra.mxu0 0
    %1392 = vmatprep.subr.bf16.mxu0 0
    %1393 = vmatpush1.bf16.msra.mxu0 0
    %1394 = vmatprep.subr.bf16.mxu0 0
    %1395 = vmatpush1.bf16.msra.mxu0 0
    %1396 = vmatprep.subr.bf16.mxu0 0
    %1397 = vmatpush1.bf16.msra.mxu0 0
    %1398 = vmatprep.subr.bf16.mxu0 0
    %1399 = vmatpush1.bf16.msra.mxu0 0
    %1400 = vmatprep.subr.bf16.mxu0 0
    %1401 = vmatpush1.bf16.msra.mxu0 0
    %1402 = vmatprep.subr.bf16.mxu0 0
    %1403 = vmatpush1.bf16.msra.mxu0 0
    %1404 = vmatprep.subr.bf16.mxu0 0
    %1405 = vmatpush1.bf16.msra.mxu0 0
    %1406 = vmatprep.subr.bf16.mxu0 0
    %1407 = vmatpush1.bf16.msra.mxu0 0
    %1408 = vmatprep.subr.bf16.mxu0 0
    %1409 = vmatpush1.bf16.msra.mxu0 0
    %1410 = vmatprep.subr.bf16.mxu0 0
    %1411 = vmatpush1.bf16.msra.mxu0 0
    %1412 = vmatprep.subr.bf16.mxu0 0
    %1413 = vmatpush1.bf16.msra.mxu0 0
    %1414 = vmatprep.subr.bf16.mxu0 0
    %1415 = vmatpush1.bf16.msra.mxu0 0
    %1416 = vmatprep.mubr.bf16.mxu0 0
    %1417 = vmatmul.mubr.bf16.gmra.mrb[0].mxu0 %v1220
    %v1418 = vpop.f32.mrb[0].mxu0
    %v1419 = vadd.f32 %v1192, %v1418
    %v1420 = vpop.f32.mrb[0].mxu0
    %v1421 = vadd.f32 %v1192, %v1420
    %v1422 = vpop.f32.mrb[0].mxu0
    %v1423 = vadd.f32 %v1197, %v1422
    %v1424 = vpop.f32.mrb[0].mxu0
    %v1425 = vadd.f32 %v1197, %v1424
    %1426 = vmatprep.mubr.bf16.mxu0 0
    %1427 = vmatmul.mubr.bf16.gmra.mrb[0].mxu0 %v1223
    %v1428 = vpop.f32.mrb[0].mxu0
    %v1429 = vadd.f32 %v1202, %v1428
    %v1430 = vpop.f32.mrb[0].mxu0
    %v1431 = vadd.f32 %v1202, %v1430
    %v1432 = vpop.f32.mrb[0].mxu0
    %v1433 = vadd.f32 %v1207, %v1432
    %v1434 = vpop.f32.mrb[0].mxu0
    %v1435 = vadd.f32 %v1207, %v1434
    %1436 = vdwg.mxu0
    %v1437 = vmax.f32 %v1260, 0.0
    %v1438 = vmax.f32 %v1262, 0.0
    %v1439 = vmax.f32 %v1313, 0.0
    %v1440 = vmax.f32 %v1315, 0.0
    %v1441 = vmax.f32 %v1366, 0.0
    %v1442 = vmax.f32 %v1368, 0.0
    %v1443 = vmax.f32 %v1419, 0.0
    %v1444 = vmax.f32 %v1421, 0.0
    %v1445 = vmax.f32 %v1264, 0.0
    %v1446 = vmax.f32 %v1266, 0.0
    %v1447 = vmax.f32 %v1317, 0.0
    %v1448 = vmax.f32 %v1319, 0.0
    %v1449 = vmax.f32 %v1370, 0.0
    %v1450 = vmax.f32 %v1372, 0.0
    %v1451 = vmax.f32 %v1423, 0.0
    %v1452 = vmax.f32 %v1425, 0.0
    %v1453 = vmax.f32 %v1270, 0.0
    %v1454 = vmax.f32 %v1272, 0.0
    %v1455 = vmax.f32 %v1323, 0.0
    %v1456 = vmax.f32 %v1325, 0.0
    %v1457 = vmax.f32 %v1376, 0.0
    %v1458 = vmax.f32 %v1378, 0.0
    %v1459 = vmax.f32 %v1429, 0.0
    %v1460 = vmax.f32 %v1431, 0.0
    %v1461 = vmax.f32 %v1274, 0.0
    %v1462 = vmax.f32 %v1276, 0.0
    %v1463 = vmax.f32 %v1327, 0.0
    %v1464 = vmax.f32 %v1329, 0.0
    %v1465 = vmax.f32 %v1380, 0.0
    %v1466 = vmax.f32 %v1382, 0.0
    %v1467 = vmax.f32 %v1433, 0.0
    %v1468 = vmax.f32 %v1435, 0.0
    %vm1469 = vcmp.gt.s32.totalorder %v38, 0
    %v1470 = vsel %vm1469, 1, 0
    %v1471 = vlaneseq
    %v1472 = vshrl.u32 %v1471, 7
    %v1473 = vsub.s32 0, %v1472
    %v1474 = vrot.slane %v1470, %v1473
    %vm1475 = vcmp.eq.s32.totalorder %v1474, 1
    %v1476 = vsel %vm1475, %v1437, 0.0
    %v1477 = vsel %vm1475, %v1445, 0.0
    %v1478 = vsel %vm1475, %v1453, 0.0
    %v1479 = vsel %vm1475, %v1461, 0.0
    %v1480 = vmax.f32 %v1476, 0.0
    %v1481 = vmax.f32 %v1477, 0.0
    %v1482 = vmax.f32 %v1478, 0.0
    %v1483 = vmax.f32 %v1479, 0.0
    %vm1484 = vcmp.gt.s32.totalorder %v38, 1
    %v1485 = vsel %vm1484, 1, 0
    %v1486 = vlaneseq
    %v1487 = vshrl.u32 %v1486, 7
    %v1488 = vsub.s32 0, %v1487
    %v1489 = vrot.slane %v1485, %v1488
    %vm1490 = vcmp.eq.s32.totalorder %v1489, 1
    %v1491 = vsel %vm1490, %v1438, 0.0
    %v1492 = vsel %vm1490, %v1446, 0.0
    %v1493 = vsel %vm1490, %v1454, 0.0
    %v1494 = vsel %vm1490, %v1462, 0.0
    %v1495 = vmax.f32 %v1480, %v1491
    %v1496 = vmax.f32 %v1481, %v1492
    %v1497 = vmax.f32 %v1482, %v1493
    %v1498 = vmax.f32 %v1483, %v1494
    %vm1499 = vcmp.gt.s32.totalorder %v38, 2
    %v1500 = vsel %vm1499, 1, 0
    %v1501 = vlaneseq
    %v1502 = vshrl.u32 %v1501, 7
    %v1503 = vsub.s32 0, %v1502
    %v1504 = vrot.slane %v1500, %v1503
    %vm1505 = vcmp.eq.s32.totalorder %v1504, 1
    %v1506 = vsel %vm1505, %v1439, 0.0
    %v1507 = vsel %vm1505, %v1447, 0.0
    %v1508 = vsel %vm1505, %v1455, 0.0
    %v1509 = vsel %vm1505, %v1463, 0.0
    %v1510 = vmax.f32 %v1495, %v1506
    %v1511 = vmax.f32 %v1496, %v1507
    %v1512 = vmax.f32 %v1497, %v1508
    %v1513 = vmax.f32 %v1498, %v1509
    %vm1514 = vcmp.gt.s32.totalorder %v38, 3
    %v1515 = vsel %vm1514, 1, 0
    %v1516 = vlaneseq
    %v1517 = vshrl.u32 %v1516, 7
    %v1518 = vsub.s32 0, %v1517
    %v1519 = vrot.slane %v1515, %v1518
    %vm1520 = vcmp.eq.s32.totalorder %v1519, 1
    %v1521 = vsel %vm1520, %v1440, 0.0
    %v1522 = vsel %vm1520, %v1448, 0.0
    %v1523 = vsel %vm1520, %v1456, 0.0
    %v1524 = vsel %vm1520, %v1464, 0.0
    %v1525 = vmax.f32 %v1510, %v1521
    %v1526 = vmax.f32 %v1511, %v1522
    %v1527 = vmax.f32 %v1512, %v1523
    %v1528 = vmax.f32 %v1513, %v1524
    %vm1529 = vcmp.gt.s32.totalorder %v38, 4
    %v1530 = vsel %vm1529, 1, 0
    %v1531 = vlaneseq
    %v1532 = vshrl.u32 %v1531, 7
    %v1533 = vsub.s32 0, %v1532
    %v1534 = vrot.slane %v1530, %v1533
    %vm1535 = vcmp.eq.s32.totalorder %v1534, 1
    %v1536 = vsel %vm1535, %v1441, 0.0
    %v1537 = vsel %vm1535, %v1449, 0.0
    %v1538 = vsel %vm1535, %v1457, 0.0
    %v1539 = vsel %vm1535, %v1465, 0.0
    %v1540 = vmax.f32 %v1525, %v1536
    %v1541 = vmax.f32 %v1526, %v1537
    %v1542 = vmax.f32 %v1527, %v1538
    %v1543 = vmax.f32 %v1528, %v1539
    %vm1544 = vcmp.gt.s32.totalorder %v38, 5
    %v1545 = vsel %vm1544, 1, 0
    %v1546 = vlaneseq
    %v1547 = vshrl.u32 %v1546, 7
    %v1548 = vsub.s32 0, %v1547
    %v1549 = vrot.slane %v1545, %v1548
    %vm1550 = vcmp.eq.s32.totalorder %v1549, 1
    %v1551 = vsel %vm1550, %v1442, 0.0
    %v1552 = vsel %vm1550, %v1450, 0.0
    %v1553 = vsel %vm1550, %v1458, 0.0
    %v1554 = vsel %vm1550, %v1466, 0.0
    %v1555 = vmax.f32 %v1540, %v1551
    %v1556 = vmax.f32 %v1541, %v1552
    %v1557 = vmax.f32 %v1542, %v1553
    %v1558 = vmax.f32 %v1543, %v1554
    %vm1559 = vcmp.gt.s32.totalorder %v38, 6
    %v1560 = vsel %vm1559, 1, 0
    %v1561 = vlaneseq
    %v1562 = vshrl.u32 %v1561, 7
    %v1563 = vsub.s32 0, %v1562
    %v1564 = vrot.slane %v1560, %v1563
    %vm1565 = vcmp.eq.s32.totalorder %v1564, 1
    %v1566 = vsel %vm1565, %v1443, 0.0
    %v1567 = vsel %vm1565, %v1451, 0.0
    %v1568 = vsel %vm1565, %v1459, 0.0
    %v1569 = vsel %vm1565, %v1467, 0.0
    %v1570 = vmax.f32 %v1555, %v1566
    %v1571 = vmax.f32 %v1556, %v1567
    %v1572 = vmax.f32 %v1557, %v1568
    %v1573 = vmax.f32 %v1558, %v1569
    %vm1574 = vcmp.gt.s32.totalorder %v38, 7
    %v1575 = vsel %vm1574, 1, 0
    %v1576 = vlaneseq
    %v1577 = vshrl.u32 %v1576, 7
    %v1578 = vsub.s32 0, %v1577
    %v1579 = vrot.slane %v1575, %v1578
    %vm1580 = vcmp.eq.s32.totalorder %v1579, 1
    %v1581 = vsel %vm1580, %v1444, 0.0
    %v1582 = vsel %vm1580, %v1452, 0.0
    %v1583 = vsel %vm1580, %v1460, 0.0
    %v1584 = vsel %vm1580, %v1468, 0.0
    %v1585 = vmax.f32 %v1570, %v1581
    %v1586 = vmax.f32 %v1571, %v1582
    %v1587 = vmax.f32 %v1572, %v1583
    %v1588 = vmax.f32 %v1573, %v1584
    %s1589 = scalar_lea.vmem %s0, 8
    %v1590 = vld [vmem:[%s1589] sm:$0xff]
    %v1591 = vlaneseq
    %v1592 = vshrl.u32 %v1591, 7
    %v1593 = vsub.s32 0, %v1592
    %v1594 = vrot.slane %v1590, %v1593
    %v1595 = vlaneseq
    %v1596 = vshrl.u32 %v1595, 7
    %v1597 = vsub.s32 1, %v1596
    %v1598 = vrot.slane %v1590, %v1597
    %v1599 = vlaneseq
    %v1600 = vshrl.u32 %v1599, 7
    %v1601 = vsub.s32 2, %v1600
    %v1602 = vrot.slane %v1590, %v1601
    %v1603 = vlaneseq
    %v1604 = vshrl.u32 %v1603, 7
    %v1605 = vsub.s32 3, %v1604
    %v1606 = vrot.slane %v1590, %v1605
    %v1607 = vlaneseq
    %v1608 = vshrl.u32 %v1607, 7
    %v1609 = vsub.s32 4, %v1608
    %v1610 = vrot.slane %v1590, %v1609
    %v1611 = vlaneseq
    %v1612 = vshrl.u32 %v1611, 7
    %v1613 = vsub.s32 5, %v1612
    %v1614 = vrot.slane %v1590, %v1613
    %v1615 = vlaneseq
    %v1616 = vshrl.u32 %v1615, 7
    %v1617 = vsub.s32 6, %v1616
    %v1618 = vrot.slane %v1590, %v1617
    %v1619 = vlaneseq
    %v1620 = vshrl.u32 %v1619, 7
    %v1621 = vsub.s32 7, %v1620
    %v1622 = vrot.slane %v1590, %v1621
    %vm1623 = vcmp.eq.s32.totalorder %v41, %v1594
    %vm1624 = vcmp.eq.s32.totalorder %v41, %v1598
    %vm1625 = vcmp.eq.s32.totalorder %v41, %v1602
    %vm1626 = vcmp.eq.s32.totalorder %v41, %v1606
    %vm1627 = vcmp.eq.s32.totalorder %v41, %v1610
    %vm1628 = vcmp.eq.s32.totalorder %v41, %v1614
    %vm1629 = vcmp.eq.s32.totalorder %v41, %v1618
    %vm1630 = vcmp.eq.s32.totalorder %v41, %v1622
    %vm1631 = vcmp.eq.s32.totalorder %v42, %v1594
    %vm1632 = vcmp.eq.s32.totalorder %v42, %v1598
    %vm1633 = vcmp.eq.s32.totalorder %v42, %v1602
    %vm1634 = vcmp.eq.s32.totalorder %v42, %v1606
    %vm1635 = vcmp.eq.s32.totalorder %v42, %v1610
    %vm1636 = vcmp.eq.s32.totalorder %v42, %v1614
    %vm1637 = vcmp.eq.s32.totalorder %v42, %v1618
    %vm1638 = vcmp.eq.s32.totalorder %v42, %v1622
    %vm1639 = vcmp.eq.s32.totalorder %v43, %v1594
    %vm1640 = vcmp.eq.s32.totalorder %v43, %v1598
    %vm1641 = vcmp.eq.s32.totalorder %v43, %v1602
    %vm1642 = vcmp.eq.s32.totalorder %v43, %v1606
    %vm1643 = vcmp.eq.s32.totalorder %v43, %v1610
    %vm1644 = vcmp.eq.s32.totalorder %v43, %v1614
    %vm1645 = vcmp.eq.s32.totalorder %v43, %v1618
    %vm1646 = vcmp.eq.s32.totalorder %v43, %v1622
    %vm1647 = vcmp.eq.s32.totalorder %v44, %v1594
    %vm1648 = vcmp.eq.s32.totalorder %v44, %v1598
    %vm1649 = vcmp.eq.s32.totalorder %v44, %v1602
    %vm1650 = vcmp.eq.s32.totalorder %v44, %v1606
    %vm1651 = vcmp.eq.s32.totalorder %v44, %v1610
    %vm1652 = vcmp.eq.s32.totalorder %v44, %v1614
    %vm1653 = vcmp.eq.s32.totalorder %v44, %v1618
    %vm1654 = vcmp.eq.s32.totalorder %v44, %v1622
    %vm1655 = vcmp.eq.s32.totalorder %v45, %v1594
    %vm1656 = vcmp.eq.s32.totalorder %v45, %v1598
    %vm1657 = vcmp.eq.s32.totalorder %v45, %v1602
    %vm1658 = vcmp.eq.s32.totalorder %v45, %v1606
    %vm1659 = vcmp.eq.s32.totalorder %v45, %v1610
    %vm1660 = vcmp.eq.s32.totalorder %v45, %v1614
    %vm1661 = vcmp.eq.s32.totalorder %v45, %v1618
    %vm1662 = vcmp.eq.s32.totalorder %v45, %v1622
    %vm1663 = vcmp.eq.s32.totalorder %v46, %v1594
    %vm1664 = vcmp.eq.s32.totalorder %v46, %v1598
    %vm1665 = vcmp.eq.s32.totalorder %v46, %v1602
    %vm1666 = vcmp.eq.s32.totalorder %v46, %v1606
    %vm1667 = vcmp.eq.s32.totalorder %v46, %v1610
    %vm1668 = vcmp.eq.s32.totalorder %v46, %v1614
    %vm1669 = vcmp.eq.s32.totalorder %v46, %v1618
    %vm1670 = vcmp.eq.s32.totalorder %v46, %v1622
    %vm1671 = vcmp.eq.s32.totalorder %v47, %v1594
    %vm1672 = vcmp.eq.s32.totalorder %v47, %v1598
    %vm1673 = vcmp.eq.s32.totalorder %v47, %v1602
    %vm1674 = vcmp.eq.s32.totalorder %v47, %v1606
    %vm1675 = vcmp.eq.s32.totalorder %v47, %v1610
    %vm1676 = vcmp.eq.s32.totalorder %v47, %v1614
    %vm1677 = vcmp.eq.s32.totalorder %v47, %v1618
    %vm1678 = vcmp.eq.s32.totalorder %v47, %v1622
    %vm1679 = vcmp.eq.s32.totalorder %v48, %v1594
    %vm1680 = vcmp.eq.s32.totalorder %v48, %v1598
    %vm1681 = vcmp.eq.s32.totalorder %v48, %v1602
    %vm1682 = vcmp.eq.s32.totalorder %v48, %v1606
    %vm1683 = vcmp.eq.s32.totalorder %v48, %v1610
    %vm1684 = vcmp.eq.s32.totalorder %v48, %v1614
    %vm1685 = vcmp.eq.s32.totalorder %v48, %v1618
    %vm1686 = vcmp.eq.s32.totalorder %v48, %v1622
    %vm1687 = vcmp.eq.s32.totalorder %v49, %v1594
    %vm1688 = vcmp.eq.s32.totalorder %v49, %v1598
    %vm1689 = vcmp.eq.s32.totalorder %v49, %v1602
    %vm1690 = vcmp.eq.s32.totalorder %v49, %v1606
    %vm1691 = vcmp.eq.s32.totalorder %v49, %v1610
    %vm1692 = vcmp.eq.s32.totalorder %v49, %v1614
    %vm1693 = vcmp.eq.s32.totalorder %v49, %v1618
    %vm1694 = vcmp.eq.s32.totalorder %v49, %v1622
    %vm1695 = vcmp.eq.s32.totalorder %v50, %v1594
    %vm1696 = vcmp.eq.s32.totalorder %v50, %v1598
    %vm1697 = vcmp.eq.s32.totalorder %v50, %v1602
    %vm1698 = vcmp.eq.s32.totalorder %v50, %v1606
    %vm1699 = vcmp.eq.s32.totalorder %v50, %v1610
    %vm1700 = vcmp.eq.s32.totalorder %v50, %v1614
    %vm1701 = vcmp.eq.s32.totalorder %v50, %v1618
    %vm1702 = vcmp.eq.s32.totalorder %v50, %v1622
    %vm1703 = vcmp.eq.s32.totalorder %v51, %v1594
    %vm1704 = vcmp.eq.s32.totalorder %v51, %v1598
    %vm1705 = vcmp.eq.s32.totalorder %v51, %v1602
    %vm1706 = vcmp.eq.s32.totalorder %v51, %v1606
    %vm1707 = vcmp.eq.s32.totalorder %v51, %v1610
    %vm1708 = vcmp.eq.s32.totalorder %v51, %v1614
    %vm1709 = vcmp.eq.s32.totalorder %v51, %v1618
    %vm1710 = vcmp.eq.s32.totalorder %v51, %v1622
    %vm1711 = vcmp.eq.s32.totalorder %v52, %v1594
    %vm1712 = vcmp.eq.s32.totalorder %v52, %v1598
    %vm1713 = vcmp.eq.s32.totalorder %v52, %v1602
    %vm1714 = vcmp.eq.s32.totalorder %v52, %v1606
    %vm1715 = vcmp.eq.s32.totalorder %v52, %v1610
    %vm1716 = vcmp.eq.s32.totalorder %v52, %v1614
    %vm1717 = vcmp.eq.s32.totalorder %v52, %v1618
    %vm1718 = vcmp.eq.s32.totalorder %v52, %v1622
    %vm1719 = vcmp.eq.s32.totalorder %v53, %v1594
    %vm1720 = vcmp.eq.s32.totalorder %v53, %v1598
    %vm1721 = vcmp.eq.s32.totalorder %v53, %v1602
    %vm1722 = vcmp.eq.s32.totalorder %v53, %v1606
    %vm1723 = vcmp.eq.s32.totalorder %v53, %v1610
    %vm1724 = vcmp.eq.s32.totalorder %v53, %v1614
    %vm1725 = vcmp.eq.s32.totalorder %v53, %v1618
    %vm1726 = vcmp.eq.s32.totalorder %v53, %v1622
    %vm1727 = vcmp.eq.s32.totalorder %v54, %v1594
    %vm1728 = vcmp.eq.s32.totalorder %v54, %v1598
    %vm1729 = vcmp.eq.s32.totalorder %v54, %v1602
    %vm1730 = vcmp.eq.s32.totalorder %v54, %v1606
    %vm1731 = vcmp.eq.s32.totalorder %v54, %v1610
    %vm1732 = vcmp.eq.s32.totalorder %v54, %v1614
    %vm1733 = vcmp.eq.s32.totalorder %v54, %v1618
    %vm1734 = vcmp.eq.s32.totalorder %v54, %v1622
    %vm1735 = vcmp.eq.s32.totalorder %v55, %v1594
    %vm1736 = vcmp.eq.s32.totalorder %v55, %v1598
    %vm1737 = vcmp.eq.s32.totalorder %v55, %v1602
    %vm1738 = vcmp.eq.s32.totalorder %v55, %v1606
    %vm1739 = vcmp.eq.s32.totalorder %v55, %v1610
    %vm1740 = vcmp.eq.s32.totalorder %v55, %v1614
    %vm1741 = vcmp.eq.s32.totalorder %v55, %v1618
    %vm1742 = vcmp.eq.s32.totalorder %v55, %v1622
    %vm1743 = vcmp.eq.s32.totalorder %v56, %v1594
    %vm1744 = vcmp.eq.s32.totalorder %v56, %v1598
    %vm1745 = vcmp.eq.s32.totalorder %v56, %v1602
    %vm1746 = vcmp.eq.s32.totalorder %v56, %v1606
    %vm1747 = vcmp.eq.s32.totalorder %v56, %v1610
    %vm1748 = vcmp.eq.s32.totalorder %v56, %v1614
    %vm1749 = vcmp.eq.s32.totalorder %v56, %v1618
    %vm1750 = vcmp.eq.s32.totalorder %v56, %v1622
    %v1751 = vsel %vm1623, 1, 0
    %v1752 = vsel %vm1624, 1, 0
    %v1753 = vsel %vm1625, 1, 0
    %v1754 = vsel %vm1626, 1, 0
    %v1755 = vsel %vm1627, 1, 0
    %v1756 = vsel %vm1628, 1, 0
    %v1757 = vsel %vm1629, 1, 0
    %v1758 = vsel %vm1630, 1, 0
    %v1759 = vsel %vm1631, 1, 0
    %v1760 = vsel %vm1632, 1, 0
    %v1761 = vsel %vm1633, 1, 0
    %v1762 = vsel %vm1634, 1, 0
    %v1763 = vsel %vm1635, 1, 0
    %v1764 = vsel %vm1636, 1, 0
    %v1765 = vsel %vm1637, 1, 0
    %v1766 = vsel %vm1638, 1, 0
    %v1767 = vsel %vm1639, 1, 0
    %v1768 = vsel %vm1640, 1, 0
    %v1769 = vsel %vm1641, 1, 0
    %v1770 = vsel %vm1642, 1, 0
    %v1771 = vsel %vm1643, 1, 0
    %v1772 = vsel %vm1644, 1, 0
    %v1773 = vsel %vm1645, 1, 0
    %v1774 = vsel %vm1646, 1, 0
    %v1775 = vsel %vm1647, 1, 0
    %v1776 = vsel %vm1648, 1, 0
    %v1777 = vsel %vm1649, 1, 0
    %v1778 = vsel %vm1650, 1, 0
    %v1779 = vsel %vm1651, 1, 0
    %v1780 = vsel %vm1652, 1, 0
    %v1781 = vsel %vm1653, 1, 0
    %v1782 = vsel %vm1654, 1, 0
    %v1783 = vsel %vm1655, 1, 0
    %v1784 = vsel %vm1656, 1, 0
    %v1785 = vsel %vm1657, 1, 0
    %v1786 = vsel %vm1658, 1, 0
    %v1787 = vsel %vm1659, 1, 0
    %v1788 = vsel %vm1660, 1, 0
    %v1789 = vsel %vm1661, 1, 0
    %v1790 = vsel %vm1662, 1, 0
    %v1791 = vsel %vm1663, 1, 0
    %v1792 = vsel %vm1664, 1, 0
    %v1793 = vsel %vm1665, 1, 0
    %v1794 = vsel %vm1666, 1, 0
    %v1795 = vsel %vm1667, 1, 0
    %v1796 = vsel %vm1668, 1, 0
    %v1797 = vsel %vm1669, 1, 0
    %v1798 = vsel %vm1670, 1, 0
    %v1799 = vsel %vm1671, 1, 0
    %v1800 = vsel %vm1672, 1, 0
    %v1801 = vsel %vm1673, 1, 0
    %v1802 = vsel %vm1674, 1, 0
    %v1803 = vsel %vm1675, 1, 0
    %v1804 = vsel %vm1676, 1, 0
    %v1805 = vsel %vm1677, 1, 0
    %v1806 = vsel %vm1678, 1, 0
    %v1807 = vsel %vm1679, 1, 0
    %v1808 = vsel %vm1680, 1, 0
    %v1809 = vsel %vm1681, 1, 0
    %v1810 = vsel %vm1682, 1, 0
    %v1811 = vsel %vm1683, 1, 0
    %v1812 = vsel %vm1684, 1, 0
    %v1813 = vsel %vm1685, 1, 0
    %v1814 = vsel %vm1686, 1, 0
    %v1815 = vsel %vm1687, 1, 0
    %v1816 = vsel %vm1688, 1, 0
    %v1817 = vsel %vm1689, 1, 0
    %v1818 = vsel %vm1690, 1, 0
    %v1819 = vsel %vm1691, 1, 0
    %v1820 = vsel %vm1692, 1, 0
    %v1821 = vsel %vm1693, 1, 0
    %v1822 = vsel %vm1694, 1, 0
    %v1823 = vsel %vm1695, 1, 0
    %v1824 = vsel %vm1696, 1, 0
    %v1825 = vsel %vm1697, 1, 0
    %v1826 = vsel %vm1698, 1, 0
    %v1827 = vsel %vm1699, 1, 0
    %v1828 = vsel %vm1700, 1, 0
    %v1829 = vsel %vm1701, 1, 0
    %v1830 = vsel %vm1702, 1, 0
    %v1831 = vsel %vm1703, 1, 0
    %v1832 = vsel %vm1704, 1, 0
    %v1833 = vsel %vm1705, 1, 0
    %v1834 = vsel %vm1706, 1, 0
    %v1835 = vsel %vm1707, 1, 0
    %v1836 = vsel %vm1708, 1, 0
    %v1837 = vsel %vm1709, 1, 0
    %v1838 = vsel %vm1710, 1, 0
    %v1839 = vsel %vm1711, 1, 0
    %v1840 = vsel %vm1712, 1, 0
    %v1841 = vsel %vm1713, 1, 0
    %v1842 = vsel %vm1714, 1, 0
    %v1843 = vsel %vm1715, 1, 0
    %v1844 = vsel %vm1716, 1, 0
    %v1845 = vsel %vm1717, 1, 0
    %v1846 = vsel %vm1718, 1, 0
    %v1847 = vsel %vm1719, 1, 0
    %v1848 = vsel %vm1720, 1, 0
    %v1849 = vsel %vm1721, 1, 0
    %v1850 = vsel %vm1722, 1, 0
    %v1851 = vsel %vm1723, 1, 0
    %v1852 = vsel %vm1724, 1, 0
    %v1853 = vsel %vm1725, 1, 0
    %v1854 = vsel %vm1726, 1, 0
    %v1855 = vsel %vm1727, 1, 0
    %v1856 = vsel %vm1728, 1, 0
    %v1857 = vsel %vm1729, 1, 0
    %v1858 = vsel %vm1730, 1, 0
    %v1859 = vsel %vm1731, 1, 0
    %v1860 = vsel %vm1732, 1, 0
    %v1861 = vsel %vm1733, 1, 0
    %v1862 = vsel %vm1734, 1, 0
    %v1863 = vsel %vm1735, 1, 0
    %v1864 = vsel %vm1736, 1, 0
    %v1865 = vsel %vm1737, 1, 0
    %v1866 = vsel %vm1738, 1, 0
    %v1867 = vsel %vm1739, 1, 0
    %v1868 = vsel %vm1740, 1, 0
    %v1869 = vsel %vm1741, 1, 0
    %v1870 = vsel %vm1742, 1, 0
    %v1871 = vsel %vm1743, 1, 0
    %v1872 = vsel %vm1744, 1, 0
    %v1873 = vsel %vm1745, 1, 0
    %v1874 = vsel %vm1746, 1, 0
    %v1875 = vsel %vm1747, 1, 0
    %v1876 = vsel %vm1748, 1, 0
    %v1877 = vsel %vm1749, 1, 0
    %v1878 = vsel %vm1750, 1, 0
    %v1879 = vcvt.s32.f32 %v1751
    %v1880 = vcvt.s32.f32 %v1752
    %v1881 = vcvt.s32.f32 %v1753
    %v1882 = vcvt.s32.f32 %v1754
    %v1883 = vcvt.s32.f32 %v1755
    %v1884 = vcvt.s32.f32 %v1756
    %v1885 = vcvt.s32.f32 %v1757
    %v1886 = vcvt.s32.f32 %v1758
    %v1887 = vcvt.s32.f32 %v1759
    %v1888 = vcvt.s32.f32 %v1760
    %v1889 = vcvt.s32.f32 %v1761
    %v1890 = vcvt.s32.f32 %v1762
    %v1891 = vcvt.s32.f32 %v1763
    %v1892 = vcvt.s32.f32 %v1764
    %v1893 = vcvt.s32.f32 %v1765
    %v1894 = vcvt.s32.f32 %v1766
    %v1895 = vcvt.s32.f32 %v1767
    %v1896 = vcvt.s32.f32 %v1768
    %v1897 = vcvt.s32.f32 %v1769
    %v1898 = vcvt.s32.f32 %v1770
    %v1899 = vcvt.s32.f32 %v1771
    %v1900 = vcvt.s32.f32 %v1772
    %v1901 = vcvt.s32.f32 %v1773
    %v1902 = vcvt.s32.f32 %v1774
    %v1903 = vcvt.s32.f32 %v1775
    %v1904 = vcvt.s32.f32 %v1776
    %v1905 = vcvt.s32.f32 %v1777
    %v1906 = vcvt.s32.f32 %v1778
    %v1907 = vcvt.s32.f32 %v1779
    %v1908 = vcvt.s32.f32 %v1780
    %v1909 = vcvt.s32.f32 %v1781
    %v1910 = vcvt.s32.f32 %v1782
    %v1911 = vcvt.s32.f32 %v1783
    %v1912 = vcvt.s32.f32 %v1784
    %v1913 = vcvt.s32.f32 %v1785
    %v1914 = vcvt.s32.f32 %v1786
    %v1915 = vcvt.s32.f32 %v1787
    %v1916 = vcvt.s32.f32 %v1788
    %v1917 = vcvt.s32.f32 %v1789
    %v1918 = vcvt.s32.f32 %v1790
    %v1919 = vcvt.s32.f32 %v1791
    %v1920 = vcvt.s32.f32 %v1792
    %v1921 = vcvt.s32.f32 %v1793
    %v1922 = vcvt.s32.f32 %v1794
    %v1923 = vcvt.s32.f32 %v1795
    %v1924 = vcvt.s32.f32 %v1796
    %v1925 = vcvt.s32.f32 %v1797
    %v1926 = vcvt.s32.f32 %v1798
    %v1927 = vcvt.s32.f32 %v1799
    %v1928 = vcvt.s32.f32 %v1800
    %v1929 = vcvt.s32.f32 %v1801
    %v1930 = vcvt.s32.f32 %v1802
    %v1931 = vcvt.s32.f32 %v1803
    %v1932 = vcvt.s32.f32 %v1804
    %v1933 = vcvt.s32.f32 %v1805
    %v1934 = vcvt.s32.f32 %v1806
    %v1935 = vcvt.s32.f32 %v1807
    %v1936 = vcvt.s32.f32 %v1808
    %v1937 = vcvt.s32.f32 %v1809
    %v1938 = vcvt.s32.f32 %v1810
    %v1939 = vcvt.s32.f32 %v1811
    %v1940 = vcvt.s32.f32 %v1812
    %v1941 = vcvt.s32.f32 %v1813
    %v1942 = vcvt.s32.f32 %v1814
    %v1943 = vcvt.s32.f32 %v1815
    %v1944 = vcvt.s32.f32 %v1816
    %v1945 = vcvt.s32.f32 %v1817
    %v1946 = vcvt.s32.f32 %v1818
    %v1947 = vcvt.s32.f32 %v1819
    %v1948 = vcvt.s32.f32 %v1820
    %v1949 = vcvt.s32.f32 %v1821
    %v1950 = vcvt.s32.f32 %v1822
    %v1951 = vcvt.s32.f32 %v1823
    %v1952 = vcvt.s32.f32 %v1824
    %v1953 = vcvt.s32.f32 %v1825
    %v1954 = vcvt.s32.f32 %v1826
    %v1955 = vcvt.s32.f32 %v1827
    %v1956 = vcvt.s32.f32 %v1828
    %v1957 = vcvt.s32.f32 %v1829
    %v1958 = vcvt.s32.f32 %v1830
    %v1959 = vcvt.s32.f32 %v1831
    %v1960 = vcvt.s32.f32 %v1832
    %v1961 = vcvt.s32.f32 %v1833
    %v1962 = vcvt.s32.f32 %v1834
    %v1963 = vcvt.s32.f32 %v1835
    %v1964 = vcvt.s32.f32 %v1836
    %v1965 = vcvt.s32.f32 %v1837
    %v1966 = vcvt.s32.f32 %v1838
    %v1967 = vcvt.s32.f32 %v1839
    %v1968 = vcvt.s32.f32 %v1840
    %v1969 = vcvt.s32.f32 %v1841
    %v1970 = vcvt.s32.f32 %v1842
    %v1971 = vcvt.s32.f32 %v1843
    %v1972 = vcvt.s32.f32 %v1844
    %v1973 = vcvt.s32.f32 %v1845
    %v1974 = vcvt.s32.f32 %v1846
    %v1975 = vcvt.s32.f32 %v1847
    %v1976 = vcvt.s32.f32 %v1848
    %v1977 = vcvt.s32.f32 %v1849
    %v1978 = vcvt.s32.f32 %v1850
    %v1979 = vcvt.s32.f32 %v1851
    %v1980 = vcvt.s32.f32 %v1852
    %v1981 = vcvt.s32.f32 %v1853
    %v1982 = vcvt.s32.f32 %v1854
    %v1983 = vcvt.s32.f32 %v1855
    %v1984 = vcvt.s32.f32 %v1856
    %v1985 = vcvt.s32.f32 %v1857
    %v1986 = vcvt.s32.f32 %v1858
    %v1987 = vcvt.s32.f32 %v1859
    %v1988 = vcvt.s32.f32 %v1860
    %v1989 = vcvt.s32.f32 %v1861
    %v1990 = vcvt.s32.f32 %v1862
    %v1991 = vcvt.s32.f32 %v1863
    %v1992 = vcvt.s32.f32 %v1864
    %v1993 = vcvt.s32.f32 %v1865
    %v1994 = vcvt.s32.f32 %v1866
    %v1995 = vcvt.s32.f32 %v1867
    %v1996 = vcvt.s32.f32 %v1868
    %v1997 = vcvt.s32.f32 %v1869
    %v1998 = vcvt.s32.f32 %v1870
    %v1999 = vcvt.s32.f32 %v1871
    %v2000 = vcvt.s32.f32 %v1872
    %v2001 = vcvt.s32.f32 %v1873
    %v2002 = vcvt.s32.f32 %v1874
    %v2003 = vcvt.s32.f32 %v1875
    %v2004 = vcvt.s32.f32 %v1876
    %v2005 = vcvt.s32.f32 %v1877
    %v2006 = vcvt.s32.f32 %v1878
    %v2007 = vpack.c.bf16 %v1887, %v1879
    %v2008 = vpack.c.bf16 %v1888, %v1880
    %v2009 = vpack.c.bf16 %v1889, %v1881
    %v2010 = vpack.c.bf16 %v1890, %v1882
    %v2011 = vpack.c.bf16 %v1891, %v1883
    %v2012 = vpack.c.bf16 %v1892, %v1884
    %v2013 = vpack.c.bf16 %v1893, %v1885
    %v2014 = vpack.c.bf16 %v1894, %v1886
    %v2015 = vpack.c.bf16 %v1903, %v1895
    %v2016 = vpack.c.bf16 %v1904, %v1896
    %v2017 = vpack.c.bf16 %v1905, %v1897
    %v2018 = vpack.c.bf16 %v1906, %v1898
    %v2019 = vpack.c.bf16 %v1907, %v1899
    %v2020 = vpack.c.bf16 %v1908, %v1900
    %v2021 = vpack.c.bf16 %v1909, %v1901
    %v2022 = vpack.c.bf16 %v1910, %v1902
    %v2023 = vpack.c.bf16 %v1919, %v1911
    %v2024 = vpack.c.bf16 %v1920, %v1912
    %v2025 = vpack.c.bf16 %v1921, %v1913
    %v2026 = vpack.c.bf16 %v1922, %v1914
    %v2027 = vpack.c.bf16 %v1923, %v1915
    %v2028 = vpack.c.bf16 %v1924, %v1916
    %v2029 = vpack.c.bf16 %v1925, %v1917
    %v2030 = vpack.c.bf16 %v1926, %v1918
    %v2031 = vpack.c.bf16 %v1935, %v1927
    %v2032 = vpack.c.bf16 %v1936, %v1928
    %v2033 = vpack.c.bf16 %v1937, %v1929
    %v2034 = vpack.c.bf16 %v1938, %v1930
    %v2035 = vpack.c.bf16 %v1939, %v1931
    %v2036 = vpack.c.bf16 %v1940, %v1932
    %v2037 = vpack.c.bf16 %v1941, %v1933
    %v2038 = vpack.c.bf16 %v1942, %v1934
    %v2039 = vpack.c.bf16 %v1951, %v1943
    %v2040 = vpack.c.bf16 %v1952, %v1944
    %v2041 = vpack.c.bf16 %v1953, %v1945
    %v2042 = vpack.c.bf16 %v1954, %v1946
    %v2043 = vpack.c.bf16 %v1955, %v1947
    %v2044 = vpack.c.bf16 %v1956, %v1948
    %v2045 = vpack.c.bf16 %v1957, %v1949
    %v2046 = vpack.c.bf16 %v1958, %v1950
    %v2047 = vpack.c.bf16 %v1967, %v1959
    %v2048 = vpack.c.bf16 %v1968, %v1960
    %v2049 = vpack.c.bf16 %v1969, %v1961
    %v2050 = vpack.c.bf16 %v1970, %v1962
    %v2051 = vpack.c.bf16 %v1971, %v1963
    %v2052 = vpack.c.bf16 %v1972, %v1964
    %v2053 = vpack.c.bf16 %v1973, %v1965
    %v2054 = vpack.c.bf16 %v1974, %v1966
    %v2055 = vpack.c.bf16 %v1983, %v1975
    %v2056 = vpack.c.bf16 %v1984, %v1976
    %v2057 = vpack.c.bf16 %v1985, %v1977
    %v2058 = vpack.c.bf16 %v1986, %v1978
    %v2059 = vpack.c.bf16 %v1987, %v1979
    %v2060 = vpack.c.bf16 %v1988, %v1980
    %v2061 = vpack.c.bf16 %v1989, %v1981
    %v2062 = vpack.c.bf16 %v1990, %v1982
    %v2063 = vpack.c.bf16 %v1999, %v1991
    %v2064 = vpack.c.bf16 %v2000, %v1992
    %v2065 = vpack.c.bf16 %v2001, %v1993
    %v2066 = vpack.c.bf16 %v2002, %v1994
    %v2067 = vpack.c.bf16 %v2003, %v1995
    %v2068 = vpack.c.bf16 %v2004, %v1996
    %v2069 = vpack.c.bf16 %v2005, %v1997
    %v2070 = vpack.c.bf16 %v2006, %v1998
    %2071 = vmatprep.subr.bf16.mxu0 %v2008
    %2072 = vmatpush1.bf16.msra.mxu0 %v2007
    %2073 = vmatprep.subr.bf16.mxu0 %v2016
    %2074 = vmatpush1.bf16.msra.mxu0 %v2015
    %2075 = vmatprep.subr.bf16.mxu0 %v2024
    %2076 = vmatpush1.bf16.msra.mxu0 %v2023
    %2077 = vmatprep.subr.bf16.mxu0 %v2032
    %2078 = vmatpush1.bf16.msra.mxu0 %v2031
    %2079 = vmatprep.subr.bf16.mxu0 %v2040
    %2080 = vmatpush1.bf16.msra.mxu0 %v2039
    %2081 = vmatprep.subr.bf16.mxu0 %v2048
    %2082 = vmatpush1.bf16.msra.mxu0 %v2047
    %2083 = vmatprep.subr.bf16.mxu0 %v2056
    %2084 = vmatpush1.bf16.msra.mxu0 %v2055
    %2085 = vmatprep.subr.bf16.mxu0 %v2064
    %2086 = vmatpush1.bf16.msra.mxu0 %v2063
    %2087 = vmatprep.subr.bf16.mxu0 0
    %2088 = vmatpush1.bf16.msra.mxu0 0
    %2089 = vmatprep.subr.bf16.mxu0 0
    %2090 = vmatpush1.bf16.msra.mxu0 0
    %2091 = vmatprep.subr.bf16.mxu0 0
    %2092 = vmatpush1.bf16.msra.mxu0 0
    %2093 = vmatprep.subr.bf16.mxu0 0
    %2094 = vmatpush1.bf16.msra.mxu0 0
    %2095 = vmatprep.subr.bf16.mxu0 0
    %2096 = vmatpush1.bf16.msra.mxu0 0
    %2097 = vmatprep.subr.bf16.mxu0 0
    %2098 = vmatpush1.bf16.msra.mxu0 0
    %2099 = vmatprep.subr.bf16.mxu0 0
    %2100 = vmatpush1.bf16.msra.mxu0 0
    %2101 = vmatprep.subr.bf16.mxu0 0
    %2102 = vmatpush1.bf16.msra.mxu0 0
    %2103 = vmatprep.mubr.bf16.mxu0 0
    %2104 = vmatmul.mubr.bf16.gmra.mrb[0].mxu0 %v37
    %v2105 = vpop.f32.mrb[0].mxu0
    %v2106 = vadd.f32 0.0, %v2105
    %v2107 = vpop.f32.mrb[0].mxu0
    %v2108 = vadd.f32 0.0, %v2107
    %v2109 = vpop.f32.mrb[0].mxu0
    %v2110 = vpop.f32.mrb[0].mxu0
    %2111 = vdwg.mxu0
    %2112 = vmatprep.subr.bf16.mxu0 %v2010
    %2113 = vmatpush1.bf16.msra.mxu0 %v2009
    %2114 = vmatprep.subr.bf16.mxu0 %v2018
    %2115 = vmatpush1.bf16.msra.mxu0 %v2017
    %2116 = vmatprep.subr.bf16.mxu0 %v2026
    %2117 = vmatpush1.bf16.msra.mxu0 %v2025
    %2118 = vmatprep.subr.bf16.mxu0 %v2034
    %2119 = vmatpush1.bf16.msra.mxu0 %v2033
    %2120 = vmatprep.subr.bf16.mxu0 %v2042
    %2121 = vmatpush1.bf16.msra.mxu0 %v2041
    %2122 = vmatprep.subr.bf16.mxu0 %v2050
    %2123 = vmatpush1.bf16.msra.mxu0 %v2049
    %2124 = vmatprep.subr.bf16.mxu0 %v2058
    %2125 = vmatpush1.bf16.msra.mxu0 %v2057
    %2126 = vmatprep.subr.bf16.mxu0 %v2066
    %2127 = vmatpush1.bf16.msra.mxu0 %v2065
    %2128 = vmatprep.subr.bf16.mxu0 0
    %2129 = vmatpush1.bf16.msra.mxu0 0
    %2130 = vmatprep.subr.bf16.mxu0 0
    %2131 = vmatpush1.bf16.msra.mxu0 0
    %2132 = vmatprep.subr.bf16.mxu0 0
    %2133 = vmatpush1.bf16.msra.mxu0 0
    %2134 = vmatprep.subr.bf16.mxu0 0
    %2135 = vmatpush1.bf16.msra.mxu0 0
    %2136 = vmatprep.subr.bf16.mxu0 0
    %2137 = vmatpush1.bf16.msra.mxu0 0
    %2138 = vmatprep.subr.bf16.mxu0 0
    %2139 = vmatpush1.bf16.msra.mxu0 0
    %2140 = vmatprep.subr.bf16.mxu0 0
    %2141 = vmatpush1.bf16.msra.mxu0 0
    %2142 = vmatprep.subr.bf16.mxu0 0
    %2143 = vmatpush1.bf16.msra.mxu0 0
    %2144 = vmatprep.mubr.bf16.mxu0 0
    %2145 = vmatmul.mubr.bf16.gmra.mrb[0].mxu0 %v37
    %v2146 = vpop.f32.mrb[0].mxu0
    %v2147 = vadd.f32 0.0, %v2146
    %v2148 = vpop.f32.mrb[0].mxu0
    %v2149 = vadd.f32 0.0, %v2148
    %v2150 = vpop.f32.mrb[0].mxu0
    %v2151 = vpop.f32.mrb[0].mxu0
    %2152 = vdwg.mxu0
    %2153 = vmatprep.subr.bf16.mxu0 %v2012
    %2154 = vmatpush1.bf16.msra.mxu0 %v2011
    %2155 = vmatprep.subr.bf16.mxu0 %v2020
    %2156 = vmatpush1.bf16.msra.mxu0 %v2019
    %2157 = vmatprep.subr.bf16.mxu0 %v2028
    %2158 = vmatpush1.bf16.msra.mxu0 %v2027
    %2159 = vmatprep.subr.bf16.mxu0 %v2036
    %2160 = vmatpush1.bf16.msra.mxu0 %v2035
    %2161 = vmatprep.subr.bf16.mxu0 %v2044
    %2162 = vmatpush1.bf16.msra.mxu0 %v2043
    %2163 = vmatprep.subr.bf16.mxu0 %v2052
    %2164 = vmatpush1.bf16.msra.mxu0 %v2051
    %2165 = vmatprep.subr.bf16.mxu0 %v2060
    %2166 = vmatpush1.bf16.msra.mxu0 %v2059
    %2167 = vmatprep.subr.bf16.mxu0 %v2068
    %2168 = vmatpush1.bf16.msra.mxu0 %v2067
    %2169 = vmatprep.subr.bf16.mxu0 0
    %2170 = vmatpush1.bf16.msra.mxu0 0
    %2171 = vmatprep.subr.bf16.mxu0 0
    %2172 = vmatpush1.bf16.msra.mxu0 0
    %2173 = vmatprep.subr.bf16.mxu0 0
    %2174 = vmatpush1.bf16.msra.mxu0 0
    %2175 = vmatprep.subr.bf16.mxu0 0
    %2176 = vmatpush1.bf16.msra.mxu0 0
    %2177 = vmatprep.subr.bf16.mxu0 0
    %2178 = vmatpush1.bf16.msra.mxu0 0
    %2179 = vmatprep.subr.bf16.mxu0 0
    %2180 = vmatpush1.bf16.msra.mxu0 0
    %2181 = vmatprep.subr.bf16.mxu0 0
    %2182 = vmatpush1.bf16.msra.mxu0 0
    %2183 = vmatprep.subr.bf16.mxu0 0
    %2184 = vmatpush1.bf16.msra.mxu0 0
    %2185 = vmatprep.mubr.bf16.mxu0 0
    %2186 = vmatmul.mubr.bf16.gmra.mrb[0].mxu0 %v37
    %v2187 = vpop.f32.mrb[0].mxu0
    %v2188 = vadd.f32 0.0, %v2187
    %v2189 = vpop.f32.mrb[0].mxu0
    %v2190 = vadd.f32 0.0, %v2189
    %v2191 = vpop.f32.mrb[0].mxu0
    %v2192 = vpop.f32.mrb[0].mxu0
    %2193 = vdwg.mxu0
    %2194 = vmatprep.subr.bf16.mxu0 %v2014
    %2195 = vmatpush1.bf16.msra.mxu0 %v2013
    %2196 = vmatprep.subr.bf16.mxu0 %v2022
    %2197 = vmatpush1.bf16.msra.mxu0 %v2021
    %2198 = vmatprep.subr.bf16.mxu0 %v2030
    %2199 = vmatpush1.bf16.msra.mxu0 %v2029
    %2200 = vmatprep.subr.bf16.mxu0 %v2038
    %2201 = vmatpush1.bf16.msra.mxu0 %v2037
    %2202 = vmatprep.subr.bf16.mxu0 %v2046
    %2203 = vmatpush1.bf16.msra.mxu0 %v2045
    %2204 = vmatprep.subr.bf16.mxu0 %v2054
    %2205 = vmatpush1.bf16.msra.mxu0 %v2053
    %2206 = vmatprep.subr.bf16.mxu0 %v2062
    %2207 = vmatpush1.bf16.msra.mxu0 %v2061
    %2208 = vmatprep.subr.bf16.mxu0 %v2070
    %2209 = vmatpush1.bf16.msra.mxu0 %v2069
    %2210 = vmatprep.subr.bf16.mxu0 0
    %2211 = vmatpush1.bf16.msra.mxu0 0
    %2212 = vmatprep.subr.bf16.mxu0 0
    %2213 = vmatpush1.bf16.msra.mxu0 0
    %2214 = vmatprep.subr.bf16.mxu0 0
    %2215 = vmatpush1.bf16.msra.mxu0 0
    %2216 = vmatprep.subr.bf16.mxu0 0
    %2217 = vmatpush1.bf16.msra.mxu0 0
    %2218 = vmatprep.subr.bf16.mxu0 0
    %2219 = vmatpush1.bf16.msra.mxu0 0
    %2220 = vmatprep.subr.bf16.mxu0 0
    %2221 = vmatpush1.bf16.msra.mxu0 0
    %2222 = vmatprep.subr.bf16.mxu0 0
    %2223 = vmatpush1.bf16.msra.mxu0 0
    %2224 = vmatprep.subr.bf16.mxu0 0
    %2225 = vmatpush1.bf16.msra.mxu0 0
    %2226 = vmatprep.mubr.bf16.mxu0 0
    %2227 = vmatmul.mubr.bf16.gmra.mrb[0].mxu0 %v37
    %v2228 = vpop.f32.mrb[0].mxu0
    %v2229 = vadd.f32 0.0, %v2228
    %v2230 = vpop.f32.mrb[0].mxu0
    %v2231 = vadd.f32 0.0, %v2230
    %v2232 = vpop.f32.mrb[0].mxu0
    %v2233 = vpop.f32.mrb[0].mxu0
    %2234 = vdwg.mxu0
    %v2235 = vsub.f32 %v2106, %v39
    %v2236 = vsub.f32 %v2108, %v39
    %v2237 = vsub.f32 %v2147, %v39
    %v2238 = vsub.f32 %v2149, %v39
    %v2239 = vsub.f32 %v2188, %v39
    %v2240 = vsub.f32 %v2190, %v39
    %v2241 = vsub.f32 %v2229, %v39
    %v2242 = vsub.f32 %v2231, %v39
    %v2243 = vpack.c.bf16 %v2235, %v2235
    %v2244 = vpack.c.bf16 %v2236, %v2236
    %v2245 = vpack.c.bf16 %v2237, %v2237
    %v2246 = vpack.c.bf16 %v2238, %v2238
    %v2247 = vpack.c.bf16 %v2239, %v2239
    %v2248 = vpack.c.bf16 %v2240, %v2240
    %v2249 = vpack.c.bf16 %v2241, %v2241
    %v2250 = vpack.c.bf16 %v2242, %v2242
    %v2252 = vsel %vm753, %v2243, 0
    %v2255 = vsel %vm753, %v2244, 0
    %v2258 = vsel %vm753, %v2245, 0
    %v2261 = vsel %vm753, %v2246, 0
    %v2264 = vsel %vm753, %v2247, 0
    %v2267 = vsel %vm753, %v2248, 0
    %v2270 = vsel %vm753, %v2249, 0
    %v2273 = vsel %vm753, %v2250, 0
    %2275 = vmatprep.subr.bf16.mxu0 %v2255
    %2276 = vmatpush1.bf16.msra.mxu0 %v2252
    %2277 = vmatprep.subr.bf16.mxu0 0
    %2278 = vmatpush1.bf16.msra.mxu0 0
    %2279 = vmatprep.subr.bf16.mxu0 0
    %2280 = vmatpush1.bf16.msra.mxu0 0
    %2281 = vmatprep.subr.bf16.mxu0 0
    %2282 = vmatpush1.bf16.msra.mxu0 0
    %2283 = vmatprep.subr.bf16.mxu0 0
    %2284 = vmatpush1.bf16.msra.mxu0 0
    %2285 = vmatprep.subr.bf16.mxu0 0
    %2286 = vmatpush1.bf16.msra.mxu0 0
    %2287 = vmatprep.subr.bf16.mxu0 0
    %2288 = vmatpush1.bf16.msra.mxu0 0
    %2289 = vmatprep.subr.bf16.mxu0 0
    %2290 = vmatpush1.bf16.msra.mxu0 0
    %2291 = vmatprep.subr.bf16.mxu0 0
    %2292 = vmatpush1.bf16.msra.mxu0 0
    %2293 = vmatprep.subr.bf16.mxu0 0
    %2294 = vmatpush1.bf16.msra.mxu0 0
    %2295 = vmatprep.subr.bf16.mxu0 0
    %2296 = vmatpush1.bf16.msra.mxu0 0
    %2297 = vmatprep.subr.bf16.mxu0 0
    %2298 = vmatpush1.bf16.msra.mxu0 0
    %2299 = vmatprep.subr.bf16.mxu0 0
    %2300 = vmatpush1.bf16.msra.mxu0 0
    %2301 = vmatprep.subr.bf16.mxu0 0
    %2302 = vmatpush1.bf16.msra.mxu0 0
    %2303 = vmatprep.subr.bf16.mxu0 0
    %2304 = vmatpush1.bf16.msra.mxu0 0
    %2305 = vmatprep.subr.bf16.mxu0 0
    %2306 = vmatpush1.bf16.msra.mxu0 0
    %2307 = vmatprep.mubr.bf16.mxu0 0
    %2308 = vmatmul.mubr.bf16.gmra.mrb[0].mxu0 %v751
    %v2309 = vpop.f32.mrb[0].mxu0
    %v2310 = vadd.f32 %v737, %v2309
    %v2311 = vpop.f32.mrb[0].mxu0
    %v2312 = vadd.f32 %v737, %v2311
    %v2313 = vpop.f32.mrb[0].mxu0
    %v2314 = vadd.f32 %v742, %v2313
    %v2315 = vpop.f32.mrb[0].mxu0
    %v2316 = vadd.f32 %v742, %v2315
    %2317 = vdwg.mxu0
    %2318 = vmatprep.subr.bf16.mxu0 %v2261
    %2319 = vmatpush1.bf16.msra.mxu0 %v2258
    %2320 = vmatprep.subr.bf16.mxu0 0
    %2321 = vmatpush1.bf16.msra.mxu0 0
    %2322 = vmatprep.subr.bf16.mxu0 0
    %2323 = vmatpush1.bf16.msra.mxu0 0
    %2324 = vmatprep.subr.bf16.mxu0 0
    %2325 = vmatpush1.bf16.msra.mxu0 0
    %2326 = vmatprep.subr.bf16.mxu0 0
    %2327 = vmatpush1.bf16.msra.mxu0 0
    %2328 = vmatprep.subr.bf16.mxu0 0
    %2329 = vmatpush1.bf16.msra.mxu0 0
    %2330 = vmatprep.subr.bf16.mxu0 0
    %2331 = vmatpush1.bf16.msra.mxu0 0
    %2332 = vmatprep.subr.bf16.mxu0 0
    %2333 = vmatpush1.bf16.msra.mxu0 0
    %2334 = vmatprep.subr.bf16.mxu0 0
    %2335 = vmatpush1.bf16.msra.mxu0 0
    %2336 = vmatprep.subr.bf16.mxu0 0
    %2337 = vmatpush1.bf16.msra.mxu0 0
    %2338 = vmatprep.subr.bf16.mxu0 0
    %2339 = vmatpush1.bf16.msra.mxu0 0
    %2340 = vmatprep.subr.bf16.mxu0 0
    %2341 = vmatpush1.bf16.msra.mxu0 0
    %2342 = vmatprep.subr.bf16.mxu0 0
    %2343 = vmatpush1.bf16.msra.mxu0 0
    %2344 = vmatprep.subr.bf16.mxu0 0
    %2345 = vmatpush1.bf16.msra.mxu0 0
    %2346 = vmatprep.subr.bf16.mxu0 0
    %2347 = vmatpush1.bf16.msra.mxu0 0
    %2348 = vmatprep.subr.bf16.mxu0 0
    %2349 = vmatpush1.bf16.msra.mxu0 0
    %2350 = vmatprep.mubr.bf16.mxu0 0
    %2351 = vmatmul.mubr.bf16.gmra.mrb[0].mxu0 %v751
    %v2352 = vpop.f32.mrb[0].mxu0
    %v2353 = vadd.f32 %v737, %v2352
    %v2354 = vpop.f32.mrb[0].mxu0
    %v2355 = vadd.f32 %v737, %v2354
    %v2356 = vpop.f32.mrb[0].mxu0
    %v2357 = vadd.f32 %v742, %v2356
    %v2358 = vpop.f32.mrb[0].mxu0
    %v2359 = vadd.f32 %v742, %v2358
    %2360 = vdwg.mxu0
    %2361 = vmatprep.subr.bf16.mxu0 %v2267
    %2362 = vmatpush1.bf16.msra.mxu0 %v2264
    %2363 = vmatprep.subr.bf16.mxu0 0
    %2364 = vmatpush1.bf16.msra.mxu0 0
    %2365 = vmatprep.subr.bf16.mxu0 0
    %2366 = vmatpush1.bf16.msra.mxu0 0
    %2367 = vmatprep.subr.bf16.mxu0 0
    %2368 = vmatpush1.bf16.msra.mxu0 0
    %2369 = vmatprep.subr.bf16.mxu0 0
    %2370 = vmatpush1.bf16.msra.mxu0 0
    %2371 = vmatprep.subr.bf16.mxu0 0
    %2372 = vmatpush1.bf16.msra.mxu0 0
    %2373 = vmatprep.subr.bf16.mxu0 0
    %2374 = vmatpush1.bf16.msra.mxu0 0
    %2375 = vmatprep.subr.bf16.mxu0 0
    %2376 = vmatpush1.bf16.msra.mxu0 0
    %2377 = vmatprep.subr.bf16.mxu0 0
    %2378 = vmatpush1.bf16.msra.mxu0 0
    %2379 = vmatprep.subr.bf16.mxu0 0
    %2380 = vmatpush1.bf16.msra.mxu0 0
    %2381 = vmatprep.subr.bf16.mxu0 0
    %2382 = vmatpush1.bf16.msra.mxu0 0
    %2383 = vmatprep.subr.bf16.mxu0 0
    %2384 = vmatpush1.bf16.msra.mxu0 0
    %2385 = vmatprep.subr.bf16.mxu0 0
    %2386 = vmatpush1.bf16.msra.mxu0 0
    %2387 = vmatprep.subr.bf16.mxu0 0
    %2388 = vmatpush1.bf16.msra.mxu0 0
    %2389 = vmatprep.subr.bf16.mxu0 0
    %2390 = vmatpush1.bf16.msra.mxu0 0
    %2391 = vmatprep.subr.bf16.mxu0 0
    %2392 = vmatpush1.bf16.msra.mxu0 0
    %2393 = vmatprep.mubr.bf16.mxu0 0
    %2394 = vmatmul.mubr.bf16.gmra.mrb[0].mxu0 %v751
    %v2395 = vpop.f32.mrb[0].mxu0
    %v2396 = vadd.f32 %v737, %v2395
    %v2397 = vpop.f32.mrb[0].mxu0
    %v2398 = vadd.f32 %v737, %v2397
    %v2399 = vpop.f32.mrb[0].mxu0
    %v2400 = vadd.f32 %v742, %v2399
    %v2401 = vpop.f32.mrb[0].mxu0
    %v2402 = vadd.f32 %v742, %v2401
    %2403 = vdwg.mxu0
    %2404 = vmatprep.subr.bf16.mxu0 %v2273
    %2405 = vmatpush1.bf16.msra.mxu0 %v2270
    %2406 = vmatprep.subr.bf16.mxu0 0
    %2407 = vmatpush1.bf16.msra.mxu0 0
    %2408 = vmatprep.subr.bf16.mxu0 0
    %2409 = vmatpush1.bf16.msra.mxu0 0
    %2410 = vmatprep.subr.bf16.mxu0 0
    %2411 = vmatpush1.bf16.msra.mxu0 0
    %2412 = vmatprep.subr.bf16.mxu0 0
    %2413 = vmatpush1.bf16.msra.mxu0 0
    %2414 = vmatprep.subr.bf16.mxu0 0
    %2415 = vmatpush1.bf16.msra.mxu0 0
    %2416 = vmatprep.subr.bf16.mxu0 0
    %2417 = vmatpush1.bf16.msra.mxu0 0
    %2418 = vmatprep.subr.bf16.mxu0 0
    %2419 = vmatpush1.bf16.msra.mxu0 0
    %2420 = vmatprep.subr.bf16.mxu0 0
    %2421 = vmatpush1.bf16.msra.mxu0 0
    %2422 = vmatprep.subr.bf16.mxu0 0
    %2423 = vmatpush1.bf16.msra.mxu0 0
    %2424 = vmatprep.subr.bf16.mxu0 0
    %2425 = vmatpush1.bf16.msra.mxu0 0
    %2426 = vmatprep.subr.bf16.mxu0 0
    %2427 = vmatpush1.bf16.msra.mxu0 0
    %2428 = vmatprep.subr.bf16.mxu0 0
    %2429 = vmatpush1.bf16.msra.mxu0 0
    %2430 = vmatprep.subr.bf16.mxu0 0
    %2431 = vmatpush1.bf16.msra.mxu0 0
    %2432 = vmatprep.subr.bf16.mxu0 0
    %2433 = vmatpush1.bf16.msra.mxu0 0
    %2434 = vmatprep.subr.bf16.mxu0 0
    %2435 = vmatpush1.bf16.msra.mxu0 0
    %2436 = vmatprep.mubr.bf16.mxu0 0
    %2437 = vmatmul.mubr.bf16.gmra.mrb[0].mxu0 %v751
    %v2438 = vpop.f32.mrb[0].mxu0
    %v2439 = vadd.f32 %v737, %v2438
    %v2440 = vpop.f32.mrb[0].mxu0
    %v2441 = vadd.f32 %v737, %v2440
    %v2442 = vpop.f32.mrb[0].mxu0
    %v2443 = vadd.f32 %v742, %v2442
    %v2444 = vpop.f32.mrb[0].mxu0
    %v2445 = vadd.f32 %v742, %v2444
    %2446 = vdwg.mxu0
    %v2447 = vmax.f32 %v2310, 0.0
    %v2448 = vmax.f32 %v2312, 0.0
    %v2449 = vmax.f32 %v2353, 0.0
    %v2450 = vmax.f32 %v2355, 0.0
    %v2451 = vmax.f32 %v2396, 0.0
    %v2452 = vmax.f32 %v2398, 0.0
    %v2453 = vmax.f32 %v2439, 0.0
    %v2454 = vmax.f32 %v2441, 0.0
    %v2455 = vmax.f32 %v2314, 0.0
    %v2456 = vmax.f32 %v2316, 0.0
    %v2457 = vmax.f32 %v2357, 0.0
    %v2458 = vmax.f32 %v2359, 0.0
    %v2459 = vmax.f32 %v2400, 0.0
    %v2460 = vmax.f32 %v2402, 0.0
    %v2461 = vmax.f32 %v2443, 0.0
    %v2462 = vmax.f32 %v2445, 0.0
    %v2463 = vpack.c.bf16 %v2455, %v2447
    %v2464 = vpack.c.bf16 %v2456, %v2448
    %v2465 = vpack.c.bf16 %v2457, %v2449
    %v2466 = vpack.c.bf16 %v2458, %v2450
    %v2467 = vpack.c.bf16 %v2459, %v2451
    %v2468 = vpack.c.bf16 %v2460, %v2452
    %v2469 = vpack.c.bf16 %v2461, %v2453
    %v2470 = vpack.c.bf16 %v2462, %v2454
    %2471 = vmatprep.subr.bf16.mxu0 %v2464
    %2472 = vmatpush1.bf16.msra.mxu0 %v2463
    %2473 = vmatprep.subr.bf16.mxu0 0
    %2474 = vmatpush1.bf16.msra.mxu0 0
    %2475 = vmatprep.subr.bf16.mxu0 0
    %2476 = vmatpush1.bf16.msra.mxu0 0
    %2477 = vmatprep.subr.bf16.mxu0 0
    %2478 = vmatpush1.bf16.msra.mxu0 0
    %2479 = vmatprep.subr.bf16.mxu0 0
    %2480 = vmatpush1.bf16.msra.mxu0 0
    %2481 = vmatprep.subr.bf16.mxu0 0
    %2482 = vmatpush1.bf16.msra.mxu0 0
    %2483 = vmatprep.subr.bf16.mxu0 0
    %2484 = vmatpush1.bf16.msra.mxu0 0
    %2485 = vmatprep.subr.bf16.mxu0 0
    %2486 = vmatpush1.bf16.msra.mxu0 0
    %2487 = vmatprep.subr.bf16.mxu0 0
    %2488 = vmatpush1.bf16.msra.mxu0 0
    %2489 = vmatprep.subr.bf16.mxu0 0
    %2490 = vmatpush1.bf16.msra.mxu0 0
    %2491 = vmatprep.subr.bf16.mxu0 0
    %2492 = vmatpush1.bf16.msra.mxu0 0
    %2493 = vmatprep.subr.bf16.mxu0 0
    %2494 = vmatpush1.bf16.msra.mxu0 0
    %2495 = vmatprep.subr.bf16.mxu0 0
    %2496 = vmatpush1.bf16.msra.mxu0 0
    %2497 = vmatprep.subr.bf16.mxu0 0
    %2498 = vmatpush1.bf16.msra.mxu0 0
    %2499 = vmatprep.subr.bf16.mxu0 0
    %2500 = vmatpush1.bf16.msra.mxu0 0
    %2501 = vmatprep.subr.bf16.mxu0 0
    %2502 = vmatpush1.bf16.msra.mxu0 0
    %2503 = vmatprep.mubr.bf16.mxu0 0
    %2504 = vmatmul.mubr.bf16.gmra.mrb[0].mxu0 %v991
    %v2505 = vpop.f32.mrb[0].mxu0
    %v2506 = vadd.f32 %v977, %v2505
    %v2507 = vpop.f32.mrb[0].mxu0
    %v2508 = vadd.f32 %v977, %v2507
    %v2509 = vpop.f32.mrb[0].mxu0
    %v2510 = vadd.f32 %v982, %v2509
    %v2511 = vpop.f32.mrb[0].mxu0
    %v2512 = vadd.f32 %v982, %v2511
    %2513 = vdwg.mxu0
    %2514 = vmatprep.subr.bf16.mxu0 %v2466
    %2515 = vmatpush1.bf16.msra.mxu0 %v2465
    %2516 = vmatprep.subr.bf16.mxu0 0
    %2517 = vmatpush1.bf16.msra.mxu0 0
    %2518 = vmatprep.subr.bf16.mxu0 0
    %2519 = vmatpush1.bf16.msra.mxu0 0
    %2520 = vmatprep.subr.bf16.mxu0 0
    %2521 = vmatpush1.bf16.msra.mxu0 0
    %2522 = vmatprep.subr.bf16.mxu0 0
    %2523 = vmatpush1.bf16.msra.mxu0 0
    %2524 = vmatprep.subr.bf16.mxu0 0
    %2525 = vmatpush1.bf16.msra.mxu0 0
    %2526 = vmatprep.subr.bf16.mxu0 0
    %2527 = vmatpush1.bf16.msra.mxu0 0
    %2528 = vmatprep.subr.bf16.mxu0 0
    %2529 = vmatpush1.bf16.msra.mxu0 0
    %2530 = vmatprep.subr.bf16.mxu0 0
    %2531 = vmatpush1.bf16.msra.mxu0 0
    %2532 = vmatprep.subr.bf16.mxu0 0
    %2533 = vmatpush1.bf16.msra.mxu0 0
    %2534 = vmatprep.subr.bf16.mxu0 0
    %2535 = vmatpush1.bf16.msra.mxu0 0
    %2536 = vmatprep.subr.bf16.mxu0 0
    %2537 = vmatpush1.bf16.msra.mxu0 0
    %2538 = vmatprep.subr.bf16.mxu0 0
    %2539 = vmatpush1.bf16.msra.mxu0 0
    %2540 = vmatprep.subr.bf16.mxu0 0
    %2541 = vmatpush1.bf16.msra.mxu0 0
    %2542 = vmatprep.subr.bf16.mxu0 0
    %2543 = vmatpush1.bf16.msra.mxu0 0
    %2544 = vmatprep.subr.bf16.mxu0 0
    %2545 = vmatpush1.bf16.msra.mxu0 0
    %2546 = vmatprep.mubr.bf16.mxu0 0
    %2547 = vmatmul.mubr.bf16.gmra.mrb[0].mxu0 %v991
    %v2548 = vpop.f32.mrb[0].mxu0
    %v2549 = vadd.f32 %v977, %v2548
    %v2550 = vpop.f32.mrb[0].mxu0
    %v2551 = vadd.f32 %v977, %v2550
    %v2552 = vpop.f32.mrb[0].mxu0
    %v2553 = vadd.f32 %v982, %v2552
    %v2554 = vpop.f32.mrb[0].mxu0
    %v2555 = vadd.f32 %v982, %v2554
    %2556 = vdwg.mxu0
    %2557 = vmatprep.subr.bf16.mxu0 %v2468
    %2558 = vmatpush1.bf16.msra.mxu0 %v2467
    %2559 = vmatprep.subr.bf16.mxu0 0
    %2560 = vmatpush1.bf16.msra.mxu0 0
    %2561 = vmatprep.subr.bf16.mxu0 0
    %2562 = vmatpush1.bf16.msra.mxu0 0
    %2563 = vmatprep.subr.bf16.mxu0 0
    %2564 = vmatpush1.bf16.msra.mxu0 0
    %2565 = vmatprep.subr.bf16.mxu0 0
    %2566 = vmatpush1.bf16.msra.mxu0 0
    %2567 = vmatprep.subr.bf16.mxu0 0
    %2568 = vmatpush1.bf16.msra.mxu0 0
    %2569 = vmatprep.subr.bf16.mxu0 0
    %2570 = vmatpush1.bf16.msra.mxu0 0
    %2571 = vmatprep.subr.bf16.mxu0 0
    %2572 = vmatpush1.bf16.msra.mxu0 0
    %2573 = vmatprep.subr.bf16.mxu0 0
    %2574 = vmatpush1.bf16.msra.mxu0 0
    %2575 = vmatprep.subr.bf16.mxu0 0
    %2576 = vmatpush1.bf16.msra.mxu0 0
    %2577 = vmatprep.subr.bf16.mxu0 0
    %2578 = vmatpush1.bf16.msra.mxu0 0
    %2579 = vmatprep.subr.bf16.mxu0 0
    %2580 = vmatpush1.bf16.msra.mxu0 0
    %2581 = vmatprep.subr.bf16.mxu0 0
    %2582 = vmatpush1.bf16.msra.mxu0 0
    %2583 = vmatprep.subr.bf16.mxu0 0
    %2584 = vmatpush1.bf16.msra.mxu0 0
    %2585 = vmatprep.subr.bf16.mxu0 0
    %2586 = vmatpush1.bf16.msra.mxu0 0
    %2587 = vmatprep.subr.bf16.mxu0 0
    %2588 = vmatpush1.bf16.msra.mxu0 0
    %2589 = vmatprep.mubr.bf16.mxu0 0
    %2590 = vmatmul.mubr.bf16.gmra.mrb[0].mxu0 %v991
    %v2591 = vpop.f32.mrb[0].mxu0
    %v2592 = vadd.f32 %v977, %v2591
    %v2593 = vpop.f32.mrb[0].mxu0
    %v2594 = vadd.f32 %v977, %v2593
    %v2595 = vpop.f32.mrb[0].mxu0
    %v2596 = vadd.f32 %v982, %v2595
    %v2597 = vpop.f32.mrb[0].mxu0
    %v2598 = vadd.f32 %v982, %v2597
    %2599 = vdwg.mxu0
    %2600 = vmatprep.subr.bf16.mxu0 %v2470
    %2601 = vmatpush1.bf16.msra.mxu0 %v2469
    %2602 = vmatprep.subr.bf16.mxu0 0
    %2603 = vmatpush1.bf16.msra.mxu0 0
    %2604 = vmatprep.subr.bf16.mxu0 0
    %2605 = vmatpush1.bf16.msra.mxu0 0
    %2606 = vmatprep.subr.bf16.mxu0 0
    %2607 = vmatpush1.bf16.msra.mxu0 0
    %2608 = vmatprep.subr.bf16.mxu0 0
    %2609 = vmatpush1.bf16.msra.mxu0 0
    %2610 = vmatprep.subr.bf16.mxu0 0
    %2611 = vmatpush1.bf16.msra.mxu0 0
    %2612 = vmatprep.subr.bf16.mxu0 0
    %2613 = vmatpush1.bf16.msra.mxu0 0
    %2614 = vmatprep.subr.bf16.mxu0 0
    %2615 = vmatpush1.bf16.msra.mxu0 0
    %2616 = vmatprep.subr.bf16.mxu0 0
    %2617 = vmatpush1.bf16.msra.mxu0 0
    %2618 = vmatprep.subr.bf16.mxu0 0
    %2619 = vmatpush1.bf16.msra.mxu0 0
    %2620 = vmatprep.subr.bf16.mxu0 0
    %2621 = vmatpush1.bf16.msra.mxu0 0
    %2622 = vmatprep.subr.bf16.mxu0 0
    %2623 = vmatpush1.bf16.msra.mxu0 0
    %2624 = vmatprep.subr.bf16.mxu0 0
    %2625 = vmatpush1.bf16.msra.mxu0 0
    %2626 = vmatprep.subr.bf16.mxu0 0
    %2627 = vmatpush1.bf16.msra.mxu0 0
    %2628 = vmatprep.subr.bf16.mxu0 0
    %2629 = vmatpush1.bf16.msra.mxu0 0
    %2630 = vmatprep.subr.bf16.mxu0 0
    %2631 = vmatpush1.bf16.msra.mxu0 0
    %2632 = vmatprep.mubr.bf16.mxu0 0
    %2633 = vmatmul.mubr.bf16.gmra.mrb[0].mxu0 %v991
    %v2634 = vpop.f32.mrb[0].mxu0
    %v2635 = vadd.f32 %v977, %v2634
    %v2636 = vpop.f32.mrb[0].mxu0
    %v2637 = vadd.f32 %v977, %v2636
    %v2638 = vpop.f32.mrb[0].mxu0
    %v2639 = vadd.f32 %v982, %v2638
    %v2640 = vpop.f32.mrb[0].mxu0
    %v2641 = vadd.f32 %v982, %v2640
    %2642 = vdwg.mxu0
    %v2643 = vmax.f32 %v2506, 0.0
    %v2644 = vmax.f32 %v2508, 0.0
    %v2645 = vmax.f32 %v2549, 0.0
    %v2646 = vmax.f32 %v2551, 0.0
    %v2647 = vmax.f32 %v2592, 0.0
    %v2648 = vmax.f32 %v2594, 0.0
    %v2649 = vmax.f32 %v2635, 0.0
    %v2650 = vmax.f32 %v2637, 0.0
    %v2651 = vmax.f32 %v2510, 0.0
    %v2652 = vmax.f32 %v2512, 0.0
    %v2653 = vmax.f32 %v2553, 0.0
    %v2654 = vmax.f32 %v2555, 0.0
    %v2655 = vmax.f32 %v2596, 0.0
    %v2656 = vmax.f32 %v2598, 0.0
    %v2657 = vmax.f32 %v2639, 0.0
    %v2658 = vmax.f32 %v2641, 0.0
    %v2659 = vpack.c.bf16 %v2651, %v2643
    %v2660 = vpack.c.bf16 %v2652, %v2644
    %v2661 = vpack.c.bf16 %v2653, %v2645
    %v2662 = vpack.c.bf16 %v2654, %v2646
    %v2663 = vpack.c.bf16 %v2655, %v2647
    %v2664 = vpack.c.bf16 %v2656, %v2648
    %v2665 = vpack.c.bf16 %v2657, %v2649
    %v2666 = vpack.c.bf16 %v2658, %v2650
    %2667 = vmatprep.subr.bf16.mxu0 %v2660
    %2668 = vmatpush1.bf16.msra.mxu0 %v2659
    %2669 = vmatprep.subr.bf16.mxu0 0
    %2670 = vmatpush1.bf16.msra.mxu0 0
    %2671 = vmatprep.subr.bf16.mxu0 0
    %2672 = vmatpush1.bf16.msra.mxu0 0
    %2673 = vmatprep.subr.bf16.mxu0 0
    %2674 = vmatpush1.bf16.msra.mxu0 0
    %2675 = vmatprep.subr.bf16.mxu0 0
    %2676 = vmatpush1.bf16.msra.mxu0 0
    %2677 = vmatprep.subr.bf16.mxu0 0
    %2678 = vmatpush1.bf16.msra.mxu0 0
    %2679 = vmatprep.subr.bf16.mxu0 0
    %2680 = vmatpush1.bf16.msra.mxu0 0
    %2681 = vmatprep.subr.bf16.mxu0 0
    %2682 = vmatpush1.bf16.msra.mxu0 0
    %2683 = vmatprep.subr.bf16.mxu0 0
    %2684 = vmatpush1.bf16.msra.mxu0 0
    %2685 = vmatprep.subr.bf16.mxu0 0
    %2686 = vmatpush1.bf16.msra.mxu0 0
    %2687 = vmatprep.subr.bf16.mxu0 0
    %2688 = vmatpush1.bf16.msra.mxu0 0
    %2689 = vmatprep.subr.bf16.mxu0 0
    %2690 = vmatpush1.bf16.msra.mxu0 0
    %2691 = vmatprep.subr.bf16.mxu0 0
    %2692 = vmatpush1.bf16.msra.mxu0 0
    %2693 = vmatprep.subr.bf16.mxu0 0
    %2694 = vmatpush1.bf16.msra.mxu0 0
    %2695 = vmatprep.subr.bf16.mxu0 0
    %2696 = vmatpush1.bf16.msra.mxu0 0
    %2697 = vmatprep.subr.bf16.mxu0 0
    %2698 = vmatpush1.bf16.msra.mxu0 0
    %2699 = vmatprep.mubr.bf16.mxu0 0
    %2700 = vmatmul.mubr.bf16.gmra.mrb[0].mxu0 %v1220
    %v2701 = vpop.f32.mrb[0].mxu0
    %v2702 = vadd.f32 %v1192, %v2701
    %v2703 = vpop.f32.mrb[0].mxu0
    %v2704 = vadd.f32 %v1192, %v2703
    %v2705 = vpop.f32.mrb[0].mxu0
    %v2706 = vadd.f32 %v1197, %v2705
    %v2707 = vpop.f32.mrb[0].mxu0
    %v2708 = vadd.f32 %v1197, %v2707
    %2709 = vmatprep.mubr.bf16.mxu0 0
    %2710 = vmatmul.mubr.bf16.gmra.mrb[0].mxu0 %v1223
    %v2711 = vpop.f32.mrb[0].mxu0
    %v2712 = vadd.f32 %v1202, %v2711
    %v2713 = vpop.f32.mrb[0].mxu0
    %v2714 = vadd.f32 %v1202, %v2713
    %v2715 = vpop.f32.mrb[0].mxu0
    %v2716 = vadd.f32 %v1207, %v2715
    %v2717 = vpop.f32.mrb[0].mxu0
    %v2718 = vadd.f32 %v1207, %v2717
    %2719 = vdwg.mxu0
    %2720 = vmatprep.subr.bf16.mxu0 %v2662
    %2721 = vmatpush1.bf16.msra.mxu0 %v2661
    %2722 = vmatprep.subr.bf16.mxu0 0
    %2723 = vmatpush1.bf16.msra.mxu0 0
    %2724 = vmatprep.subr.bf16.mxu0 0
    %2725 = vmatpush1.bf16.msra.mxu0 0
    %2726 = vmatprep.subr.bf16.mxu0 0
    %2727 = vmatpush1.bf16.msra.mxu0 0
    %2728 = vmatprep.subr.bf16.mxu0 0
    %2729 = vmatpush1.bf16.msra.mxu0 0
    %2730 = vmatprep.subr.bf16.mxu0 0
    %2731 = vmatpush1.bf16.msra.mxu0 0
    %2732 = vmatprep.subr.bf16.mxu0 0
    %2733 = vmatpush1.bf16.msra.mxu0 0
    %2734 = vmatprep.subr.bf16.mxu0 0
    %2735 = vmatpush1.bf16.msra.mxu0 0
    %2736 = vmatprep.subr.bf16.mxu0 0
    %2737 = vmatpush1.bf16.msra.mxu0 0
    %2738 = vmatprep.subr.bf16.mxu0 0
    %2739 = vmatpush1.bf16.msra.mxu0 0
    %2740 = vmatprep.subr.bf16.mxu0 0
    %2741 = vmatpush1.bf16.msra.mxu0 0
    %2742 = vmatprep.subr.bf16.mxu0 0
    %2743 = vmatpush1.bf16.msra.mxu0 0
    %2744 = vmatprep.subr.bf16.mxu0 0
    %2745 = vmatpush1.bf16.msra.mxu0 0
    %2746 = vmatprep.subr.bf16.mxu0 0
    %2747 = vmatpush1.bf16.msra.mxu0 0
    %2748 = vmatprep.subr.bf16.mxu0 0
    %2749 = vmatpush1.bf16.msra.mxu0 0
    %2750 = vmatprep.subr.bf16.mxu0 0
    %2751 = vmatpush1.bf16.msra.mxu0 0
    %2752 = vmatprep.mubr.bf16.mxu0 0
    %2753 = vmatmul.mubr.bf16.gmra.mrb[0].mxu0 %v1220
    %v2754 = vpop.f32.mrb[0].mxu0
    %v2755 = vadd.f32 %v1192, %v2754
    %v2756 = vpop.f32.mrb[0].mxu0
    %v2757 = vadd.f32 %v1192, %v2756
    %v2758 = vpop.f32.mrb[0].mxu0
    %v2759 = vadd.f32 %v1197, %v2758
    %v2760 = vpop.f32.mrb[0].mxu0
    %v2761 = vadd.f32 %v1197, %v2760
    %2762 = vmatprep.mubr.bf16.mxu0 0
    %2763 = vmatmul.mubr.bf16.gmra.mrb[0].mxu0 %v1223
    %v2764 = vpop.f32.mrb[0].mxu0
    %v2765 = vadd.f32 %v1202, %v2764
    %v2766 = vpop.f32.mrb[0].mxu0
    %v2767 = vadd.f32 %v1202, %v2766
    %v2768 = vpop.f32.mrb[0].mxu0
    %v2769 = vadd.f32 %v1207, %v2768
    %v2770 = vpop.f32.mrb[0].mxu0
    %v2771 = vadd.f32 %v1207, %v2770
    %2772 = vdwg.mxu0
    %2773 = vmatprep.subr.bf16.mxu0 %v2664
    %2774 = vmatpush1.bf16.msra.mxu0 %v2663
    %2775 = vmatprep.subr.bf16.mxu0 0
    %2776 = vmatpush1.bf16.msra.mxu0 0
    %2777 = vmatprep.subr.bf16.mxu0 0
    %2778 = vmatpush1.bf16.msra.mxu0 0
    %2779 = vmatprep.subr.bf16.mxu0 0
    %2780 = vmatpush1.bf16.msra.mxu0 0
    %2781 = vmatprep.subr.bf16.mxu0 0
    %2782 = vmatpush1.bf16.msra.mxu0 0
    %2783 = vmatprep.subr.bf16.mxu0 0
    %2784 = vmatpush1.bf16.msra.mxu0 0
    %2785 = vmatprep.subr.bf16.mxu0 0
    %2786 = vmatpush1.bf16.msra.mxu0 0
    %2787 = vmatprep.subr.bf16.mxu0 0
    %2788 = vmatpush1.bf16.msra.mxu0 0
    %2789 = vmatprep.subr.bf16.mxu0 0
    %2790 = vmatpush1.bf16.msra.mxu0 0
    %2791 = vmatprep.subr.bf16.mxu0 0
    %2792 = vmatpush1.bf16.msra.mxu0 0
    %2793 = vmatprep.subr.bf16.mxu0 0
    %2794 = vmatpush1.bf16.msra.mxu0 0
    %2795 = vmatprep.subr.bf16.mxu0 0
    %2796 = vmatpush1.bf16.msra.mxu0 0
    %2797 = vmatprep.subr.bf16.mxu0 0
    %2798 = vmatpush1.bf16.msra.mxu0 0
    %2799 = vmatprep.subr.bf16.mxu0 0
    %2800 = vmatpush1.bf16.msra.mxu0 0
    %2801 = vmatprep.subr.bf16.mxu0 0
    %2802 = vmatpush1.bf16.msra.mxu0 0
    %2803 = vmatprep.subr.bf16.mxu0 0
    %2804 = vmatpush1.bf16.msra.mxu0 0
    %2805 = vmatprep.mubr.bf16.mxu0 0
    %2806 = vmatmul.mubr.bf16.gmra.mrb[0].mxu0 %v1220
    %v2807 = vpop.f32.mrb[0].mxu0
    %v2808 = vadd.f32 %v1192, %v2807
    %v2809 = vpop.f32.mrb[0].mxu0
    %v2810 = vadd.f32 %v1192, %v2809
    %v2811 = vpop.f32.mrb[0].mxu0
    %v2812 = vadd.f32 %v1197, %v2811
    %v2813 = vpop.f32.mrb[0].mxu0
    %v2814 = vadd.f32 %v1197, %v2813
    %2815 = vmatprep.mubr.bf16.mxu0 0
    %2816 = vmatmul.mubr.bf16.gmra.mrb[0].mxu0 %v1223
    %v2817 = vpop.f32.mrb[0].mxu0
    %v2818 = vadd.f32 %v1202, %v2817
    %v2819 = vpop.f32.mrb[0].mxu0
    %v2820 = vadd.f32 %v1202, %v2819
    %v2821 = vpop.f32.mrb[0].mxu0
    %v2822 = vadd.f32 %v1207, %v2821
    %v2823 = vpop.f32.mrb[0].mxu0
    %v2824 = vadd.f32 %v1207, %v2823
    %2825 = vdwg.mxu0
    %2826 = vmatprep.subr.bf16.mxu0 %v2666
    %2827 = vmatpush1.bf16.msra.mxu0 %v2665
    %2828 = vmatprep.subr.bf16.mxu0 0
    %2829 = vmatpush1.bf16.msra.mxu0 0
    %2830 = vmatprep.subr.bf16.mxu0 0
    %2831 = vmatpush1.bf16.msra.mxu0 0
    %2832 = vmatprep.subr.bf16.mxu0 0
    %2833 = vmatpush1.bf16.msra.mxu0 0
    %2834 = vmatprep.subr.bf16.mxu0 0
    %2835 = vmatpush1.bf16.msra.mxu0 0
    %2836 = vmatprep.subr.bf16.mxu0 0
    %2837 = vmatpush1.bf16.msra.mxu0 0
    %2838 = vmatprep.subr.bf16.mxu0 0
    %2839 = vmatpush1.bf16.msra.mxu0 0
    %2840 = vmatprep.subr.bf16.mxu0 0
    %2841 = vmatpush1.bf16.msra.mxu0 0
    %2842 = vmatprep.subr.bf16.mxu0 0
    %2843 = vmatpush1.bf16.msra.mxu0 0
    %2844 = vmatprep.subr.bf16.mxu0 0
    %2845 = vmatpush1.bf16.msra.mxu0 0
    %2846 = vmatprep.subr.bf16.mxu0 0
    %2847 = vmatpush1.bf16.msra.mxu0 0
    %2848 = vmatprep.subr.bf16.mxu0 0
    %2849 = vmatpush1.bf16.msra.mxu0 0
    %2850 = vmatprep.subr.bf16.mxu0 0
    %2851 = vmatpush1.bf16.msra.mxu0 0
    %2852 = vmatprep.subr.bf16.mxu0 0
    %2853 = vmatpush1.bf16.msra.mxu0 0
    %2854 = vmatprep.subr.bf16.mxu0 0
    %2855 = vmatpush1.bf16.msra.mxu0 0
    %2856 = vmatprep.subr.bf16.mxu0 0
    %2857 = vmatpush1.bf16.msra.mxu0 0
    %2858 = vmatprep.mubr.bf16.mxu0 0
    %2859 = vmatmul.mubr.bf16.gmra.mrb[0].mxu0 %v1220
    %v2860 = vpop.f32.mrb[0].mxu0
    %v2861 = vadd.f32 %v1192, %v2860
    %v2862 = vpop.f32.mrb[0].mxu0
    %v2863 = vadd.f32 %v1192, %v2862
    %v2864 = vpop.f32.mrb[0].mxu0
    %v2865 = vadd.f32 %v1197, %v2864
    %v2866 = vpop.f32.mrb[0].mxu0
    %v2867 = vadd.f32 %v1197, %v2866
    %2868 = vmatprep.mubr.bf16.mxu0 0
    %2869 = vmatmul.mubr.bf16.gmra.mrb[0].mxu0 %v1223
    %v2870 = vpop.f32.mrb[0].mxu0
    %v2871 = vadd.f32 %v1202, %v2870
    %v2872 = vpop.f32.mrb[0].mxu0
    %v2873 = vadd.f32 %v1202, %v2872
    %v2874 = vpop.f32.mrb[0].mxu0
    %v2875 = vadd.f32 %v1207, %v2874
    %v2876 = vpop.f32.mrb[0].mxu0
    %v2877 = vadd.f32 %v1207, %v2876
    %2878 = vdwg.mxu0
    %v2879 = vmax.f32 %v2702, 0.0
    %v2880 = vmax.f32 %v2704, 0.0
    %v2881 = vmax.f32 %v2755, 0.0
    %v2882 = vmax.f32 %v2757, 0.0
    %v2883 = vmax.f32 %v2808, 0.0
    %v2884 = vmax.f32 %v2810, 0.0
    %v2885 = vmax.f32 %v2861, 0.0
    %v2886 = vmax.f32 %v2863, 0.0
    %v2887 = vmax.f32 %v2706, 0.0
    %v2888 = vmax.f32 %v2708, 0.0
    %v2889 = vmax.f32 %v2759, 0.0
    %v2890 = vmax.f32 %v2761, 0.0
    %v2891 = vmax.f32 %v2812, 0.0
    %v2892 = vmax.f32 %v2814, 0.0
    %v2893 = vmax.f32 %v2865, 0.0
    %v2894 = vmax.f32 %v2867, 0.0
    %v2895 = vmax.f32 %v2712, 0.0
    %v2896 = vmax.f32 %v2714, 0.0
    %v2897 = vmax.f32 %v2765, 0.0
    %v2898 = vmax.f32 %v2767, 0.0
    %v2899 = vmax.f32 %v2818, 0.0
    %v2900 = vmax.f32 %v2820, 0.0
    %v2901 = vmax.f32 %v2871, 0.0
    %v2902 = vmax.f32 %v2873, 0.0
    %v2903 = vmax.f32 %v2716, 0.0
    %v2904 = vmax.f32 %v2718, 0.0
    %v2905 = vmax.f32 %v2769, 0.0
    %v2906 = vmax.f32 %v2771, 0.0
    %v2907 = vmax.f32 %v2822, 0.0
    %v2908 = vmax.f32 %v2824, 0.0
    %v2909 = vmax.f32 %v2875, 0.0
    %v2910 = vmax.f32 %v2877, 0.0
    %vm2911 = vcmp.gt.s32.totalorder %v38, 8
    %v2912 = vsel %vm2911, 1, 0
    %v2913 = vlaneseq
    %v2914 = vshrl.u32 %v2913, 7
    %v2915 = vsub.s32 0, %v2914
    %v2916 = vrot.slane %v2912, %v2915
    %vm2917 = vcmp.eq.s32.totalorder %v2916, 1
    %v2918 = vsel %vm2917, %v2879, 0.0
    %v2919 = vsel %vm2917, %v2887, 0.0
    %v2920 = vsel %vm2917, %v2895, 0.0
    %v2921 = vsel %vm2917, %v2903, 0.0
    %v2922 = vmax.f32 %v1585, %v2918
    %v2923 = vmax.f32 %v1586, %v2919
    %v2924 = vmax.f32 %v1587, %v2920
    %v2925 = vmax.f32 %v1588, %v2921
    %vm2926 = vcmp.gt.s32.totalorder %v38, 9
    %v2927 = vsel %vm2926, 1, 0
    %v2928 = vlaneseq
    %v2929 = vshrl.u32 %v2928, 7
    %v2930 = vsub.s32 0, %v2929
    %v2931 = vrot.slane %v2927, %v2930
    %vm2932 = vcmp.eq.s32.totalorder %v2931, 1
    %v2933 = vsel %vm2932, %v2880, 0.0
    %v2934 = vsel %vm2932, %v2888, 0.0
    %v2935 = vsel %vm2932, %v2896, 0.0
    %v2936 = vsel %vm2932, %v2904, 0.0
    %v2937 = vmax.f32 %v2922, %v2933
    %v2938 = vmax.f32 %v2923, %v2934
    %v2939 = vmax.f32 %v2924, %v2935
    %v2940 = vmax.f32 %v2925, %v2936
    %vm2941 = vcmp.gt.s32.totalorder %v38, 10
    %v2942 = vsel %vm2941, 1, 0
    %v2943 = vlaneseq
    %v2944 = vshrl.u32 %v2943, 7
    %v2945 = vsub.s32 0, %v2944
    %v2946 = vrot.slane %v2942, %v2945
    %vm2947 = vcmp.eq.s32.totalorder %v2946, 1
    %v2948 = vsel %vm2947, %v2881, 0.0
    %v2949 = vsel %vm2947, %v2889, 0.0
    %v2950 = vsel %vm2947, %v2897, 0.0
    %v2951 = vsel %vm2947, %v2905, 0.0
    %v2952 = vmax.f32 %v2937, %v2948
    %v2953 = vmax.f32 %v2938, %v2949
    %v2954 = vmax.f32 %v2939, %v2950
    %v2955 = vmax.f32 %v2940, %v2951
    %vm2956 = vcmp.gt.s32.totalorder %v38, 11
    %v2957 = vsel %vm2956, 1, 0
    %v2958 = vlaneseq
    %v2959 = vshrl.u32 %v2958, 7
    %v2960 = vsub.s32 0, %v2959
    %v2961 = vrot.slane %v2957, %v2960
    %vm2962 = vcmp.eq.s32.totalorder %v2961, 1
    %v2963 = vsel %vm2962, %v2882, 0.0
    %v2964 = vsel %vm2962, %v2890, 0.0
    %v2965 = vsel %vm2962, %v2898, 0.0
    %v2966 = vsel %vm2962, %v2906, 0.0
    %v2967 = vmax.f32 %v2952, %v2963
    %v2968 = vmax.f32 %v2953, %v2964
    %v2969 = vmax.f32 %v2954, %v2965
    %v2970 = vmax.f32 %v2955, %v2966
    %vm2971 = vcmp.gt.s32.totalorder %v38, 12
    %v2972 = vsel %vm2971, 1, 0
    %v2973 = vlaneseq
    %v2974 = vshrl.u32 %v2973, 7
    %v2975 = vsub.s32 0, %v2974
    %v2976 = vrot.slane %v2972, %v2975
    %vm2977 = vcmp.eq.s32.totalorder %v2976, 1
    %v2978 = vsel %vm2977, %v2883, 0.0
    %v2979 = vsel %vm2977, %v2891, 0.0
    %v2980 = vsel %vm2977, %v2899, 0.0
    %v2981 = vsel %vm2977, %v2907, 0.0
    %v2982 = vmax.f32 %v2967, %v2978
    %v2983 = vmax.f32 %v2968, %v2979
    %v2984 = vmax.f32 %v2969, %v2980
    %v2985 = vmax.f32 %v2970, %v2981
    %vm2986 = vcmp.gt.s32.totalorder %v38, 13
    %v2987 = vsel %vm2986, 1, 0
    %v2988 = vlaneseq
    %v2989 = vshrl.u32 %v2988, 7
    %v2990 = vsub.s32 0, %v2989
    %v2991 = vrot.slane %v2987, %v2990
    %vm2992 = vcmp.eq.s32.totalorder %v2991, 1
    %v2993 = vsel %vm2992, %v2884, 0.0
    %v2994 = vsel %vm2992, %v2892, 0.0
    %v2995 = vsel %vm2992, %v2900, 0.0
    %v2996 = vsel %vm2992, %v2908, 0.0
    %v2997 = vmax.f32 %v2982, %v2993
    %v2998 = vmax.f32 %v2983, %v2994
    %v2999 = vmax.f32 %v2984, %v2995
    %v3000 = vmax.f32 %v2985, %v2996
    %vm3001 = vcmp.gt.s32.totalorder %v38, 14
    %v3002 = vsel %vm3001, 1, 0
    %v3003 = vlaneseq
    %v3004 = vshrl.u32 %v3003, 7
    %v3005 = vsub.s32 0, %v3004
    %v3006 = vrot.slane %v3002, %v3005
    %vm3007 = vcmp.eq.s32.totalorder %v3006, 1
    %v3008 = vsel %vm3007, %v2885, 0.0
    %v3009 = vsel %vm3007, %v2893, 0.0
    %v3010 = vsel %vm3007, %v2901, 0.0
    %v3011 = vsel %vm3007, %v2909, 0.0
    %v3012 = vmax.f32 %v2997, %v3008
    %v3013 = vmax.f32 %v2998, %v3009
    %v3014 = vmax.f32 %v2999, %v3010
    %v3015 = vmax.f32 %v3000, %v3011
    %vm3016 = vcmp.gt.s32.totalorder %v38, 15
    %v3017 = vsel %vm3016, 1, 0
    %v3018 = vlaneseq
    %v3019 = vshrl.u32 %v3018, 7
    %v3020 = vsub.s32 0, %v3019
    %v3021 = vrot.slane %v3017, %v3020
    %vm3022 = vcmp.eq.s32.totalorder %v3021, 1
    %v3023 = vsel %vm3022, %v2886, 0.0
    %v3024 = vsel %vm3022, %v2894, 0.0
    %v3025 = vsel %vm3022, %v2902, 0.0
    %v3026 = vsel %vm3022, %v2910, 0.0
    %v3027 = vmax.f32 %v3012, %v3023
    %v3028 = vmax.f32 %v3013, %v3024
    %v3029 = vmax.f32 %v3014, %v3025
    %v3030 = vmax.f32 %v3015, %v3026
    %s3031 = scalar_lea.vmem %s0, 16
    %v3032 = vld [vmem:[%s3031] sm:$0xff]
    %v3033 = vlaneseq
    %v3034 = vshrl.u32 %v3033, 7
    %v3035 = vsub.s32 0, %v3034
    %v3036 = vrot.slane %v3032, %v3035
    %v3037 = vlaneseq
    %v3038 = vshrl.u32 %v3037, 7
    %v3039 = vsub.s32 1, %v3038
    %v3040 = vrot.slane %v3032, %v3039
    %v3041 = vlaneseq
    %v3042 = vshrl.u32 %v3041, 7
    %v3043 = vsub.s32 2, %v3042
    %v3044 = vrot.slane %v3032, %v3043
    %v3045 = vlaneseq
    %v3046 = vshrl.u32 %v3045, 7
    %v3047 = vsub.s32 3, %v3046
    %v3048 = vrot.slane %v3032, %v3047
    %v3049 = vlaneseq
    %v3050 = vshrl.u32 %v3049, 7
    %v3051 = vsub.s32 4, %v3050
    %v3052 = vrot.slane %v3032, %v3051
    %v3053 = vlaneseq
    %v3054 = vshrl.u32 %v3053, 7
    %v3055 = vsub.s32 5, %v3054
    %v3056 = vrot.slane %v3032, %v3055
    %v3057 = vlaneseq
    %v3058 = vshrl.u32 %v3057, 7
    %v3059 = vsub.s32 6, %v3058
    %v3060 = vrot.slane %v3032, %v3059
    %v3061 = vlaneseq
    %v3062 = vshrl.u32 %v3061, 7
    %v3063 = vsub.s32 7, %v3062
    %v3064 = vrot.slane %v3032, %v3063
    %vm3065 = vcmp.eq.s32.totalorder %v41, %v3036
    %vm3066 = vcmp.eq.s32.totalorder %v41, %v3040
    %vm3067 = vcmp.eq.s32.totalorder %v41, %v3044
    %vm3068 = vcmp.eq.s32.totalorder %v41, %v3048
    %vm3069 = vcmp.eq.s32.totalorder %v41, %v3052
    %vm3070 = vcmp.eq.s32.totalorder %v41, %v3056
    %vm3071 = vcmp.eq.s32.totalorder %v41, %v3060
    %vm3072 = vcmp.eq.s32.totalorder %v41, %v3064
    %vm3073 = vcmp.eq.s32.totalorder %v42, %v3036
    %vm3074 = vcmp.eq.s32.totalorder %v42, %v3040
    %vm3075 = vcmp.eq.s32.totalorder %v42, %v3044
    %vm3076 = vcmp.eq.s32.totalorder %v42, %v3048
    %vm3077 = vcmp.eq.s32.totalorder %v42, %v3052
    %vm3078 = vcmp.eq.s32.totalorder %v42, %v3056
    %vm3079 = vcmp.eq.s32.totalorder %v42, %v3060
    %vm3080 = vcmp.eq.s32.totalorder %v42, %v3064
    %vm3081 = vcmp.eq.s32.totalorder %v43, %v3036
    %vm3082 = vcmp.eq.s32.totalorder %v43, %v3040
    %vm3083 = vcmp.eq.s32.totalorder %v43, %v3044
    %vm3084 = vcmp.eq.s32.totalorder %v43, %v3048
    %vm3085 = vcmp.eq.s32.totalorder %v43, %v3052
    %vm3086 = vcmp.eq.s32.totalorder %v43, %v3056
    %vm3087 = vcmp.eq.s32.totalorder %v43, %v3060
    %vm3088 = vcmp.eq.s32.totalorder %v43, %v3064
    %vm3089 = vcmp.eq.s32.totalorder %v44, %v3036
    %vm3090 = vcmp.eq.s32.totalorder %v44, %v3040
    %vm3091 = vcmp.eq.s32.totalorder %v44, %v3044
    %vm3092 = vcmp.eq.s32.totalorder %v44, %v3048
    %vm3093 = vcmp.eq.s32.totalorder %v44, %v3052
    %vm3094 = vcmp.eq.s32.totalorder %v44, %v3056
    %vm3095 = vcmp.eq.s32.totalorder %v44, %v3060
    %vm3096 = vcmp.eq.s32.totalorder %v44, %v3064
    %vm3097 = vcmp.eq.s32.totalorder %v45, %v3036
    %vm3098 = vcmp.eq.s32.totalorder %v45, %v3040
    %vm3099 = vcmp.eq.s32.totalorder %v45, %v3044
    %vm3100 = vcmp.eq.s32.totalorder %v45, %v3048
    %vm3101 = vcmp.eq.s32.totalorder %v45, %v3052
    %vm3102 = vcmp.eq.s32.totalorder %v45, %v3056
    %vm3103 = vcmp.eq.s32.totalorder %v45, %v3060
    %vm3104 = vcmp.eq.s32.totalorder %v45, %v3064
    %vm3105 = vcmp.eq.s32.totalorder %v46, %v3036
    %vm3106 = vcmp.eq.s32.totalorder %v46, %v3040
    %vm3107 = vcmp.eq.s32.totalorder %v46, %v3044
    %vm3108 = vcmp.eq.s32.totalorder %v46, %v3048
    %vm3109 = vcmp.eq.s32.totalorder %v46, %v3052
    %vm3110 = vcmp.eq.s32.totalorder %v46, %v3056
    %vm3111 = vcmp.eq.s32.totalorder %v46, %v3060
    %vm3112 = vcmp.eq.s32.totalorder %v46, %v3064
    %vm3113 = vcmp.eq.s32.totalorder %v47, %v3036
    %vm3114 = vcmp.eq.s32.totalorder %v47, %v3040
    %vm3115 = vcmp.eq.s32.totalorder %v47, %v3044
    %vm3116 = vcmp.eq.s32.totalorder %v47, %v3048
    %vm3117 = vcmp.eq.s32.totalorder %v47, %v3052
    %vm3118 = vcmp.eq.s32.totalorder %v47, %v3056
    %vm3119 = vcmp.eq.s32.totalorder %v47, %v3060
    %vm3120 = vcmp.eq.s32.totalorder %v47, %v3064
    %vm3121 = vcmp.eq.s32.totalorder %v48, %v3036
    %vm3122 = vcmp.eq.s32.totalorder %v48, %v3040
    %vm3123 = vcmp.eq.s32.totalorder %v48, %v3044
    %vm3124 = vcmp.eq.s32.totalorder %v48, %v3048
    %vm3125 = vcmp.eq.s32.totalorder %v48, %v3052
    %vm3126 = vcmp.eq.s32.totalorder %v48, %v3056
    %vm3127 = vcmp.eq.s32.totalorder %v48, %v3060
    %vm3128 = vcmp.eq.s32.totalorder %v48, %v3064
    %vm3129 = vcmp.eq.s32.totalorder %v49, %v3036
    %vm3130 = vcmp.eq.s32.totalorder %v49, %v3040
    %vm3131 = vcmp.eq.s32.totalorder %v49, %v3044
    %vm3132 = vcmp.eq.s32.totalorder %v49, %v3048
    %vm3133 = vcmp.eq.s32.totalorder %v49, %v3052
    %vm3134 = vcmp.eq.s32.totalorder %v49, %v3056
    %vm3135 = vcmp.eq.s32.totalorder %v49, %v3060
    %vm3136 = vcmp.eq.s32.totalorder %v49, %v3064
    %vm3137 = vcmp.eq.s32.totalorder %v50, %v3036
    %vm3138 = vcmp.eq.s32.totalorder %v50, %v3040
    %vm3139 = vcmp.eq.s32.totalorder %v50, %v3044
    %vm3140 = vcmp.eq.s32.totalorder %v50, %v3048
    %vm3141 = vcmp.eq.s32.totalorder %v50, %v3052
    %vm3142 = vcmp.eq.s32.totalorder %v50, %v3056
    %vm3143 = vcmp.eq.s32.totalorder %v50, %v3060
    %vm3144 = vcmp.eq.s32.totalorder %v50, %v3064
    %vm3145 = vcmp.eq.s32.totalorder %v51, %v3036
    %vm3146 = vcmp.eq.s32.totalorder %v51, %v3040
    %vm3147 = vcmp.eq.s32.totalorder %v51, %v3044
    %vm3148 = vcmp.eq.s32.totalorder %v51, %v3048
    %vm3149 = vcmp.eq.s32.totalorder %v51, %v3052
    %vm3150 = vcmp.eq.s32.totalorder %v51, %v3056
    %vm3151 = vcmp.eq.s32.totalorder %v51, %v3060
    %vm3152 = vcmp.eq.s32.totalorder %v51, %v3064
    %vm3153 = vcmp.eq.s32.totalorder %v52, %v3036
    %vm3154 = vcmp.eq.s32.totalorder %v52, %v3040
    %vm3155 = vcmp.eq.s32.totalorder %v52, %v3044
    %vm3156 = vcmp.eq.s32.totalorder %v52, %v3048
    %vm3157 = vcmp.eq.s32.totalorder %v52, %v3052
    %vm3158 = vcmp.eq.s32.totalorder %v52, %v3056
    %vm3159 = vcmp.eq.s32.totalorder %v52, %v3060
    %vm3160 = vcmp.eq.s32.totalorder %v52, %v3064
    %vm3161 = vcmp.eq.s32.totalorder %v53, %v3036
    %vm3162 = vcmp.eq.s32.totalorder %v53, %v3040
    %vm3163 = vcmp.eq.s32.totalorder %v53, %v3044
    %vm3164 = vcmp.eq.s32.totalorder %v53, %v3048
    %vm3165 = vcmp.eq.s32.totalorder %v53, %v3052
    %vm3166 = vcmp.eq.s32.totalorder %v53, %v3056
    %vm3167 = vcmp.eq.s32.totalorder %v53, %v3060
    %vm3168 = vcmp.eq.s32.totalorder %v53, %v3064
    %vm3169 = vcmp.eq.s32.totalorder %v54, %v3036
    %vm3170 = vcmp.eq.s32.totalorder %v54, %v3040
    %vm3171 = vcmp.eq.s32.totalorder %v54, %v3044
    %vm3172 = vcmp.eq.s32.totalorder %v54, %v3048
    %vm3173 = vcmp.eq.s32.totalorder %v54, %v3052
    %vm3174 = vcmp.eq.s32.totalorder %v54, %v3056
    %vm3175 = vcmp.eq.s32.totalorder %v54, %v3060
    %vm3176 = vcmp.eq.s32.totalorder %v54, %v3064
    %vm3177 = vcmp.eq.s32.totalorder %v55, %v3036
    %vm3178 = vcmp.eq.s32.totalorder %v55, %v3040
    %vm3179 = vcmp.eq.s32.totalorder %v55, %v3044
    %vm3180 = vcmp.eq.s32.totalorder %v55, %v3048
    %vm3181 = vcmp.eq.s32.totalorder %v55, %v3052
    %vm3182 = vcmp.eq.s32.totalorder %v55, %v3056
    %vm3183 = vcmp.eq.s32.totalorder %v55, %v3060
    %vm3184 = vcmp.eq.s32.totalorder %v55, %v3064
    %vm3185 = vcmp.eq.s32.totalorder %v56, %v3036
    %vm3186 = vcmp.eq.s32.totalorder %v56, %v3040
    %vm3187 = vcmp.eq.s32.totalorder %v56, %v3044
    %vm3188 = vcmp.eq.s32.totalorder %v56, %v3048
    %vm3189 = vcmp.eq.s32.totalorder %v56, %v3052
    %vm3190 = vcmp.eq.s32.totalorder %v56, %v3056
    %vm3191 = vcmp.eq.s32.totalorder %v56, %v3060
    %vm3192 = vcmp.eq.s32.totalorder %v56, %v3064
    %v3193 = vsel %vm3065, 1, 0
    %v3194 = vsel %vm3066, 1, 0
    %v3195 = vsel %vm3067, 1, 0
    %v3196 = vsel %vm3068, 1, 0
    %v3197 = vsel %vm3069, 1, 0
    %v3198 = vsel %vm3070, 1, 0
    %v3199 = vsel %vm3071, 1, 0
    %v3200 = vsel %vm3072, 1, 0
    %v3201 = vsel %vm3073, 1, 0
    %v3202 = vsel %vm3074, 1, 0
    %v3203 = vsel %vm3075, 1, 0
    %v3204 = vsel %vm3076, 1, 0
    %v3205 = vsel %vm3077, 1, 0
    %v3206 = vsel %vm3078, 1, 0
    %v3207 = vsel %vm3079, 1, 0
    %v3208 = vsel %vm3080, 1, 0
    %v3209 = vsel %vm3081, 1, 0
    %v3210 = vsel %vm3082, 1, 0
    %v3211 = vsel %vm3083, 1, 0
    %v3212 = vsel %vm3084, 1, 0
    %v3213 = vsel %vm3085, 1, 0
    %v3214 = vsel %vm3086, 1, 0
    %v3215 = vsel %vm3087, 1, 0
    %v3216 = vsel %vm3088, 1, 0
    %v3217 = vsel %vm3089, 1, 0
    %v3218 = vsel %vm3090, 1, 0
    %v3219 = vsel %vm3091, 1, 0
    %v3220 = vsel %vm3092, 1, 0
    %v3221 = vsel %vm3093, 1, 0
    %v3222 = vsel %vm3094, 1, 0
    %v3223 = vsel %vm3095, 1, 0
    %v3224 = vsel %vm3096, 1, 0
    %v3225 = vsel %vm3097, 1, 0
    %v3226 = vsel %vm3098, 1, 0
    %v3227 = vsel %vm3099, 1, 0
    %v3228 = vsel %vm3100, 1, 0
    %v3229 = vsel %vm3101, 1, 0
    %v3230 = vsel %vm3102, 1, 0
    %v3231 = vsel %vm3103, 1, 0
    %v3232 = vsel %vm3104, 1, 0
    %v3233 = vsel %vm3105, 1, 0
    %v3234 = vsel %vm3106, 1, 0
    %v3235 = vsel %vm3107, 1, 0
    %v3236 = vsel %vm3108, 1, 0
    %v3237 = vsel %vm3109, 1, 0
    %v3238 = vsel %vm3110, 1, 0
    %v3239 = vsel %vm3111, 1, 0
    %v3240 = vsel %vm3112, 1, 0
    %v3241 = vsel %vm3113, 1, 0
    %v3242 = vsel %vm3114, 1, 0
    %v3243 = vsel %vm3115, 1, 0
    %v3244 = vsel %vm3116, 1, 0
    %v3245 = vsel %vm3117, 1, 0
    %v3246 = vsel %vm3118, 1, 0
    %v3247 = vsel %vm3119, 1, 0
    %v3248 = vsel %vm3120, 1, 0
    %v3249 = vsel %vm3121, 1, 0
    %v3250 = vsel %vm3122, 1, 0
    %v3251 = vsel %vm3123, 1, 0
    %v3252 = vsel %vm3124, 1, 0
    %v3253 = vsel %vm3125, 1, 0
    %v3254 = vsel %vm3126, 1, 0
    %v3255 = vsel %vm3127, 1, 0
    %v3256 = vsel %vm3128, 1, 0
    %v3257 = vsel %vm3129, 1, 0
    %v3258 = vsel %vm3130, 1, 0
    %v3259 = vsel %vm3131, 1, 0
    %v3260 = vsel %vm3132, 1, 0
    %v3261 = vsel %vm3133, 1, 0
    %v3262 = vsel %vm3134, 1, 0
    %v3263 = vsel %vm3135, 1, 0
    %v3264 = vsel %vm3136, 1, 0
    %v3265 = vsel %vm3137, 1, 0
    %v3266 = vsel %vm3138, 1, 0
    %v3267 = vsel %vm3139, 1, 0
    %v3268 = vsel %vm3140, 1, 0
    %v3269 = vsel %vm3141, 1, 0
    %v3270 = vsel %vm3142, 1, 0
    %v3271 = vsel %vm3143, 1, 0
    %v3272 = vsel %vm3144, 1, 0
    %v3273 = vsel %vm3145, 1, 0
    %v3274 = vsel %vm3146, 1, 0
    %v3275 = vsel %vm3147, 1, 0
    %v3276 = vsel %vm3148, 1, 0
    %v3277 = vsel %vm3149, 1, 0
    %v3278 = vsel %vm3150, 1, 0
    %v3279 = vsel %vm3151, 1, 0
    %v3280 = vsel %vm3152, 1, 0
    %v3281 = vsel %vm3153, 1, 0
    %v3282 = vsel %vm3154, 1, 0
    %v3283 = vsel %vm3155, 1, 0
    %v3284 = vsel %vm3156, 1, 0
    %v3285 = vsel %vm3157, 1, 0
    %v3286 = vsel %vm3158, 1, 0
    %v3287 = vsel %vm3159, 1, 0
    %v3288 = vsel %vm3160, 1, 0
    %v3289 = vsel %vm3161, 1, 0
    %v3290 = vsel %vm3162, 1, 0
    %v3291 = vsel %vm3163, 1, 0
    %v3292 = vsel %vm3164, 1, 0
    %v3293 = vsel %vm3165, 1, 0
    %v3294 = vsel %vm3166, 1, 0
    %v3295 = vsel %vm3167, 1, 0
    %v3296 = vsel %vm3168, 1, 0
    %v3297 = vsel %vm3169, 1, 0
    %v3298 = vsel %vm3170, 1, 0
    %v3299 = vsel %vm3171, 1, 0
    %v3300 = vsel %vm3172, 1, 0
    %v3301 = vsel %vm3173, 1, 0
    %v3302 = vsel %vm3174, 1, 0
    %v3303 = vsel %vm3175, 1, 0
    %v3304 = vsel %vm3176, 1, 0
    %v3305 = vsel %vm3177, 1, 0
    %v3306 = vsel %vm3178, 1, 0
    %v3307 = vsel %vm3179, 1, 0
    %v3308 = vsel %vm3180, 1, 0
    %v3309 = vsel %vm3181, 1, 0
    %v3310 = vsel %vm3182, 1, 0
    %v3311 = vsel %vm3183, 1, 0
    %v3312 = vsel %vm3184, 1, 0
    %v3313 = vsel %vm3185, 1, 0
    %v3314 = vsel %vm3186, 1, 0
    %v3315 = vsel %vm3187, 1, 0
    %v3316 = vsel %vm3188, 1, 0
    %v3317 = vsel %vm3189, 1, 0
    %v3318 = vsel %vm3190, 1, 0
    %v3319 = vsel %vm3191, 1, 0
    %v3320 = vsel %vm3192, 1, 0
    %v3321 = vcvt.s32.f32 %v3193
    %v3322 = vcvt.s32.f32 %v3194
    %v3323 = vcvt.s32.f32 %v3195
    %v3324 = vcvt.s32.f32 %v3196
    %v3325 = vcvt.s32.f32 %v3197
    %v3326 = vcvt.s32.f32 %v3198
    %v3327 = vcvt.s32.f32 %v3199
    %v3328 = vcvt.s32.f32 %v3200
    %v3329 = vcvt.s32.f32 %v3201
    %v3330 = vcvt.s32.f32 %v3202
    %v3331 = vcvt.s32.f32 %v3203
    %v3332 = vcvt.s32.f32 %v3204
    %v3333 = vcvt.s32.f32 %v3205
    %v3334 = vcvt.s32.f32 %v3206
    %v3335 = vcvt.s32.f32 %v3207
    %v3336 = vcvt.s32.f32 %v3208
    %v3337 = vcvt.s32.f32 %v3209
    %v3338 = vcvt.s32.f32 %v3210
    %v3339 = vcvt.s32.f32 %v3211
    %v3340 = vcvt.s32.f32 %v3212
    %v3341 = vcvt.s32.f32 %v3213
    %v3342 = vcvt.s32.f32 %v3214
    %v3343 = vcvt.s32.f32 %v3215
    %v3344 = vcvt.s32.f32 %v3216
    %v3345 = vcvt.s32.f32 %v3217
    %v3346 = vcvt.s32.f32 %v3218
    %v3347 = vcvt.s32.f32 %v3219
    %v3348 = vcvt.s32.f32 %v3220
    %v3349 = vcvt.s32.f32 %v3221
    %v3350 = vcvt.s32.f32 %v3222
    %v3351 = vcvt.s32.f32 %v3223
    %v3352 = vcvt.s32.f32 %v3224
    %v3353 = vcvt.s32.f32 %v3225
    %v3354 = vcvt.s32.f32 %v3226
    %v3355 = vcvt.s32.f32 %v3227
    %v3356 = vcvt.s32.f32 %v3228
    %v3357 = vcvt.s32.f32 %v3229
    %v3358 = vcvt.s32.f32 %v3230
    %v3359 = vcvt.s32.f32 %v3231
    %v3360 = vcvt.s32.f32 %v3232
    %v3361 = vcvt.s32.f32 %v3233
    %v3362 = vcvt.s32.f32 %v3234
    %v3363 = vcvt.s32.f32 %v3235
    %v3364 = vcvt.s32.f32 %v3236
    %v3365 = vcvt.s32.f32 %v3237
    %v3366 = vcvt.s32.f32 %v3238
    %v3367 = vcvt.s32.f32 %v3239
    %v3368 = vcvt.s32.f32 %v3240
    %v3369 = vcvt.s32.f32 %v3241
    %v3370 = vcvt.s32.f32 %v3242
    %v3371 = vcvt.s32.f32 %v3243
    %v3372 = vcvt.s32.f32 %v3244
    %v3373 = vcvt.s32.f32 %v3245
    %v3374 = vcvt.s32.f32 %v3246
    %v3375 = vcvt.s32.f32 %v3247
    %v3376 = vcvt.s32.f32 %v3248
    %v3377 = vcvt.s32.f32 %v3249
    %v3378 = vcvt.s32.f32 %v3250
    %v3379 = vcvt.s32.f32 %v3251
    %v3380 = vcvt.s32.f32 %v3252
    %v3381 = vcvt.s32.f32 %v3253
    %v3382 = vcvt.s32.f32 %v3254
    %v3383 = vcvt.s32.f32 %v3255
    %v3384 = vcvt.s32.f32 %v3256
    %v3385 = vcvt.s32.f32 %v3257
    %v3386 = vcvt.s32.f32 %v3258
    %v3387 = vcvt.s32.f32 %v3259
    %v3388 = vcvt.s32.f32 %v3260
    %v3389 = vcvt.s32.f32 %v3261
    %v3390 = vcvt.s32.f32 %v3262
    %v3391 = vcvt.s32.f32 %v3263
    %v3392 = vcvt.s32.f32 %v3264
    %v3393 = vcvt.s32.f32 %v3265
    %v3394 = vcvt.s32.f32 %v3266
    %v3395 = vcvt.s32.f32 %v3267
    %v3396 = vcvt.s32.f32 %v3268
    %v3397 = vcvt.s32.f32 %v3269
    %v3398 = vcvt.s32.f32 %v3270
    %v3399 = vcvt.s32.f32 %v3271
    %v3400 = vcvt.s32.f32 %v3272
    %v3401 = vcvt.s32.f32 %v3273
    %v3402 = vcvt.s32.f32 %v3274
    %v3403 = vcvt.s32.f32 %v3275
    %v3404 = vcvt.s32.f32 %v3276
    %v3405 = vcvt.s32.f32 %v3277
    %v3406 = vcvt.s32.f32 %v3278
    %v3407 = vcvt.s32.f32 %v3279
    %v3408 = vcvt.s32.f32 %v3280
    %v3409 = vcvt.s32.f32 %v3281
    %v3410 = vcvt.s32.f32 %v3282
    %v3411 = vcvt.s32.f32 %v3283
    %v3412 = vcvt.s32.f32 %v3284
    %v3413 = vcvt.s32.f32 %v3285
    %v3414 = vcvt.s32.f32 %v3286
    %v3415 = vcvt.s32.f32 %v3287
    %v3416 = vcvt.s32.f32 %v3288
    %v3417 = vcvt.s32.f32 %v3289
    %v3418 = vcvt.s32.f32 %v3290
    %v3419 = vcvt.s32.f32 %v3291
    %v3420 = vcvt.s32.f32 %v3292
    %v3421 = vcvt.s32.f32 %v3293
    %v3422 = vcvt.s32.f32 %v3294
    %v3423 = vcvt.s32.f32 %v3295
    %v3424 = vcvt.s32.f32 %v3296
    %v3425 = vcvt.s32.f32 %v3297
    %v3426 = vcvt.s32.f32 %v3298
    %v3427 = vcvt.s32.f32 %v3299
    %v3428 = vcvt.s32.f32 %v3300
    %v3429 = vcvt.s32.f32 %v3301
    %v3430 = vcvt.s32.f32 %v3302
    %v3431 = vcvt.s32.f32 %v3303
    %v3432 = vcvt.s32.f32 %v3304
    %v3433 = vcvt.s32.f32 %v3305
    %v3434 = vcvt.s32.f32 %v3306
    %v3435 = vcvt.s32.f32 %v3307
    %v3436 = vcvt.s32.f32 %v3308
    %v3437 = vcvt.s32.f32 %v3309
    %v3438 = vcvt.s32.f32 %v3310
    %v3439 = vcvt.s32.f32 %v3311
    %v3440 = vcvt.s32.f32 %v3312
    %v3441 = vcvt.s32.f32 %v3313
    %v3442 = vcvt.s32.f32 %v3314
    %v3443 = vcvt.s32.f32 %v3315
    %v3444 = vcvt.s32.f32 %v3316
    %v3445 = vcvt.s32.f32 %v3317
    %v3446 = vcvt.s32.f32 %v3318
    %v3447 = vcvt.s32.f32 %v3319
    %v3448 = vcvt.s32.f32 %v3320
    %v3449 = vpack.c.bf16 %v3329, %v3321
    %v3450 = vpack.c.bf16 %v3330, %v3322
    %v3451 = vpack.c.bf16 %v3331, %v3323
    %v3452 = vpack.c.bf16 %v3332, %v3324
    %v3453 = vpack.c.bf16 %v3333, %v3325
    %v3454 = vpack.c.bf16 %v3334, %v3326
    %v3455 = vpack.c.bf16 %v3335, %v3327
    %v3456 = vpack.c.bf16 %v3336, %v3328
    %v3457 = vpack.c.bf16 %v3345, %v3337
    %v3458 = vpack.c.bf16 %v3346, %v3338
    %v3459 = vpack.c.bf16 %v3347, %v3339
    %v3460 = vpack.c.bf16 %v3348, %v3340
    %v3461 = vpack.c.bf16 %v3349, %v3341
    %v3462 = vpack.c.bf16 %v3350, %v3342
    %v3463 = vpack.c.bf16 %v3351, %v3343
    %v3464 = vpack.c.bf16 %v3352, %v3344
    %v3465 = vpack.c.bf16 %v3361, %v3353
    %v3466 = vpack.c.bf16 %v3362, %v3354
    %v3467 = vpack.c.bf16 %v3363, %v3355
    %v3468 = vpack.c.bf16 %v3364, %v3356
    %v3469 = vpack.c.bf16 %v3365, %v3357
    %v3470 = vpack.c.bf16 %v3366, %v3358
    %v3471 = vpack.c.bf16 %v3367, %v3359
    %v3472 = vpack.c.bf16 %v3368, %v3360
    %v3473 = vpack.c.bf16 %v3377, %v3369
    %v3474 = vpack.c.bf16 %v3378, %v3370
    %v3475 = vpack.c.bf16 %v3379, %v3371
    %v3476 = vpack.c.bf16 %v3380, %v3372
    %v3477 = vpack.c.bf16 %v3381, %v3373
    %v3478 = vpack.c.bf16 %v3382, %v3374
    %v3479 = vpack.c.bf16 %v3383, %v3375
    %v3480 = vpack.c.bf16 %v3384, %v3376
    %v3481 = vpack.c.bf16 %v3393, %v3385
    %v3482 = vpack.c.bf16 %v3394, %v3386
    %v3483 = vpack.c.bf16 %v3395, %v3387
    %v3484 = vpack.c.bf16 %v3396, %v3388
    %v3485 = vpack.c.bf16 %v3397, %v3389
    %v3486 = vpack.c.bf16 %v3398, %v3390
    %v3487 = vpack.c.bf16 %v3399, %v3391
    %v3488 = vpack.c.bf16 %v3400, %v3392
    %v3489 = vpack.c.bf16 %v3409, %v3401
    %v3490 = vpack.c.bf16 %v3410, %v3402
    %v3491 = vpack.c.bf16 %v3411, %v3403
    %v3492 = vpack.c.bf16 %v3412, %v3404
    %v3493 = vpack.c.bf16 %v3413, %v3405
    %v3494 = vpack.c.bf16 %v3414, %v3406
    %v3495 = vpack.c.bf16 %v3415, %v3407
    %v3496 = vpack.c.bf16 %v3416, %v3408
    %v3497 = vpack.c.bf16 %v3425, %v3417
    %v3498 = vpack.c.bf16 %v3426, %v3418
    %v3499 = vpack.c.bf16 %v3427, %v3419
    %v3500 = vpack.c.bf16 %v3428, %v3420
    %v3501 = vpack.c.bf16 %v3429, %v3421
    %v3502 = vpack.c.bf16 %v3430, %v3422
    %v3503 = vpack.c.bf16 %v3431, %v3423
    %v3504 = vpack.c.bf16 %v3432, %v3424
    %v3505 = vpack.c.bf16 %v3441, %v3433
    %v3506 = vpack.c.bf16 %v3442, %v3434
    %v3507 = vpack.c.bf16 %v3443, %v3435
    %v3508 = vpack.c.bf16 %v3444, %v3436
    %v3509 = vpack.c.bf16 %v3445, %v3437
    %v3510 = vpack.c.bf16 %v3446, %v3438
    %v3511 = vpack.c.bf16 %v3447, %v3439
    %v3512 = vpack.c.bf16 %v3448, %v3440
    %3513 = vmatprep.subr.bf16.mxu0 %v3450
    %3514 = vmatpush1.bf16.msra.mxu0 %v3449
    %3515 = vmatprep.subr.bf16.mxu0 %v3458
    %3516 = vmatpush1.bf16.msra.mxu0 %v3457
    %3517 = vmatprep.subr.bf16.mxu0 %v3466
    %3518 = vmatpush1.bf16.msra.mxu0 %v3465
    %3519 = vmatprep.subr.bf16.mxu0 %v3474
    %3520 = vmatpush1.bf16.msra.mxu0 %v3473
    %3521 = vmatprep.subr.bf16.mxu0 %v3482
    %3522 = vmatpush1.bf16.msra.mxu0 %v3481
    %3523 = vmatprep.subr.bf16.mxu0 %v3490
    %3524 = vmatpush1.bf16.msra.mxu0 %v3489
    %3525 = vmatprep.subr.bf16.mxu0 %v3498
    %3526 = vmatpush1.bf16.msra.mxu0 %v3497
    %3527 = vmatprep.subr.bf16.mxu0 %v3506
    %3528 = vmatpush1.bf16.msra.mxu0 %v3505
    %3529 = vmatprep.subr.bf16.mxu0 0
    %3530 = vmatpush1.bf16.msra.mxu0 0
    %3531 = vmatprep.subr.bf16.mxu0 0
    %3532 = vmatpush1.bf16.msra.mxu0 0
    %3533 = vmatprep.subr.bf16.mxu0 0
    %3534 = vmatpush1.bf16.msra.mxu0 0
    %3535 = vmatprep.subr.bf16.mxu0 0
    %3536 = vmatpush1.bf16.msra.mxu0 0
    %3537 = vmatprep.subr.bf16.mxu0 0
    %3538 = vmatpush1.bf16.msra.mxu0 0
    %3539 = vmatprep.subr.bf16.mxu0 0
    %3540 = vmatpush1.bf16.msra.mxu0 0
    %3541 = vmatprep.subr.bf16.mxu0 0
    %3542 = vmatpush1.bf16.msra.mxu0 0
    %3543 = vmatprep.subr.bf16.mxu0 0
    %3544 = vmatpush1.bf16.msra.mxu0 0
    %3545 = vmatprep.mubr.bf16.mxu0 0
    %3546 = vmatmul.mubr.bf16.gmra.mrb[0].mxu0 %v37
    %v3547 = vpop.f32.mrb[0].mxu0
    %v3548 = vadd.f32 0.0, %v3547
    %v3549 = vpop.f32.mrb[0].mxu0
    %v3550 = vadd.f32 0.0, %v3549
    %v3551 = vpop.f32.mrb[0].mxu0
    %v3552 = vpop.f32.mrb[0].mxu0
    %3553 = vdwg.mxu0
    %3554 = vmatprep.subr.bf16.mxu0 %v3452
    %3555 = vmatpush1.bf16.msra.mxu0 %v3451
    %3556 = vmatprep.subr.bf16.mxu0 %v3460
    %3557 = vmatpush1.bf16.msra.mxu0 %v3459
    %3558 = vmatprep.subr.bf16.mxu0 %v3468
    %3559 = vmatpush1.bf16.msra.mxu0 %v3467
    %3560 = vmatprep.subr.bf16.mxu0 %v3476
    %3561 = vmatpush1.bf16.msra.mxu0 %v3475
    %3562 = vmatprep.subr.bf16.mxu0 %v3484
    %3563 = vmatpush1.bf16.msra.mxu0 %v3483
    %3564 = vmatprep.subr.bf16.mxu0 %v3492
    %3565 = vmatpush1.bf16.msra.mxu0 %v3491
    %3566 = vmatprep.subr.bf16.mxu0 %v3500
    %3567 = vmatpush1.bf16.msra.mxu0 %v3499
    %3568 = vmatprep.subr.bf16.mxu0 %v3508
    %3569 = vmatpush1.bf16.msra.mxu0 %v3507
    %3570 = vmatprep.subr.bf16.mxu0 0
    %3571 = vmatpush1.bf16.msra.mxu0 0
    %3572 = vmatprep.subr.bf16.mxu0 0
    %3573 = vmatpush1.bf16.msra.mxu0 0
    %3574 = vmatprep.subr.bf16.mxu0 0
    %3575 = vmatpush1.bf16.msra.mxu0 0
    %3576 = vmatprep.subr.bf16.mxu0 0
    %3577 = vmatpush1.bf16.msra.mxu0 0
    %3578 = vmatprep.subr.bf16.mxu0 0
    %3579 = vmatpush1.bf16.msra.mxu0 0
    %3580 = vmatprep.subr.bf16.mxu0 0
    %3581 = vmatpush1.bf16.msra.mxu0 0
    %3582 = vmatprep.subr.bf16.mxu0 0
    %3583 = vmatpush1.bf16.msra.mxu0 0
    %3584 = vmatprep.subr.bf16.mxu0 0
    %3585 = vmatpush1.bf16.msra.mxu0 0
    %3586 = vmatprep.mubr.bf16.mxu0 0
    %3587 = vmatmul.mubr.bf16.gmra.mrb[0].mxu0 %v37
    %v3588 = vpop.f32.mrb[0].mxu0
    %v3589 = vadd.f32 0.0, %v3588
    %v3590 = vpop.f32.mrb[0].mxu0
    %v3591 = vadd.f32 0.0, %v3590
    %v3592 = vpop.f32.mrb[0].mxu0
    %v3593 = vpop.f32.mrb[0].mxu0
    %3594 = vdwg.mxu0
    %3595 = vmatprep.subr.bf16.mxu0 %v3454
    %3596 = vmatpush1.bf16.msra.mxu0 %v3453
    %3597 = vmatprep.subr.bf16.mxu0 %v3462
    %3598 = vmatpush1.bf16.msra.mxu0 %v3461
    %3599 = vmatprep.subr.bf16.mxu0 %v3470
    %3600 = vmatpush1.bf16.msra.mxu0 %v3469
    %3601 = vmatprep.subr.bf16.mxu0 %v3478
    %3602 = vmatpush1.bf16.msra.mxu0 %v3477
    %3603 = vmatprep.subr.bf16.mxu0 %v3486
    %3604 = vmatpush1.bf16.msra.mxu0 %v3485
    %3605 = vmatprep.subr.bf16.mxu0 %v3494
    %3606 = vmatpush1.bf16.msra.mxu0 %v3493
    %3607 = vmatprep.subr.bf16.mxu0 %v3502
    %3608 = vmatpush1.bf16.msra.mxu0 %v3501
    %3609 = vmatprep.subr.bf16.mxu0 %v3510
    %3610 = vmatpush1.bf16.msra.mxu0 %v3509
    %3611 = vmatprep.subr.bf16.mxu0 0
    %3612 = vmatpush1.bf16.msra.mxu0 0
    %3613 = vmatprep.subr.bf16.mxu0 0
    %3614 = vmatpush1.bf16.msra.mxu0 0
    %3615 = vmatprep.subr.bf16.mxu0 0
    %3616 = vmatpush1.bf16.msra.mxu0 0
    %3617 = vmatprep.subr.bf16.mxu0 0
    %3618 = vmatpush1.bf16.msra.mxu0 0
    %3619 = vmatprep.subr.bf16.mxu0 0
    %3620 = vmatpush1.bf16.msra.mxu0 0
    %3621 = vmatprep.subr.bf16.mxu0 0
    %3622 = vmatpush1.bf16.msra.mxu0 0
    %3623 = vmatprep.subr.bf16.mxu0 0
    %3624 = vmatpush1.bf16.msra.mxu0 0
    %3625 = vmatprep.subr.bf16.mxu0 0
    %3626 = vmatpush1.bf16.msra.mxu0 0
    %3627 = vmatprep.mubr.bf16.mxu0 0
    %3628 = vmatmul.mubr.bf16.gmra.mrb[0].mxu0 %v37
    %v3629 = vpop.f32.mrb[0].mxu0
    %v3630 = vadd.f32 0.0, %v3629
    %v3631 = vpop.f32.mrb[0].mxu0
    %v3632 = vadd.f32 0.0, %v3631
    %v3633 = vpop.f32.mrb[0].mxu0
    %v3634 = vpop.f32.mrb[0].mxu0
    %3635 = vdwg.mxu0
    %3636 = vmatprep.subr.bf16.mxu0 %v3456
    %3637 = vmatpush1.bf16.msra.mxu0 %v3455
    %3638 = vmatprep.subr.bf16.mxu0 %v3464
    %3639 = vmatpush1.bf16.msra.mxu0 %v3463
    %3640 = vmatprep.subr.bf16.mxu0 %v3472
    %3641 = vmatpush1.bf16.msra.mxu0 %v3471
    %3642 = vmatprep.subr.bf16.mxu0 %v3480
    %3643 = vmatpush1.bf16.msra.mxu0 %v3479
    %3644 = vmatprep.subr.bf16.mxu0 %v3488
    %3645 = vmatpush1.bf16.msra.mxu0 %v3487
    %3646 = vmatprep.subr.bf16.mxu0 %v3496
    %3647 = vmatpush1.bf16.msra.mxu0 %v3495
    %3648 = vmatprep.subr.bf16.mxu0 %v3504
    %3649 = vmatpush1.bf16.msra.mxu0 %v3503
    %3650 = vmatprep.subr.bf16.mxu0 %v3512
    %3651 = vmatpush1.bf16.msra.mxu0 %v3511
    %3652 = vmatprep.subr.bf16.mxu0 0
    %3653 = vmatpush1.bf16.msra.mxu0 0
    %3654 = vmatprep.subr.bf16.mxu0 0
    %3655 = vmatpush1.bf16.msra.mxu0 0
    %3656 = vmatprep.subr.bf16.mxu0 0
    %3657 = vmatpush1.bf16.msra.mxu0 0
    %3658 = vmatprep.subr.bf16.mxu0 0
    %3659 = vmatpush1.bf16.msra.mxu0 0
    %3660 = vmatprep.subr.bf16.mxu0 0
    %3661 = vmatpush1.bf16.msra.mxu0 0
    %3662 = vmatprep.subr.bf16.mxu0 0
    %3663 = vmatpush1.bf16.msra.mxu0 0
    %3664 = vmatprep.subr.bf16.mxu0 0
    %3665 = vmatpush1.bf16.msra.mxu0 0
    %3666 = vmatprep.subr.bf16.mxu0 0
    %3667 = vmatpush1.bf16.msra.mxu0 0
    %3668 = vmatprep.mubr.bf16.mxu0 0
    %3669 = vmatmul.mubr.bf16.gmra.mrb[0].mxu0 %v37
    %v3670 = vpop.f32.mrb[0].mxu0
    %v3671 = vadd.f32 0.0, %v3670
    %v3672 = vpop.f32.mrb[0].mxu0
    %v3673 = vadd.f32 0.0, %v3672
    %v3674 = vpop.f32.mrb[0].mxu0
    %v3675 = vpop.f32.mrb[0].mxu0
    %3676 = vdwg.mxu0
    %v3677 = vsub.f32 %v3548, %v39
    %v3678 = vsub.f32 %v3550, %v39
    %v3679 = vsub.f32 %v3589, %v39
    %v3680 = vsub.f32 %v3591, %v39
    %v3681 = vsub.f32 %v3630, %v39
    %v3682 = vsub.f32 %v3632, %v39
    %v3683 = vsub.f32 %v3671, %v39
    %v3684 = vsub.f32 %v3673, %v39
    %v3685 = vpack.c.bf16 %v3677, %v3677
    %v3686 = vpack.c.bf16 %v3678, %v3678
    %v3687 = vpack.c.bf16 %v3679, %v3679
    %v3688 = vpack.c.bf16 %v3680, %v3680
    %v3689 = vpack.c.bf16 %v3681, %v3681
    %v3690 = vpack.c.bf16 %v3682, %v3682
    %v3691 = vpack.c.bf16 %v3683, %v3683
    %v3692 = vpack.c.bf16 %v3684, %v3684
    %v3694 = vsel %vm753, %v3685, 0
    %v3697 = vsel %vm753, %v3686, 0
    %v3700 = vsel %vm753, %v3687, 0
    %v3703 = vsel %vm753, %v3688, 0
    %v3706 = vsel %vm753, %v3689, 0
    %v3709 = vsel %vm753, %v3690, 0
    %v3712 = vsel %vm753, %v3691, 0
    %v3715 = vsel %vm753, %v3692, 0
    %3717 = vmatprep.subr.bf16.mxu0 %v3697
    %3718 = vmatpush1.bf16.msra.mxu0 %v3694
    %3719 = vmatprep.subr.bf16.mxu0 0
    %3720 = vmatpush1.bf16.msra.mxu0 0
    %3721 = vmatprep.subr.bf16.mxu0 0
    %3722 = vmatpush1.bf16.msra.mxu0 0
    %3723 = vmatprep.subr.bf16.mxu0 0
    %3724 = vmatpush1.bf16.msra.mxu0 0
    %3725 = vmatprep.subr.bf16.mxu0 0
    %3726 = vmatpush1.bf16.msra.mxu0 0
    %3727 = vmatprep.subr.bf16.mxu0 0
    %3728 = vmatpush1.bf16.msra.mxu0 0
    %3729 = vmatprep.subr.bf16.mxu0 0
    %3730 = vmatpush1.bf16.msra.mxu0 0
    %3731 = vmatprep.subr.bf16.mxu0 0
    %3732 = vmatpush1.bf16.msra.mxu0 0
    %3733 = vmatprep.subr.bf16.mxu0 0
    %3734 = vmatpush1.bf16.msra.mxu0 0
    %3735 = vmatprep.subr.bf16.mxu0 0
    %3736 = vmatpush1.bf16.msra.mxu0 0
    %3737 = vmatprep.subr.bf16.mxu0 0
    %3738 = vmatpush1.bf16.msra.mxu0 0
    %3739 = vmatprep.subr.bf16.mxu0 0
    %3740 = vmatpush1.bf16.msra.mxu0 0
    %3741 = vmatprep.subr.bf16.mxu0 0
    %3742 = vmatpush1.bf16.msra.mxu0 0
    %3743 = vmatprep.subr.bf16.mxu0 0
    %3744 = vmatpush1.bf16.msra.mxu0 0
    %3745 = vmatprep.subr.bf16.mxu0 0
    %3746 = vmatpush1.bf16.msra.mxu0 0
    %3747 = vmatprep.subr.bf16.mxu0 0
    %3748 = vmatpush1.bf16.msra.mxu0 0
    %3749 = vmatprep.mubr.bf16.mxu0 0
    %3750 = vmatmul.mubr.bf16.gmra.mrb[0].mxu0 %v751
    %v3751 = vpop.f32.mrb[0].mxu0
    %v3752 = vadd.f32 %v737, %v3751
    %v3753 = vpop.f32.mrb[0].mxu0
    %v3754 = vadd.f32 %v737, %v3753
    %v3755 = vpop.f32.mrb[0].mxu0
    %v3756 = vadd.f32 %v742, %v3755
    %v3757 = vpop.f32.mrb[0].mxu0
    %v3758 = vadd.f32 %v742, %v3757
    %3759 = vdwg.mxu0
    %3760 = vmatprep.subr.bf16.mxu0 %v3703
    %3761 = vmatpush1.bf16.msra.mxu0 %v3700
    %3762 = vmatprep.subr.bf16.mxu0 0
    %3763 = vmatpush1.bf16.msra.mxu0 0
    %3764 = vmatprep.subr.bf16.mxu0 0
    %3765 = vmatpush1.bf16.msra.mxu0 0
    %3766 = vmatprep.subr.bf16.mxu0 0
    %3767 = vmatpush1.bf16.msra.mxu0 0
    %3768 = vmatprep.subr.bf16.mxu0 0
    %3769 = vmatpush1.bf16.msra.mxu0 0
    %3770 = vmatprep.subr.bf16.mxu0 0
    %3771 = vmatpush1.bf16.msra.mxu0 0
    %3772 = vmatprep.subr.bf16.mxu0 0
    %3773 = vmatpush1.bf16.msra.mxu0 0
    %3774 = vmatprep.subr.bf16.mxu0 0
    %3775 = vmatpush1.bf16.msra.mxu0 0
    %3776 = vmatprep.subr.bf16.mxu0 0
    %3777 = vmatpush1.bf16.msra.mxu0 0
    %3778 = vmatprep.subr.bf16.mxu0 0
    %3779 = vmatpush1.bf16.msra.mxu0 0
    %3780 = vmatprep.subr.bf16.mxu0 0
    %3781 = vmatpush1.bf16.msra.mxu0 0
    %3782 = vmatprep.subr.bf16.mxu0 0
    %3783 = vmatpush1.bf16.msra.mxu0 0
    %3784 = vmatprep.subr.bf16.mxu0 0
    %3785 = vmatpush1.bf16.msra.mxu0 0
    %3786 = vmatprep.subr.bf16.mxu0 0
    %3787 = vmatpush1.bf16.msra.mxu0 0
    %3788 = vmatprep.subr.bf16.mxu0 0
    %3789 = vmatpush1.bf16.msra.mxu0 0
    %3790 = vmatprep.subr.bf16.mxu0 0
    %3791 = vmatpush1.bf16.msra.mxu0 0
    %3792 = vmatprep.mubr.bf16.mxu0 0
    %3793 = vmatmul.mubr.bf16.gmra.mrb[0].mxu0 %v751
    %v3794 = vpop.f32.mrb[0].mxu0
    %v3795 = vadd.f32 %v737, %v3794
    %v3796 = vpop.f32.mrb[0].mxu0
    %v3797 = vadd.f32 %v737, %v3796
    %v3798 = vpop.f32.mrb[0].mxu0
    %v3799 = vadd.f32 %v742, %v3798
    %v3800 = vpop.f32.mrb[0].mxu0
    %v3801 = vadd.f32 %v742, %v3800
    %3802 = vdwg.mxu0
    %3803 = vmatprep.subr.bf16.mxu0 %v3709
    %3804 = vmatpush1.bf16.msra.mxu0 %v3706
    %3805 = vmatprep.subr.bf16.mxu0 0
    %3806 = vmatpush1.bf16.msra.mxu0 0
    %3807 = vmatprep.subr.bf16.mxu0 0
    %3808 = vmatpush1.bf16.msra.mxu0 0
    %3809 = vmatprep.subr.bf16.mxu0 0
    %3810 = vmatpush1.bf16.msra.mxu0 0
    %3811 = vmatprep.subr.bf16.mxu0 0
    %3812 = vmatpush1.bf16.msra.mxu0 0
    %3813 = vmatprep.subr.bf16.mxu0 0
    %3814 = vmatpush1.bf16.msra.mxu0 0
    %3815 = vmatprep.subr.bf16.mxu0 0
    %3816 = vmatpush1.bf16.msra.mxu0 0
    %3817 = vmatprep.subr.bf16.mxu0 0
    %3818 = vmatpush1.bf16.msra.mxu0 0
    %3819 = vmatprep.subr.bf16.mxu0 0
    %3820 = vmatpush1.bf16.msra.mxu0 0
    %3821 = vmatprep.subr.bf16.mxu0 0
    %3822 = vmatpush1.bf16.msra.mxu0 0
    %3823 = vmatprep.subr.bf16.mxu0 0
    %3824 = vmatpush1.bf16.msra.mxu0 0
    %3825 = vmatprep.subr.bf16.mxu0 0
    %3826 = vmatpush1.bf16.msra.mxu0 0
    %3827 = vmatprep.subr.bf16.mxu0 0
    %3828 = vmatpush1.bf16.msra.mxu0 0
    %3829 = vmatprep.subr.bf16.mxu0 0
    %3830 = vmatpush1.bf16.msra.mxu0 0
    %3831 = vmatprep.subr.bf16.mxu0 0
    %3832 = vmatpush1.bf16.msra.mxu0 0
    %3833 = vmatprep.subr.bf16.mxu0 0
    %3834 = vmatpush1.bf16.msra.mxu0 0
    %3835 = vmatprep.mubr.bf16.mxu0 0
    %3836 = vmatmul.mubr.bf16.gmra.mrb[0].mxu0 %v751
    %v3837 = vpop.f32.mrb[0].mxu0
    %v3838 = vadd.f32 %v737, %v3837
    %v3839 = vpop.f32.mrb[0].mxu0
    %v3840 = vadd.f32 %v737, %v3839
    %v3841 = vpop.f32.mrb[0].mxu0
    %v3842 = vadd.f32 %v742, %v3841
    %v3843 = vpop.f32.mrb[0].mxu0
    %v3844 = vadd.f32 %v742, %v3843
    %3845 = vdwg.mxu0
    %3846 = vmatprep.subr.bf16.mxu0 %v3715
    %3847 = vmatpush1.bf16.msra.mxu0 %v3712
    %3848 = vmatprep.subr.bf16.mxu0 0
    %3849 = vmatpush1.bf16.msra.mxu0 0
    %3850 = vmatprep.subr.bf16.mxu0 0
    %3851 = vmatpush1.bf16.msra.mxu0 0
    %3852 = vmatprep.subr.bf16.mxu0 0
    %3853 = vmatpush1.bf16.msra.mxu0 0
    %3854 = vmatprep.subr.bf16.mxu0 0
    %3855 = vmatpush1.bf16.msra.mxu0 0
    %3856 = vmatprep.subr.bf16.mxu0 0
    %3857 = vmatpush1.bf16.msra.mxu0 0
    %3858 = vmatprep.subr.bf16.mxu0 0
    %3859 = vmatpush1.bf16.msra.mxu0 0
    %3860 = vmatprep.subr.bf16.mxu0 0
    %3861 = vmatpush1.bf16.msra.mxu0 0
    %3862 = vmatprep.subr.bf16.mxu0 0
    %3863 = vmatpush1.bf16.msra.mxu0 0
    %3864 = vmatprep.subr.bf16.mxu0 0
    %3865 = vmatpush1.bf16.msra.mxu0 0
    %3866 = vmatprep.subr.bf16.mxu0 0
    %3867 = vmatpush1.bf16.msra.mxu0 0
    %3868 = vmatprep.subr.bf16.mxu0 0
    %3869 = vmatpush1.bf16.msra.mxu0 0
    %3870 = vmatprep.subr.bf16.mxu0 0
    %3871 = vmatpush1.bf16.msra.mxu0 0
    %3872 = vmatprep.subr.bf16.mxu0 0
    %3873 = vmatpush1.bf16.msra.mxu0 0
    %3874 = vmatprep.subr.bf16.mxu0 0
    %3875 = vmatpush1.bf16.msra.mxu0 0
    %3876 = vmatprep.subr.bf16.mxu0 0
    %3877 = vmatpush1.bf16.msra.mxu0 0
    %3878 = vmatprep.mubr.bf16.mxu0 0
    %3879 = vmatmul.mubr.bf16.gmra.mrb[0].mxu0 %v751
    %v3880 = vpop.f32.mrb[0].mxu0
    %v3881 = vadd.f32 %v737, %v3880
    %v3882 = vpop.f32.mrb[0].mxu0
    %v3883 = vadd.f32 %v737, %v3882
    %v3884 = vpop.f32.mrb[0].mxu0
    %v3885 = vadd.f32 %v742, %v3884
    %v3886 = vpop.f32.mrb[0].mxu0
    %v3887 = vadd.f32 %v742, %v3886
    %3888 = vdwg.mxu0
    %v3889 = vmax.f32 %v3752, 0.0
    %v3890 = vmax.f32 %v3754, 0.0
    %v3891 = vmax.f32 %v3795, 0.0
    %v3892 = vmax.f32 %v3797, 0.0
    %v3893 = vmax.f32 %v3838, 0.0
    %v3894 = vmax.f32 %v3840, 0.0
    %v3895 = vmax.f32 %v3881, 0.0
    %v3896 = vmax.f32 %v3883, 0.0
    %v3897 = vmax.f32 %v3756, 0.0
    %v3898 = vmax.f32 %v3758, 0.0
    %v3899 = vmax.f32 %v3799, 0.0
    %v3900 = vmax.f32 %v3801, 0.0
    %v3901 = vmax.f32 %v3842, 0.0
    %v3902 = vmax.f32 %v3844, 0.0
    %v3903 = vmax.f32 %v3885, 0.0
    %v3904 = vmax.f32 %v3887, 0.0
    %v3905 = vpack.c.bf16 %v3897, %v3889
    %v3906 = vpack.c.bf16 %v3898, %v3890
    %v3907 = vpack.c.bf16 %v3899, %v3891
    %v3908 = vpack.c.bf16 %v3900, %v3892
    %v3909 = vpack.c.bf16 %v3901, %v3893
    %v3910 = vpack.c.bf16 %v3902, %v3894
    %v3911 = vpack.c.bf16 %v3903, %v3895
    %v3912 = vpack.c.bf16 %v3904, %v3896
    %3913 = vmatprep.subr.bf16.mxu0 %v3906
    %3914 = vmatpush1.bf16.msra.mxu0 %v3905
    %3915 = vmatprep.subr.bf16.mxu0 0
    %3916 = vmatpush1.bf16.msra.mxu0 0
    %3917 = vmatprep.subr.bf16.mxu0 0
    %3918 = vmatpush1.bf16.msra.mxu0 0
    %3919 = vmatprep.subr.bf16.mxu0 0
    %3920 = vmatpush1.bf16.msra.mxu0 0
    %3921 = vmatprep.subr.bf16.mxu0 0
    %3922 = vmatpush1.bf16.msra.mxu0 0
    %3923 = vmatprep.subr.bf16.mxu0 0
    %3924 = vmatpush1.bf16.msra.mxu0 0
    %3925 = vmatprep.subr.bf16.mxu0 0
    %3926 = vmatpush1.bf16.msra.mxu0 0
    %3927 = vmatprep.subr.bf16.mxu0 0
    %3928 = vmatpush1.bf16.msra.mxu0 0
    %3929 = vmatprep.subr.bf16.mxu0 0
    %3930 = vmatpush1.bf16.msra.mxu0 0
    %3931 = vmatprep.subr.bf16.mxu0 0
    %3932 = vmatpush1.bf16.msra.mxu0 0
    %3933 = vmatprep.subr.bf16.mxu0 0
    %3934 = vmatpush1.bf16.msra.mxu0 0
    %3935 = vmatprep.subr.bf16.mxu0 0
    %3936 = vmatpush1.bf16.msra.mxu0 0
    %3937 = vmatprep.subr.bf16.mxu0 0
    %3938 = vmatpush1.bf16.msra.mxu0 0
    %3939 = vmatprep.subr.bf16.mxu0 0
    %3940 = vmatpush1.bf16.msra.mxu0 0
    %3941 = vmatprep.subr.bf16.mxu0 0
    %3942 = vmatpush1.bf16.msra.mxu0 0
    %3943 = vmatprep.subr.bf16.mxu0 0
    %3944 = vmatpush1.bf16.msra.mxu0 0
    %3945 = vmatprep.mubr.bf16.mxu0 0
    %3946 = vmatmul.mubr.bf16.gmra.mrb[0].mxu0 %v991
    %v3947 = vpop.f32.mrb[0].mxu0
    %v3948 = vadd.f32 %v977, %v3947
    %v3949 = vpop.f32.mrb[0].mxu0
    %v3950 = vadd.f32 %v977, %v3949
    %v3951 = vpop.f32.mrb[0].mxu0
    %v3952 = vadd.f32 %v982, %v3951
    %v3953 = vpop.f32.mrb[0].mxu0
    %v3954 = vadd.f32 %v982, %v3953
    %3955 = vdwg.mxu0
    %3956 = vmatprep.subr.bf16.mxu0 %v3908
    %3957 = vmatpush1.bf16.msra.mxu0 %v3907
    %3958 = vmatprep.subr.bf16.mxu0 0
    %3959 = vmatpush1.bf16.msra.mxu0 0
    %3960 = vmatprep.subr.bf16.mxu0 0
    %3961 = vmatpush1.bf16.msra.mxu0 0
    %3962 = vmatprep.subr.bf16.mxu0 0
    %3963 = vmatpush1.bf16.msra.mxu0 0
    %3964 = vmatprep.subr.bf16.mxu0 0
    %3965 = vmatpush1.bf16.msra.mxu0 0
    %3966 = vmatprep.subr.bf16.mxu0 0
    %3967 = vmatpush1.bf16.msra.mxu0 0
    %3968 = vmatprep.subr.bf16.mxu0 0
    %3969 = vmatpush1.bf16.msra.mxu0 0
    %3970 = vmatprep.subr.bf16.mxu0 0
    %3971 = vmatpush1.bf16.msra.mxu0 0
    %3972 = vmatprep.subr.bf16.mxu0 0
    %3973 = vmatpush1.bf16.msra.mxu0 0
    %3974 = vmatprep.subr.bf16.mxu0 0
    %3975 = vmatpush1.bf16.msra.mxu0 0
    %3976 = vmatprep.subr.bf16.mxu0 0
    %3977 = vmatpush1.bf16.msra.mxu0 0
    %3978 = vmatprep.subr.bf16.mxu0 0
    %3979 = vmatpush1.bf16.msra.mxu0 0
    %3980 = vmatprep.subr.bf16.mxu0 0
    %3981 = vmatpush1.bf16.msra.mxu0 0
    %3982 = vmatprep.subr.bf16.mxu0 0
    %3983 = vmatpush1.bf16.msra.mxu0 0
    %3984 = vmatprep.subr.bf16.mxu0 0
    %3985 = vmatpush1.bf16.msra.mxu0 0
    %3986 = vmatprep.subr.bf16.mxu0 0
    %3987 = vmatpush1.bf16.msra.mxu0 0
    %3988 = vmatprep.mubr.bf16.mxu0 0
    %3989 = vmatmul.mubr.bf16.gmra.mrb[0].mxu0 %v991
    %v3990 = vpop.f32.mrb[0].mxu0
    %v3991 = vadd.f32 %v977, %v3990
    %v3992 = vpop.f32.mrb[0].mxu0
    %v3993 = vadd.f32 %v977, %v3992
    %v3994 = vpop.f32.mrb[0].mxu0
    %v3995 = vadd.f32 %v982, %v3994
    %v3996 = vpop.f32.mrb[0].mxu0
    %v3997 = vadd.f32 %v982, %v3996
    %3998 = vdwg.mxu0
    %3999 = vmatprep.subr.bf16.mxu0 %v3910
    %4000 = vmatpush1.bf16.msra.mxu0 %v3909
    %4001 = vmatprep.subr.bf16.mxu0 0
    %4002 = vmatpush1.bf16.msra.mxu0 0
    %4003 = vmatprep.subr.bf16.mxu0 0
    %4004 = vmatpush1.bf16.msra.mxu0 0
    %4005 = vmatprep.subr.bf16.mxu0 0
    %4006 = vmatpush1.bf16.msra.mxu0 0
    %4007 = vmatprep.subr.bf16.mxu0 0
    %4008 = vmatpush1.bf16.msra.mxu0 0
    %4009 = vmatprep.subr.bf16.mxu0 0
    %4010 = vmatpush1.bf16.msra.mxu0 0
    %4011 = vmatprep.subr.bf16.mxu0 0
    %4012 = vmatpush1.bf16.msra.mxu0 0
    %4013 = vmatprep.subr.bf16.mxu0 0
    %4014 = vmatpush1.bf16.msra.mxu0 0
    %4015 = vmatprep.subr.bf16.mxu0 0
    %4016 = vmatpush1.bf16.msra.mxu0 0
    %4017 = vmatprep.subr.bf16.mxu0 0
    %4018 = vmatpush1.bf16.msra.mxu0 0
    %4019 = vmatprep.subr.bf16.mxu0 0
    %4020 = vmatpush1.bf16.msra.mxu0 0
    %4021 = vmatprep.subr.bf16.mxu0 0
    %4022 = vmatpush1.bf16.msra.mxu0 0
    %4023 = vmatprep.subr.bf16.mxu0 0
    %4024 = vmatpush1.bf16.msra.mxu0 0
    %4025 = vmatprep.subr.bf16.mxu0 0
    %4026 = vmatpush1.bf16.msra.mxu0 0
    %4027 = vmatprep.subr.bf16.mxu0 0
    %4028 = vmatpush1.bf16.msra.mxu0 0
    %4029 = vmatprep.subr.bf16.mxu0 0
    %4030 = vmatpush1.bf16.msra.mxu0 0
    %4031 = vmatprep.mubr.bf16.mxu0 0
    %4032 = vmatmul.mubr.bf16.gmra.mrb[0].mxu0 %v991
    %v4033 = vpop.f32.mrb[0].mxu0
    %v4034 = vadd.f32 %v977, %v4033
    %v4035 = vpop.f32.mrb[0].mxu0
    %v4036 = vadd.f32 %v977, %v4035
    %v4037 = vpop.f32.mrb[0].mxu0
    %v4038 = vadd.f32 %v982, %v4037
    %v4039 = vpop.f32.mrb[0].mxu0
    %v4040 = vadd.f32 %v982, %v4039
    %4041 = vdwg.mxu0
    %4042 = vmatprep.subr.bf16.mxu0 %v3912
    %4043 = vmatpush1.bf16.msra.mxu0 %v3911
    %4044 = vmatprep.subr.bf16.mxu0 0
    %4045 = vmatpush1.bf16.msra.mxu0 0
    %4046 = vmatprep.subr.bf16.mxu0 0
    %4047 = vmatpush1.bf16.msra.mxu0 0
    %4048 = vmatprep.subr.bf16.mxu0 0
    %4049 = vmatpush1.bf16.msra.mxu0 0
    %4050 = vmatprep.subr.bf16.mxu0 0
    %4051 = vmatpush1.bf16.msra.mxu0 0
    %4052 = vmatprep.subr.bf16.mxu0 0
    %4053 = vmatpush1.bf16.msra.mxu0 0
    %4054 = vmatprep.subr.bf16.mxu0 0
    %4055 = vmatpush1.bf16.msra.mxu0 0
    %4056 = vmatprep.subr.bf16.mxu0 0
    %4057 = vmatpush1.bf16.msra.mxu0 0
    %4058 = vmatprep.subr.bf16.mxu0 0
    %4059 = vmatpush1.bf16.msra.mxu0 0
    %4060 = vmatprep.subr.bf16.mxu0 0
    %4061 = vmatpush1.bf16.msra.mxu0 0
    %4062 = vmatprep.subr.bf16.mxu0 0
    %4063 = vmatpush1.bf16.msra.mxu0 0
    %4064 = vmatprep.subr.bf16.mxu0 0
    %4065 = vmatpush1.bf16.msra.mxu0 0
    %4066 = vmatprep.subr.bf16.mxu0 0
    %4067 = vmatpush1.bf16.msra.mxu0 0
    %4068 = vmatprep.subr.bf16.mxu0 0
    %4069 = vmatpush1.bf16.msra.mxu0 0
    %4070 = vmatprep.subr.bf16.mxu0 0
    %4071 = vmatpush1.bf16.msra.mxu0 0
    %4072 = vmatprep.subr.bf16.mxu0 0
    %4073 = vmatpush1.bf16.msra.mxu0 0
    %4074 = vmatprep.mubr.bf16.mxu0 0
    %4075 = vmatmul.mubr.bf16.gmra.mrb[0].mxu0 %v991
    %v4076 = vpop.f32.mrb[0].mxu0
    %v4077 = vadd.f32 %v977, %v4076
    %v4078 = vpop.f32.mrb[0].mxu0
    %v4079 = vadd.f32 %v977, %v4078
    %v4080 = vpop.f32.mrb[0].mxu0
    %v4081 = vadd.f32 %v982, %v4080
    %v4082 = vpop.f32.mrb[0].mxu0
    %v4083 = vadd.f32 %v982, %v4082
    %4084 = vdwg.mxu0
    %v4085 = vmax.f32 %v3948, 0.0
    %v4086 = vmax.f32 %v3950, 0.0
    %v4087 = vmax.f32 %v3991, 0.0
    %v4088 = vmax.f32 %v3993, 0.0
    %v4089 = vmax.f32 %v4034, 0.0
    %v4090 = vmax.f32 %v4036, 0.0
    %v4091 = vmax.f32 %v4077, 0.0
    %v4092 = vmax.f32 %v4079, 0.0
    %v4093 = vmax.f32 %v3952, 0.0
    %v4094 = vmax.f32 %v3954, 0.0
    %v4095 = vmax.f32 %v3995, 0.0
    %v4096 = vmax.f32 %v3997, 0.0
    %v4097 = vmax.f32 %v4038, 0.0
    %v4098 = vmax.f32 %v4040, 0.0
    %v4099 = vmax.f32 %v4081, 0.0
    %v4100 = vmax.f32 %v4083, 0.0
    %v4101 = vpack.c.bf16 %v4093, %v4085
    %v4102 = vpack.c.bf16 %v4094, %v4086
    %v4103 = vpack.c.bf16 %v4095, %v4087
    %v4104 = vpack.c.bf16 %v4096, %v4088
    %v4105 = vpack.c.bf16 %v4097, %v4089
    %v4106 = vpack.c.bf16 %v4098, %v4090
    %v4107 = vpack.c.bf16 %v4099, %v4091
    %v4108 = vpack.c.bf16 %v4100, %v4092
    %4109 = vmatprep.subr.bf16.mxu0 %v4102
    %4110 = vmatpush1.bf16.msra.mxu0 %v4101
    %4111 = vmatprep.subr.bf16.mxu0 0
    %4112 = vmatpush1.bf16.msra.mxu0 0
    %4113 = vmatprep.subr.bf16.mxu0 0
    %4114 = vmatpush1.bf16.msra.mxu0 0
    %4115 = vmatprep.subr.bf16.mxu0 0
    %4116 = vmatpush1.bf16.msra.mxu0 0
    %4117 = vmatprep.subr.bf16.mxu0 0
    %4118 = vmatpush1.bf16.msra.mxu0 0
    %4119 = vmatprep.subr.bf16.mxu0 0
    %4120 = vmatpush1.bf16.msra.mxu0 0
    %4121 = vmatprep.subr.bf16.mxu0 0
    %4122 = vmatpush1.bf16.msra.mxu0 0
    %4123 = vmatprep.subr.bf16.mxu0 0
    %4124 = vmatpush1.bf16.msra.mxu0 0
    %4125 = vmatprep.subr.bf16.mxu0 0
    %4126 = vmatpush1.bf16.msra.mxu0 0
    %4127 = vmatprep.subr.bf16.mxu0 0
    %4128 = vmatpush1.bf16.msra.mxu0 0
    %4129 = vmatprep.subr.bf16.mxu0 0
    %4130 = vmatpush1.bf16.msra.mxu0 0
    %4131 = vmatprep.subr.bf16.mxu0 0
    %4132 = vmatpush1.bf16.msra.mxu0 0
    %4133 = vmatprep.subr.bf16.mxu0 0
    %4134 = vmatpush1.bf16.msra.mxu0 0
    %4135 = vmatprep.subr.bf16.mxu0 0
    %4136 = vmatpush1.bf16.msra.mxu0 0
    %4137 = vmatprep.subr.bf16.mxu0 0
    %4138 = vmatpush1.bf16.msra.mxu0 0
    %4139 = vmatprep.subr.bf16.mxu0 0
    %4140 = vmatpush1.bf16.msra.mxu0 0
    %4141 = vmatprep.mubr.bf16.mxu0 0
    %4142 = vmatmul.mubr.bf16.gmra.mrb[0].mxu0 %v1220
    %v4143 = vpop.f32.mrb[0].mxu0
    %v4144 = vadd.f32 %v1192, %v4143
    %v4145 = vpop.f32.mrb[0].mxu0
    %v4146 = vadd.f32 %v1192, %v4145
    %v4147 = vpop.f32.mrb[0].mxu0
    %v4148 = vadd.f32 %v1197, %v4147
    %v4149 = vpop.f32.mrb[0].mxu0
    %v4150 = vadd.f32 %v1197, %v4149
    %4151 = vmatprep.mubr.bf16.mxu0 0
    %4152 = vmatmul.mubr.bf16.gmra.mrb[0].mxu0 %v1223
    %v4153 = vpop.f32.mrb[0].mxu0
    %v4154 = vadd.f32 %v1202, %v4153
    %v4155 = vpop.f32.mrb[0].mxu0
    %v4156 = vadd.f32 %v1202, %v4155
    %v4157 = vpop.f32.mrb[0].mxu0
    %v4158 = vadd.f32 %v1207, %v4157
    %v4159 = vpop.f32.mrb[0].mxu0
    %v4160 = vadd.f32 %v1207, %v4159
    %4161 = vdwg.mxu0
    %4162 = vmatprep.subr.bf16.mxu0 %v4104
    %4163 = vmatpush1.bf16.msra.mxu0 %v4103
    %4164 = vmatprep.subr.bf16.mxu0 0
    %4165 = vmatpush1.bf16.msra.mxu0 0
    %4166 = vmatprep.subr.bf16.mxu0 0
    %4167 = vmatpush1.bf16.msra.mxu0 0
    %4168 = vmatprep.subr.bf16.mxu0 0
    %4169 = vmatpush1.bf16.msra.mxu0 0
    %4170 = vmatprep.subr.bf16.mxu0 0
    %4171 = vmatpush1.bf16.msra.mxu0 0
    %4172 = vmatprep.subr.bf16.mxu0 0
    %4173 = vmatpush1.bf16.msra.mxu0 0
    %4174 = vmatprep.subr.bf16.mxu0 0
    %4175 = vmatpush1.bf16.msra.mxu0 0
    %4176 = vmatprep.subr.bf16.mxu0 0
    %4177 = vmatpush1.bf16.msra.mxu0 0
    %4178 = vmatprep.subr.bf16.mxu0 0
    %4179 = vmatpush1.bf16.msra.mxu0 0
    %4180 = vmatprep.subr.bf16.mxu0 0
    %4181 = vmatpush1.bf16.msra.mxu0 0
    %4182 = vmatprep.subr.bf16.mxu0 0
    %4183 = vmatpush1.bf16.msra.mxu0 0
    %4184 = vmatprep.subr.bf16.mxu0 0
    %4185 = vmatpush1.bf16.msra.mxu0 0
    %4186 = vmatprep.subr.bf16.mxu0 0
    %4187 = vmatpush1.bf16.msra.mxu0 0
    %4188 = vmatprep.subr.bf16.mxu0 0
    %4189 = vmatpush1.bf16.msra.mxu0 0
    %4190 = vmatprep.subr.bf16.mxu0 0
    %4191 = vmatpush1.bf16.msra.mxu0 0
    %4192 = vmatprep.subr.bf16.mxu0 0
    %4193 = vmatpush1.bf16.msra.mxu0 0
    %4194 = vmatprep.mubr.bf16.mxu0 0
    %4195 = vmatmul.mubr.bf16.gmra.mrb[0].mxu0 %v1220
    %v4196 = vpop.f32.mrb[0].mxu0
    %v4197 = vadd.f32 %v1192, %v4196
    %v4198 = vpop.f32.mrb[0].mxu0
    %v4199 = vadd.f32 %v1192, %v4198
    %v4200 = vpop.f32.mrb[0].mxu0
    %v4201 = vadd.f32 %v1197, %v4200
    %v4202 = vpop.f32.mrb[0].mxu0
    %v4203 = vadd.f32 %v1197, %v4202
    %4204 = vmatprep.mubr.bf16.mxu0 0
    %4205 = vmatmul.mubr.bf16.gmra.mrb[0].mxu0 %v1223
    %v4206 = vpop.f32.mrb[0].mxu0
    %v4207 = vadd.f32 %v1202, %v4206
    %v4208 = vpop.f32.mrb[0].mxu0
    %v4209 = vadd.f32 %v1202, %v4208
    %v4210 = vpop.f32.mrb[0].mxu0
    %v4211 = vadd.f32 %v1207, %v4210
    %v4212 = vpop.f32.mrb[0].mxu0
    %v4213 = vadd.f32 %v1207, %v4212
    %4214 = vdwg.mxu0
    %4215 = vmatprep.subr.bf16.mxu0 %v4106
    %4216 = vmatpush1.bf16.msra.mxu0 %v4105
    %4217 = vmatprep.subr.bf16.mxu0 0
    %4218 = vmatpush1.bf16.msra.mxu0 0
    %4219 = vmatprep.subr.bf16.mxu0 0
    %4220 = vmatpush1.bf16.msra.mxu0 0
    %4221 = vmatprep.subr.bf16.mxu0 0
    %4222 = vmatpush1.bf16.msra.mxu0 0
    %4223 = vmatprep.subr.bf16.mxu0 0
    %4224 = vmatpush1.bf16.msra.mxu0 0
    %4225 = vmatprep.subr.bf16.mxu0 0
    %4226 = vmatpush1.bf16.msra.mxu0 0
    %4227 = vmatprep.subr.bf16.mxu0 0
    %4228 = vmatpush1.bf16.msra.mxu0 0
    %4229 = vmatprep.subr.bf16.mxu0 0
    %4230 = vmatpush1.bf16.msra.mxu0 0
    %4231 = vmatprep.subr.bf16.mxu0 0
    %4232 = vmatpush1.bf16.msra.mxu0 0
    %4233 = vmatprep.subr.bf16.mxu0 0
    %4234 = vmatpush1.bf16.msra.mxu0 0
    %4235 = vmatprep.subr.bf16.mxu0 0
    %4236 = vmatpush1.bf16.msra.mxu0 0
    %4237 = vmatprep.subr.bf16.mxu0 0
    %4238 = vmatpush1.bf16.msra.mxu0 0
    %4239 = vmatprep.subr.bf16.mxu0 0
    %4240 = vmatpush1.bf16.msra.mxu0 0
    %4241 = vmatprep.subr.bf16.mxu0 0
    %4242 = vmatpush1.bf16.msra.mxu0 0
    %4243 = vmatprep.subr.bf16.mxu0 0
    %4244 = vmatpush1.bf16.msra.mxu0 0
    %4245 = vmatprep.subr.bf16.mxu0 0
    %4246 = vmatpush1.bf16.msra.mxu0 0
    %4247 = vmatprep.mubr.bf16.mxu0 0
    %4248 = vmatmul.mubr.bf16.gmra.mrb[0].mxu0 %v1220
    %v4249 = vpop.f32.mrb[0].mxu0
    %v4250 = vadd.f32 %v1192, %v4249
    %v4251 = vpop.f32.mrb[0].mxu0
    %v4252 = vadd.f32 %v1192, %v4251
    %v4253 = vpop.f32.mrb[0].mxu0
    %v4254 = vadd.f32 %v1197, %v4253
    %v4255 = vpop.f32.mrb[0].mxu0
    %v4256 = vadd.f32 %v1197, %v4255
    %4257 = vmatprep.mubr.bf16.mxu0 0
    %4258 = vmatmul.mubr.bf16.gmra.mrb[0].mxu0 %v1223
    %v4259 = vpop.f32.mrb[0].mxu0
    %v4260 = vadd.f32 %v1202, %v4259
    %v4261 = vpop.f32.mrb[0].mxu0
    %v4262 = vadd.f32 %v1202, %v4261
    %v4263 = vpop.f32.mrb[0].mxu0
    %v4264 = vadd.f32 %v1207, %v4263
    %v4265 = vpop.f32.mrb[0].mxu0
    %v4266 = vadd.f32 %v1207, %v4265
    %4267 = vdwg.mxu0
    %4268 = vmatprep.subr.bf16.mxu0 %v4108
    %4269 = vmatpush1.bf16.msra.mxu0 %v4107
    %4270 = vmatprep.subr.bf16.mxu0 0
    %4271 = vmatpush1.bf16.msra.mxu0 0
    %4272 = vmatprep.subr.bf16.mxu0 0
    %4273 = vmatpush1.bf16.msra.mxu0 0
    %4274 = vmatprep.subr.bf16.mxu0 0
    %4275 = vmatpush1.bf16.msra.mxu0 0
    %4276 = vmatprep.subr.bf16.mxu0 0
    %4277 = vmatpush1.bf16.msra.mxu0 0
    %4278 = vmatprep.subr.bf16.mxu0 0
    %4279 = vmatpush1.bf16.msra.mxu0 0
    %4280 = vmatprep.subr.bf16.mxu0 0
    %4281 = vmatpush1.bf16.msra.mxu0 0
    %4282 = vmatprep.subr.bf16.mxu0 0
    %4283 = vmatpush1.bf16.msra.mxu0 0
    %4284 = vmatprep.subr.bf16.mxu0 0
    %4285 = vmatpush1.bf16.msra.mxu0 0
    %4286 = vmatprep.subr.bf16.mxu0 0
    %4287 = vmatpush1.bf16.msra.mxu0 0
    %4288 = vmatprep.subr.bf16.mxu0 0
    %4289 = vmatpush1.bf16.msra.mxu0 0
    %4290 = vmatprep.subr.bf16.mxu0 0
    %4291 = vmatpush1.bf16.msra.mxu0 0
    %4292 = vmatprep.subr.bf16.mxu0 0
    %4293 = vmatpush1.bf16.msra.mxu0 0
    %4294 = vmatprep.subr.bf16.mxu0 0
    %4295 = vmatpush1.bf16.msra.mxu0 0
    %4296 = vmatprep.subr.bf16.mxu0 0
    %4297 = vmatpush1.bf16.msra.mxu0 0
    %4298 = vmatprep.subr.bf16.mxu0 0
    %4299 = vmatpush1.bf16.msra.mxu0 0
    %4300 = vmatprep.mubr.bf16.mxu0 0
    %4301 = vmatmul.mubr.bf16.gmra.mrb[0].mxu0 %v1220
    %v4302 = vpop.f32.mrb[0].mxu0
    %v4303 = vadd.f32 %v1192, %v4302
    %v4304 = vpop.f32.mrb[0].mxu0
    %v4305 = vadd.f32 %v1192, %v4304
    %v4306 = vpop.f32.mrb[0].mxu0
    %v4307 = vadd.f32 %v1197, %v4306
    %v4308 = vpop.f32.mrb[0].mxu0
    %v4309 = vadd.f32 %v1197, %v4308
    %4310 = vmatprep.mubr.bf16.mxu0 0
    %4311 = vmatmul.mubr.bf16.gmra.mrb[0].mxu0 %v1223
    %v4312 = vpop.f32.mrb[0].mxu0
    %v4313 = vadd.f32 %v1202, %v4312
    %v4314 = vpop.f32.mrb[0].mxu0
    %v4315 = vadd.f32 %v1202, %v4314
    %v4316 = vpop.f32.mrb[0].mxu0
    %v4317 = vadd.f32 %v1207, %v4316
    %v4318 = vpop.f32.mrb[0].mxu0
    %v4319 = vadd.f32 %v1207, %v4318
    %4320 = vdwg.mxu0
    %v4321 = vmax.f32 %v4144, 0.0
    %v4322 = vmax.f32 %v4146, 0.0
    %v4323 = vmax.f32 %v4197, 0.0
    %v4324 = vmax.f32 %v4199, 0.0
    %v4325 = vmax.f32 %v4250, 0.0
    %v4326 = vmax.f32 %v4252, 0.0
    %v4327 = vmax.f32 %v4303, 0.0
    %v4328 = vmax.f32 %v4305, 0.0
    %v4329 = vmax.f32 %v4148, 0.0
    %v4330 = vmax.f32 %v4150, 0.0
    %v4331 = vmax.f32 %v4201, 0.0
    %v4332 = vmax.f32 %v4203, 0.0
    %v4333 = vmax.f32 %v4254, 0.0
    %v4334 = vmax.f32 %v4256, 0.0
    %v4335 = vmax.f32 %v4307, 0.0
    %v4336 = vmax.f32 %v4309, 0.0
    %v4337 = vmax.f32 %v4154, 0.0
    %v4338 = vmax.f32 %v4156, 0.0
    %v4339 = vmax.f32 %v4207, 0.0
    %v4340 = vmax.f32 %v4209, 0.0
    %v4341 = vmax.f32 %v4260, 0.0
    %v4342 = vmax.f32 %v4262, 0.0
    %v4343 = vmax.f32 %v4313, 0.0
    %v4344 = vmax.f32 %v4315, 0.0
    %v4345 = vmax.f32 %v4158, 0.0
    %v4346 = vmax.f32 %v4160, 0.0
    %v4347 = vmax.f32 %v4211, 0.0
    %v4348 = vmax.f32 %v4213, 0.0
    %v4349 = vmax.f32 %v4264, 0.0
    %v4350 = vmax.f32 %v4266, 0.0
    %v4351 = vmax.f32 %v4317, 0.0
    %v4352 = vmax.f32 %v4319, 0.0
    %vm4353 = vcmp.gt.s32.totalorder %v38, 16
    %v4354 = vsel %vm4353, 1, 0
    %v4355 = vlaneseq
    %v4356 = vshrl.u32 %v4355, 7
    %v4357 = vsub.s32 0, %v4356
    %v4358 = vrot.slane %v4354, %v4357
    %vm4359 = vcmp.eq.s32.totalorder %v4358, 1
    %v4360 = vsel %vm4359, %v4321, 0.0
    %v4361 = vsel %vm4359, %v4329, 0.0
    %v4362 = vsel %vm4359, %v4337, 0.0
    %v4363 = vsel %vm4359, %v4345, 0.0
    %v4364 = vmax.f32 %v3027, %v4360
    %v4365 = vmax.f32 %v3028, %v4361
    %v4366 = vmax.f32 %v3029, %v4362
    %v4367 = vmax.f32 %v3030, %v4363
    %vm4368 = vcmp.gt.s32.totalorder %v38, 17
    %v4369 = vsel %vm4368, 1, 0
    %v4370 = vlaneseq
    %v4371 = vshrl.u32 %v4370, 7
    %v4372 = vsub.s32 0, %v4371
    %v4373 = vrot.slane %v4369, %v4372
    %vm4374 = vcmp.eq.s32.totalorder %v4373, 1
    %v4375 = vsel %vm4374, %v4322, 0.0
    %v4376 = vsel %vm4374, %v4330, 0.0
    %v4377 = vsel %vm4374, %v4338, 0.0
    %v4378 = vsel %vm4374, %v4346, 0.0
    %v4379 = vmax.f32 %v4364, %v4375
    %v4380 = vmax.f32 %v4365, %v4376
    %v4381 = vmax.f32 %v4366, %v4377
    %v4382 = vmax.f32 %v4367, %v4378
    %vm4383 = vcmp.gt.s32.totalorder %v38, 18
    %v4384 = vsel %vm4383, 1, 0
    %v4385 = vlaneseq
    %v4386 = vshrl.u32 %v4385, 7
    %v4387 = vsub.s32 0, %v4386
    %v4388 = vrot.slane %v4384, %v4387
    %vm4389 = vcmp.eq.s32.totalorder %v4388, 1
    %v4390 = vsel %vm4389, %v4323, 0.0
    %v4391 = vsel %vm4389, %v4331, 0.0
    %v4392 = vsel %vm4389, %v4339, 0.0
    %v4393 = vsel %vm4389, %v4347, 0.0
    %v4394 = vmax.f32 %v4379, %v4390
    %v4395 = vmax.f32 %v4380, %v4391
    %v4396 = vmax.f32 %v4381, %v4392
    %v4397 = vmax.f32 %v4382, %v4393
    %vm4398 = vcmp.gt.s32.totalorder %v38, 19
    %v4399 = vsel %vm4398, 1, 0
    %v4400 = vlaneseq
    %v4401 = vshrl.u32 %v4400, 7
    %v4402 = vsub.s32 0, %v4401
    %v4403 = vrot.slane %v4399, %v4402
    %vm4404 = vcmp.eq.s32.totalorder %v4403, 1
    %v4405 = vsel %vm4404, %v4324, 0.0
    %v4406 = vsel %vm4404, %v4332, 0.0
    %v4407 = vsel %vm4404, %v4340, 0.0
    %v4408 = vsel %vm4404, %v4348, 0.0
    %v4409 = vmax.f32 %v4394, %v4405
    %v4410 = vmax.f32 %v4395, %v4406
    %v4411 = vmax.f32 %v4396, %v4407
    %v4412 = vmax.f32 %v4397, %v4408
    %vm4413 = vcmp.gt.s32.totalorder %v38, 20
    %v4414 = vsel %vm4413, 1, 0
    %v4415 = vlaneseq
    %v4416 = vshrl.u32 %v4415, 7
    %v4417 = vsub.s32 0, %v4416
    %v4418 = vrot.slane %v4414, %v4417
    %vm4419 = vcmp.eq.s32.totalorder %v4418, 1
    %v4420 = vsel %vm4419, %v4325, 0.0
    %v4421 = vsel %vm4419, %v4333, 0.0
    %v4422 = vsel %vm4419, %v4341, 0.0
    %v4423 = vsel %vm4419, %v4349, 0.0
    %v4424 = vmax.f32 %v4409, %v4420
    %v4425 = vmax.f32 %v4410, %v4421
    %v4426 = vmax.f32 %v4411, %v4422
    %v4427 = vmax.f32 %v4412, %v4423
    %vm4428 = vcmp.gt.s32.totalorder %v38, 21
    %v4429 = vsel %vm4428, 1, 0
    %v4430 = vlaneseq
    %v4431 = vshrl.u32 %v4430, 7
    %v4432 = vsub.s32 0, %v4431
    %v4433 = vrot.slane %v4429, %v4432
    %vm4434 = vcmp.eq.s32.totalorder %v4433, 1
    %v4435 = vsel %vm4434, %v4326, 0.0
    %v4436 = vsel %vm4434, %v4334, 0.0
    %v4437 = vsel %vm4434, %v4342, 0.0
    %v4438 = vsel %vm4434, %v4350, 0.0
    %v4439 = vmax.f32 %v4424, %v4435
    %v4440 = vmax.f32 %v4425, %v4436
    %v4441 = vmax.f32 %v4426, %v4437
    %v4442 = vmax.f32 %v4427, %v4438
    %vm4443 = vcmp.gt.s32.totalorder %v38, 22
    %v4444 = vsel %vm4443, 1, 0
    %v4445 = vlaneseq
    %v4446 = vshrl.u32 %v4445, 7
    %v4447 = vsub.s32 0, %v4446
    %v4448 = vrot.slane %v4444, %v4447
    %vm4449 = vcmp.eq.s32.totalorder %v4448, 1
    %v4450 = vsel %vm4449, %v4327, 0.0
    %v4451 = vsel %vm4449, %v4335, 0.0
    %v4452 = vsel %vm4449, %v4343, 0.0
    %v4453 = vsel %vm4449, %v4351, 0.0
    %v4454 = vmax.f32 %v4439, %v4450
    %v4455 = vmax.f32 %v4440, %v4451
    %v4456 = vmax.f32 %v4441, %v4452
    %v4457 = vmax.f32 %v4442, %v4453
    %vm4458 = vcmp.gt.s32.totalorder %v38, 23
    %v4459 = vsel %vm4458, 1, 0
    %v4460 = vlaneseq
    %v4461 = vshrl.u32 %v4460, 7
    %v4462 = vsub.s32 0, %v4461
    %v4463 = vrot.slane %v4459, %v4462
    %vm4464 = vcmp.eq.s32.totalorder %v4463, 1
    %v4465 = vsel %vm4464, %v4328, 0.0
    %v4466 = vsel %vm4464, %v4336, 0.0
    %v4467 = vsel %vm4464, %v4344, 0.0
    %v4468 = vsel %vm4464, %v4352, 0.0
    %v4469 = vmax.f32 %v4454, %v4465
    %v4470 = vmax.f32 %v4455, %v4466
    %v4471 = vmax.f32 %v4456, %v4467
    %v4472 = vmax.f32 %v4457, %v4468
    %s4473 = scalar_lea.vmem %s0, 24
    %v4474 = vld [vmem:[%s4473] sm:$0xff]
    %v4475 = vlaneseq
    %v4476 = vshrl.u32 %v4475, 7
    %v4477 = vsub.s32 0, %v4476
    %v4478 = vrot.slane %v4474, %v4477
    %v4479 = vlaneseq
    %v4480 = vshrl.u32 %v4479, 7
    %v4481 = vsub.s32 1, %v4480
    %v4482 = vrot.slane %v4474, %v4481
    %v4483 = vlaneseq
    %v4484 = vshrl.u32 %v4483, 7
    %v4485 = vsub.s32 2, %v4484
    %v4486 = vrot.slane %v4474, %v4485
    %v4487 = vlaneseq
    %v4488 = vshrl.u32 %v4487, 7
    %v4489 = vsub.s32 3, %v4488
    %v4490 = vrot.slane %v4474, %v4489
    %v4491 = vlaneseq
    %v4492 = vshrl.u32 %v4491, 7
    %v4493 = vsub.s32 4, %v4492
    %v4494 = vrot.slane %v4474, %v4493
    %v4495 = vlaneseq
    %v4496 = vshrl.u32 %v4495, 7
    %v4497 = vsub.s32 5, %v4496
    %v4498 = vrot.slane %v4474, %v4497
    %v4499 = vlaneseq
    %v4500 = vshrl.u32 %v4499, 7
    %v4501 = vsub.s32 6, %v4500
    %v4502 = vrot.slane %v4474, %v4501
    %v4503 = vlaneseq
    %v4504 = vshrl.u32 %v4503, 7
    %v4505 = vsub.s32 7, %v4504
    %v4506 = vrot.slane %v4474, %v4505
    %vm4507 = vcmp.eq.s32.totalorder %v41, %v4478
    %vm4508 = vcmp.eq.s32.totalorder %v41, %v4482
    %vm4509 = vcmp.eq.s32.totalorder %v41, %v4486
    %vm4510 = vcmp.eq.s32.totalorder %v41, %v4490
    %vm4511 = vcmp.eq.s32.totalorder %v41, %v4494
    %vm4512 = vcmp.eq.s32.totalorder %v41, %v4498
    %vm4513 = vcmp.eq.s32.totalorder %v41, %v4502
    %vm4514 = vcmp.eq.s32.totalorder %v41, %v4506
    %vm4515 = vcmp.eq.s32.totalorder %v42, %v4478
    %vm4516 = vcmp.eq.s32.totalorder %v42, %v4482
    %vm4517 = vcmp.eq.s32.totalorder %v42, %v4486
    %vm4518 = vcmp.eq.s32.totalorder %v42, %v4490
    %vm4519 = vcmp.eq.s32.totalorder %v42, %v4494
    %vm4520 = vcmp.eq.s32.totalorder %v42, %v4498
    %vm4521 = vcmp.eq.s32.totalorder %v42, %v4502
    %vm4522 = vcmp.eq.s32.totalorder %v42, %v4506
    %vm4523 = vcmp.eq.s32.totalorder %v43, %v4478
    %vm4524 = vcmp.eq.s32.totalorder %v43, %v4482
    %vm4525 = vcmp.eq.s32.totalorder %v43, %v4486
    %vm4526 = vcmp.eq.s32.totalorder %v43, %v4490
    %vm4527 = vcmp.eq.s32.totalorder %v43, %v4494
    %vm4528 = vcmp.eq.s32.totalorder %v43, %v4498
    %vm4529 = vcmp.eq.s32.totalorder %v43, %v4502
    %vm4530 = vcmp.eq.s32.totalorder %v43, %v4506
    %vm4531 = vcmp.eq.s32.totalorder %v44, %v4478
    %vm4532 = vcmp.eq.s32.totalorder %v44, %v4482
    %vm4533 = vcmp.eq.s32.totalorder %v44, %v4486
    %vm4534 = vcmp.eq.s32.totalorder %v44, %v4490
    %vm4535 = vcmp.eq.s32.totalorder %v44, %v4494
    %vm4536 = vcmp.eq.s32.totalorder %v44, %v4498
    %vm4537 = vcmp.eq.s32.totalorder %v44, %v4502
    %vm4538 = vcmp.eq.s32.totalorder %v44, %v4506
    %vm4539 = vcmp.eq.s32.totalorder %v45, %v4478
    %vm4540 = vcmp.eq.s32.totalorder %v45, %v4482
    %vm4541 = vcmp.eq.s32.totalorder %v45, %v4486
    %vm4542 = vcmp.eq.s32.totalorder %v45, %v4490
    %vm4543 = vcmp.eq.s32.totalorder %v45, %v4494
    %vm4544 = vcmp.eq.s32.totalorder %v45, %v4498
    %vm4545 = vcmp.eq.s32.totalorder %v45, %v4502
    %vm4546 = vcmp.eq.s32.totalorder %v45, %v4506
    %vm4547 = vcmp.eq.s32.totalorder %v46, %v4478
    %vm4548 = vcmp.eq.s32.totalorder %v46, %v4482
    %vm4549 = vcmp.eq.s32.totalorder %v46, %v4486
    %vm4550 = vcmp.eq.s32.totalorder %v46, %v4490
    %vm4551 = vcmp.eq.s32.totalorder %v46, %v4494
    %vm4552 = vcmp.eq.s32.totalorder %v46, %v4498
    %vm4553 = vcmp.eq.s32.totalorder %v46, %v4502
    %vm4554 = vcmp.eq.s32.totalorder %v46, %v4506
    %vm4555 = vcmp.eq.s32.totalorder %v47, %v4478
    %vm4556 = vcmp.eq.s32.totalorder %v47, %v4482
    %vm4557 = vcmp.eq.s32.totalorder %v47, %v4486
    %vm4558 = vcmp.eq.s32.totalorder %v47, %v4490
    %vm4559 = vcmp.eq.s32.totalorder %v47, %v4494
    %vm4560 = vcmp.eq.s32.totalorder %v47, %v4498
    %vm4561 = vcmp.eq.s32.totalorder %v47, %v4502
    %vm4562 = vcmp.eq.s32.totalorder %v47, %v4506
    %vm4563 = vcmp.eq.s32.totalorder %v48, %v4478
    %vm4564 = vcmp.eq.s32.totalorder %v48, %v4482
    %vm4565 = vcmp.eq.s32.totalorder %v48, %v4486
    %vm4566 = vcmp.eq.s32.totalorder %v48, %v4490
    %vm4567 = vcmp.eq.s32.totalorder %v48, %v4494
    %vm4568 = vcmp.eq.s32.totalorder %v48, %v4498
    %vm4569 = vcmp.eq.s32.totalorder %v48, %v4502
    %vm4570 = vcmp.eq.s32.totalorder %v48, %v4506
    %vm4571 = vcmp.eq.s32.totalorder %v49, %v4478
    %vm4572 = vcmp.eq.s32.totalorder %v49, %v4482
    %vm4573 = vcmp.eq.s32.totalorder %v49, %v4486
    %vm4574 = vcmp.eq.s32.totalorder %v49, %v4490
    %vm4575 = vcmp.eq.s32.totalorder %v49, %v4494
    %vm4576 = vcmp.eq.s32.totalorder %v49, %v4498
    %vm4577 = vcmp.eq.s32.totalorder %v49, %v4502
    %vm4578 = vcmp.eq.s32.totalorder %v49, %v4506
    %vm4579 = vcmp.eq.s32.totalorder %v50, %v4478
    %vm4580 = vcmp.eq.s32.totalorder %v50, %v4482
    %vm4581 = vcmp.eq.s32.totalorder %v50, %v4486
    %vm4582 = vcmp.eq.s32.totalorder %v50, %v4490
    %vm4583 = vcmp.eq.s32.totalorder %v50, %v4494
    %vm4584 = vcmp.eq.s32.totalorder %v50, %v4498
    %vm4585 = vcmp.eq.s32.totalorder %v50, %v4502
    %vm4586 = vcmp.eq.s32.totalorder %v50, %v4506
    %vm4587 = vcmp.eq.s32.totalorder %v51, %v4478
    %vm4588 = vcmp.eq.s32.totalorder %v51, %v4482
    %vm4589 = vcmp.eq.s32.totalorder %v51, %v4486
    %vm4590 = vcmp.eq.s32.totalorder %v51, %v4490
    %vm4591 = vcmp.eq.s32.totalorder %v51, %v4494
    %vm4592 = vcmp.eq.s32.totalorder %v51, %v4498
    %vm4593 = vcmp.eq.s32.totalorder %v51, %v4502
    %vm4594 = vcmp.eq.s32.totalorder %v51, %v4506
    %vm4595 = vcmp.eq.s32.totalorder %v52, %v4478
    %vm4596 = vcmp.eq.s32.totalorder %v52, %v4482
    %vm4597 = vcmp.eq.s32.totalorder %v52, %v4486
    %vm4598 = vcmp.eq.s32.totalorder %v52, %v4490
    %vm4599 = vcmp.eq.s32.totalorder %v52, %v4494
    %vm4600 = vcmp.eq.s32.totalorder %v52, %v4498
    %vm4601 = vcmp.eq.s32.totalorder %v52, %v4502
    %vm4602 = vcmp.eq.s32.totalorder %v52, %v4506
    %vm4603 = vcmp.eq.s32.totalorder %v53, %v4478
    %vm4604 = vcmp.eq.s32.totalorder %v53, %v4482
    %vm4605 = vcmp.eq.s32.totalorder %v53, %v4486
    %vm4606 = vcmp.eq.s32.totalorder %v53, %v4490
    %vm4607 = vcmp.eq.s32.totalorder %v53, %v4494
    %vm4608 = vcmp.eq.s32.totalorder %v53, %v4498
    %vm4609 = vcmp.eq.s32.totalorder %v53, %v4502
    %vm4610 = vcmp.eq.s32.totalorder %v53, %v4506
    %vm4611 = vcmp.eq.s32.totalorder %v54, %v4478
    %vm4612 = vcmp.eq.s32.totalorder %v54, %v4482
    %vm4613 = vcmp.eq.s32.totalorder %v54, %v4486
    %vm4614 = vcmp.eq.s32.totalorder %v54, %v4490
    %vm4615 = vcmp.eq.s32.totalorder %v54, %v4494
    %vm4616 = vcmp.eq.s32.totalorder %v54, %v4498
    %vm4617 = vcmp.eq.s32.totalorder %v54, %v4502
    %vm4618 = vcmp.eq.s32.totalorder %v54, %v4506
    %vm4619 = vcmp.eq.s32.totalorder %v55, %v4478
    %vm4620 = vcmp.eq.s32.totalorder %v55, %v4482
    %vm4621 = vcmp.eq.s32.totalorder %v55, %v4486
    %vm4622 = vcmp.eq.s32.totalorder %v55, %v4490
    %vm4623 = vcmp.eq.s32.totalorder %v55, %v4494
    %vm4624 = vcmp.eq.s32.totalorder %v55, %v4498
    %vm4625 = vcmp.eq.s32.totalorder %v55, %v4502
    %vm4626 = vcmp.eq.s32.totalorder %v55, %v4506
    %vm4627 = vcmp.eq.s32.totalorder %v56, %v4478
    %vm4628 = vcmp.eq.s32.totalorder %v56, %v4482
    %vm4629 = vcmp.eq.s32.totalorder %v56, %v4486
    %vm4630 = vcmp.eq.s32.totalorder %v56, %v4490
    %vm4631 = vcmp.eq.s32.totalorder %v56, %v4494
    %vm4632 = vcmp.eq.s32.totalorder %v56, %v4498
    %vm4633 = vcmp.eq.s32.totalorder %v56, %v4502
    %vm4634 = vcmp.eq.s32.totalorder %v56, %v4506
    %v4635 = vsel %vm4507, 1, 0
    %v4636 = vsel %vm4508, 1, 0
    %v4637 = vsel %vm4509, 1, 0
    %v4638 = vsel %vm4510, 1, 0
    %v4639 = vsel %vm4511, 1, 0
    %v4640 = vsel %vm4512, 1, 0
    %v4641 = vsel %vm4513, 1, 0
    %v4642 = vsel %vm4514, 1, 0
    %v4643 = vsel %vm4515, 1, 0
    %v4644 = vsel %vm4516, 1, 0
    %v4645 = vsel %vm4517, 1, 0
    %v4646 = vsel %vm4518, 1, 0
    %v4647 = vsel %vm4519, 1, 0
    %v4648 = vsel %vm4520, 1, 0
    %v4649 = vsel %vm4521, 1, 0
    %v4650 = vsel %vm4522, 1, 0
    %v4651 = vsel %vm4523, 1, 0
    %v4652 = vsel %vm4524, 1, 0
    %v4653 = vsel %vm4525, 1, 0
    %v4654 = vsel %vm4526, 1, 0
    %v4655 = vsel %vm4527, 1, 0
    %v4656 = vsel %vm4528, 1, 0
    %v4657 = vsel %vm4529, 1, 0
    %v4658 = vsel %vm4530, 1, 0
    %v4659 = vsel %vm4531, 1, 0
    %v4660 = vsel %vm4532, 1, 0
    %v4661 = vsel %vm4533, 1, 0
    %v4662 = vsel %vm4534, 1, 0
    %v4663 = vsel %vm4535, 1, 0
    %v4664 = vsel %vm4536, 1, 0
    %v4665 = vsel %vm4537, 1, 0
    %v4666 = vsel %vm4538, 1, 0
    %v4667 = vsel %vm4539, 1, 0
    %v4668 = vsel %vm4540, 1, 0
    %v4669 = vsel %vm4541, 1, 0
    %v4670 = vsel %vm4542, 1, 0
    %v4671 = vsel %vm4543, 1, 0
    %v4672 = vsel %vm4544, 1, 0
    %v4673 = vsel %vm4545, 1, 0
    %v4674 = vsel %vm4546, 1, 0
    %v4675 = vsel %vm4547, 1, 0
    %v4676 = vsel %vm4548, 1, 0
    %v4677 = vsel %vm4549, 1, 0
    %v4678 = vsel %vm4550, 1, 0
    %v4679 = vsel %vm4551, 1, 0
    %v4680 = vsel %vm4552, 1, 0
    %v4681 = vsel %vm4553, 1, 0
    %v4682 = vsel %vm4554, 1, 0
    %v4683 = vsel %vm4555, 1, 0
    %v4684 = vsel %vm4556, 1, 0
    %v4685 = vsel %vm4557, 1, 0
    %v4686 = vsel %vm4558, 1, 0
    %v4687 = vsel %vm4559, 1, 0
    %v4688 = vsel %vm4560, 1, 0
    %v4689 = vsel %vm4561, 1, 0
    %v4690 = vsel %vm4562, 1, 0
    %v4691 = vsel %vm4563, 1, 0
    %v4692 = vsel %vm4564, 1, 0
    %v4693 = vsel %vm4565, 1, 0
    %v4694 = vsel %vm4566, 1, 0
    %v4695 = vsel %vm4567, 1, 0
    %v4696 = vsel %vm4568, 1, 0
    %v4697 = vsel %vm4569, 1, 0
    %v4698 = vsel %vm4570, 1, 0
    %v4699 = vsel %vm4571, 1, 0
    %v4700 = vsel %vm4572, 1, 0
    %v4701 = vsel %vm4573, 1, 0
    %v4702 = vsel %vm4574, 1, 0
    %v4703 = vsel %vm4575, 1, 0
    %v4704 = vsel %vm4576, 1, 0
    %v4705 = vsel %vm4577, 1, 0
    %v4706 = vsel %vm4578, 1, 0
    %v4707 = vsel %vm4579, 1, 0
    %v4708 = vsel %vm4580, 1, 0
    %v4709 = vsel %vm4581, 1, 0
    %v4710 = vsel %vm4582, 1, 0
    %v4711 = vsel %vm4583, 1, 0
    %v4712 = vsel %vm4584, 1, 0
    %v4713 = vsel %vm4585, 1, 0
    %v4714 = vsel %vm4586, 1, 0
    %v4715 = vsel %vm4587, 1, 0
    %v4716 = vsel %vm4588, 1, 0
    %v4717 = vsel %vm4589, 1, 0
    %v4718 = vsel %vm4590, 1, 0
    %v4719 = vsel %vm4591, 1, 0
    %v4720 = vsel %vm4592, 1, 0
    %v4721 = vsel %vm4593, 1, 0
    %v4722 = vsel %vm4594, 1, 0
    %v4723 = vsel %vm4595, 1, 0
    %v4724 = vsel %vm4596, 1, 0
    %v4725 = vsel %vm4597, 1, 0
    %v4726 = vsel %vm4598, 1, 0
    %v4727 = vsel %vm4599, 1, 0
    %v4728 = vsel %vm4600, 1, 0
    %v4729 = vsel %vm4601, 1, 0
    %v4730 = vsel %vm4602, 1, 0
    %v4731 = vsel %vm4603, 1, 0
    %v4732 = vsel %vm4604, 1, 0
    %v4733 = vsel %vm4605, 1, 0
    %v4734 = vsel %vm4606, 1, 0
    %v4735 = vsel %vm4607, 1, 0
    %v4736 = vsel %vm4608, 1, 0
    %v4737 = vsel %vm4609, 1, 0
    %v4738 = vsel %vm4610, 1, 0
    %v4739 = vsel %vm4611, 1, 0
    %v4740 = vsel %vm4612, 1, 0
    %v4741 = vsel %vm4613, 1, 0
    %v4742 = vsel %vm4614, 1, 0
    %v4743 = vsel %vm4615, 1, 0
    %v4744 = vsel %vm4616, 1, 0
    %v4745 = vsel %vm4617, 1, 0
    %v4746 = vsel %vm4618, 1, 0
    %v4747 = vsel %vm4619, 1, 0
    %v4748 = vsel %vm4620, 1, 0
    %v4749 = vsel %vm4621, 1, 0
    %v4750 = vsel %vm4622, 1, 0
    %v4751 = vsel %vm4623, 1, 0
    %v4752 = vsel %vm4624, 1, 0
    %v4753 = vsel %vm4625, 1, 0
    %v4754 = vsel %vm4626, 1, 0
    %v4755 = vsel %vm4627, 1, 0
    %v4756 = vsel %vm4628, 1, 0
    %v4757 = vsel %vm4629, 1, 0
    %v4758 = vsel %vm4630, 1, 0
    %v4759 = vsel %vm4631, 1, 0
    %v4760 = vsel %vm4632, 1, 0
    %v4761 = vsel %vm4633, 1, 0
    %v4762 = vsel %vm4634, 1, 0
    %v4763 = vcvt.s32.f32 %v4635
    %v4764 = vcvt.s32.f32 %v4636
    %v4765 = vcvt.s32.f32 %v4637
    %v4766 = vcvt.s32.f32 %v4638
    %v4767 = vcvt.s32.f32 %v4639
    %v4768 = vcvt.s32.f32 %v4640
    %v4769 = vcvt.s32.f32 %v4641
    %v4770 = vcvt.s32.f32 %v4642
    %v4771 = vcvt.s32.f32 %v4643
    %v4772 = vcvt.s32.f32 %v4644
    %v4773 = vcvt.s32.f32 %v4645
    %v4774 = vcvt.s32.f32 %v4646
    %v4775 = vcvt.s32.f32 %v4647
    %v4776 = vcvt.s32.f32 %v4648
    %v4777 = vcvt.s32.f32 %v4649
    %v4778 = vcvt.s32.f32 %v4650
    %v4779 = vcvt.s32.f32 %v4651
    %v4780 = vcvt.s32.f32 %v4652
    %v4781 = vcvt.s32.f32 %v4653
    %v4782 = vcvt.s32.f32 %v4654
    %v4783 = vcvt.s32.f32 %v4655
    %v4784 = vcvt.s32.f32 %v4656
    %v4785 = vcvt.s32.f32 %v4657
    %v4786 = vcvt.s32.f32 %v4658
    %v4787 = vcvt.s32.f32 %v4659
    %v4788 = vcvt.s32.f32 %v4660
    %v4789 = vcvt.s32.f32 %v4661
    %v4790 = vcvt.s32.f32 %v4662
    %v4791 = vcvt.s32.f32 %v4663
    %v4792 = vcvt.s32.f32 %v4664
    %v4793 = vcvt.s32.f32 %v4665
    %v4794 = vcvt.s32.f32 %v4666
    %v4795 = vcvt.s32.f32 %v4667
    %v4796 = vcvt.s32.f32 %v4668
    %v4797 = vcvt.s32.f32 %v4669
    %v4798 = vcvt.s32.f32 %v4670
    %v4799 = vcvt.s32.f32 %v4671
    %v4800 = vcvt.s32.f32 %v4672
    %v4801 = vcvt.s32.f32 %v4673
    %v4802 = vcvt.s32.f32 %v4674
    %v4803 = vcvt.s32.f32 %v4675
    %v4804 = vcvt.s32.f32 %v4676
    %v4805 = vcvt.s32.f32 %v4677
    %v4806 = vcvt.s32.f32 %v4678
    %v4807 = vcvt.s32.f32 %v4679
    %v4808 = vcvt.s32.f32 %v4680
    %v4809 = vcvt.s32.f32 %v4681
    %v4810 = vcvt.s32.f32 %v4682
    %v4811 = vcvt.s32.f32 %v4683
    %v4812 = vcvt.s32.f32 %v4684
    %v4813 = vcvt.s32.f32 %v4685
    %v4814 = vcvt.s32.f32 %v4686
    %v4815 = vcvt.s32.f32 %v4687
    %v4816 = vcvt.s32.f32 %v4688
    %v4817 = vcvt.s32.f32 %v4689
    %v4818 = vcvt.s32.f32 %v4690
    %v4819 = vcvt.s32.f32 %v4691
    %v4820 = vcvt.s32.f32 %v4692
    %v4821 = vcvt.s32.f32 %v4693
    %v4822 = vcvt.s32.f32 %v4694
    %v4823 = vcvt.s32.f32 %v4695
    %v4824 = vcvt.s32.f32 %v4696
    %v4825 = vcvt.s32.f32 %v4697
    %v4826 = vcvt.s32.f32 %v4698
    %v4827 = vcvt.s32.f32 %v4699
    %v4828 = vcvt.s32.f32 %v4700
    %v4829 = vcvt.s32.f32 %v4701
    %v4830 = vcvt.s32.f32 %v4702
    %v4831 = vcvt.s32.f32 %v4703
    %v4832 = vcvt.s32.f32 %v4704
    %v4833 = vcvt.s32.f32 %v4705
    %v4834 = vcvt.s32.f32 %v4706
    %v4835 = vcvt.s32.f32 %v4707
    %v4836 = vcvt.s32.f32 %v4708
    %v4837 = vcvt.s32.f32 %v4709
    %v4838 = vcvt.s32.f32 %v4710
    %v4839 = vcvt.s32.f32 %v4711
    %v4840 = vcvt.s32.f32 %v4712
    %v4841 = vcvt.s32.f32 %v4713
    %v4842 = vcvt.s32.f32 %v4714
    %v4843 = vcvt.s32.f32 %v4715
    %v4844 = vcvt.s32.f32 %v4716
    %v4845 = vcvt.s32.f32 %v4717
    %v4846 = vcvt.s32.f32 %v4718
    %v4847 = vcvt.s32.f32 %v4719
    %v4848 = vcvt.s32.f32 %v4720
    %v4849 = vcvt.s32.f32 %v4721
    %v4850 = vcvt.s32.f32 %v4722
    %v4851 = vcvt.s32.f32 %v4723
    %v4852 = vcvt.s32.f32 %v4724
    %v4853 = vcvt.s32.f32 %v4725
    %v4854 = vcvt.s32.f32 %v4726
    %v4855 = vcvt.s32.f32 %v4727
    %v4856 = vcvt.s32.f32 %v4728
    %v4857 = vcvt.s32.f32 %v4729
    %v4858 = vcvt.s32.f32 %v4730
    %v4859 = vcvt.s32.f32 %v4731
    %v4860 = vcvt.s32.f32 %v4732
    %v4861 = vcvt.s32.f32 %v4733
    %v4862 = vcvt.s32.f32 %v4734
    %v4863 = vcvt.s32.f32 %v4735
    %v4864 = vcvt.s32.f32 %v4736
    %v4865 = vcvt.s32.f32 %v4737
    %v4866 = vcvt.s32.f32 %v4738
    %v4867 = vcvt.s32.f32 %v4739
    %v4868 = vcvt.s32.f32 %v4740
    %v4869 = vcvt.s32.f32 %v4741
    %v4870 = vcvt.s32.f32 %v4742
    %v4871 = vcvt.s32.f32 %v4743
    %v4872 = vcvt.s32.f32 %v4744
    %v4873 = vcvt.s32.f32 %v4745
    %v4874 = vcvt.s32.f32 %v4746
    %v4875 = vcvt.s32.f32 %v4747
    %v4876 = vcvt.s32.f32 %v4748
    %v4877 = vcvt.s32.f32 %v4749
    %v4878 = vcvt.s32.f32 %v4750
    %v4879 = vcvt.s32.f32 %v4751
    %v4880 = vcvt.s32.f32 %v4752
    %v4881 = vcvt.s32.f32 %v4753
    %v4882 = vcvt.s32.f32 %v4754
    %v4883 = vcvt.s32.f32 %v4755
    %v4884 = vcvt.s32.f32 %v4756
    %v4885 = vcvt.s32.f32 %v4757
    %v4886 = vcvt.s32.f32 %v4758
    %v4887 = vcvt.s32.f32 %v4759
    %v4888 = vcvt.s32.f32 %v4760
    %v4889 = vcvt.s32.f32 %v4761
    %v4890 = vcvt.s32.f32 %v4762
    %v4891 = vpack.c.bf16 %v4771, %v4763
    %v4892 = vpack.c.bf16 %v4772, %v4764
    %v4893 = vpack.c.bf16 %v4773, %v4765
    %v4894 = vpack.c.bf16 %v4774, %v4766
    %v4895 = vpack.c.bf16 %v4775, %v4767
    %v4896 = vpack.c.bf16 %v4776, %v4768
    %v4897 = vpack.c.bf16 %v4777, %v4769
    %v4898 = vpack.c.bf16 %v4778, %v4770
    %v4899 = vpack.c.bf16 %v4787, %v4779
    %v4900 = vpack.c.bf16 %v4788, %v4780
    %v4901 = vpack.c.bf16 %v4789, %v4781
    %v4902 = vpack.c.bf16 %v4790, %v4782
    %v4903 = vpack.c.bf16 %v4791, %v4783
    %v4904 = vpack.c.bf16 %v4792, %v4784
    %v4905 = vpack.c.bf16 %v4793, %v4785
    %v4906 = vpack.c.bf16 %v4794, %v4786
    %v4907 = vpack.c.bf16 %v4803, %v4795
    %v4908 = vpack.c.bf16 %v4804, %v4796
    %v4909 = vpack.c.bf16 %v4805, %v4797
    %v4910 = vpack.c.bf16 %v4806, %v4798
    %v4911 = vpack.c.bf16 %v4807, %v4799
    %v4912 = vpack.c.bf16 %v4808, %v4800
    %v4913 = vpack.c.bf16 %v4809, %v4801
    %v4914 = vpack.c.bf16 %v4810, %v4802
    %v4915 = vpack.c.bf16 %v4819, %v4811
    %v4916 = vpack.c.bf16 %v4820, %v4812
    %v4917 = vpack.c.bf16 %v4821, %v4813
    %v4918 = vpack.c.bf16 %v4822, %v4814
    %v4919 = vpack.c.bf16 %v4823, %v4815
    %v4920 = vpack.c.bf16 %v4824, %v4816
    %v4921 = vpack.c.bf16 %v4825, %v4817
    %v4922 = vpack.c.bf16 %v4826, %v4818
    %v4923 = vpack.c.bf16 %v4835, %v4827
    %v4924 = vpack.c.bf16 %v4836, %v4828
    %v4925 = vpack.c.bf16 %v4837, %v4829
    %v4926 = vpack.c.bf16 %v4838, %v4830
    %v4927 = vpack.c.bf16 %v4839, %v4831
    %v4928 = vpack.c.bf16 %v4840, %v4832
    %v4929 = vpack.c.bf16 %v4841, %v4833
    %v4930 = vpack.c.bf16 %v4842, %v4834
    %v4931 = vpack.c.bf16 %v4851, %v4843
    %v4932 = vpack.c.bf16 %v4852, %v4844
    %v4933 = vpack.c.bf16 %v4853, %v4845
    %v4934 = vpack.c.bf16 %v4854, %v4846
    %v4935 = vpack.c.bf16 %v4855, %v4847
    %v4936 = vpack.c.bf16 %v4856, %v4848
    %v4937 = vpack.c.bf16 %v4857, %v4849
    %v4938 = vpack.c.bf16 %v4858, %v4850
    %v4939 = vpack.c.bf16 %v4867, %v4859
    %v4940 = vpack.c.bf16 %v4868, %v4860
    %v4941 = vpack.c.bf16 %v4869, %v4861
    %v4942 = vpack.c.bf16 %v4870, %v4862
    %v4943 = vpack.c.bf16 %v4871, %v4863
    %v4944 = vpack.c.bf16 %v4872, %v4864
    %v4945 = vpack.c.bf16 %v4873, %v4865
    %v4946 = vpack.c.bf16 %v4874, %v4866
    %v4947 = vpack.c.bf16 %v4883, %v4875
    %v4948 = vpack.c.bf16 %v4884, %v4876
    %v4949 = vpack.c.bf16 %v4885, %v4877
    %v4950 = vpack.c.bf16 %v4886, %v4878
    %v4951 = vpack.c.bf16 %v4887, %v4879
    %v4952 = vpack.c.bf16 %v4888, %v4880
    %v4953 = vpack.c.bf16 %v4889, %v4881
    %v4954 = vpack.c.bf16 %v4890, %v4882
    %4955 = vmatprep.subr.bf16.mxu0 %v4892
    %4956 = vmatpush1.bf16.msra.mxu0 %v4891
    %4957 = vmatprep.subr.bf16.mxu0 %v4900
    %4958 = vmatpush1.bf16.msra.mxu0 %v4899
    %4959 = vmatprep.subr.bf16.mxu0 %v4908
    %4960 = vmatpush1.bf16.msra.mxu0 %v4907
    %4961 = vmatprep.subr.bf16.mxu0 %v4916
    %4962 = vmatpush1.bf16.msra.mxu0 %v4915
    %4963 = vmatprep.subr.bf16.mxu0 %v4924
    %4964 = vmatpush1.bf16.msra.mxu0 %v4923
    %4965 = vmatprep.subr.bf16.mxu0 %v4932
    %4966 = vmatpush1.bf16.msra.mxu0 %v4931
    %4967 = vmatprep.subr.bf16.mxu0 %v4940
    %4968 = vmatpush1.bf16.msra.mxu0 %v4939
    %4969 = vmatprep.subr.bf16.mxu0 %v4948
    %4970 = vmatpush1.bf16.msra.mxu0 %v4947
    %4971 = vmatprep.subr.bf16.mxu0 0
    %4972 = vmatpush1.bf16.msra.mxu0 0
    %4973 = vmatprep.subr.bf16.mxu0 0
    %4974 = vmatpush1.bf16.msra.mxu0 0
    %4975 = vmatprep.subr.bf16.mxu0 0
    %4976 = vmatpush1.bf16.msra.mxu0 0
    %4977 = vmatprep.subr.bf16.mxu0 0
    %4978 = vmatpush1.bf16.msra.mxu0 0
    %4979 = vmatprep.subr.bf16.mxu0 0
    %4980 = vmatpush1.bf16.msra.mxu0 0
    %4981 = vmatprep.subr.bf16.mxu0 0
    %4982 = vmatpush1.bf16.msra.mxu0 0
    %4983 = vmatprep.subr.bf16.mxu0 0
    %4984 = vmatpush1.bf16.msra.mxu0 0
    %4985 = vmatprep.subr.bf16.mxu0 0
    %4986 = vmatpush1.bf16.msra.mxu0 0
    %4987 = vmatprep.mubr.bf16.mxu0 0
    %4988 = vmatmul.mubr.bf16.gmra.mrb[0].mxu0 %v37
    %v4989 = vpop.f32.mrb[0].mxu0
    %v4990 = vadd.f32 0.0, %v4989
    %v4991 = vpop.f32.mrb[0].mxu0
    %v4992 = vadd.f32 0.0, %v4991
    %v4993 = vpop.f32.mrb[0].mxu0
    %v4994 = vpop.f32.mrb[0].mxu0
    %4995 = vdwg.mxu0
    %4996 = vmatprep.subr.bf16.mxu0 %v4894
    %4997 = vmatpush1.bf16.msra.mxu0 %v4893
    %4998 = vmatprep.subr.bf16.mxu0 %v4902
    %4999 = vmatpush1.bf16.msra.mxu0 %v4901
    %5000 = vmatprep.subr.bf16.mxu0 %v4910
    %5001 = vmatpush1.bf16.msra.mxu0 %v4909
    %5002 = vmatprep.subr.bf16.mxu0 %v4918
    %5003 = vmatpush1.bf16.msra.mxu0 %v4917
    %5004 = vmatprep.subr.bf16.mxu0 %v4926
    %5005 = vmatpush1.bf16.msra.mxu0 %v4925
    %5006 = vmatprep.subr.bf16.mxu0 %v4934
    %5007 = vmatpush1.bf16.msra.mxu0 %v4933
    %5008 = vmatprep.subr.bf16.mxu0 %v4942
    %5009 = vmatpush1.bf16.msra.mxu0 %v4941
    %5010 = vmatprep.subr.bf16.mxu0 %v4950
    %5011 = vmatpush1.bf16.msra.mxu0 %v4949
    %5012 = vmatprep.subr.bf16.mxu0 0
    %5013 = vmatpush1.bf16.msra.mxu0 0
    %5014 = vmatprep.subr.bf16.mxu0 0
    %5015 = vmatpush1.bf16.msra.mxu0 0
    %5016 = vmatprep.subr.bf16.mxu0 0
    %5017 = vmatpush1.bf16.msra.mxu0 0
    %5018 = vmatprep.subr.bf16.mxu0 0
    %5019 = vmatpush1.bf16.msra.mxu0 0
    %5020 = vmatprep.subr.bf16.mxu0 0
    %5021 = vmatpush1.bf16.msra.mxu0 0
    %5022 = vmatprep.subr.bf16.mxu0 0
    %5023 = vmatpush1.bf16.msra.mxu0 0
    %5024 = vmatprep.subr.bf16.mxu0 0
    %5025 = vmatpush1.bf16.msra.mxu0 0
    %5026 = vmatprep.subr.bf16.mxu0 0
    %5027 = vmatpush1.bf16.msra.mxu0 0
    %5028 = vmatprep.mubr.bf16.mxu0 0
    %5029 = vmatmul.mubr.bf16.gmra.mrb[0].mxu0 %v37
    %v5030 = vpop.f32.mrb[0].mxu0
    %v5031 = vadd.f32 0.0, %v5030
    %v5032 = vpop.f32.mrb[0].mxu0
    %v5033 = vadd.f32 0.0, %v5032
    %v5034 = vpop.f32.mrb[0].mxu0
    %v5035 = vpop.f32.mrb[0].mxu0
    %5036 = vdwg.mxu0
    %5037 = vmatprep.subr.bf16.mxu0 %v4896
    %5038 = vmatpush1.bf16.msra.mxu0 %v4895
    %5039 = vmatprep.subr.bf16.mxu0 %v4904
    %5040 = vmatpush1.bf16.msra.mxu0 %v4903
    %5041 = vmatprep.subr.bf16.mxu0 %v4912
    %5042 = vmatpush1.bf16.msra.mxu0 %v4911
    %5043 = vmatprep.subr.bf16.mxu0 %v4920
    %5044 = vmatpush1.bf16.msra.mxu0 %v4919
    %5045 = vmatprep.subr.bf16.mxu0 %v4928
    %5046 = vmatpush1.bf16.msra.mxu0 %v4927
    %5047 = vmatprep.subr.bf16.mxu0 %v4936
    %5048 = vmatpush1.bf16.msra.mxu0 %v4935
    %5049 = vmatprep.subr.bf16.mxu0 %v4944
    %5050 = vmatpush1.bf16.msra.mxu0 %v4943
    %5051 = vmatprep.subr.bf16.mxu0 %v4952
    %5052 = vmatpush1.bf16.msra.mxu0 %v4951
    %5053 = vmatprep.subr.bf16.mxu0 0
    %5054 = vmatpush1.bf16.msra.mxu0 0
    %5055 = vmatprep.subr.bf16.mxu0 0
    %5056 = vmatpush1.bf16.msra.mxu0 0
    %5057 = vmatprep.subr.bf16.mxu0 0
    %5058 = vmatpush1.bf16.msra.mxu0 0
    %5059 = vmatprep.subr.bf16.mxu0 0
    %5060 = vmatpush1.bf16.msra.mxu0 0
    %5061 = vmatprep.subr.bf16.mxu0 0
    %5062 = vmatpush1.bf16.msra.mxu0 0
    %5063 = vmatprep.subr.bf16.mxu0 0
    %5064 = vmatpush1.bf16.msra.mxu0 0
    %5065 = vmatprep.subr.bf16.mxu0 0
    %5066 = vmatpush1.bf16.msra.mxu0 0
    %5067 = vmatprep.subr.bf16.mxu0 0
    %5068 = vmatpush1.bf16.msra.mxu0 0
    %5069 = vmatprep.mubr.bf16.mxu0 0
    %5070 = vmatmul.mubr.bf16.gmra.mrb[0].mxu0 %v37
    %v5071 = vpop.f32.mrb[0].mxu0
    %v5072 = vadd.f32 0.0, %v5071
    %v5073 = vpop.f32.mrb[0].mxu0
    %v5074 = vadd.f32 0.0, %v5073
    %v5075 = vpop.f32.mrb[0].mxu0
    %v5076 = vpop.f32.mrb[0].mxu0
    %5077 = vdwg.mxu0
    %5078 = vmatprep.subr.bf16.mxu0 %v4898
    %5079 = vmatpush1.bf16.msra.mxu0 %v4897
    %5080 = vmatprep.subr.bf16.mxu0 %v4906
    %5081 = vmatpush1.bf16.msra.mxu0 %v4905
    %5082 = vmatprep.subr.bf16.mxu0 %v4914
    %5083 = vmatpush1.bf16.msra.mxu0 %v4913
    %5084 = vmatprep.subr.bf16.mxu0 %v4922
    %5085 = vmatpush1.bf16.msra.mxu0 %v4921
    %5086 = vmatprep.subr.bf16.mxu0 %v4930
    %5087 = vmatpush1.bf16.msra.mxu0 %v4929
    %5088 = vmatprep.subr.bf16.mxu0 %v4938
    %5089 = vmatpush1.bf16.msra.mxu0 %v4937
    %5090 = vmatprep.subr.bf16.mxu0 %v4946
    %5091 = vmatpush1.bf16.msra.mxu0 %v4945
    %5092 = vmatprep.subr.bf16.mxu0 %v4954
    %5093 = vmatpush1.bf16.msra.mxu0 %v4953
    %5094 = vmatprep.subr.bf16.mxu0 0
    %5095 = vmatpush1.bf16.msra.mxu0 0
    %5096 = vmatprep.subr.bf16.mxu0 0
    %5097 = vmatpush1.bf16.msra.mxu0 0
    %5098 = vmatprep.subr.bf16.mxu0 0
    %5099 = vmatpush1.bf16.msra.mxu0 0
    %5100 = vmatprep.subr.bf16.mxu0 0
    %5101 = vmatpush1.bf16.msra.mxu0 0
    %5102 = vmatprep.subr.bf16.mxu0 0
    %5103 = vmatpush1.bf16.msra.mxu0 0
    %5104 = vmatprep.subr.bf16.mxu0 0
    %5105 = vmatpush1.bf16.msra.mxu0 0
    %5106 = vmatprep.subr.bf16.mxu0 0
    %5107 = vmatpush1.bf16.msra.mxu0 0
    %5108 = vmatprep.subr.bf16.mxu0 0
    %5109 = vmatpush1.bf16.msra.mxu0 0
    %5110 = vmatprep.mubr.bf16.mxu0 0
    %5111 = vmatmul.mubr.bf16.gmra.mrb[0].mxu0 %v37
    %v5112 = vpop.f32.mrb[0].mxu0
    %v5113 = vadd.f32 0.0, %v5112
    %v5114 = vpop.f32.mrb[0].mxu0
    %v5115 = vadd.f32 0.0, %v5114
    %v5116 = vpop.f32.mrb[0].mxu0
    %v5117 = vpop.f32.mrb[0].mxu0
    %5118 = vdwg.mxu0
    %v5119 = vsub.f32 %v4990, %v39
    %v5120 = vsub.f32 %v4992, %v39
    %v5121 = vsub.f32 %v5031, %v39
    %v5122 = vsub.f32 %v5033, %v39
    %v5123 = vsub.f32 %v5072, %v39
    %v5124 = vsub.f32 %v5074, %v39
    %v5125 = vsub.f32 %v5113, %v39
    %v5126 = vsub.f32 %v5115, %v39
    %v5127 = vpack.c.bf16 %v5119, %v5119
    %v5128 = vpack.c.bf16 %v5120, %v5120
    %v5129 = vpack.c.bf16 %v5121, %v5121
    %v5130 = vpack.c.bf16 %v5122, %v5122
    %v5131 = vpack.c.bf16 %v5123, %v5123
    %v5132 = vpack.c.bf16 %v5124, %v5124
    %v5133 = vpack.c.bf16 %v5125, %v5125
    %v5134 = vpack.c.bf16 %v5126, %v5126
    %v5136 = vsel %vm753, %v5127, 0
    %v5139 = vsel %vm753, %v5128, 0
    %v5142 = vsel %vm753, %v5129, 0
    %v5145 = vsel %vm753, %v5130, 0
    %v5148 = vsel %vm753, %v5131, 0
    %v5151 = vsel %vm753, %v5132, 0
    %v5154 = vsel %vm753, %v5133, 0
    %v5157 = vsel %vm753, %v5134, 0
    %5159 = vmatprep.subr.bf16.mxu0 %v5139
    %5160 = vmatpush1.bf16.msra.mxu0 %v5136
    %5161 = vmatprep.subr.bf16.mxu0 0
    %5162 = vmatpush1.bf16.msra.mxu0 0
    %5163 = vmatprep.subr.bf16.mxu0 0
    %5164 = vmatpush1.bf16.msra.mxu0 0
    %5165 = vmatprep.subr.bf16.mxu0 0
    %5166 = vmatpush1.bf16.msra.mxu0 0
    %5167 = vmatprep.subr.bf16.mxu0 0
    %5168 = vmatpush1.bf16.msra.mxu0 0
    %5169 = vmatprep.subr.bf16.mxu0 0
    %5170 = vmatpush1.bf16.msra.mxu0 0
    %5171 = vmatprep.subr.bf16.mxu0 0
    %5172 = vmatpush1.bf16.msra.mxu0 0
    %5173 = vmatprep.subr.bf16.mxu0 0
    %5174 = vmatpush1.bf16.msra.mxu0 0
    %5175 = vmatprep.subr.bf16.mxu0 0
    %5176 = vmatpush1.bf16.msra.mxu0 0
    %5177 = vmatprep.subr.bf16.mxu0 0
    %5178 = vmatpush1.bf16.msra.mxu0 0
    %5179 = vmatprep.subr.bf16.mxu0 0
    %5180 = vmatpush1.bf16.msra.mxu0 0
    %5181 = vmatprep.subr.bf16.mxu0 0
    %5182 = vmatpush1.bf16.msra.mxu0 0
    %5183 = vmatprep.subr.bf16.mxu0 0
    %5184 = vmatpush1.bf16.msra.mxu0 0
    %5185 = vmatprep.subr.bf16.mxu0 0
    %5186 = vmatpush1.bf16.msra.mxu0 0
    %5187 = vmatprep.subr.bf16.mxu0 0
    %5188 = vmatpush1.bf16.msra.mxu0 0
    %5189 = vmatprep.subr.bf16.mxu0 0
    %5190 = vmatpush1.bf16.msra.mxu0 0
    %5191 = vmatprep.mubr.bf16.mxu0 0
    %5192 = vmatmul.mubr.bf16.gmra.mrb[0].mxu0 %v751
    %v5193 = vpop.f32.mrb[0].mxu0
    %v5194 = vadd.f32 %v737, %v5193
    %v5195 = vpop.f32.mrb[0].mxu0
    %v5196 = vadd.f32 %v737, %v5195
    %v5197 = vpop.f32.mrb[0].mxu0
    %v5198 = vadd.f32 %v742, %v5197
    %v5199 = vpop.f32.mrb[0].mxu0
    %v5200 = vadd.f32 %v742, %v5199
    %5201 = vdwg.mxu0
    %5202 = vmatprep.subr.bf16.mxu0 %v5145
    %5203 = vmatpush1.bf16.msra.mxu0 %v5142
    %5204 = vmatprep.subr.bf16.mxu0 0
    %5205 = vmatpush1.bf16.msra.mxu0 0
    %5206 = vmatprep.subr.bf16.mxu0 0
    %5207 = vmatpush1.bf16.msra.mxu0 0
    %5208 = vmatprep.subr.bf16.mxu0 0
    %5209 = vmatpush1.bf16.msra.mxu0 0
    %5210 = vmatprep.subr.bf16.mxu0 0
    %5211 = vmatpush1.bf16.msra.mxu0 0
    %5212 = vmatprep.subr.bf16.mxu0 0
    %5213 = vmatpush1.bf16.msra.mxu0 0
    %5214 = vmatprep.subr.bf16.mxu0 0
    %5215 = vmatpush1.bf16.msra.mxu0 0
    %5216 = vmatprep.subr.bf16.mxu0 0
    %5217 = vmatpush1.bf16.msra.mxu0 0
    %5218 = vmatprep.subr.bf16.mxu0 0
    %5219 = vmatpush1.bf16.msra.mxu0 0
    %5220 = vmatprep.subr.bf16.mxu0 0
    %5221 = vmatpush1.bf16.msra.mxu0 0
    %5222 = vmatprep.subr.bf16.mxu0 0
    %5223 = vmatpush1.bf16.msra.mxu0 0
    %5224 = vmatprep.subr.bf16.mxu0 0
    %5225 = vmatpush1.bf16.msra.mxu0 0
    %5226 = vmatprep.subr.bf16.mxu0 0
    %5227 = vmatpush1.bf16.msra.mxu0 0
    %5228 = vmatprep.subr.bf16.mxu0 0
    %5229 = vmatpush1.bf16.msra.mxu0 0
    %5230 = vmatprep.subr.bf16.mxu0 0
    %5231 = vmatpush1.bf16.msra.mxu0 0
    %5232 = vmatprep.subr.bf16.mxu0 0
    %5233 = vmatpush1.bf16.msra.mxu0 0
    %5234 = vmatprep.mubr.bf16.mxu0 0
    %5235 = vmatmul.mubr.bf16.gmra.mrb[0].mxu0 %v751
    %v5236 = vpop.f32.mrb[0].mxu0
    %v5237 = vadd.f32 %v737, %v5236
    %v5238 = vpop.f32.mrb[0].mxu0
    %v5239 = vadd.f32 %v737, %v5238
    %v5240 = vpop.f32.mrb[0].mxu0
    %v5241 = vadd.f32 %v742, %v5240
    %v5242 = vpop.f32.mrb[0].mxu0
    %v5243 = vadd.f32 %v742, %v5242
    %5244 = vdwg.mxu0
    %5245 = vmatprep.subr.bf16.mxu0 %v5151
    %5246 = vmatpush1.bf16.msra.mxu0 %v5148
    %5247 = vmatprep.subr.bf16.mxu0 0
    %5248 = vmatpush1.bf16.msra.mxu0 0
    %5249 = vmatprep.subr.bf16.mxu0 0
    %5250 = vmatpush1.bf16.msra.mxu0 0
    %5251 = vmatprep.subr.bf16.mxu0 0
    %5252 = vmatpush1.bf16.msra.mxu0 0
    %5253 = vmatprep.subr.bf16.mxu0 0
    %5254 = vmatpush1.bf16.msra.mxu0 0
    %5255 = vmatprep.subr.bf16.mxu0 0
    %5256 = vmatpush1.bf16.msra.mxu0 0
    %5257 = vmatprep.subr.bf16.mxu0 0
    %5258 = vmatpush1.bf16.msra.mxu0 0
    %5259 = vmatprep.subr.bf16.mxu0 0
    %5260 = vmatpush1.bf16.msra.mxu0 0
    %5261 = vmatprep.subr.bf16.mxu0 0
    %5262 = vmatpush1.bf16.msra.mxu0 0
    %5263 = vmatprep.subr.bf16.mxu0 0
    %5264 = vmatpush1.bf16.msra.mxu0 0
    %5265 = vmatprep.subr.bf16.mxu0 0
    %5266 = vmatpush1.bf16.msra.mxu0 0
    %5267 = vmatprep.subr.bf16.mxu0 0
    %5268 = vmatpush1.bf16.msra.mxu0 0
    %5269 = vmatprep.subr.bf16.mxu0 0
    %5270 = vmatpush1.bf16.msra.mxu0 0
    %5271 = vmatprep.subr.bf16.mxu0 0
    %5272 = vmatpush1.bf16.msra.mxu0 0
    %5273 = vmatprep.subr.bf16.mxu0 0
    %5274 = vmatpush1.bf16.msra.mxu0 0
    %5275 = vmatprep.subr.bf16.mxu0 0
    %5276 = vmatpush1.bf16.msra.mxu0 0
    %5277 = vmatprep.mubr.bf16.mxu0 0
    %5278 = vmatmul.mubr.bf16.gmra.mrb[0].mxu0 %v751
    %v5279 = vpop.f32.mrb[0].mxu0
    %v5280 = vadd.f32 %v737, %v5279
    %v5281 = vpop.f32.mrb[0].mxu0
    %v5282 = vadd.f32 %v737, %v5281
    %v5283 = vpop.f32.mrb[0].mxu0
    %v5284 = vadd.f32 %v742, %v5283
    %v5285 = vpop.f32.mrb[0].mxu0
    %v5286 = vadd.f32 %v742, %v5285
    %5287 = vdwg.mxu0
    %5288 = vmatprep.subr.bf16.mxu0 %v5157
    %5289 = vmatpush1.bf16.msra.mxu0 %v5154
    %5290 = vmatprep.subr.bf16.mxu0 0
    %5291 = vmatpush1.bf16.msra.mxu0 0
    %5292 = vmatprep.subr.bf16.mxu0 0
    %5293 = vmatpush1.bf16.msra.mxu0 0
    %5294 = vmatprep.subr.bf16.mxu0 0
    %5295 = vmatpush1.bf16.msra.mxu0 0
    %5296 = vmatprep.subr.bf16.mxu0 0
    %5297 = vmatpush1.bf16.msra.mxu0 0
    %5298 = vmatprep.subr.bf16.mxu0 0
    %5299 = vmatpush1.bf16.msra.mxu0 0
    %5300 = vmatprep.subr.bf16.mxu0 0
    %5301 = vmatpush1.bf16.msra.mxu0 0
    %5302 = vmatprep.subr.bf16.mxu0 0
    %5303 = vmatpush1.bf16.msra.mxu0 0
    %5304 = vmatprep.subr.bf16.mxu0 0
    %5305 = vmatpush1.bf16.msra.mxu0 0
    %5306 = vmatprep.subr.bf16.mxu0 0
    %5307 = vmatpush1.bf16.msra.mxu0 0
    %5308 = vmatprep.subr.bf16.mxu0 0
    %5309 = vmatpush1.bf16.msra.mxu0 0
    %5310 = vmatprep.subr.bf16.mxu0 0
    %5311 = vmatpush1.bf16.msra.mxu0 0
    %5312 = vmatprep.subr.bf16.mxu0 0
    %5313 = vmatpush1.bf16.msra.mxu0 0
    %5314 = vmatprep.subr.bf16.mxu0 0
    %5315 = vmatpush1.bf16.msra.mxu0 0
    %5316 = vmatprep.subr.bf16.mxu0 0
    %5317 = vmatpush1.bf16.msra.mxu0 0
    %5318 = vmatprep.subr.bf16.mxu0 0
    %5319 = vmatpush1.bf16.msra.mxu0 0
    %5320 = vmatprep.mubr.bf16.mxu0 0
    %5321 = vmatmul.mubr.bf16.gmra.mrb[0].mxu0 %v751
    %v5322 = vpop.f32.mrb[0].mxu0
    %v5323 = vadd.f32 %v737, %v5322
    %v5324 = vpop.f32.mrb[0].mxu0
    %v5325 = vadd.f32 %v737, %v5324
    %v5326 = vpop.f32.mrb[0].mxu0
    %v5327 = vadd.f32 %v742, %v5326
    %v5328 = vpop.f32.mrb[0].mxu0
    %v5329 = vadd.f32 %v742, %v5328
    %5330 = vdwg.mxu0
    %v5331 = vmax.f32 %v5194, 0.0
    %v5332 = vmax.f32 %v5196, 0.0
    %v5333 = vmax.f32 %v5237, 0.0
    %v5334 = vmax.f32 %v5239, 0.0
    %v5335 = vmax.f32 %v5280, 0.0
    %v5336 = vmax.f32 %v5282, 0.0
    %v5337 = vmax.f32 %v5323, 0.0
    %v5338 = vmax.f32 %v5325, 0.0
    %v5339 = vmax.f32 %v5198, 0.0
    %v5340 = vmax.f32 %v5200, 0.0
    %v5341 = vmax.f32 %v5241, 0.0
    %v5342 = vmax.f32 %v5243, 0.0
    %v5343 = vmax.f32 %v5284, 0.0
    %v5344 = vmax.f32 %v5286, 0.0
    %v5345 = vmax.f32 %v5327, 0.0
    %v5346 = vmax.f32 %v5329, 0.0
    %v5347 = vpack.c.bf16 %v5339, %v5331
    %v5348 = vpack.c.bf16 %v5340, %v5332
    %v5349 = vpack.c.bf16 %v5341, %v5333
    %v5350 = vpack.c.bf16 %v5342, %v5334
    %v5351 = vpack.c.bf16 %v5343, %v5335
    %v5352 = vpack.c.bf16 %v5344, %v5336
    %v5353 = vpack.c.bf16 %v5345, %v5337
    %v5354 = vpack.c.bf16 %v5346, %v5338
    %5355 = vmatprep.subr.bf16.mxu0 %v5348
    %5356 = vmatpush1.bf16.msra.mxu0 %v5347
    %5357 = vmatprep.subr.bf16.mxu0 0
    %5358 = vmatpush1.bf16.msra.mxu0 0
    %5359 = vmatprep.subr.bf16.mxu0 0
    %5360 = vmatpush1.bf16.msra.mxu0 0
    %5361 = vmatprep.subr.bf16.mxu0 0
    %5362 = vmatpush1.bf16.msra.mxu0 0
    %5363 = vmatprep.subr.bf16.mxu0 0
    %5364 = vmatpush1.bf16.msra.mxu0 0
    %5365 = vmatprep.subr.bf16.mxu0 0
    %5366 = vmatpush1.bf16.msra.mxu0 0
    %5367 = vmatprep.subr.bf16.mxu0 0
    %5368 = vmatpush1.bf16.msra.mxu0 0
    %5369 = vmatprep.subr.bf16.mxu0 0
    %5370 = vmatpush1.bf16.msra.mxu0 0
    %5371 = vmatprep.subr.bf16.mxu0 0
    %5372 = vmatpush1.bf16.msra.mxu0 0
    %5373 = vmatprep.subr.bf16.mxu0 0
    %5374 = vmatpush1.bf16.msra.mxu0 0
    %5375 = vmatprep.subr.bf16.mxu0 0
    %5376 = vmatpush1.bf16.msra.mxu0 0
    %5377 = vmatprep.subr.bf16.mxu0 0
    %5378 = vmatpush1.bf16.msra.mxu0 0
    %5379 = vmatprep.subr.bf16.mxu0 0
    %5380 = vmatpush1.bf16.msra.mxu0 0
    %5381 = vmatprep.subr.bf16.mxu0 0
    %5382 = vmatpush1.bf16.msra.mxu0 0
    %5383 = vmatprep.subr.bf16.mxu0 0
    %5384 = vmatpush1.bf16.msra.mxu0 0
    %5385 = vmatprep.subr.bf16.mxu0 0
    %5386 = vmatpush1.bf16.msra.mxu0 0
    %5387 = vmatprep.mubr.bf16.mxu0 0
    %5388 = vmatmul.mubr.bf16.gmra.mrb[0].mxu0 %v991
    %v5389 = vpop.f32.mrb[0].mxu0
    %v5390 = vadd.f32 %v977, %v5389
    %v5391 = vpop.f32.mrb[0].mxu0
    %v5392 = vadd.f32 %v977, %v5391
    %v5393 = vpop.f32.mrb[0].mxu0
    %v5394 = vadd.f32 %v982, %v5393
    %v5395 = vpop.f32.mrb[0].mxu0
    %v5396 = vadd.f32 %v982, %v5395
    %5397 = vdwg.mxu0
    %5398 = vmatprep.subr.bf16.mxu0 %v5350
    %5399 = vmatpush1.bf16.msra.mxu0 %v5349
    %5400 = vmatprep.subr.bf16.mxu0 0
    %5401 = vmatpush1.bf16.msra.mxu0 0
    %5402 = vmatprep.subr.bf16.mxu0 0
    %5403 = vmatpush1.bf16.msra.mxu0 0
    %5404 = vmatprep.subr.bf16.mxu0 0
    %5405 = vmatpush1.bf16.msra.mxu0 0
    %5406 = vmatprep.subr.bf16.mxu0 0
    %5407 = vmatpush1.bf16.msra.mxu0 0
    %5408 = vmatprep.subr.bf16.mxu0 0
    %5409 = vmatpush1.bf16.msra.mxu0 0
    %5410 = vmatprep.subr.bf16.mxu0 0
    %5411 = vmatpush1.bf16.msra.mxu0 0
    %5412 = vmatprep.subr.bf16.mxu0 0
    %5413 = vmatpush1.bf16.msra.mxu0 0
    %5414 = vmatprep.subr.bf16.mxu0 0
    %5415 = vmatpush1.bf16.msra.mxu0 0
    %5416 = vmatprep.subr.bf16.mxu0 0
    %5417 = vmatpush1.bf16.msra.mxu0 0
    %5418 = vmatprep.subr.bf16.mxu0 0
    %5419 = vmatpush1.bf16.msra.mxu0 0
    %5420 = vmatprep.subr.bf16.mxu0 0
    %5421 = vmatpush1.bf16.msra.mxu0 0
    %5422 = vmatprep.subr.bf16.mxu0 0
    %5423 = vmatpush1.bf16.msra.mxu0 0
    %5424 = vmatprep.subr.bf16.mxu0 0
    %5425 = vmatpush1.bf16.msra.mxu0 0
    %5426 = vmatprep.subr.bf16.mxu0 0
    %5427 = vmatpush1.bf16.msra.mxu0 0
    %5428 = vmatprep.subr.bf16.mxu0 0
    %5429 = vmatpush1.bf16.msra.mxu0 0
    %5430 = vmatprep.mubr.bf16.mxu0 0
    %5431 = vmatmul.mubr.bf16.gmra.mrb[0].mxu0 %v991
    %v5432 = vpop.f32.mrb[0].mxu0
    %v5433 = vadd.f32 %v977, %v5432
    %v5434 = vpop.f32.mrb[0].mxu0
    %v5435 = vadd.f32 %v977, %v5434
    %v5436 = vpop.f32.mrb[0].mxu0
    %v5437 = vadd.f32 %v982, %v5436
    %v5438 = vpop.f32.mrb[0].mxu0
    %v5439 = vadd.f32 %v982, %v5438
    %5440 = vdwg.mxu0
    %5441 = vmatprep.subr.bf16.mxu0 %v5352
    %5442 = vmatpush1.bf16.msra.mxu0 %v5351
    %5443 = vmatprep.subr.bf16.mxu0 0
    %5444 = vmatpush1.bf16.msra.mxu0 0
    %5445 = vmatprep.subr.bf16.mxu0 0
    %5446 = vmatpush1.bf16.msra.mxu0 0
    %5447 = vmatprep.subr.bf16.mxu0 0
    %5448 = vmatpush1.bf16.msra.mxu0 0
    %5449 = vmatprep.subr.bf16.mxu0 0
    %5450 = vmatpush1.bf16.msra.mxu0 0
    %5451 = vmatprep.subr.bf16.mxu0 0
    %5452 = vmatpush1.bf16.msra.mxu0 0
    %5453 = vmatprep.subr.bf16.mxu0 0
    %5454 = vmatpush1.bf16.msra.mxu0 0
    %5455 = vmatprep.subr.bf16.mxu0 0
    %5456 = vmatpush1.bf16.msra.mxu0 0
    %5457 = vmatprep.subr.bf16.mxu0 0
    %5458 = vmatpush1.bf16.msra.mxu0 0
    %5459 = vmatprep.subr.bf16.mxu0 0
    %5460 = vmatpush1.bf16.msra.mxu0 0
    %5461 = vmatprep.subr.bf16.mxu0 0
    %5462 = vmatpush1.bf16.msra.mxu0 0
    %5463 = vmatprep.subr.bf16.mxu0 0
    %5464 = vmatpush1.bf16.msra.mxu0 0
    %5465 = vmatprep.subr.bf16.mxu0 0
    %5466 = vmatpush1.bf16.msra.mxu0 0
    %5467 = vmatprep.subr.bf16.mxu0 0
    %5468 = vmatpush1.bf16.msra.mxu0 0
    %5469 = vmatprep.subr.bf16.mxu0 0
    %5470 = vmatpush1.bf16.msra.mxu0 0
    %5471 = vmatprep.subr.bf16.mxu0 0
    %5472 = vmatpush1.bf16.msra.mxu0 0
    %5473 = vmatprep.mubr.bf16.mxu0 0
    %5474 = vmatmul.mubr.bf16.gmra.mrb[0].mxu0 %v991
    %v5475 = vpop.f32.mrb[0].mxu0
    %v5476 = vadd.f32 %v977, %v5475
    %v5477 = vpop.f32.mrb[0].mxu0
    %v5478 = vadd.f32 %v977, %v5477
    %v5479 = vpop.f32.mrb[0].mxu0
    %v5480 = vadd.f32 %v982, %v5479
    %v5481 = vpop.f32.mrb[0].mxu0
    %v5482 = vadd.f32 %v982, %v5481
    %5483 = vdwg.mxu0
    %5484 = vmatprep.subr.bf16.mxu0 %v5354
    %5485 = vmatpush1.bf16.msra.mxu0 %v5353
    %5486 = vmatprep.subr.bf16.mxu0 0
    %5487 = vmatpush1.bf16.msra.mxu0 0
    %5488 = vmatprep.subr.bf16.mxu0 0
    %5489 = vmatpush1.bf16.msra.mxu0 0
    %5490 = vmatprep.subr.bf16.mxu0 0
    %5491 = vmatpush1.bf16.msra.mxu0 0
    %5492 = vmatprep.subr.bf16.mxu0 0
    %5493 = vmatpush1.bf16.msra.mxu0 0
    %5494 = vmatprep.subr.bf16.mxu0 0
    %5495 = vmatpush1.bf16.msra.mxu0 0
    %5496 = vmatprep.subr.bf16.mxu0 0
    %5497 = vmatpush1.bf16.msra.mxu0 0
    %5498 = vmatprep.subr.bf16.mxu0 0
    %5499 = vmatpush1.bf16.msra.mxu0 0
    %5500 = vmatprep.subr.bf16.mxu0 0
    %5501 = vmatpush1.bf16.msra.mxu0 0
    %5502 = vmatprep.subr.bf16.mxu0 0
    %5503 = vmatpush1.bf16.msra.mxu0 0
    %5504 = vmatprep.subr.bf16.mxu0 0
    %5505 = vmatpush1.bf16.msra.mxu0 0
    %5506 = vmatprep.subr.bf16.mxu0 0
    %5507 = vmatpush1.bf16.msra.mxu0 0
    %5508 = vmatprep.subr.bf16.mxu0 0
    %5509 = vmatpush1.bf16.msra.mxu0 0
    %5510 = vmatprep.subr.bf16.mxu0 0
    %5511 = vmatpush1.bf16.msra.mxu0 0
    %5512 = vmatprep.subr.bf16.mxu0 0
    %5513 = vmatpush1.bf16.msra.mxu0 0
    %5514 = vmatprep.subr.bf16.mxu0 0
    %5515 = vmatpush1.bf16.msra.mxu0 0
    %5516 = vmatprep.mubr.bf16.mxu0 0
    %5517 = vmatmul.mubr.bf16.gmra.mrb[0].mxu0 %v991
    %v5518 = vpop.f32.mrb[0].mxu0
    %v5519 = vadd.f32 %v977, %v5518
    %v5520 = vpop.f32.mrb[0].mxu0
    %v5521 = vadd.f32 %v977, %v5520
    %v5522 = vpop.f32.mrb[0].mxu0
    %v5523 = vadd.f32 %v982, %v5522
    %v5524 = vpop.f32.mrb[0].mxu0
    %v5525 = vadd.f32 %v982, %v5524
    %5526 = vdwg.mxu0
    %v5527 = vmax.f32 %v5390, 0.0
    %v5528 = vmax.f32 %v5392, 0.0
    %v5529 = vmax.f32 %v5433, 0.0
    %v5530 = vmax.f32 %v5435, 0.0
    %v5531 = vmax.f32 %v5476, 0.0
    %v5532 = vmax.f32 %v5478, 0.0
    %v5533 = vmax.f32 %v5519, 0.0
    %v5534 = vmax.f32 %v5521, 0.0
    %v5535 = vmax.f32 %v5394, 0.0
    %v5536 = vmax.f32 %v5396, 0.0
    %v5537 = vmax.f32 %v5437, 0.0
    %v5538 = vmax.f32 %v5439, 0.0
    %v5539 = vmax.f32 %v5480, 0.0
    %v5540 = vmax.f32 %v5482, 0.0
    %v5541 = vmax.f32 %v5523, 0.0
    %v5542 = vmax.f32 %v5525, 0.0
    %v5543 = vpack.c.bf16 %v5535, %v5527
    %v5544 = vpack.c.bf16 %v5536, %v5528
    %v5545 = vpack.c.bf16 %v5537, %v5529
    %v5546 = vpack.c.bf16 %v5538, %v5530
    %v5547 = vpack.c.bf16 %v5539, %v5531
    %v5548 = vpack.c.bf16 %v5540, %v5532
    %v5549 = vpack.c.bf16 %v5541, %v5533
    %v5550 = vpack.c.bf16 %v5542, %v5534
    %5551 = vmatprep.subr.bf16.mxu0 %v5544
    %5552 = vmatpush1.bf16.msra.mxu0 %v5543
    %5553 = vmatprep.subr.bf16.mxu0 0
    %5554 = vmatpush1.bf16.msra.mxu0 0
    %5555 = vmatprep.subr.bf16.mxu0 0
    %5556 = vmatpush1.bf16.msra.mxu0 0
    %5557 = vmatprep.subr.bf16.mxu0 0
    %5558 = vmatpush1.bf16.msra.mxu0 0
    %5559 = vmatprep.subr.bf16.mxu0 0
    %5560 = vmatpush1.bf16.msra.mxu0 0
    %5561 = vmatprep.subr.bf16.mxu0 0
    %5562 = vmatpush1.bf16.msra.mxu0 0
    %5563 = vmatprep.subr.bf16.mxu0 0
    %5564 = vmatpush1.bf16.msra.mxu0 0
    %5565 = vmatprep.subr.bf16.mxu0 0
    %5566 = vmatpush1.bf16.msra.mxu0 0
    %5567 = vmatprep.subr.bf16.mxu0 0
    %5568 = vmatpush1.bf16.msra.mxu0 0
    %5569 = vmatprep.subr.bf16.mxu0 0
    %5570 = vmatpush1.bf16.msra.mxu0 0
    %5571 = vmatprep.subr.bf16.mxu0 0
    %5572 = vmatpush1.bf16.msra.mxu0 0
    %5573 = vmatprep.subr.bf16.mxu0 0
    %5574 = vmatpush1.bf16.msra.mxu0 0
    %5575 = vmatprep.subr.bf16.mxu0 0
    %5576 = vmatpush1.bf16.msra.mxu0 0
    %5577 = vmatprep.subr.bf16.mxu0 0
    %5578 = vmatpush1.bf16.msra.mxu0 0
    %5579 = vmatprep.subr.bf16.mxu0 0
    %5580 = vmatpush1.bf16.msra.mxu0 0
    %5581 = vmatprep.subr.bf16.mxu0 0
    %5582 = vmatpush1.bf16.msra.mxu0 0
    %5583 = vmatprep.mubr.bf16.mxu0 0
    %5584 = vmatmul.mubr.bf16.gmra.mrb[0].mxu0 %v1220
    %v5585 = vpop.f32.mrb[0].mxu0
    %v5586 = vadd.f32 %v1192, %v5585
    %v5587 = vpop.f32.mrb[0].mxu0
    %v5588 = vadd.f32 %v1192, %v5587
    %v5589 = vpop.f32.mrb[0].mxu0
    %v5590 = vadd.f32 %v1197, %v5589
    %v5591 = vpop.f32.mrb[0].mxu0
    %v5592 = vadd.f32 %v1197, %v5591
    %5593 = vmatprep.mubr.bf16.mxu0 0
    %5594 = vmatmul.mubr.bf16.gmra.mrb[0].mxu0 %v1223
    %v5595 = vpop.f32.mrb[0].mxu0
    %v5596 = vadd.f32 %v1202, %v5595
    %v5597 = vpop.f32.mrb[0].mxu0
    %v5598 = vadd.f32 %v1202, %v5597
    %v5599 = vpop.f32.mrb[0].mxu0
    %v5600 = vadd.f32 %v1207, %v5599
    %v5601 = vpop.f32.mrb[0].mxu0
    %v5602 = vadd.f32 %v1207, %v5601
    %5603 = vdwg.mxu0
    %5604 = vmatprep.subr.bf16.mxu0 %v5546
    %5605 = vmatpush1.bf16.msra.mxu0 %v5545
    %5606 = vmatprep.subr.bf16.mxu0 0
    %5607 = vmatpush1.bf16.msra.mxu0 0
    %5608 = vmatprep.subr.bf16.mxu0 0
    %5609 = vmatpush1.bf16.msra.mxu0 0
    %5610 = vmatprep.subr.bf16.mxu0 0
    %5611 = vmatpush1.bf16.msra.mxu0 0
    %5612 = vmatprep.subr.bf16.mxu0 0
    %5613 = vmatpush1.bf16.msra.mxu0 0
    %5614 = vmatprep.subr.bf16.mxu0 0
    %5615 = vmatpush1.bf16.msra.mxu0 0
    %5616 = vmatprep.subr.bf16.mxu0 0
    %5617 = vmatpush1.bf16.msra.mxu0 0
    %5618 = vmatprep.subr.bf16.mxu0 0
    %5619 = vmatpush1.bf16.msra.mxu0 0
    %5620 = vmatprep.subr.bf16.mxu0 0
    %5621 = vmatpush1.bf16.msra.mxu0 0
    %5622 = vmatprep.subr.bf16.mxu0 0
    %5623 = vmatpush1.bf16.msra.mxu0 0
    %5624 = vmatprep.subr.bf16.mxu0 0
    %5625 = vmatpush1.bf16.msra.mxu0 0
    %5626 = vmatprep.subr.bf16.mxu0 0
    %5627 = vmatpush1.bf16.msra.mxu0 0
    %5628 = vmatprep.subr.bf16.mxu0 0
    %5629 = vmatpush1.bf16.msra.mxu0 0
    %5630 = vmatprep.subr.bf16.mxu0 0
    %5631 = vmatpush1.bf16.msra.mxu0 0
    %5632 = vmatprep.subr.bf16.mxu0 0
    %5633 = vmatpush1.bf16.msra.mxu0 0
    %5634 = vmatprep.subr.bf16.mxu0 0
    %5635 = vmatpush1.bf16.msra.mxu0 0
    %5636 = vmatprep.mubr.bf16.mxu0 0
    %5637 = vmatmul.mubr.bf16.gmra.mrb[0].mxu0 %v1220
    %v5638 = vpop.f32.mrb[0].mxu0
    %v5639 = vadd.f32 %v1192, %v5638
    %v5640 = vpop.f32.mrb[0].mxu0
    %v5641 = vadd.f32 %v1192, %v5640
    %v5642 = vpop.f32.mrb[0].mxu0
    %v5643 = vadd.f32 %v1197, %v5642
    %v5644 = vpop.f32.mrb[0].mxu0
    %v5645 = vadd.f32 %v1197, %v5644
    %5646 = vmatprep.mubr.bf16.mxu0 0
    %5647 = vmatmul.mubr.bf16.gmra.mrb[0].mxu0 %v1223
    %v5648 = vpop.f32.mrb[0].mxu0
    %v5649 = vadd.f32 %v1202, %v5648
    %v5650 = vpop.f32.mrb[0].mxu0
    %v5651 = vadd.f32 %v1202, %v5650
    %v5652 = vpop.f32.mrb[0].mxu0
    %v5653 = vadd.f32 %v1207, %v5652
    %v5654 = vpop.f32.mrb[0].mxu0
    %v5655 = vadd.f32 %v1207, %v5654
    %5656 = vdwg.mxu0
    %5657 = vmatprep.subr.bf16.mxu0 %v5548
    %5658 = vmatpush1.bf16.msra.mxu0 %v5547
    %5659 = vmatprep.subr.bf16.mxu0 0
    %5660 = vmatpush1.bf16.msra.mxu0 0
    %5661 = vmatprep.subr.bf16.mxu0 0
    %5662 = vmatpush1.bf16.msra.mxu0 0
    %5663 = vmatprep.subr.bf16.mxu0 0
    %5664 = vmatpush1.bf16.msra.mxu0 0
    %5665 = vmatprep.subr.bf16.mxu0 0
    %5666 = vmatpush1.bf16.msra.mxu0 0
    %5667 = vmatprep.subr.bf16.mxu0 0
    %5668 = vmatpush1.bf16.msra.mxu0 0
    %5669 = vmatprep.subr.bf16.mxu0 0
    %5670 = vmatpush1.bf16.msra.mxu0 0
    %5671 = vmatprep.subr.bf16.mxu0 0
    %5672 = vmatpush1.bf16.msra.mxu0 0
    %5673 = vmatprep.subr.bf16.mxu0 0
    %5674 = vmatpush1.bf16.msra.mxu0 0
    %5675 = vmatprep.subr.bf16.mxu0 0
    %5676 = vmatpush1.bf16.msra.mxu0 0
    %5677 = vmatprep.subr.bf16.mxu0 0
    %5678 = vmatpush1.bf16.msra.mxu0 0
    %5679 = vmatprep.subr.bf16.mxu0 0
    %5680 = vmatpush1.bf16.msra.mxu0 0
    %5681 = vmatprep.subr.bf16.mxu0 0
    %5682 = vmatpush1.bf16.msra.mxu0 0
    %5683 = vmatprep.subr.bf16.mxu0 0
    %5684 = vmatpush1.bf16.msra.mxu0 0
    %5685 = vmatprep.subr.bf16.mxu0 0
    %5686 = vmatpush1.bf16.msra.mxu0 0
    %5687 = vmatprep.subr.bf16.mxu0 0
    %5688 = vmatpush1.bf16.msra.mxu0 0
    %5689 = vmatprep.mubr.bf16.mxu0 0
    %5690 = vmatmul.mubr.bf16.gmra.mrb[0].mxu0 %v1220
    %v5691 = vpop.f32.mrb[0].mxu0
    %v5692 = vadd.f32 %v1192, %v5691
    %v5693 = vpop.f32.mrb[0].mxu0
    %v5694 = vadd.f32 %v1192, %v5693
    %v5695 = vpop.f32.mrb[0].mxu0
    %v5696 = vadd.f32 %v1197, %v5695
    %v5697 = vpop.f32.mrb[0].mxu0
    %v5698 = vadd.f32 %v1197, %v5697
    %5699 = vmatprep.mubr.bf16.mxu0 0
    %5700 = vmatmul.mubr.bf16.gmra.mrb[0].mxu0 %v1223
    %v5701 = vpop.f32.mrb[0].mxu0
    %v5702 = vadd.f32 %v1202, %v5701
    %v5703 = vpop.f32.mrb[0].mxu0
    %v5704 = vadd.f32 %v1202, %v5703
    %v5705 = vpop.f32.mrb[0].mxu0
    %v5706 = vadd.f32 %v1207, %v5705
    %v5707 = vpop.f32.mrb[0].mxu0
    %v5708 = vadd.f32 %v1207, %v5707
    %5709 = vdwg.mxu0
    %5710 = vmatprep.subr.bf16.mxu0 %v5550
    %5711 = vmatpush1.bf16.msra.mxu0 %v5549
    %5712 = vmatprep.subr.bf16.mxu0 0
    %5713 = vmatpush1.bf16.msra.mxu0 0
    %5714 = vmatprep.subr.bf16.mxu0 0
    %5715 = vmatpush1.bf16.msra.mxu0 0
    %5716 = vmatprep.subr.bf16.mxu0 0
    %5717 = vmatpush1.bf16.msra.mxu0 0
    %5718 = vmatprep.subr.bf16.mxu0 0
    %5719 = vmatpush1.bf16.msra.mxu0 0
    %5720 = vmatprep.subr.bf16.mxu0 0
    %5721 = vmatpush1.bf16.msra.mxu0 0
    %5722 = vmatprep.subr.bf16.mxu0 0
    %5723 = vmatpush1.bf16.msra.mxu0 0
    %5724 = vmatprep.subr.bf16.mxu0 0
    %5725 = vmatpush1.bf16.msra.mxu0 0
    %5726 = vmatprep.subr.bf16.mxu0 0
    %5727 = vmatpush1.bf16.msra.mxu0 0
    %5728 = vmatprep.subr.bf16.mxu0 0
    %5729 = vmatpush1.bf16.msra.mxu0 0
    %5730 = vmatprep.subr.bf16.mxu0 0
    %5731 = vmatpush1.bf16.msra.mxu0 0
    %5732 = vmatprep.subr.bf16.mxu0 0
    %5733 = vmatpush1.bf16.msra.mxu0 0
    %5734 = vmatprep.subr.bf16.mxu0 0
    %5735 = vmatpush1.bf16.msra.mxu0 0
    %5736 = vmatprep.subr.bf16.mxu0 0
    %5737 = vmatpush1.bf16.msra.mxu0 0
    %5738 = vmatprep.subr.bf16.mxu0 0
    %5739 = vmatpush1.bf16.msra.mxu0 0
    %5740 = vmatprep.subr.bf16.mxu0 0
    %5741 = vmatpush1.bf16.msra.mxu0 0
    %5742 = vmatprep.mubr.bf16.mxu0 0
    %5743 = vmatmul.mubr.bf16.gmra.mrb[0].mxu0 %v1220
    %v5744 = vpop.f32.mrb[0].mxu0
    %v5745 = vadd.f32 %v1192, %v5744
    %v5746 = vpop.f32.mrb[0].mxu0
    %v5747 = vadd.f32 %v1192, %v5746
    %v5748 = vpop.f32.mrb[0].mxu0
    %v5749 = vadd.f32 %v1197, %v5748
    %v5750 = vpop.f32.mrb[0].mxu0
    %v5751 = vadd.f32 %v1197, %v5750
    %5752 = vmatprep.mubr.bf16.mxu0 0
    %5753 = vmatmul.mubr.bf16.gmra.mrb[0].mxu0 %v1223
    %v5754 = vpop.f32.mrb[0].mxu0
    %v5755 = vadd.f32 %v1202, %v5754
    %v5756 = vpop.f32.mrb[0].mxu0
    %v5757 = vadd.f32 %v1202, %v5756
    %v5758 = vpop.f32.mrb[0].mxu0
    %v5759 = vadd.f32 %v1207, %v5758
    %v5760 = vpop.f32.mrb[0].mxu0
    %v5761 = vadd.f32 %v1207, %v5760
    %5762 = vdwg.mxu0
    %v5763 = vmax.f32 %v5586, 0.0
    %v5764 = vmax.f32 %v5588, 0.0
    %v5765 = vmax.f32 %v5639, 0.0
    %v5766 = vmax.f32 %v5641, 0.0
    %v5767 = vmax.f32 %v5692, 0.0
    %v5768 = vmax.f32 %v5694, 0.0
    %v5769 = vmax.f32 %v5745, 0.0
    %v5770 = vmax.f32 %v5747, 0.0
    %v5771 = vmax.f32 %v5590, 0.0
    %v5772 = vmax.f32 %v5592, 0.0
    %v5773 = vmax.f32 %v5643, 0.0
    %v5774 = vmax.f32 %v5645, 0.0
    %v5775 = vmax.f32 %v5696, 0.0
    %v5776 = vmax.f32 %v5698, 0.0
    %v5777 = vmax.f32 %v5749, 0.0
    %v5778 = vmax.f32 %v5751, 0.0
    %v5779 = vmax.f32 %v5596, 0.0
    %v5780 = vmax.f32 %v5598, 0.0
    %v5781 = vmax.f32 %v5649, 0.0
    %v5782 = vmax.f32 %v5651, 0.0
    %v5783 = vmax.f32 %v5702, 0.0
    %v5784 = vmax.f32 %v5704, 0.0
    %v5785 = vmax.f32 %v5755, 0.0
    %v5786 = vmax.f32 %v5757, 0.0
    %v5787 = vmax.f32 %v5600, 0.0
    %v5788 = vmax.f32 %v5602, 0.0
    %v5789 = vmax.f32 %v5653, 0.0
    %v5790 = vmax.f32 %v5655, 0.0
    %v5791 = vmax.f32 %v5706, 0.0
    %v5792 = vmax.f32 %v5708, 0.0
    %v5793 = vmax.f32 %v5759, 0.0
    %v5794 = vmax.f32 %v5761, 0.0
    %vm5795 = vcmp.gt.s32.totalorder %v38, 24
    %v5796 = vsel %vm5795, 1, 0
    %v5797 = vlaneseq
    %v5798 = vshrl.u32 %v5797, 7
    %v5799 = vsub.s32 0, %v5798
    %v5800 = vrot.slane %v5796, %v5799
    %vm5801 = vcmp.eq.s32.totalorder %v5800, 1
    %v5802 = vsel %vm5801, %v5763, 0.0
    %v5803 = vsel %vm5801, %v5771, 0.0
    %v5804 = vsel %vm5801, %v5779, 0.0
    %v5805 = vsel %vm5801, %v5787, 0.0
    %v5806 = vmax.f32 %v4469, %v5802
    %v5807 = vmax.f32 %v4470, %v5803
    %v5808 = vmax.f32 %v4471, %v5804
    %v5809 = vmax.f32 %v4472, %v5805
    %vm5810 = vcmp.gt.s32.totalorder %v38, 25
    %v5811 = vsel %vm5810, 1, 0
    %v5812 = vlaneseq
    %v5813 = vshrl.u32 %v5812, 7
    %v5814 = vsub.s32 0, %v5813
    %v5815 = vrot.slane %v5811, %v5814
    %vm5816 = vcmp.eq.s32.totalorder %v5815, 1
    %v5817 = vsel %vm5816, %v5764, 0.0
    %v5818 = vsel %vm5816, %v5772, 0.0
    %v5819 = vsel %vm5816, %v5780, 0.0
    %v5820 = vsel %vm5816, %v5788, 0.0
    %v5821 = vmax.f32 %v5806, %v5817
    %v5822 = vmax.f32 %v5807, %v5818
    %v5823 = vmax.f32 %v5808, %v5819
    %v5824 = vmax.f32 %v5809, %v5820
    %vm5825 = vcmp.gt.s32.totalorder %v38, 26
    %v5826 = vsel %vm5825, 1, 0
    %v5827 = vlaneseq
    %v5828 = vshrl.u32 %v5827, 7
    %v5829 = vsub.s32 0, %v5828
    %v5830 = vrot.slane %v5826, %v5829
    %vm5831 = vcmp.eq.s32.totalorder %v5830, 1
    %v5832 = vsel %vm5831, %v5765, 0.0
    %v5833 = vsel %vm5831, %v5773, 0.0
    %v5834 = vsel %vm5831, %v5781, 0.0
    %v5835 = vsel %vm5831, %v5789, 0.0
    %v5836 = vmax.f32 %v5821, %v5832
    %v5837 = vmax.f32 %v5822, %v5833
    %v5838 = vmax.f32 %v5823, %v5834
    %v5839 = vmax.f32 %v5824, %v5835
    %vm5840 = vcmp.gt.s32.totalorder %v38, 27
    %v5841 = vsel %vm5840, 1, 0
    %v5842 = vlaneseq
    %v5843 = vshrl.u32 %v5842, 7
    %v5844 = vsub.s32 0, %v5843
    %v5845 = vrot.slane %v5841, %v5844
    %vm5846 = vcmp.eq.s32.totalorder %v5845, 1
    %v5847 = vsel %vm5846, %v5766, 0.0
    %v5848 = vsel %vm5846, %v5774, 0.0
    %v5849 = vsel %vm5846, %v5782, 0.0
    %v5850 = vsel %vm5846, %v5790, 0.0
    %v5851 = vmax.f32 %v5836, %v5847
    %v5852 = vmax.f32 %v5837, %v5848
    %v5853 = vmax.f32 %v5838, %v5849
    %v5854 = vmax.f32 %v5839, %v5850
    %vm5855 = vcmp.gt.s32.totalorder %v38, 28
    %v5856 = vsel %vm5855, 1, 0
    %v5857 = vlaneseq
    %v5858 = vshrl.u32 %v5857, 7
    %v5859 = vsub.s32 0, %v5858
    %v5860 = vrot.slane %v5856, %v5859
    %vm5861 = vcmp.eq.s32.totalorder %v5860, 1
    %v5862 = vsel %vm5861, %v5767, 0.0
    %v5863 = vsel %vm5861, %v5775, 0.0
    %v5864 = vsel %vm5861, %v5783, 0.0
    %v5865 = vsel %vm5861, %v5791, 0.0
    %v5866 = vmax.f32 %v5851, %v5862
    %v5867 = vmax.f32 %v5852, %v5863
    %v5868 = vmax.f32 %v5853, %v5864
    %v5869 = vmax.f32 %v5854, %v5865
    %vm5870 = vcmp.gt.s32.totalorder %v38, 29
    %v5871 = vsel %vm5870, 1, 0
    %v5872 = vlaneseq
    %v5873 = vshrl.u32 %v5872, 7
    %v5874 = vsub.s32 0, %v5873
    %v5875 = vrot.slane %v5871, %v5874
    %vm5876 = vcmp.eq.s32.totalorder %v5875, 1
    %v5877 = vsel %vm5876, %v5768, 0.0
    %v5878 = vsel %vm5876, %v5776, 0.0
    %v5879 = vsel %vm5876, %v5784, 0.0
    %v5880 = vsel %vm5876, %v5792, 0.0
    %v5881 = vmax.f32 %v5866, %v5877
    %v5882 = vmax.f32 %v5867, %v5878
    %v5883 = vmax.f32 %v5868, %v5879
    %v5884 = vmax.f32 %v5869, %v5880
    %vm5885 = vcmp.gt.s32.totalorder %v38, 30
    %v5886 = vsel %vm5885, 1, 0
    %v5887 = vlaneseq
    %v5888 = vshrl.u32 %v5887, 7
    %v5889 = vsub.s32 0, %v5888
    %v5890 = vrot.slane %v5886, %v5889
    %vm5891 = vcmp.eq.s32.totalorder %v5890, 1
    %v5892 = vsel %vm5891, %v5769, 0.0
    %v5893 = vsel %vm5891, %v5777, 0.0
    %v5894 = vsel %vm5891, %v5785, 0.0
    %v5895 = vsel %vm5891, %v5793, 0.0
    %v5896 = vmax.f32 %v5881, %v5892
    %v5897 = vmax.f32 %v5882, %v5893
    %v5898 = vmax.f32 %v5883, %v5894
    %v5899 = vmax.f32 %v5884, %v5895
    %vm5900 = vcmp.gt.s32.totalorder %v38, 31
    %v5901 = vsel %vm5900, 1, 0
    %v5902 = vlaneseq
    %v5903 = vshrl.u32 %v5902, 7
    %v5904 = vsub.s32 0, %v5903
    %v5905 = vrot.slane %v5901, %v5904
    %vm5906 = vcmp.eq.s32.totalorder %v5905, 1
    %v5907 = vsel %vm5906, %v5770, 0.0
    %v5908 = vsel %vm5906, %v5778, 0.0
    %v5909 = vsel %vm5906, %v5786, 0.0
    %v5910 = vsel %vm5906, %v5794, 0.0
    %v5911 = vmax.f32 %v5896, %v5907
    %v5912 = vmax.f32 %v5897, %v5908
    %v5913 = vmax.f32 %v5898, %v5909
    %v5914 = vmax.f32 %v5899, %v5910
    %5915 = vst [vmem:[#allocation2] sm:$0xff] %v5911
    %5916 = vst [vmem:[#allocation2 + $0x8] sm:$0xff] %v5912
    %5917 = vst [vmem:[#allocation2 + $0x10] sm:$0xff] %v5913
    %5918 = vst [vmem:[#allocation2 + $0x18] sm:$0xff] %v5914
    // Predicated region
    $region42: #{tpu_custom_call.1} parent=1 // pred_check
      _
    $region43: #{tpu_custom_call.1} parent=1 // pred_check_branch
      %5920 = sbr.rel (0) target = $region45
    $region44: #{tpu_custom_call.1} parent=1 // pred_region
      %s5922 = ssub.s32 512, 512
      %5923 = vsyncadd [#allocation3], %s5922
      %s5924 = sshll.u32 [#allocation2], 4
      %s5925 = int_to_ptr.vmem [resolvable:$true] %s5924
      %5930 = dma.vmem_to_hbm [thread:$0]  %s5925, 512, %s10, [#allocation3], 128, 128, 8
    $region45: #{tpu_custom_call.1} parent=1 // pred_fallthru
      _
    // Predicated region
    $region46: #{tpu_custom_call.1} parent=1 // pred_check
      _
    $region47: #{tpu_custom_call.1} parent=1 // pred_check_branch
      %5932 = sbr.rel (0) target = $region49
    $region48: #{tpu_custom_call.1} parent=1 // pred_region
      %5933 = dma.done [#allocation3], 512
    $region49: #{tpu_custom_call.1} parent=1 // pred_fallthru
      _
    %5934 = vsyncpa [#allocation3], 1

</llo_original>
